<compile_context>
chip_gen: v5e
topology: v5e:2x2
jax: 0.10.0
libtpu: 0.0.40
codegen_flags: <defaults>
</compile_context>

<pallas_src>
import functools

import jax
import jax.numpy as jnp
from jax.experimental import pallas as pl
from jax.experimental.pallas import tpu as pltpu

IN_FEATURES = 100
IN_PAD = 128          # feature dim padded to a lane multiple (inside the kernel)
NUM_CLASSES = 2
HIDDEN = (2048, 512, 128, 32)

_DIMS = (IN_PAD,) + HIDDEN + (NUM_CLASSES,)
_WEIGHT_BYTES = 2 * sum(_DIMS[i] * _DIMS[i + 1] for i in range(len(_DIMS) - 1))  # bf16


def _round_up(x, m):
    return ((x + m - 1) // m) * m


def _cdiv(a, b):
    return (a + b - 1) // b


def _tpu_config():
    """Return (two_tensorcores, default_tm) from the local device kind."""
    try:
        kind = jax.devices()[0].device_kind.lower()
    except Exception:
        kind = ""
    two_tc = "v7" in kind
    return two_tc, (512 if two_tc else 1024)


def _choose_tiling(batch, tm, min_steps):
    """Adaptive batch tiling: bounds zero-row padding to < 8 rows per tile."""
    steps = max(_cdiv(batch, tm), min_steps)
    steps = min(steps, max(_cdiv(batch, 8), 1))      # each tile needs >= 8 rows
    tile_m = _round_up(_cdiv(batch, steps), 8)
    return tile_m, tile_m * steps, steps


def _vmem_limit_bytes(tile_m, two_tc, weight_buffers):
    # Keep the f32 layer-1 slab (tile_m x 2048 x 4B) + its bf16 copy / layer-2+
    # intermediates in the accounting, plus x/out tiles and resident weights.
    acts = tile_m * HIDDEN[0] * 4 * 2
    io = tile_m * (2 * IN_FEATURES * 4 + IN_PAD * 2 + 2 * NUM_CLASSES * 4)
    total = _WEIGHT_BYTES * weight_buffers + acts + io + (8 << 20)
    floor = (40 << 20) if two_tc else (48 << 20)     # explicit: v5e default is only 16 MiB
    cap = (48 << 20) if two_tc else (96 << 20)       # v7x has 64 MiB physical VMEM
    return int(min(max(total, floor), cap))


def mlp_kernel(x_ref,
               w1_ref, b1_ref,
               w2_ref, b2_ref,
               w3_ref, b3_ref,
               w4_ref, b4_ref,
               w5_ref, b5_ref,
               o_ref, xpad_ref):
    # Cast + lane-pad the input tile in VMEM: (TM, 100) f32 -> (TM, 128) bf16.
    # (Replaces the old wrapper-side pad/cast, which was an extra HBM pass.)
    xpad_ref[...] = jnp.zeros_like(xpad_ref)
    xpad_ref[:, :IN_FEATURES] = x_ref[...].astype(jnp.bfloat16)
    h = xpad_ref[...]

    # Linear(128 -> 2048) + ReLU   (bf16 operands, f32 MXU accumulate)
    h = jnp.dot(h, w1_ref[...], preferred_element_type=jnp.float32) + b1_ref[...]
    h = jnp.maximum(h, 0.0).astype(jnp.bfloat16)

    # Linear(2048 -> 512) + ReLU   (~76% of FLOPs; already a good MXU shape)
    h = jnp.dot(h, w2_ref[...], preferred_element_type=jnp.float32) + b2_ref[...]
    h = jnp.maximum(h, 0.0).astype(jnp.bfloat16)

    # Linear(512 -> 128) + ReLU
    h = jnp.dot(h, w3_ref[...], preferred_element_type=jnp.float32) + b3_ref[...]
    h = jnp.maximum(h, 0.0).astype(jnp.bfloat16)

    # Linear(128 -> 32) + ReLU
    h = jnp.dot(h, w4_ref[...], preferred_element_type=jnp.float32) + b4_ref[...]
    h = jnp.maximum(h, 0.0).astype(jnp.bfloat16)

    # Linear(32 -> num_classes)
    logits = jnp.dot(h, w5_ref[...], preferred_element_type=jnp.float32) + b5_ref[...]

    # Stable softmax over classes (PyTorch Softmax(dim=1)), in f32.
    m = jnp.max(logits, axis=-1, keepdims=True)
    e = jnp.exp(logits - m)
    # NOTE: (TM, 2) output block is lane-sparse (masked vst.msk); acceptable at 8 B/row.
    o_ref[...] = (e / jnp.sum(e, axis=-1, keepdims=True)).astype(o_ref.dtype)


def prepare_params(params_f32):
    """f32 (in,out)/(1,out) params -> kernel params: W bf16 (W1 rows zero-padded to 128), b f32."""
    prepared = []
    for i, (w, b) in enumerate(params_f32):
        if i == 0 and w.shape[0] != IN_PAD:
            w = jnp.pad(w, ((0, IN_PAD - w.shape[0]), (0, 0)))
        prepared.append((w.astype(jnp.bfloat16), b.astype(jnp.float32)))
    return prepared


@functools.partial(jax.jit,
                   static_argnames=("tile_m", "two_tc", "single_buffer_weights"))
def _mlp_pallas(x_pad, flat_params, *, tile_m, two_tc, single_buffer_weights):
    batch_pad = x_pad.shape[0]
    wspec_kw = {"pipeline_mode": pl.Buffered(1)} if single_buffer_weights else {}

    in_specs = [pl.BlockSpec((tile_m, IN_FEATURES), lambda i: (i, 0))]
    for p in flat_params:
        # Constant index_map -> weights/biases fetched once and kept VMEM-resident.
        in_specs.append(pl.BlockSpec(p.shape, lambda i: (0, 0), **wspec_kw))

    weight_buffers = 1 if single_buffer_weights else 2
    return pl.pallas_call(
        mlp_kernel,
        out_shape=jax.ShapeDtypeStruct((batch_pad, NUM_CLASSES), jnp.float32),
        grid=(batch_pad // tile_m,),
        in_specs=in_specs,
        out_specs=pl.BlockSpec((tile_m, NUM_CLASSES), lambda i: (i, 0)),
        scratch_shapes=[pltpu.VMEM((tile_m, IN_PAD), jnp.bfloat16)],
        compiler_params=pltpu.CompilerParams(
            dimension_semantics=("parallel",),   # shard the batch grid across v7x's 2 TCs
            vmem_limit_bytes=_vmem_limit_bytes(tile_m, two_tc, weight_buffers),
        ),
    )(x_pad, *flat_params)


def mlp_forward(x, prepared_params, tm=None):
    """x: (batch, IN_FEATURES) f32; prepared_params from prepare_params()."""
    batch = x.shape[0]
    two_tc, default_tm = _tpu_config()
    tm = default_tm if tm is None else tm
    min_steps = 2 if two_tc else 1               # >=2 grid steps keeps both v7x TCs busy
    tile_m, batch_pad, _ = _choose_tiling(batch, tm, min_steps)

    x_pad = x if batch_pad == batch else jnp.pad(x, ((0, batch_pad - batch), (0, 0)))
    flat_params = tuple(p for wb in prepared_params for p in wb)

    try:
        out = _mlp_pallas(x_pad, flat_params, tile_m=tile_m, two_tc=two_tc,
                          single_buffer_weights=True)
    except Exception:
        # Fallback if this JAX build rejects pipeline_mode=pl.Buffered(1).
        out = _mlp_pallas(x_pad, flat_params, tile_m=tile_m, two_tc=two_tc,
                          single_buffer_weights=False)
    return out[:batch]


def init_params(key):
    """Deterministic synthetic init matching the nn.Linear shapes (f32 reference copy).

    PyTorch Linear(in, out) has W: (out, in), b: (out,).
    We store W transposed as (in, out) and b as (1, out)."""
    dims = (IN_FEATURES,) + HIDDEN + (NUM_CLASSES,)
    params = []
    for i in range(len(dims) - 1):
        d_in, d_out = dims[i], dims[i + 1]
        key, kw, kb = jax.random.split(key, 3)
        bound = 1.0 / jnp.sqrt(jnp.float32(d_in))
        w_t = jax.random.uniform(kw, (d_in, d_out), jnp.float32, -bound, bound)
        b = jax.random.uniform(kb, (1, d_out), jnp.float32, -bound, bound)
        params.append((w_t, b))
    return params


def reference_forward(x, params_f32):
    h = x
    for i, (w_t, b) in enumerate(params_f32):
        h = h @ w_t + b
        if i < len(params_f32) - 1:
            h = jnp.maximum(h, 0.0)
    return jax.nn.softmax(h, axis=1)


if __name__ == "__main__":
    key = jax.random.PRNGKey(0)
    kx, kp = jax.random.split(key)

    batch = 8
    x = jax.random.normal(kx, (batch, IN_FEATURES), jnp.float32)
    params_f32 = init_params(kp)
    params_kernel = prepare_params(params_f32)

    out = jax.block_until_ready(mlp_forward(x, params_kernel))
    ref = reference_forward(x, params_f32)

    assert out.shape == (batch, NUM_CLASSES)
    # bf16 weight/activation stream -> relaxed tolerance vs the f32 reference.
    assert jnp.allclose(jnp.sum(out, axis=1), 1.0, atol=1e-3)
    assert jnp.allclose(out, ref, atol=2e-2, rtol=2e-2)

    print("KERNEL_OK")
</pallas_src>

<mosaic_0001>
module attributes {stable_mosaic.version = 11 : i64} {
  func.func @mlp_kernel(%arg0: i32, %arg1: memref<8x100xf32, #tpu.memory_space<vmem>>, %arg2: memref<128x2048xbf16, #tpu.memory_space<vmem>>, %arg3: memref<1x2048xf32, #tpu.memory_space<vmem>>, %arg4: memref<2048x512xbf16, #tpu.memory_space<vmem>>, %arg5: memref<1x512xf32, #tpu.memory_space<vmem>>, %arg6: memref<512x128xbf16, #tpu.memory_space<vmem>>, %arg7: memref<1x128xf32, #tpu.memory_space<vmem>>, %arg8: memref<128x32xbf16, #tpu.memory_space<vmem>>, %arg9: memref<1x32xf32, #tpu.memory_space<vmem>>, %arg10: memref<32x2xbf16, #tpu.memory_space<vmem>>, %arg11: memref<1x2xf32, #tpu.memory_space<vmem>>, %arg12: memref<8x2xf32, #tpu.memory_space<vmem>>, %arg13: memref<8x128xbf16, #tpu.memory_space<vmem>>) attributes {dimension_semantics = [#tpu.dimension_semantics<parallel>], iteration_bounds = array<i64: 1>, scalar_prefetch = 0 : i64, scratch_operands = 1 : i64, tpu.core_type = #tpu.core_type<tc>, window_params = [{transform_indices = @transform_0, window_bounds = array<i64: 8, 100>}, {pipeline_mode = #tpu.pipeline_mode<synchronous>, transform_indices = @transform_1, window_bounds = array<i64: 128, 2048>}, {pipeline_mode = #tpu.pipeline_mode<synchronous>, transform_indices = @transform_2, window_bounds = array<i64: 1, 2048>}, {pipeline_mode = #tpu.pipeline_mode<synchronous>, transform_indices = @transform_3, window_bounds = array<i64: 2048, 512>}, {pipeline_mode = #tpu.pipeline_mode<synchronous>, transform_indices = @transform_4, window_bounds = array<i64: 1, 512>}, {pipeline_mode = #tpu.pipeline_mode<synchronous>, transform_indices = @transform_5, window_bounds = array<i64: 512, 128>}, {pipeline_mode = #tpu.pipeline_mode<synchronous>, transform_indices = @transform_6, window_bounds = array<i64: 1, 128>}, {pipeline_mode = #tpu.pipeline_mode<synchronous>, transform_indices = @transform_7, window_bounds = array<i64: 128, 32>}, {pipeline_mode = #tpu.pipeline_mode<synchronous>, transform_indices = @transform_8, window_bounds = array<i64: 1, 32>}, {pipeline_mode = #tpu.pipeline_mode<synchronous>, transform_indices = @transform_9, window_bounds = array<i64: 32, 2>}, {pipeline_mode = #tpu.pipeline_mode<synchronous>, transform_indices = @transform_10, window_bounds = array<i64: 1, 2>}, {transform_indices = @transform_11, window_bounds = array<i64: 8, 2>}]} {
    %cst = arith.constant 0.000000e+00 : bf16
    %0 = vector.broadcast %cst : bf16 to vector<8x128xbf16>
    %c0 = arith.constant 0 : index
    %c0_0 = arith.constant 0 : index
    %1 = vector.load %arg13[%c0, %c0_0] : memref<8x128xbf16, #tpu.memory_space<vmem>>, vector<8x128xbf16>
    tpu.vector_store %arg13[%c0, %c0_0], %0 {strides = array<i32>} : memref<8x128xbf16, #tpu.memory_space<vmem>>, vector<8x128xbf16>,
    %c0_1 = arith.constant 0 : index
    %c0_2 = arith.constant 0 : index
    %2 = vector.load %arg1[%c0_1, %c0_2] : memref<8x100xf32, #tpu.memory_space<vmem>>, vector<8x100xf32>
    %3 = arith.truncf %2 : vector<8x100xf32> to vector<8x100xbf16>
    %c0_3 = arith.constant 0 : index
    %c0_4 = arith.constant 0 : index
    %4 = vector.load %arg13[%c0_3, %c0_4] : memref<8x128xbf16, #tpu.memory_space<vmem>>, vector<8x100xbf16>
    tpu.vector_store %arg13[%c0_3, %c0_4], %3 {strides = array<i32>} : memref<8x128xbf16, #tpu.memory_space<vmem>>, vector<8x100xbf16>,
    %c0_5 = arith.constant 0 : index
    %c0_6 = arith.constant 0 : index
    %5 = vector.load %arg13[%c0_5, %c0_6] : memref<8x128xbf16, #tpu.memory_space<vmem>>, vector<8x128xbf16>
    %c0_7 = arith.constant 0 : index
    %c0_8 = arith.constant 0 : index
    %6 = vector.load %arg2[%c0_7, %c0_8] : memref<128x2048xbf16, #tpu.memory_space<vmem>>, vector<128x2048xbf16>
    %cst_9 = arith.constant dense<0.000000e+00> : vector<8x2048xf32>
    %7 = tpu.matmul %5, %6, %cst_9 {dimension_numbers = #tpu.dot_dimension_numbers<[1], [0], [0], [1], [0, 0, 1, 1], [], []>} : vector<8x128xbf16>, vector<128x2048xbf16>, vector<8x2048xf32> -> vector<8x2048xf32>
    %c0_10 = arith.constant 0 : index
    %c0_11 = arith.constant 0 : index
    %8 = vector.load %arg3[%c0_10, %c0_11] : memref<1x2048xf32, #tpu.memory_space<vmem>>, vector<1x2048xf32>
    %9 = vector.broadcast %8 : vector<1x2048xf32> to vector<8x2048xf32>
    %10 = arith.addf %7, %9 : vector<8x2048xf32>
    %cst_12 = arith.constant 0.000000e+00 : f32
    %11 = vector.broadcast %cst_12 : f32 to vector<8x2048xf32>
    %12 = arith.maximumf %10, %11 : vector<8x2048xf32>
    %13 = arith.truncf %12 : vector<8x2048xf32> to vector<8x2048xbf16>
    %c0_13 = arith.constant 0 : index
    %c0_14 = arith.constant 0 : index
    %14 = vector.load %arg4[%c0_13, %c0_14] : memref<2048x512xbf16, #tpu.memory_space<vmem>>, vector<2048x512xbf16>
    %cst_15 = arith.constant dense<0.000000e+00> : vector<8x512xf32>
    %15 = tpu.matmul %13, %14, %cst_15 {dimension_numbers = #tpu.dot_dimension_numbers<[1], [0], [0], [1], [0, 0, 1, 1], [], []>} : vector<8x2048xbf16>, vector<2048x512xbf16>, vector<8x512xf32> -> vector<8x512xf32>
    %c0_16 = arith.constant 0 : index
    %c0_17 = arith.constant 0 : index
    %16 = vector.load %arg5[%c0_16, %c0_17] : memref<1x512xf32, #tpu.memory_space<vmem>>, vector<1x512xf32>
    %17 = vector.broadcast %16 : vector<1x512xf32> to vector<8x512xf32>
    %18 = arith.addf %15, %17 : vector<8x512xf32>
    %cst_18 = arith.constant 0.000000e+00 : f32
    %19 = vector.broadcast %cst_18 : f32 to vector<8x512xf32>
    %20 = arith.maximumf %18, %19 : vector<8x512xf32>
    %21 = arith.truncf %20 : vector<8x512xf32> to vector<8x512xbf16>
    %c0_19 = arith.constant 0 : index
    %c0_20 = arith.constant 0 : index
    %22 = vector.load %arg6[%c0_19, %c0_20] : memref<512x128xbf16, #tpu.memory_space<vmem>>, vector<512x128xbf16>
    %cst_21 = arith.constant dense<0.000000e+00> : vector<8x128xf32>
    %23 = tpu.matmul %21, %22, %cst_21 {dimension_numbers = #tpu.dot_dimension_numbers<[1], [0], [0], [1], [0, 0, 1, 1], [], []>} : vector<8x512xbf16>, vector<512x128xbf16>, vector<8x128xf32> -> vector<8x128xf32>
    %c0_22 = arith.constant 0 : index
    %c0_23 = arith.constant 0 : index
    %24 = vector.load %arg7[%c0_22, %c0_23] : memref<1x128xf32, #tpu.memory_space<vmem>>, vector<1x128xf32>
    %25 = vector.broadcast %24 : vector<1x128xf32> to vector<8x128xf32>
    %26 = arith.addf %23, %25 : vector<8x128xf32>
    %cst_24 = arith.constant 0.000000e+00 : f32
    %27 = vector.broadcast %cst_24 : f32 to vector<8x128xf32>
    %28 = arith.maximumf %26, %27 : vector<8x128xf32>
    %29 = arith.truncf %28 : vector<8x128xf32> to vector<8x128xbf16>
    %c0_25 = arith.constant 0 : index
    %c0_26 = arith.constant 0 : index
    %30 = vector.load %arg8[%c0_25, %c0_26] : memref<128x32xbf16, #tpu.memory_space<vmem>>, vector<128x32xbf16>
    %cst_27 = arith.constant dense<0.000000e+00> : vector<8x32xf32>
    %31 = tpu.matmul %29, %30, %cst_27 {dimension_numbers = #tpu.dot_dimension_numbers<[1], [0], [0], [1], [0, 0, 1, 1], [], []>} : vector<8x128xbf16>, vector<128x32xbf16>, vector<8x32xf32> -> vector<8x32xf32>
    %c0_28 = arith.constant 0 : index
    %c0_29 = arith.constant 0 : index
    %32 = vector.load %arg9[%c0_28, %c0_29] : memref<1x32xf32, #tpu.memory_space<vmem>>, vector<1x32xf32>
    %33 = vector.broadcast %32 : vector<1x32xf32> to vector<8x32xf32>
    %34 = arith.addf %31, %33 : vector<8x32xf32>
    %cst_30 = arith.constant 0.000000e+00 : f32
    %35 = vector.broadcast %cst_30 : f32 to vector<8x32xf32>
    %36 = arith.maximumf %34, %35 : vector<8x32xf32>
    %37 = arith.truncf %36 : vector<8x32xf32> to vector<8x32xbf16>
    %c0_31 = arith.constant 0 : index
    %c0_32 = arith.constant 0 : index
    %38 = vector.load %arg10[%c0_31, %c0_32] : memref<32x2xbf16, #tpu.memory_space<vmem>>, vector<32x2xbf16>
    %cst_33 = arith.constant dense<0.000000e+00> : vector<8x2xf32>
    %39 = tpu.matmul %37, %38, %cst_33 {dimension_numbers = #tpu.dot_dimension_numbers<[1], [0], [0], [1], [0, 0, 1, 1], [], []>} : vector<8x32xbf16>, vector<32x2xbf16>, vector<8x2xf32> -> vector<8x2xf32>
    %c0_34 = arith.constant 0 : index
    %c0_35 = arith.constant 0 : index
    %40 = vector.load %arg11[%c0_34, %c0_35] : memref<1x2xf32, #tpu.memory_space<vmem>>, vector<1x2xf32>
    %41 = vector.broadcast %40 : vector<1x2xf32> to vector<8x2xf32>
    %42 = arith.addf %39, %41 : vector<8x2xf32>
    %cst_36 = arith.constant dense<0xFF800000> : vector<8xf32>
    %43 = vector.multi_reduction <maximumf>, %42, %cst_36 [1] : vector<8x2xf32> to vector<8xf32>
    %44 = vector.shape_cast %43 : vector<8xf32> to vector<8x1xf32>
    %45 = vector.broadcast %44 : vector<8x1xf32> to vector<8x2xf32>
    %46 = arith.subf %42, %45 : vector<8x2xf32>
    %47 = math.exp %46 : vector<8x2xf32>
    %cst_37 = arith.constant dense<0.000000e+00> : vector<8xf32>
    %48 = vector.multi_reduction <add>, %47, %cst_37 [1] : vector<8x2xf32> to vector<8xf32>
    %49 = vector.shape_cast %48 : vector<8xf32> to vector<8x1xf32>
    %50 = vector.broadcast %49 : vector<8x1xf32> to vector<8x2xf32>
    %51 = arith.divf %47, %50 : vector<8x2xf32>
    %c0_38 = arith.constant 0 : index
    %c0_39 = arith.constant 0 : index
    %52 = vector.load %arg12[%c0_38, %c0_39] : memref<8x2xf32, #tpu.memory_space<vmem>>, vector<8x2xf32>
    tpu.vector_store %arg12[%c0_38, %c0_39], %51 {strides = array<i32>} : memref<8x2xf32, #tpu.memory_space<vmem>>, vector<8x2xf32>,
    return
  }
  func.func @transform_0(%arg0: i32) -> (i32, i32) {
    %c0_i32 = arith.constant 0 : i32
    %c0_i32_0 = arith.constant 0 : i32
    return %arg0, %c0_i32 : i32, i32
  }
  func.func @transform_1(%arg0: i32) -> (i32, i32) {
    %c0_i32 = arith.constant 0 : i32
    %c0_i32_0 = arith.constant 0 : i32
    %c0_i32_1 = arith.constant 0 : i32
    return %c0_i32, %c0_i32_0 : i32, i32
  }
  func.func @transform_2(%arg0: i32) -> (i32, i32) {
    %c0_i32 = arith.constant 0 : i32
    %c0_i32_0 = arith.constant 0 : i32
    %c0_i32_1 = arith.constant 0 : i32
    return %c0_i32, %c0_i32_0 : i32, i32
  }
  func.func @transform_3(%arg0: i32) -> (i32, i32) {
    %c0_i32 = arith.constant 0 : i32
    %c0_i32_0 = arith.constant 0 : i32
    %c0_i32_1 = arith.constant 0 : i32
    return %c0_i32, %c0_i32_0 : i32, i32
  }
  func.func @transform_4(%arg0: i32) -> (i32, i32) {
    %c0_i32 = arith.constant 0 : i32
    %c0_i32_0 = arith.constant 0 : i32
    %c0_i32_1 = arith.constant 0 : i32
    return %c0_i32, %c0_i32_0 : i32, i32
  }
  func.func @transform_5(%arg0: i32) -> (i32, i32) {
    %c0_i32 = arith.constant 0 : i32
    %c0_i32_0 = arith.constant 0 : i32
    %c0_i32_1 = arith.constant 0 : i32
    return %c0_i32, %c0_i32_0 : i32, i32
  }
  func.func @transform_6(%arg0: i32) -> (i32, i32) {
    %c0_i32 = arith.constant 0 : i32
    %c0_i32_0 = arith.constant 0 : i32
    %c0_i32_1 = arith.constant 0 : i32
    return %c0_i32, %c0_i32_0 : i32, i32
  }
  func.func @transform_7(%arg0: i32) -> (i32, i32) {
    %c0_i32 = arith.constant 0 : i32
    %c0_i32_0 = arith.constant 0 : i32
    %c0_i32_1 = arith.constant 0 : i32
    return %c0_i32, %c0_i32_0 : i32, i32
  }
  func.func @transform_8(%arg0: i32) -> (i32, i32) {
    %c0_i32 = arith.constant 0 : i32
    %c0_i32_0 = arith.constant 0 : i32
    %c0_i32_1 = arith.constant 0 : i32
    return %c0_i32, %c0_i32_0 : i32, i32
  }
  func.func @transform_9(%arg0: i32) -> (i32, i32) {
    %c0_i32 = arith.constant 0 : i32
    %c0_i32_0 = arith.constant 0 : i32
    %c0_i32_1 = arith.constant 0 : i32
    return %c0_i32, %c0_i32_0 : i32, i32
  }
  func.func @transform_10(%arg0: i32) -> (i32, i32) {
    %c0_i32 = arith.constant 0 : i32
    %c0_i32_0 = arith.constant 0 : i32
    %c0_i32_1 = arith.constant 0 : i32
    return %c0_i32, %c0_i32_0 : i32, i32
  }
  func.func @transform_11(%arg0: i32) -> (i32, i32) {
    %c0_i32 = arith.constant 0 : i32
    %c0_i32_0 = arith.constant 0 : i32
    return %arg0, %c0_i32 : i32, i32
  }
}

module attributes {stable_mosaic.version = 11 : i64} {
  func.func @mlp_kernel(%arg0: i32, %arg1: memref<8x100xf32, #tpu.memory_space<vmem>>, %arg2: memref<128x2048xbf16, #tpu.memory_space<vmem>>, %arg3: memref<1x2048xf32, #tpu.memory_space<vmem>>, %arg4: memref<2048x512xbf16, #tpu.memory_space<vmem>>, %arg5: memref<1x512xf32, #tpu.memory_space<vmem>>, %arg6: memref<512x128xbf16, #tpu.memory_space<vmem>>, %arg7: memref<1x128xf32, #tpu.memory_space<vmem>>, %arg8: memref<128x32xbf16, #tpu.memory_space<vmem>>, %arg9: memref<1x32xf32, #tpu.memory_space<vmem>>, %arg10: memref<32x2xbf16, #tpu.memory_space<vmem>>, %arg11: memref<1x2xf32, #tpu.memory_space<vmem>>, %arg12: memref<8x2xf32, #tpu.memory_space<vmem>>, %arg13: memref<8x128xbf16, #tpu.memory_space<vmem>>) attributes {dimension_semantics = [#tpu.dimension_semantics<parallel>], iteration_bounds = array<i64: 1>, scalar_prefetch = 0 : i64, scratch_operands = 1 : i64, tpu.core_type = #tpu.core_type<tc>, window_params = [{transform_indices = @transform_0, window_bounds = array<i64: 8, 100>}, {pipeline_mode = #tpu.pipeline_mode<synchronous>, transform_indices = @transform_1, window_bounds = array<i64: 128, 2048>}, {pipeline_mode = #tpu.pipeline_mode<synchronous>, transform_indices = @transform_2, window_bounds = array<i64: 1, 2048>}, {pipeline_mode = #tpu.pipeline_mode<synchronous>, transform_indices = @transform_3, window_bounds = array<i64: 2048, 512>}, {pipeline_mode = #tpu.pipeline_mode<synchronous>, transform_indices = @transform_4, window_bounds = array<i64: 1, 512>}, {pipeline_mode = #tpu.pipeline_mode<synchronous>, transform_indices = @transform_5, window_bounds = array<i64: 512, 128>}, {pipeline_mode = #tpu.pipeline_mode<synchronous>, transform_indices = @transform_6, window_bounds = array<i64: 1, 128>}, {pipeline_mode = #tpu.pipeline_mode<synchronous>, transform_indices = @transform_7, window_bounds = array<i64: 128, 32>}, {pipeline_mode = #tpu.pipeline_mode<synchronous>, transform_indices = @transform_8, window_bounds = array<i64: 1, 32>}, {pipeline_mode = #tpu.pipeline_mode<synchronous>, transform_indices = @transform_9, window_bounds = array<i64: 32, 2>}, {pipeline_mode = #tpu.pipeline_mode<synchronous>, transform_indices = @transform_10, window_bounds = array<i64: 1, 2>}, {transform_indices = @transform_11, window_bounds = array<i64: 8, 2>}]} {
    %cst = arith.constant 0.000000e+00 : bf16
    %0 = vector.broadcast %cst : bf16 to vector<8x128xbf16>
    %c0 = arith.constant 0 : index
    %c0_0 = arith.constant 0 : index
    %1 = vector.load %arg13[%c0, %c0_0] : memref<8x128xbf16, #tpu.memory_space<vmem>>, vector<8x128xbf16>
    tpu.vector_store %arg13[%c0, %c0_0], %0 {strides = array<i32>} : memref<8x128xbf16, #tpu.memory_space<vmem>>, vector<8x128xbf16>,
    %c0_1 = arith.constant 0 : index
    %c0_2 = arith.constant 0 : index
    %2 = vector.load %arg1[%c0_1, %c0_2] : memref<8x100xf32, #tpu.memory_space<vmem>>, vector<8x100xf32>
    %3 = arith.truncf %2 : vector<8x100xf32> to vector<8x100xbf16>
    %c0_3 = arith.constant 0 : index
    %c0_4 = arith.constant 0 : index
    %4 = vector.load %arg13[%c0_3, %c0_4] : memref<8x128xbf16, #tpu.memory_space<vmem>>, vector<8x100xbf16>
    tpu.vector_store %arg13[%c0_3, %c0_4], %3 {strides = array<i32>} : memref<8x128xbf16, #tpu.memory_space<vmem>>, vector<8x100xbf16>,
    %c0_5 = arith.constant 0 : index
    %c0_6 = arith.constant 0 : index
    %5 = vector.load %arg13[%c0_5, %c0_6] : memref<8x128xbf16, #tpu.memory_space<vmem>>, vector<8x128xbf16>
    %c0_7 = arith.constant 0 : index
    %c0_8 = arith.constant 0 : index
    %6 = vector.load %arg2[%c0_7, %c0_8] : memref<128x2048xbf16, #tpu.memory_space<vmem>>, vector<128x2048xbf16>
    %cst_9 = arith.constant dense<0.000000e+00> : vector<8x2048xf32>
    %7 = tpu.matmul %5, %6, %cst_9 {dimension_numbers = #tpu.dot_dimension_numbers<[1], [0], [0], [1], [0, 0, 1, 1], [], []>} : vector<8x128xbf16>, vector<128x2048xbf16>, vector<8x2048xf32> -> vector<8x2048xf32>
    %c0_10 = arith.constant 0 : index
    %c0_11 = arith.constant 0 : index
    %8 = vector.load %arg3[%c0_10, %c0_11] : memref<1x2048xf32, #tpu.memory_space<vmem>>, vector<1x2048xf32>
    %9 = vector.broadcast %8 : vector<1x2048xf32> to vector<8x2048xf32>
    %10 = arith.addf %7, %9 : vector<8x2048xf32>
    %cst_12 = arith.constant 0.000000e+00 : f32
    %11 = vector.broadcast %cst_12 : f32 to vector<8x2048xf32>
    %12 = arith.maximumf %10, %11 : vector<8x2048xf32>
    %13 = arith.truncf %12 : vector<8x2048xf32> to vector<8x2048xbf16>
    %c0_13 = arith.constant 0 : index
    %c0_14 = arith.constant 0 : index
    %14 = vector.load %arg4[%c0_13, %c0_14] : memref<2048x512xbf16, #tpu.memory_space<vmem>>, vector<2048x512xbf16>
    %cst_15 = arith.constant dense<0.000000e+00> : vector<8x512xf32>
    %15 = tpu.matmul %13, %14, %cst_15 {dimension_numbers = #tpu.dot_dimension_numbers<[1], [0], [0], [1], [0, 0, 1, 1], [], []>} : vector<8x2048xbf16>, vector<2048x512xbf16>, vector<8x512xf32> -> vector<8x512xf32>
    %c0_16 = arith.constant 0 : index
    %c0_17 = arith.constant 0 : index
    %16 = vector.load %arg5[%c0_16, %c0_17] : memref<1x512xf32, #tpu.memory_space<vmem>>, vector<1x512xf32>
    %17 = vector.broadcast %16 : vector<1x512xf32> to vector<8x512xf32>
    %18 = arith.addf %15, %17 : vector<8x512xf32>
    %cst_18 = arith.constant 0.000000e+00 : f32
    %19 = vector.broadcast %cst_18 : f32 to vector<8x512xf32>
    %20 = arith.maximumf %18, %19 : vector<8x512xf32>
    %21 = arith.truncf %20 : vector<8x512xf32> to vector<8x512xbf16>
    %c0_19 = arith.constant 0 : index
    %c0_20 = arith.constant 0 : index
    %22 = vector.load %arg6[%c0_19, %c0_20] : memref<512x128xbf16, #tpu.memory_space<vmem>>, vector<512x128xbf16>
    %cst_21 = arith.constant dense<0.000000e+00> : vector<8x128xf32>
    %23 = tpu.matmul %21, %22, %cst_21 {dimension_numbers = #tpu.dot_dimension_numbers<[1], [0], [0], [1], [0, 0, 1, 1], [], []>} : vector<8x512xbf16>, vector<512x128xbf16>, vector<8x128xf32> -> vector<8x128xf32>
    %c0_22 = arith.constant 0 : index
    %c0_23 = arith.constant 0 : index
    %24 = vector.load %arg7[%c0_22, %c0_23] : memref<1x128xf32, #tpu.memory_space<vmem>>, vector<1x128xf32>
    %25 = vector.broadcast %24 : vector<1x128xf32> to vector<8x128xf32>
    %26 = arith.addf %23, %25 : vector<8x128xf32>
    %cst_24 = arith.constant 0.000000e+00 : f32
    %27 = vector.broadcast %cst_24 : f32 to vector<8x128xf32>
    %28 = arith.maximumf %26, %27 : vector<8x128xf32>
    %29 = arith.truncf %28 : vector<8x128xf32> to vector<8x128xbf16>
    %c0_25 = arith.constant 0 : index
    %c0_26 = arith.constant 0 : index
    %30 = vector.load %arg8[%c0_25, %c0_26] : memref<128x32xbf16, #tpu.memory_space<vmem>>, vector<128x32xbf16>
    %cst_27 = arith.constant dense<0.000000e+00> : vector<8x32xf32>
    %31 = tpu.matmul %29, %30, %cst_27 {dimension_numbers = #tpu.dot_dimension_numbers<[1], [0], [0], [1], [0, 0, 1, 1], [], []>} : vector<8x128xbf16>, vector<128x32xbf16>, vector<8x32xf32> -> vector<8x32xf32>
    %c0_28 = arith.constant 0 : index
    %c0_29 = arith.constant 0 : index
    %32 = vector.load %arg9[%c0_28, %c0_29] : memref<1x32xf32, #tpu.memory_space<vmem>>, vector<1x32xf32>
    %33 = vector.broadcast %32 : vector<1x32xf32> to vector<8x32xf32>
    %34 = arith.addf %31, %33 : vector<8x32xf32>
    %cst_30 = arith.constant 0.000000e+00 : f32
    %35 = vector.broadcast %cst_30 : f32 to vector<8x32xf32>
    %36 = arith.maximumf %34, %35 : vector<8x32xf32>
    %37 = arith.truncf %36 : vector<8x32xf32> to vector<8x32xbf16>
    %c0_31 = arith.constant 0 : index
    %c0_32 = arith.constant 0 : index
    %38 = vector.load %arg10[%c0_31, %c0_32] : memref<32x2xbf16, #tpu.memory_space<vmem>>, vector<32x2xbf16>
    %cst_33 = arith.constant dense<0.000000e+00> : vector<8x2xf32>
    %39 = tpu.matmul %37, %38, %cst_33 {dimension_numbers = #tpu.dot_dimension_numbers<[1], [0], [0], [1], [0, 0, 1, 1], [], []>} : vector<8x32xbf16>, vector<32x2xbf16>, vector<8x2xf32> -> vector<8x2xf32>
    %c0_34 = arith.constant 0 : index
    %c0_35 = arith.constant 0 : index
    %40 = vector.load %arg11[%c0_34, %c0_35] : memref<1x2xf32, #tpu.memory_space<vmem>>, vector<1x2xf32>
    %41 = vector.broadcast %40 : vector<1x2xf32> to vector<8x2xf32>
    %42 = arith.addf %39, %41 : vector<8x2xf32>
    %cst_36 = arith.constant dense<0xFF800000> : vector<8xf32>
    %43 = vector.multi_reduction <maximumf>, %42, %cst_36 [1] : vector<8x2xf32> to vector<8xf32>
    %44 = vector.shape_cast %43 : vector<8xf32> to vector<8x1xf32>
    %45 = vector.broadcast %44 : vector<8x1xf32> to vector<8x2xf32>
    %46 = arith.subf %42, %45 : vector<8x2xf32>
    %47 = math.exp %46 : vector<8x2xf32>
    %cst_37 = arith.constant dense<0.000000e+00> : vector<8xf32>
    %48 = vector.multi_reduction <add>, %47, %cst_37 [1] : vector<8x2xf32> to vector<8xf32>
    %49 = vector.shape_cast %48 : vector<8xf32> to vector<8x1xf32>
    %50 = vector.broadcast %49 : vector<8x1xf32> to vector<8x2xf32>
    %51 = arith.divf %47, %50 : vector<8x2xf32>
    %c0_38 = arith.constant 0 : index
    %c0_39 = arith.constant 0 : index
    %52 = vector.load %arg12[%c0_38, %c0_39] : memref<8x2xf32, #tpu.memory_space<vmem>>, vector<8x2xf32>
    tpu.vector_store %arg12[%c0_38, %c0_39], %51 {strides = array<i32>} : memref<8x2xf32, #tpu.memory_space<vmem>>, vector<8x2xf32>,
    return
  }
  func.func @transform_0(%arg0: i32) -> (i32, i32) {
    %c0_i32 = arith.constant 0 : i32
    %c0_i32_0 = arith.constant 0 : i32
    return %arg0, %c0_i32 : i32, i32
  }
  func.func @transform_1(%arg0: i32) -> (i32, i32) {
    %c0_i32 = arith.constant 0 : i32
    %c0_i32_0 = arith.constant 0 : i32
    %c0_i32_1 = arith.constant 0 : i32
    return %c0_i32, %c0_i32_0 : i32, i32
  }
  func.func @transform_2(%arg0: i32) -> (i32, i32) {
    %c0_i32 = arith.constant 0 : i32
    %c0_i32_0 = arith.constant 0 : i32
    %c0_i32_1 = arith.constant 0 : i32
    return %c0_i32, %c0_i32_0 : i32, i32
  }
  func.func @transform_3(%arg0: i32) -> (i32, i32) {
    %c0_i32 = arith.constant 0 : i32
    %c0_i32_0 = arith.constant 0 : i32
    %c0_i32_1 = arith.constant 0 : i32
    return %c0_i32, %c0_i32_0 : i32, i32
  }
  func.func @transform_4(%arg0: i32) -> (i32, i32) {
    %c0_i32 = arith.constant 0 : i32
    %c0_i32_0 = arith.constant 0 : i32
    %c0_i32_1 = arith.constant 0 : i32
    return %c0_i32, %c0_i32_0 : i32, i32
  }
  func.func @transform_5(%arg0: i32) -> (i32, i32) {
    %c0_i32 = arith.constant 0 : i32
    %c0_i32_0 = arith.constant 0 : i32
    %c0_i32_1 = arith.constant 0 : i32
    return %c0_i32, %c0_i32_0 : i32, i32
  }
  func.func @transform_6(%arg0: i32) -> (i32, i32) {
    %c0_i32 = arith.constant 0 : i32
    %c0_i32_0 = arith.constant 0 : i32
    %c0_i32_1 = arith.constant 0 : i32
    return %c0_i32, %c0_i32_0 : i32, i32
  }
  func.func @transform_7(%arg0: i32) -> (i32, i32) {
    %c0_i32 = arith.constant 0 : i32
    %c0_i32_0 = arith.constant 0 : i32
    %c0_i32_1 = arith.constant 0 : i32
    return %c0_i32, %c0_i32_0 : i32, i32
  }
  func.func @transform_8(%arg0: i32) -> (i32, i32) {
    %c0_i32 = arith.constant 0 : i32
    %c0_i32_0 = arith.constant 0 : i32
    %c0_i32_1 = arith.constant 0 : i32
    return %c0_i32, %c0_i32_0 : i32, i32
  }
  func.func @transform_9(%arg0: i32) -> (i32, i32) {
    %c0_i32 = arith.constant 0 : i32
    %c0_i32_0 = arith.constant 0 : i32
    %c0_i32_1 = arith.constant 0 : i32
    return %c0_i32, %c0_i32_0 : i32, i32
  }
  func.func @transform_10(%arg0: i32) -> (i32, i32) {
    %c0_i32 = arith.constant 0 : i32
    %c0_i32_0 = arith.constant 0 : i32
    %c0_i32_1 = arith.constant 0 : i32
    return %c0_i32, %c0_i32_0 : i32, i32
  }
  func.func @transform_11(%arg0: i32) -> (i32, i32) {
    %c0_i32 = arith.constant 0 : i32
    %c0_i32_0 = arith.constant 0 : i32
    return %arg0, %c0_i32 : i32, i32
  }
}

</mosaic_0001>

<llo_original>
// kernel: _mlp_pallas.1
$region0: #{_mlp_pallas.1}
  #allocation0 [shape = 'u32[]', space=smem, size = 0x4, offset = 0x4, fixed_abs, tag = 'smem constant byte address 0x4 - core index']
  #allocation1 [shape = 'u32[72,128]{1,0:T(1,128)}', space=vmem, size = 0x9000, scoped, tag = 'internal scratch']
  #allocation2 [shape = 'bf16[8,128]{1,0:T(8,128)(2,1)}', space=vmem, size = 0x800, scoped, tag = 'scratch operand']
  %s0 = inlined_call_operand.hbm [shape: f32[8,100], index: 0, kind: input, shape index: {}]
  %s1 = inlined_call_operand.hbm [shape: bf16[128,2048], index: 1, kind: input, shape index: {}]
  %s2 = inlined_call_operand.hbm [shape: f32[1,2048], index: 2, kind: input, shape index: {}]
  %s3 = inlined_call_operand.hbm [shape: bf16[2048,512], index: 3, kind: input, shape index: {}]
  %s4 = inlined_call_operand.hbm [shape: f32[1,512], index: 4, kind: input, shape index: {}]
  %s5 = inlined_call_operand.hbm [shape: bf16[512,128], index: 5, kind: input, shape index: {}]
  %s6 = inlined_call_operand.hbm [shape: f32[1,128], index: 6, kind: input, shape index: {}]
  %s7 = inlined_call_operand.vmem [shape: bf16[128,32], index: 7, kind: input, shape index: {}]
  %s8 = inlined_call_operand.hbm [shape: f32[1,32], index: 8, kind: input, shape index: {}]
  %s9 = inlined_call_operand.vmem [shape: bf16[32,2], index: 9, kind: input, shape index: {}]
  %s10 = inlined_call_operand.hbm [shape: f32[1,2], index: 10, kind: input, shape index: {}]
  %s11 = inlined_call_operand.vmem [shape: f32[8,2], index: 11, kind: output, shape index: {}]
  %s12 = sld [smem:[#allocation0]]
  $region90: #{_mlp_pallas.1} parent=0
    _
  %s14 = ssub.s32 1, %s12
  %s15 = scalar_select 0, %s14, %s12
  $region1: #{_mlp_pallas.1} parent=0
    #allocation3 [shape = 'u8[4096]{0}', space=vmem, size = 0x1000, scoped, tag = 'input window, operand 0, single buffered']
    #allocation4 [shape = 's32[1]{0}', space=sflag, size = 0x4, scoped, tag = 'scoped memory for _mlp_pallas.1']
    #allocation5 [shape = 'u8[524288]{0}', space=vmem, size = 0x80000, scoped, tag = 'input window, operand 1, single buffered']
    #allocation6 [shape = 's32[1]{0}', space=sflag, size = 0x4, scoped, tag = 'scoped memory for _mlp_pallas.1']
    #allocation7 [shape = 'u8[8192]{0}', space=vmem, size = 0x2000, scoped, tag = 'input window, operand 2, single buffered']
    #allocation8 [shape = 'u8[2097152]{0}', space=vmem, size = 0x200000, scoped, tag = 'input window, operand 3, single buffered']
    #allocation9 [shape = 's32[1]{0}', space=sflag, size = 0x4, scoped, tag = 'scoped memory for _mlp_pallas.1']
    #allocation10 [shape = 'u8[2048]{0}', space=vmem, size = 0x800, scoped, tag = 'input window, operand 4, single buffered']
    #allocation11 [shape = 'u8[131072]{0}', space=vmem, size = 0x20000, scoped, tag = 'input window, operand 5, single buffered']
    #allocation12 [shape = 's32[1]{0}', space=sflag, size = 0x4, scoped, tag = 'scoped memory for _mlp_pallas.1']
    #allocation13 [shape = 'u8[512]{0}', space=vmem, size = 0x400, scoped, tag = 'input window, operand 6, single buffered']
    #allocation14 [shape = 'u8[512]{0}', space=vmem, size = 0x400, scoped, tag = 'input window, operand 8, single buffered']
    #allocation15 [shape = 's32[1]{0}', space=sflag, size = 0x4, scoped, tag = 'scoped memory for _mlp_pallas.1']
    #allocation16 [shape = 'u8[512]{0}', space=vmem, size = 0x400, scoped, tag = 'input window, operand 10, single buffered']
    %16 = vsyncpa [#allocation4], 0
    %17 = vsyncpa [#allocation6], 0
    %18 = vsyncpa [#allocation9], 0
    %19 = vsyncpa [#allocation12], 0
    %20 = vsyncpa [#allocation15], 0
    // Predicated region
    $region2: #{_mlp_pallas.1} parent=1 // pred_check
      _
    $region3: #{_mlp_pallas.1} parent=1 // pred_check_branch
      %22 = sbr.rel (0) target = $region5
    $region4: #{_mlp_pallas.1} parent=1 // pred_region
      %24 = vsyncadd [#allocation4], 0
      %s26 = sshll.u32 %s0, 4
      %s27 = int_to_ptr.hbm [resolvable:$true] %s26
      %s28 = sshll.u32 [#allocation3], 4
      %s29 = int_to_ptr.vmem [resolvable:$true] %s28
      %31 = dma.hbm_to_vmem [thread:$0]  %s27, 128, %s29, [#allocation4]
    $region5: #{_mlp_pallas.1} parent=1 // pred_fallthru
      _
    // Predicated region
    $region6: #{_mlp_pallas.1} parent=1 // pred_check
      _
    $region7: #{_mlp_pallas.1} parent=1 // pred_check_branch
      %33 = sbr.rel (0) target = $region9
    $region8: #{_mlp_pallas.1} parent=1 // pred_region
      %35 = vsyncadd [#allocation6], 0
      %s36 = sshll.u32 %s1, 4
      %s37 = int_to_ptr.hbm [resolvable:$true] %s36
      %s38 = sshll.u32 [#allocation5], 4
      %s39 = int_to_ptr.vmem [resolvable:$true] %s38
      %44 = dma.hbm_to_vmem [thread:$0]  %s37, 16384, %s39, [#allocation6], 1024, 1024, 64
    $region9: #{_mlp_pallas.1} parent=1 // pred_fallthru
      _
    // Predicated region
    $region10: #{_mlp_pallas.1} parent=1 // pred_check
      _
    $region11: #{_mlp_pallas.1} parent=1 // pred_check_branch
      %46 = sbr.rel (0) target = $region13
    $region12: #{_mlp_pallas.1} parent=1 // pred_region
      %48 = vsyncadd [#allocation6], 0
      %s50 = sshll.u32 %s2, 4
      %s51 = int_to_ptr.hbm [resolvable:$true] %s50
      %s52 = sshll.u32 [#allocation7], 4
      %s53 = int_to_ptr.vmem [resolvable:$true] %s52
      %55 = dma.hbm_to_vmem [thread:$0]  %s51, 256, %s53, [#allocation6]
    $region13: #{_mlp_pallas.1} parent=1 // pred_fallthru
      _
    // Predicated region
    $region14: #{_mlp_pallas.1} parent=1 // pred_check
      _
    $region15: #{_mlp_pallas.1} parent=1 // pred_check_branch
      %57 = sbr.rel (0) target = $region17
    $region16: #{_mlp_pallas.1} parent=1 // pred_region
      %59 = vsyncadd [#allocation9], 0
      %s60 = sshll.u32 %s3, 4
      %s61 = int_to_ptr.hbm [resolvable:$true] %s60
      %s62 = sshll.u32 [#allocation8], 4
      %s63 = int_to_ptr.vmem [resolvable:$true] %s62
      %68 = dma.hbm_to_vmem [thread:$0]  %s61, 65536, %s63, [#allocation9], 256, 256, 16
    $region17: #{_mlp_pallas.1} parent=1 // pred_fallthru
      _
    // Predicated region
    $region18: #{_mlp_pallas.1} parent=1 // pred_check
      _
    $region19: #{_mlp_pallas.1} parent=1 // pred_check_branch
      %70 = sbr.rel (0) target = $region21
    $region20: #{_mlp_pallas.1} parent=1 // pred_region
      %72 = vsyncadd [#allocation9], 0
      %s74 = sshll.u32 %s4, 4
      %s75 = int_to_ptr.hbm [resolvable:$true] %s74
      %s76 = sshll.u32 [#allocation10], 4
      %s77 = int_to_ptr.vmem [resolvable:$true] %s76
      %79 = dma.hbm_to_vmem [thread:$0]  %s75, 64, %s77, [#allocation9]
    $region21: #{_mlp_pallas.1} parent=1 // pred_fallthru
      _
    // Predicated region
    $region22: #{_mlp_pallas.1} parent=1 // pred_check
      _
    $region23: #{_mlp_pallas.1} parent=1 // pred_check_branch
      %81 = sbr.rel (0) target = $region25
    $region24: #{_mlp_pallas.1} parent=1 // pred_region
      %83 = vsyncadd [#allocation12], 0
      %s84 = sshll.u32 %s5, 4
      %s85 = int_to_ptr.hbm [resolvable:$true] %s84
      %s86 = sshll.u32 [#allocation11], 4
      %s87 = int_to_ptr.vmem [resolvable:$true] %s86
      %92 = dma.hbm_to_vmem [thread:$0]  %s85, 4096, %s87, [#allocation12], 64, 64, 4
    $region25: #{_mlp_pallas.1} parent=1 // pred_fallthru
      _
    // Predicated region
    $region26: #{_mlp_pallas.1} parent=1 // pred_check
      _
    $region27: #{_mlp_pallas.1} parent=1 // pred_check_branch
      %94 = sbr.rel (0) target = $region29
    $region28: #{_mlp_pallas.1} parent=1 // pred_region
      %96 = vsyncadd [#allocation12], 0
      %s98 = sshll.u32 %s6, 4
      %s99 = int_to_ptr.hbm [resolvable:$true] %s98
      %s100 = sshll.u32 [#allocation13], 4
      %s101 = int_to_ptr.vmem [resolvable:$true] %s100
      %103 = dma.hbm_to_vmem [thread:$0]  %s99, 16, %s101, [#allocation12]
    $region29: #{_mlp_pallas.1} parent=1 // pred_fallthru
      _
    // Predicated region
    $region30: #{_mlp_pallas.1} parent=1 // pred_check
      _
    $region31: #{_mlp_pallas.1} parent=1 // pred_check_branch
      %105 = sbr.rel (0) target = $region33
    $region32: #{_mlp_pallas.1} parent=1 // pred_region
      _
    $region33: #{_mlp_pallas.1} parent=1 // pred_fallthru
      _
    // Predicated region
    $region34: #{_mlp_pallas.1} parent=1 // pred_check
      _
    $region35: #{_mlp_pallas.1} parent=1 // pred_check_branch
      %107 = sbr.rel (0) target = $region37
    $region36: #{_mlp_pallas.1} parent=1 // pred_region
      %109 = vsyncadd [#allocation15], 0
      %s111 = sshll.u32 %s8, 4
      %s112 = int_to_ptr.hbm [resolvable:$true] %s111
      %s113 = sshll.u32 [#allocation14], 4
      %s114 = int_to_ptr.vmem [resolvable:$true] %s113
      %116 = dma.hbm_to_vmem [thread:$0]  %s112, 16, %s114, [#allocation15]
    $region37: #{_mlp_pallas.1} parent=1 // pred_fallthru
      _
    // Predicated region
    $region38: #{_mlp_pallas.1} parent=1 // pred_check
      _
    $region39: #{_mlp_pallas.1} parent=1 // pred_check_branch
      %118 = sbr.rel (0) target = $region41
    $region40: #{_mlp_pallas.1} parent=1 // pred_region
      _
    $region41: #{_mlp_pallas.1} parent=1 // pred_fallthru
      _
    // Predicated region
    $region42: #{_mlp_pallas.1} parent=1 // pred_check
      _
    $region43: #{_mlp_pallas.1} parent=1 // pred_check_branch
      %120 = sbr.rel (0) target = $region45
    $region44: #{_mlp_pallas.1} parent=1 // pred_region
      %122 = vsyncadd [#allocation15], 0
      %s124 = sshll.u32 %s10, 4
      %s125 = int_to_ptr.hbm [resolvable:$true] %s124
      %s126 = sshll.u32 [#allocation16], 4
      %s127 = int_to_ptr.vmem [resolvable:$true] %s126
      %129 = dma.hbm_to_vmem [thread:$0]  %s125, 16, %s127, [#allocation15]
    $region45: #{_mlp_pallas.1} parent=1 // pred_fallthru
      _
    // Predicated region
    $region46: #{_mlp_pallas.1} parent=1 // pred_check
      _
    $region47: #{_mlp_pallas.1} parent=1 // pred_check_branch
      %131 = sbr.rel (0) target = $region49
    $region48: #{_mlp_pallas.1} parent=1 // pred_region
      %133 = dma.done [#allocation4], 128
    $region49: #{_mlp_pallas.1} parent=1 // pred_fallthru
      _
    // Predicated region
    $region50: #{_mlp_pallas.1} parent=1 // pred_check
      _
    $region51: #{_mlp_pallas.1} parent=1 // pred_check_branch
      %135 = sbr.rel (0) target = $region53
    $region52: #{_mlp_pallas.1} parent=1 // pred_region
      %137 = dma.done [#allocation6], 16384
    $region53: #{_mlp_pallas.1} parent=1 // pred_fallthru
      _
    // Predicated region
    $region54: #{_mlp_pallas.1} parent=1 // pred_check
      _
    $region55: #{_mlp_pallas.1} parent=1 // pred_check_branch
      %139 = sbr.rel (0) target = $region57
    $region56: #{_mlp_pallas.1} parent=1 // pred_region
      %141 = dma.done [#allocation6], 256
    $region57: #{_mlp_pallas.1} parent=1 // pred_fallthru
      _
    // Predicated region
    $region58: #{_mlp_pallas.1} parent=1 // pred_check
      _
    $region59: #{_mlp_pallas.1} parent=1 // pred_check_branch
      %143 = sbr.rel (0) target = $region61
    $region60: #{_mlp_pallas.1} parent=1 // pred_region
      %145 = dma.done [#allocation9], 65536
    $region61: #{_mlp_pallas.1} parent=1 // pred_fallthru
      _
    // Predicated region
    $region62: #{_mlp_pallas.1} parent=1 // pred_check
      _
    $region63: #{_mlp_pallas.1} parent=1 // pred_check_branch
      %147 = sbr.rel (0) target = $region65
    $region64: #{_mlp_pallas.1} parent=1 // pred_region
      %149 = dma.done [#allocation9], 64
    $region65: #{_mlp_pallas.1} parent=1 // pred_fallthru
      _
    // Predicated region
    $region66: #{_mlp_pallas.1} parent=1 // pred_check
      _
    $region67: #{_mlp_pallas.1} parent=1 // pred_check_branch
      %151 = sbr.rel (0) target = $region69
    $region68: #{_mlp_pallas.1} parent=1 // pred_region
      %153 = dma.done [#allocation12], 4096
    $region69: #{_mlp_pallas.1} parent=1 // pred_fallthru
      _
    // Predicated region
    $region70: #{_mlp_pallas.1} parent=1 // pred_check
      _
    $region71: #{_mlp_pallas.1} parent=1 // pred_check_branch
      %155 = sbr.rel (0) target = $region73
    $region72: #{_mlp_pallas.1} parent=1 // pred_region
      %157 = dma.done [#allocation12], 16
    $region73: #{_mlp_pallas.1} parent=1 // pred_fallthru
      _
    // Predicated region
    $region74: #{_mlp_pallas.1} parent=1 // pred_check
      _
    $region75: #{_mlp_pallas.1} parent=1 // pred_check_branch
      %159 = sbr.rel (0) target = $region77
    $region76: #{_mlp_pallas.1} parent=1 // pred_region
      %161 = dma.done [#allocation15], 16
    $region77: #{_mlp_pallas.1} parent=1 // pred_fallthru
      _
    // Predicated region
    $region78: #{_mlp_pallas.1} parent=1 // pred_check
      _
    $region79: #{_mlp_pallas.1} parent=1 // pred_check_branch
      %163 = sbr.rel (0) target = $region81
    $region80: #{_mlp_pallas.1} parent=1 // pred_region
      %165 = dma.done [#allocation15], 16
    $region81: #{_mlp_pallas.1} parent=1 // pred_fallthru
      _
    %167 = vst [vmem:[#allocation2] sm:$0xf] 0
    %v168 = vld [vmem:[#allocation3] sm:$0xff]
    %v169 = vpack.c.bf16 %v168, %v168
    %vm170 = vcmask 814080
    %171 = vst.msk [vmem:[#allocation2] sm:$0xf] %vm170, %v169
    %v172 = vld [vmem:[#allocation2] sm:$0xf]
    %v173 = vld [vmem:[#allocation5] sm:$0xff]
    %v174 = vld [vmem:[#allocation5 + $0x8] sm:$0xff]
    %v175 = vld [vmem:[#allocation5 + $0x10] sm:$0xff]
    %v176 = vld [vmem:[#allocation5 + $0x18] sm:$0xff]
    %v177 = vld [vmem:[#allocation5 + $0x20] sm:$0xff]
    %v178 = vld [vmem:[#allocation5 + $0x28] sm:$0xff]
    %v179 = vld [vmem:[#allocation5 + $0x30] sm:$0xff]
    %v180 = vld [vmem:[#allocation5 + $0x38] sm:$0xff]
    %v181 = vld [vmem:[#allocation5 + $0x40] sm:$0xff]
    %v182 = vld [vmem:[#allocation5 + $0x48] sm:$0xff]
    %v183 = vld [vmem:[#allocation5 + $0x50] sm:$0xff]
    %v184 = vld [vmem:[#allocation5 + $0x58] sm:$0xff]
    %v185 = vld [vmem:[#allocation5 + $0x60] sm:$0xff]
    %v186 = vld [vmem:[#allocation5 + $0x68] sm:$0xff]
    %v187 = vld [vmem:[#allocation5 + $0x70] sm:$0xff]
    %v188 = vld [vmem:[#allocation5 + $0x78] sm:$0xff]
    %v189 = vld [vmem:[#allocation5 + $0x80] sm:$0xff]
    %v190 = vld [vmem:[#allocation5 + $0x88] sm:$0xff]
    %v191 = vld [vmem:[#allocation5 + $0x90] sm:$0xff]
    %v192 = vld [vmem:[#allocation5 + $0x98] sm:$0xff]
    %v193 = vld [vmem:[#allocation5 + $0xa0] sm:$0xff]
    %v194 = vld [vmem:[#allocation5 + $0xa8] sm:$0xff]
    %v195 = vld [vmem:[#allocation5 + $0xb0] sm:$0xff]
    %v196 = vld [vmem:[#allocation5 + $0xb8] sm:$0xff]
    %v197 = vld [vmem:[#allocation5 + $0xc0] sm:$0xff]
    %v198 = vld [vmem:[#allocation5 + $0xc8] sm:$0xff]
    %v199 = vld [vmem:[#allocation5 + $0xd0] sm:$0xff]
    %v200 = vld [vmem:[#allocation5 + $0xd8] sm:$0xff]
    %v201 = vld [vmem:[#allocation5 + $0xe0] sm:$0xff]
    %v202 = vld [vmem:[#allocation5 + $0xe8] sm:$0xff]
    %v203 = vld [vmem:[#allocation5 + $0xf0] sm:$0xff]
    %v204 = vld [vmem:[#allocation5 + $0xf8] sm:$0xff]
    %v205 = vld [vmem:[#allocation5 + $0x100] sm:$0xff]
    %v206 = vld [vmem:[#allocation5 + $0x108] sm:$0xff]
    %v207 = vld [vmem:[#allocation5 + $0x110] sm:$0xff]
    %v208 = vld [vmem:[#allocation5 + $0x118] sm:$0xff]
    %v209 = vld [vmem:[#allocation5 + $0x120] sm:$0xff]
    %v210 = vld [vmem:[#allocation5 + $0x128] sm:$0xff]
    %v211 = vld [vmem:[#allocation5 + $0x130] sm:$0xff]
    %v212 = vld [vmem:[#allocation5 + $0x138] sm:$0xff]
    %v213 = vld [vmem:[#allocation5 + $0x140] sm:$0xff]
    %v214 = vld [vmem:[#allocation5 + $0x148] sm:$0xff]
    %v215 = vld [vmem:[#allocation5 + $0x150] sm:$0xff]
    %v216 = vld [vmem:[#allocation5 + $0x158] sm:$0xff]
    %v217 = vld [vmem:[#allocation5 + $0x160] sm:$0xff]
    %v218 = vld [vmem:[#allocation5 + $0x168] sm:$0xff]
    %v219 = vld [vmem:[#allocation5 + $0x170] sm:$0xff]
    %v220 = vld [vmem:[#allocation5 + $0x178] sm:$0xff]
    %v221 = vld [vmem:[#allocation5 + $0x180] sm:$0xff]
    %v222 = vld [vmem:[#allocation5 + $0x188] sm:$0xff]
    %v223 = vld [vmem:[#allocation5 + $0x190] sm:$0xff]
    %v224 = vld [vmem:[#allocation5 + $0x198] sm:$0xff]
    %v225 = vld [vmem:[#allocation5 + $0x1a0] sm:$0xff]
    %v226 = vld [vmem:[#allocation5 + $0x1a8] sm:$0xff]
    %v227 = vld [vmem:[#allocation5 + $0x1b0] sm:$0xff]
    %v228 = vld [vmem:[#allocation5 + $0x1b8] sm:$0xff]
    %v229 = vld [vmem:[#allocation5 + $0x1c0] sm:$0xff]
    %v230 = vld [vmem:[#allocation5 + $0x1c8] sm:$0xff]
    %v231 = vld [vmem:[#allocation5 + $0x1d0] sm:$0xff]
    %v232 = vld [vmem:[#allocation5 + $0x1d8] sm:$0xff]
    %v233 = vld [vmem:[#allocation5 + $0x1e0] sm:$0xff]
    %v234 = vld [vmem:[#allocation5 + $0x1e8] sm:$0xff]
    %v235 = vld [vmem:[#allocation5 + $0x1f0] sm:$0xff]
    %v236 = vld [vmem:[#allocation5 + $0x1f8] sm:$0xff]
    %v237 = vld [vmem:[#allocation5 + $0x200] sm:$0xff]
    %v238 = vld [vmem:[#allocation5 + $0x208] sm:$0xff]
    %v239 = vld [vmem:[#allocation5 + $0x210] sm:$0xff]
    %v240 = vld [vmem:[#allocation5 + $0x218] sm:$0xff]
    %v241 = vld [vmem:[#allocation5 + $0x220] sm:$0xff]
    %v242 = vld [vmem:[#allocation5 + $0x228] sm:$0xff]
    %v243 = vld [vmem:[#allocation5 + $0x230] sm:$0xff]
    %v244 = vld [vmem:[#allocation5 + $0x238] sm:$0xff]
    %v245 = vld [vmem:[#allocation5 + $0x240] sm:$0xff]
    %v246 = vld [vmem:[#allocation5 + $0x248] sm:$0xff]
    %v247 = vld [vmem:[#allocation5 + $0x250] sm:$0xff]
    %v248 = vld [vmem:[#allocation5 + $0x258] sm:$0xff]
    %v249 = vld [vmem:[#allocation5 + $0x260] sm:$0xff]
    %v250 = vld [vmem:[#allocation5 + $0x268] sm:$0xff]
    %v251 = vld [vmem:[#allocation5 + $0x270] sm:$0xff]
    %v252 = vld [vmem:[#allocation5 + $0x278] sm:$0xff]
    %v253 = vld [vmem:[#allocation5 + $0x280] sm:$0xff]
    %v254 = vld [vmem:[#allocation5 + $0x288] sm:$0xff]
    %v255 = vld [vmem:[#allocation5 + $0x290] sm:$0xff]
    %v256 = vld [vmem:[#allocation5 + $0x298] sm:$0xff]
    %v257 = vld [vmem:[#allocation5 + $0x2a0] sm:$0xff]
    %v258 = vld [vmem:[#allocation5 + $0x2a8] sm:$0xff]
    %v259 = vld [vmem:[#allocation5 + $0x2b0] sm:$0xff]
    %v260 = vld [vmem:[#allocation5 + $0x2b8] sm:$0xff]
    %v261 = vld [vmem:[#allocation5 + $0x2c0] sm:$0xff]
    %v262 = vld [vmem:[#allocation5 + $0x2c8] sm:$0xff]
    %v263 = vld [vmem:[#allocation5 + $0x2d0] sm:$0xff]
    %v264 = vld [vmem:[#allocation5 + $0x2d8] sm:$0xff]
    %v265 = vld [vmem:[#allocation5 + $0x2e0] sm:$0xff]
    %v266 = vld [vmem:[#allocation5 + $0x2e8] sm:$0xff]
    %v267 = vld [vmem:[#allocation5 + $0x2f0] sm:$0xff]
    %v268 = vld [vmem:[#allocation5 + $0x2f8] sm:$0xff]
    %v269 = vld [vmem:[#allocation5 + $0x300] sm:$0xff]
    %v270 = vld [vmem:[#allocation5 + $0x308] sm:$0xff]
    %v271 = vld [vmem:[#allocation5 + $0x310] sm:$0xff]
    %v272 = vld [vmem:[#allocation5 + $0x318] sm:$0xff]
    %v273 = vld [vmem:[#allocation5 + $0x320] sm:$0xff]
    %v274 = vld [vmem:[#allocation5 + $0x328] sm:$0xff]
    %v275 = vld [vmem:[#allocation5 + $0x330] sm:$0xff]
    %v276 = vld [vmem:[#allocation5 + $0x338] sm:$0xff]
    %v277 = vld [vmem:[#allocation5 + $0x340] sm:$0xff]
    %v278 = vld [vmem:[#allocation5 + $0x348] sm:$0xff]
    %v279 = vld [vmem:[#allocation5 + $0x350] sm:$0xff]
    %v280 = vld [vmem:[#allocation5 + $0x358] sm:$0xff]
    %v281 = vld [vmem:[#allocation5 + $0x360] sm:$0xff]
    %v282 = vld [vmem:[#allocation5 + $0x368] sm:$0xff]
    %v283 = vld [vmem:[#allocation5 + $0x370] sm:$0xff]
    %v284 = vld [vmem:[#allocation5 + $0x378] sm:$0xff]
    %v285 = vld [vmem:[#allocation5 + $0x380] sm:$0xff]
    %v286 = vld [vmem:[#allocation5 + $0x388] sm:$0xff]
    %v287 = vld [vmem:[#allocation5 + $0x390] sm:$0xff]
    %v288 = vld [vmem:[#allocation5 + $0x398] sm:$0xff]
    %v289 = vld [vmem:[#allocation5 + $0x3a0] sm:$0xff]
    %v290 = vld [vmem:[#allocation5 + $0x3a8] sm:$0xff]
    %v291 = vld [vmem:[#allocation5 + $0x3b0] sm:$0xff]
    %v292 = vld [vmem:[#allocation5 + $0x3b8] sm:$0xff]
    %v293 = vld [vmem:[#allocation5 + $0x3c0] sm:$0xff]
    %v294 = vld [vmem:[#allocation5 + $0x3c8] sm:$0xff]
    %v295 = vld [vmem:[#allocation5 + $0x3d0] sm:$0xff]
    %v296 = vld [vmem:[#allocation5 + $0x3d8] sm:$0xff]
    %v297 = vld [vmem:[#allocation5 + $0x3e0] sm:$0xff]
    %v298 = vld [vmem:[#allocation5 + $0x3e8] sm:$0xff]
    %v299 = vld [vmem:[#allocation5 + $0x3f0] sm:$0xff]
    %v300 = vld [vmem:[#allocation5 + $0x3f8] sm:$0xff]
    %v301 = vld [vmem:[#allocation7] sm:$0xff]
    %v302 = vld [vmem:[#allocation7 + $0x8] sm:$0xff]
    %v305 = vperm.slane %v301, 0
    %v306 = vperm.slane %v301, 1
    %v307 = vperm.slane %v301, 2
    %v308 = vperm.slane %v301, 3
    %v309 = vperm.slane %v301, 4
    %v310 = vperm.slane %v301, 5
    %v311 = vperm.slane %v301, 6
    %v312 = vperm.slane %v301, 7
    %v313 = vperm.slane %v302, 0
    %v314 = vperm.slane %v302, 1
    %v315 = vperm.slane %v302, 2
    %v316 = vperm.slane %v302, 3
    %v317 = vperm.slane %v302, 4
    %v318 = vperm.slane %v302, 5
    %v319 = vperm.slane %v302, 6
    %v320 = vperm.slane %v302, 7
    %v465 = vunpack.c.l.b16 %v173
    %v466 = vunpack.c.h.b16 %v173
    %v467 = vunpack.c.l.b16 %v174
    %v468 = vunpack.c.h.b16 %v174
    %v469 = vunpack.c.l.b16 %v175
    %v470 = vunpack.c.h.b16 %v175
    %v471 = vunpack.c.l.b16 %v176
    %v472 = vunpack.c.h.b16 %v176
    %v473 = vunpack.c.l.b16 %v177
    %v474 = vunpack.c.h.b16 %v177
    %v475 = vunpack.c.l.b16 %v178
    %v476 = vunpack.c.h.b16 %v178
    %v477 = vunpack.c.l.b16 %v179
    %v478 = vunpack.c.h.b16 %v179
    %v479 = vunpack.c.l.b16 %v180
    %v480 = vunpack.c.h.b16 %v180
    %v481 = vunpack.c.l.b16 %v181
    %v482 = vunpack.c.h.b16 %v181
    %v483 = vunpack.c.l.b16 %v182
    %v484 = vunpack.c.h.b16 %v182
    %v485 = vunpack.c.l.b16 %v183
    %v486 = vunpack.c.h.b16 %v183
    %v487 = vunpack.c.l.b16 %v184
    %v488 = vunpack.c.h.b16 %v184
    %v489 = vunpack.c.l.b16 %v185
    %v490 = vunpack.c.h.b16 %v185
    %v491 = vunpack.c.l.b16 %v186
    %v492 = vunpack.c.h.b16 %v186
    %v493 = vunpack.c.l.b16 %v187
    %v494 = vunpack.c.h.b16 %v187
    %v495 = vunpack.c.l.b16 %v188
    %v496 = vunpack.c.h.b16 %v188
    %v497 = vunpack.c.l.b16 %v189
    %v498 = vunpack.c.h.b16 %v189
    %v499 = vunpack.c.l.b16 %v190
    %v500 = vunpack.c.h.b16 %v190
    %v501 = vunpack.c.l.b16 %v191
    %v502 = vunpack.c.h.b16 %v191
    %v503 = vunpack.c.l.b16 %v192
    %v504 = vunpack.c.h.b16 %v192
    %v505 = vunpack.c.l.b16 %v193
    %v506 = vunpack.c.h.b16 %v193
    %v507 = vunpack.c.l.b16 %v194
    %v508 = vunpack.c.h.b16 %v194
    %v509 = vunpack.c.l.b16 %v195
    %v510 = vunpack.c.h.b16 %v195
    %v511 = vunpack.c.l.b16 %v196
    %v512 = vunpack.c.h.b16 %v196
    %v513 = vunpack.c.l.b16 %v197
    %v514 = vunpack.c.h.b16 %v197
    %v515 = vunpack.c.l.b16 %v198
    %v516 = vunpack.c.h.b16 %v198
    %v517 = vunpack.c.l.b16 %v199
    %v518 = vunpack.c.h.b16 %v199
    %v519 = vunpack.c.l.b16 %v200
    %v520 = vunpack.c.h.b16 %v200
    %v521 = vunpack.c.l.b16 %v201
    %v522 = vunpack.c.h.b16 %v201
    %v523 = vunpack.c.l.b16 %v202
    %v524 = vunpack.c.h.b16 %v202
    %v525 = vunpack.c.l.b16 %v203
    %v526 = vunpack.c.h.b16 %v203
    %v527 = vunpack.c.l.b16 %v204
    %v528 = vunpack.c.h.b16 %v204
    %v529 = vunpack.c.l.b16 %v205
    %v530 = vunpack.c.h.b16 %v205
    %v531 = vunpack.c.l.b16 %v206
    %v532 = vunpack.c.h.b16 %v206
    %v533 = vunpack.c.l.b16 %v207
    %v534 = vunpack.c.h.b16 %v207
    %v535 = vunpack.c.l.b16 %v208
    %v536 = vunpack.c.h.b16 %v208
    %v537 = vunpack.c.l.b16 %v209
    %v538 = vunpack.c.h.b16 %v209
    %v539 = vunpack.c.l.b16 %v210
    %v540 = vunpack.c.h.b16 %v210
    %v541 = vunpack.c.l.b16 %v211
    %v542 = vunpack.c.h.b16 %v211
    %v543 = vunpack.c.l.b16 %v212
    %v544 = vunpack.c.h.b16 %v212
    %v545 = vunpack.c.l.b16 %v213
    %v546 = vunpack.c.h.b16 %v213
    %v547 = vunpack.c.l.b16 %v214
    %v548 = vunpack.c.h.b16 %v214
    %v549 = vunpack.c.l.b16 %v215
    %v550 = vunpack.c.h.b16 %v215
    %v551 = vunpack.c.l.b16 %v216
    %v552 = vunpack.c.h.b16 %v216
    %v553 = vunpack.c.l.b16 %v217
    %v554 = vunpack.c.h.b16 %v217
    %v555 = vunpack.c.l.b16 %v218
    %v556 = vunpack.c.h.b16 %v218
    %v557 = vunpack.c.l.b16 %v219
    %v558 = vunpack.c.h.b16 %v219
    %v559 = vunpack.c.l.b16 %v220
    %v560 = vunpack.c.h.b16 %v220
    %v561 = vunpack.c.l.b16 %v221
    %v562 = vunpack.c.h.b16 %v221
    %v563 = vunpack.c.l.b16 %v222
    %v564 = vunpack.c.h.b16 %v222
    %v565 = vunpack.c.l.b16 %v223
    %v566 = vunpack.c.h.b16 %v223
    %v567 = vunpack.c.l.b16 %v224
    %v568 = vunpack.c.h.b16 %v224
    %v569 = vunpack.c.l.b16 %v225
    %v570 = vunpack.c.h.b16 %v225
    %v571 = vunpack.c.l.b16 %v226
    %v572 = vunpack.c.h.b16 %v226
    %v573 = vunpack.c.l.b16 %v227
    %v574 = vunpack.c.h.b16 %v227
    %v575 = vunpack.c.l.b16 %v228
    %v576 = vunpack.c.h.b16 %v228
    %v577 = vunpack.c.l.b16 %v229
    %v578 = vunpack.c.h.b16 %v229
    %v579 = vunpack.c.l.b16 %v230
    %v580 = vunpack.c.h.b16 %v230
    %v581 = vunpack.c.l.b16 %v231
    %v582 = vunpack.c.h.b16 %v231
    %v583 = vunpack.c.l.b16 %v232
    %v584 = vunpack.c.h.b16 %v232
    %v585 = vunpack.c.l.b16 %v233
    %v586 = vunpack.c.h.b16 %v233
    %v587 = vunpack.c.l.b16 %v234
    %v588 = vunpack.c.h.b16 %v234
    %v589 = vunpack.c.l.b16 %v235
    %v590 = vunpack.c.h.b16 %v235
    %v591 = vunpack.c.l.b16 %v236
    %v592 = vunpack.c.h.b16 %v236
    %v593 = vunpack.c.l.b16 %v237
    %v594 = vunpack.c.h.b16 %v237
    %v595 = vunpack.c.l.b16 %v238
    %v596 = vunpack.c.h.b16 %v238
    %v597 = vunpack.c.l.b16 %v239
    %v598 = vunpack.c.h.b16 %v239
    %v599 = vunpack.c.l.b16 %v240
    %v600 = vunpack.c.h.b16 %v240
    %v601 = vunpack.c.l.b16 %v241
    %v602 = vunpack.c.h.b16 %v241
    %v603 = vunpack.c.l.b16 %v242
    %v604 = vunpack.c.h.b16 %v242
    %v605 = vunpack.c.l.b16 %v243
    %v606 = vunpack.c.h.b16 %v243
    %v607 = vunpack.c.l.b16 %v244
    %v608 = vunpack.c.h.b16 %v244
    %v609 = vunpack.c.l.b16 %v245
    %v610 = vunpack.c.h.b16 %v245
    %v611 = vunpack.c.l.b16 %v246
    %v612 = vunpack.c.h.b16 %v246
    %v613 = vunpack.c.l.b16 %v247
    %v614 = vunpack.c.h.b16 %v247
    %v615 = vunpack.c.l.b16 %v248
    %v616 = vunpack.c.h.b16 %v248
    %v617 = vunpack.c.l.b16 %v249
    %v618 = vunpack.c.h.b16 %v249
    %v619 = vunpack.c.l.b16 %v250
    %v620 = vunpack.c.h.b16 %v250
    %v621 = vunpack.c.l.b16 %v251
    %v622 = vunpack.c.h.b16 %v251
    %v623 = vunpack.c.l.b16 %v252
    %v624 = vunpack.c.h.b16 %v252
    %v625 = vunpack.c.l.b16 %v253
    %v626 = vunpack.c.h.b16 %v253
    %v627 = vunpack.c.l.b16 %v254
    %v628 = vunpack.c.h.b16 %v254
    %v629 = vunpack.c.l.b16 %v255
    %v630 = vunpack.c.h.b16 %v255
    %v631 = vunpack.c.l.b16 %v256
    %v632 = vunpack.c.h.b16 %v256
    %v633 = vunpack.c.l.b16 %v257
    %v634 = vunpack.c.h.b16 %v257
    %v635 = vunpack.c.l.b16 %v258
    %v636 = vunpack.c.h.b16 %v258
    %v637 = vunpack.c.l.b16 %v259
    %v638 = vunpack.c.h.b16 %v259
    %v639 = vunpack.c.l.b16 %v260
    %v640 = vunpack.c.h.b16 %v260
    %v641 = vunpack.c.l.b16 %v261
    %v642 = vunpack.c.h.b16 %v261
    %v643 = vunpack.c.l.b16 %v262
    %v644 = vunpack.c.h.b16 %v262
    %v645 = vunpack.c.l.b16 %v263
    %v646 = vunpack.c.h.b16 %v263
    %v647 = vunpack.c.l.b16 %v264
    %v648 = vunpack.c.h.b16 %v264
    %v649 = vunpack.c.l.b16 %v265
    %v650 = vunpack.c.h.b16 %v265
    %v651 = vunpack.c.l.b16 %v266
    %v652 = vunpack.c.h.b16 %v266
    %v653 = vunpack.c.l.b16 %v267
    %v654 = vunpack.c.h.b16 %v267
    %v655 = vunpack.c.l.b16 %v268
    %v656 = vunpack.c.h.b16 %v268
    %v657 = vunpack.c.l.b16 %v269
    %v658 = vunpack.c.h.b16 %v269
    %v659 = vunpack.c.l.b16 %v270
    %v660 = vunpack.c.h.b16 %v270
    %v661 = vunpack.c.l.b16 %v271
    %v662 = vunpack.c.h.b16 %v271
    %v663 = vunpack.c.l.b16 %v272
    %v664 = vunpack.c.h.b16 %v272
    %v665 = vunpack.c.l.b16 %v273
    %v666 = vunpack.c.h.b16 %v273
    %v667 = vunpack.c.l.b16 %v274
    %v668 = vunpack.c.h.b16 %v274
    %v669 = vunpack.c.l.b16 %v275
    %v670 = vunpack.c.h.b16 %v275
    %v671 = vunpack.c.l.b16 %v276
    %v672 = vunpack.c.h.b16 %v276
    %v673 = vunpack.c.l.b16 %v277
    %v674 = vunpack.c.h.b16 %v277
    %v675 = vunpack.c.l.b16 %v278
    %v676 = vunpack.c.h.b16 %v278
    %v677 = vunpack.c.l.b16 %v279
    %v678 = vunpack.c.h.b16 %v279
    %v679 = vunpack.c.l.b16 %v280
    %v680 = vunpack.c.h.b16 %v280
    %v681 = vunpack.c.l.b16 %v281
    %v682 = vunpack.c.h.b16 %v281
    %v683 = vunpack.c.l.b16 %v282
    %v684 = vunpack.c.h.b16 %v282
    %v685 = vunpack.c.l.b16 %v283
    %v686 = vunpack.c.h.b16 %v283
    %v687 = vunpack.c.l.b16 %v284
    %v688 = vunpack.c.h.b16 %v284
    %v689 = vunpack.c.l.b16 %v285
    %v690 = vunpack.c.h.b16 %v285
    %v691 = vunpack.c.l.b16 %v286
    %v692 = vunpack.c.h.b16 %v286
    %v693 = vunpack.c.l.b16 %v287
    %v694 = vunpack.c.h.b16 %v287
    %v695 = vunpack.c.l.b16 %v288
    %v696 = vunpack.c.h.b16 %v288
    %v697 = vunpack.c.l.b16 %v289
    %v698 = vunpack.c.h.b16 %v289
    %v699 = vunpack.c.l.b16 %v290
    %v700 = vunpack.c.h.b16 %v290
    %v701 = vunpack.c.l.b16 %v291
    %v702 = vunpack.c.h.b16 %v291
    %v703 = vunpack.c.l.b16 %v292
    %v704 = vunpack.c.h.b16 %v292
    %v705 = vunpack.c.l.b16 %v293
    %v706 = vunpack.c.h.b16 %v293
    %v707 = vunpack.c.l.b16 %v294
    %v708 = vunpack.c.h.b16 %v294
    %v709 = vunpack.c.l.b16 %v295
    %v710 = vunpack.c.h.b16 %v295
    %v711 = vunpack.c.l.b16 %v296
    %v712 = vunpack.c.h.b16 %v296
    %v713 = vunpack.c.l.b16 %v297
    %v714 = vunpack.c.h.b16 %v297
    %v715 = vunpack.c.l.b16 %v298
    %v716 = vunpack.c.h.b16 %v298
    %v717 = vunpack.c.l.b16 %v299
    %v718 = vunpack.c.h.b16 %v299
    %v719 = vunpack.c.l.b16 %v300
    %v720 = vunpack.c.h.b16 %v300
    %v721 = vpack.c.b16 %v481, %v465
    %v722 = vpack.c.b16 %v482, %v466
    %v723 = vpack.c.b16 %v483, %v467
    %v724 = vpack.c.b16 %v484, %v468
    %v725 = vpack.c.b16 %v485, %v469
    %v726 = vpack.c.b16 %v486, %v470
    %v727 = vpack.c.b16 %v487, %v471
    %v728 = vpack.c.b16 %v488, %v472
    %v729 = vpack.c.b16 %v489, %v473
    %v730 = vpack.c.b16 %v490, %v474
    %v731 = vpack.c.b16 %v491, %v475
    %v732 = vpack.c.b16 %v492, %v476
    %v733 = vpack.c.b16 %v493, %v477
    %v734 = vpack.c.b16 %v494, %v478
    %v735 = vpack.c.b16 %v495, %v479
    %v736 = vpack.c.b16 %v496, %v480
    %v737 = vpack.c.b16 %v513, %v497
    %v738 = vpack.c.b16 %v514, %v498
    %v739 = vpack.c.b16 %v515, %v499
    %v740 = vpack.c.b16 %v516, %v500
    %v741 = vpack.c.b16 %v517, %v501
    %v742 = vpack.c.b16 %v518, %v502
    %v743 = vpack.c.b16 %v519, %v503
    %v744 = vpack.c.b16 %v520, %v504
    %v745 = vpack.c.b16 %v521, %v505
    %v746 = vpack.c.b16 %v522, %v506
    %v747 = vpack.c.b16 %v523, %v507
    %v748 = vpack.c.b16 %v524, %v508
    %v749 = vpack.c.b16 %v525, %v509
    %v750 = vpack.c.b16 %v526, %v510
    %v751 = vpack.c.b16 %v527, %v511
    %v752 = vpack.c.b16 %v528, %v512
    %v753 = vpack.c.b16 %v545, %v529
    %v754 = vpack.c.b16 %v546, %v530
    %v755 = vpack.c.b16 %v547, %v531
    %v756 = vpack.c.b16 %v548, %v532
    %v757 = vpack.c.b16 %v549, %v533
    %v758 = vpack.c.b16 %v550, %v534
    %v759 = vpack.c.b16 %v551, %v535
    %v760 = vpack.c.b16 %v552, %v536
    %v761 = vpack.c.b16 %v553, %v537
    %v762 = vpack.c.b16 %v554, %v538
    %v763 = vpack.c.b16 %v555, %v539
    %v764 = vpack.c.b16 %v556, %v540
    %v765 = vpack.c.b16 %v557, %v541
    %v766 = vpack.c.b16 %v558, %v542
    %v767 = vpack.c.b16 %v559, %v543
    %v768 = vpack.c.b16 %v560, %v544
    %v769 = vpack.c.b16 %v577, %v561
    %v770 = vpack.c.b16 %v578, %v562
    %v771 = vpack.c.b16 %v579, %v563
    %v772 = vpack.c.b16 %v580, %v564
    %v773 = vpack.c.b16 %v581, %v565
    %v774 = vpack.c.b16 %v582, %v566
    %v775 = vpack.c.b16 %v583, %v567
    %v776 = vpack.c.b16 %v584, %v568
    %v777 = vpack.c.b16 %v585, %v569
    %v778 = vpack.c.b16 %v586, %v570
    %v779 = vpack.c.b16 %v587, %v571
    %v780 = vpack.c.b16 %v588, %v572
    %v781 = vpack.c.b16 %v589, %v573
    %v782 = vpack.c.b16 %v590, %v574
    %v783 = vpack.c.b16 %v591, %v575
    %v784 = vpack.c.b16 %v592, %v576
    %v785 = vpack.c.b16 %v609, %v593
    %v786 = vpack.c.b16 %v610, %v594
    %v787 = vpack.c.b16 %v611, %v595
    %v788 = vpack.c.b16 %v612, %v596
    %v789 = vpack.c.b16 %v613, %v597
    %v790 = vpack.c.b16 %v614, %v598
    %v791 = vpack.c.b16 %v615, %v599
    %v792 = vpack.c.b16 %v616, %v600
    %v793 = vpack.c.b16 %v617, %v601
    %v794 = vpack.c.b16 %v618, %v602
    %v795 = vpack.c.b16 %v619, %v603
    %v796 = vpack.c.b16 %v620, %v604
    %v797 = vpack.c.b16 %v621, %v605
    %v798 = vpack.c.b16 %v622, %v606
    %v799 = vpack.c.b16 %v623, %v607
    %v800 = vpack.c.b16 %v624, %v608
    %v801 = vpack.c.b16 %v641, %v625
    %v802 = vpack.c.b16 %v642, %v626
    %v803 = vpack.c.b16 %v643, %v627
    %v804 = vpack.c.b16 %v644, %v628
    %v805 = vpack.c.b16 %v645, %v629
    %v806 = vpack.c.b16 %v646, %v630
    %v807 = vpack.c.b16 %v647, %v631
    %v808 = vpack.c.b16 %v648, %v632
    %v809 = vpack.c.b16 %v649, %v633
    %v810 = vpack.c.b16 %v650, %v634
    %v811 = vpack.c.b16 %v651, %v635
    %v812 = vpack.c.b16 %v652, %v636
    %v813 = vpack.c.b16 %v653, %v637
    %v814 = vpack.c.b16 %v654, %v638
    %v815 = vpack.c.b16 %v655, %v639
    %v816 = vpack.c.b16 %v656, %v640
    %v817 = vpack.c.b16 %v673, %v657
    %v818 = vpack.c.b16 %v674, %v658
    %v819 = vpack.c.b16 %v675, %v659
    %v820 = vpack.c.b16 %v676, %v660
    %v821 = vpack.c.b16 %v677, %v661
    %v822 = vpack.c.b16 %v678, %v662
    %v823 = vpack.c.b16 %v679, %v663
    %v824 = vpack.c.b16 %v680, %v664
    %v825 = vpack.c.b16 %v681, %v665
    %v826 = vpack.c.b16 %v682, %v666
    %v827 = vpack.c.b16 %v683, %v667
    %v828 = vpack.c.b16 %v684, %v668
    %v829 = vpack.c.b16 %v685, %v669
    %v830 = vpack.c.b16 %v686, %v670
    %v831 = vpack.c.b16 %v687, %v671
    %v832 = vpack.c.b16 %v688, %v672
    %v833 = vpack.c.b16 %v705, %v689
    %v834 = vpack.c.b16 %v706, %v690
    %v835 = vpack.c.b16 %v707, %v691
    %v836 = vpack.c.b16 %v708, %v692
    %v837 = vpack.c.b16 %v709, %v693
    %v838 = vpack.c.b16 %v710, %v694
    %v839 = vpack.c.b16 %v711, %v695
    %v840 = vpack.c.b16 %v712, %v696
    %v841 = vpack.c.b16 %v713, %v697
    %v842 = vpack.c.b16 %v714, %v698
    %v843 = vpack.c.b16 %v715, %v699
    %v844 = vpack.c.b16 %v716, %v700
    %v845 = vpack.c.b16 %v717, %v701
    %v846 = vpack.c.b16 %v718, %v702
    %v847 = vpack.c.b16 %v719, %v703
    %v848 = vpack.c.b16 %v720, %v704
    %977 = vmatpush.bf16.msra.mxu0 %v833
    %978 = vmatpush.bf16.msra.mxu0 %v817
    %979 = vmatpush.bf16.msra.mxu0 %v801
    %980 = vmatpush.bf16.msra.mxu0 %v785
    %981 = vmatpush.bf16.msra.mxu0 %v769
    %982 = vmatpush.bf16.msra.mxu0 %v753
    %983 = vmatpush.bf16.msra.mxu0 %v737
    %984 = vmatpush.bf16.msra.mxu0 %v721
    %985 = vmatmul.bf16.gmra.mxu0 %v172
    %v986 = vpop.f32.mrf.mxu0
    %v987 = vadd.f32 %v305, %v986
    %v988 = vpop.f32.mrf.mxu0
    %989 = vdwg.mxu0
    %990 = vmatpush.bf16.msra.mxu0 %v834
    %991 = vmatpush.bf16.msra.mxu0 %v818
    %992 = vmatpush.bf16.msra.mxu0 %v802
    %993 = vmatpush.bf16.msra.mxu0 %v786
    %994 = vmatpush.bf16.msra.mxu0 %v770
    %995 = vmatpush.bf16.msra.mxu0 %v754
    %996 = vmatpush.bf16.msra.mxu0 %v738
    %997 = vmatpush.bf16.msra.mxu0 %v722
    %998 = vmatmul.bf16.gmra.mxu0 %v172
    %v999 = vpop.f32.mrf.mxu0
    %v1000 = vadd.f32 %v306, %v999
    %v1001 = vpop.f32.mrf.mxu0
    %1002 = vdwg.mxu0
    %1003 = vmatpush.bf16.msra.mxu0 %v835
    %1004 = vmatpush.bf16.msra.mxu0 %v819
    %1005 = vmatpush.bf16.msra.mxu0 %v803
    %1006 = vmatpush.bf16.msra.mxu0 %v787
    %1007 = vmatpush.bf16.msra.mxu0 %v771
    %1008 = vmatpush.bf16.msra.mxu0 %v755
    %1009 = vmatpush.bf16.msra.mxu0 %v739
    %1010 = vmatpush.bf16.msra.mxu0 %v723
    %1011 = vmatmul.bf16.gmra.mxu0 %v172
    %v1012 = vpop.f32.mrf.mxu0
    %v1013 = vadd.f32 %v307, %v1012
    %v1014 = vpop.f32.mrf.mxu0
    %1015 = vdwg.mxu0
    %1016 = vmatpush.bf16.msra.mxu0 %v836
    %1017 = vmatpush.bf16.msra.mxu0 %v820
    %1018 = vmatpush.bf16.msra.mxu0 %v804
    %1019 = vmatpush.bf16.msra.mxu0 %v788
    %1020 = vmatpush.bf16.msra.mxu0 %v772
    %1021 = vmatpush.bf16.msra.mxu0 %v756
    %1022 = vmatpush.bf16.msra.mxu0 %v740
    %1023 = vmatpush.bf16.msra.mxu0 %v724
    %1024 = vmatmul.bf16.gmra.mxu0 %v172
    %v1025 = vpop.f32.mrf.mxu0
    %v1026 = vadd.f32 %v308, %v1025
    %v1027 = vpop.f32.mrf.mxu0
    %1028 = vdwg.mxu0
    %1029 = vmatpush.bf16.msra.mxu0 %v837
    %1030 = vmatpush.bf16.msra.mxu0 %v821
    %1031 = vmatpush.bf16.msra.mxu0 %v805
    %1032 = vmatpush.bf16.msra.mxu0 %v789
    %1033 = vmatpush.bf16.msra.mxu0 %v773
    %1034 = vmatpush.bf16.msra.mxu0 %v757
    %1035 = vmatpush.bf16.msra.mxu0 %v741
    %1036 = vmatpush.bf16.msra.mxu0 %v725
    %1037 = vmatmul.bf16.gmra.mxu0 %v172
    %v1038 = vpop.f32.mrf.mxu0
    %v1039 = vadd.f32 %v309, %v1038
    %v1040 = vpop.f32.mrf.mxu0
    %1041 = vdwg.mxu0
    %1042 = vmatpush.bf16.msra.mxu0 %v838
    %1043 = vmatpush.bf16.msra.mxu0 %v822
    %1044 = vmatpush.bf16.msra.mxu0 %v806
    %1045 = vmatpush.bf16.msra.mxu0 %v790
    %1046 = vmatpush.bf16.msra.mxu0 %v774
    %1047 = vmatpush.bf16.msra.mxu0 %v758
    %1048 = vmatpush.bf16.msra.mxu0 %v742
    %1049 = vmatpush.bf16.msra.mxu0 %v726
    %1050 = vmatmul.bf16.gmra.mxu0 %v172
    %v1051 = vpop.f32.mrf.mxu0
    %v1052 = vadd.f32 %v310, %v1051
    %v1053 = vpop.f32.mrf.mxu0
    %1054 = vdwg.mxu0
    %1055 = vmatpush.bf16.msra.mxu0 %v839
    %1056 = vmatpush.bf16.msra.mxu0 %v823
    %1057 = vmatpush.bf16.msra.mxu0 %v807
    %1058 = vmatpush.bf16.msra.mxu0 %v791
    %1059 = vmatpush.bf16.msra.mxu0 %v775
    %1060 = vmatpush.bf16.msra.mxu0 %v759
    %1061 = vmatpush.bf16.msra.mxu0 %v743
    %1062 = vmatpush.bf16.msra.mxu0 %v727
    %1063 = vmatmul.bf16.gmra.mxu0 %v172
    %v1064 = vpop.f32.mrf.mxu0
    %v1065 = vadd.f32 %v311, %v1064
    %v1066 = vpop.f32.mrf.mxu0
    %1067 = vdwg.mxu0
    %1068 = vmatpush.bf16.msra.mxu0 %v840
    %1069 = vmatpush.bf16.msra.mxu0 %v824
    %1070 = vmatpush.bf16.msra.mxu0 %v808
    %1071 = vmatpush.bf16.msra.mxu0 %v792
    %1072 = vmatpush.bf16.msra.mxu0 %v776
    %1073 = vmatpush.bf16.msra.mxu0 %v760
    %1074 = vmatpush.bf16.msra.mxu0 %v744
    %1075 = vmatpush.bf16.msra.mxu0 %v728
    %1076 = vmatmul.bf16.gmra.mxu0 %v172
    %v1077 = vpop.f32.mrf.mxu0
    %v1078 = vadd.f32 %v312, %v1077
    %v1079 = vpop.f32.mrf.mxu0
    %1080 = vdwg.mxu0
    %1081 = vmatpush.bf16.msra.mxu0 %v841
    %1082 = vmatpush.bf16.msra.mxu0 %v825
    %1083 = vmatpush.bf16.msra.mxu0 %v809
    %1084 = vmatpush.bf16.msra.mxu0 %v793
    %1085 = vmatpush.bf16.msra.mxu0 %v777
    %1086 = vmatpush.bf16.msra.mxu0 %v761
    %1087 = vmatpush.bf16.msra.mxu0 %v745
    %1088 = vmatpush.bf16.msra.mxu0 %v729
    %1089 = vmatmul.bf16.gmra.mxu0 %v172
    %v1090 = vpop.f32.mrf.mxu0
    %v1091 = vadd.f32 %v313, %v1090
    %v1092 = vpop.f32.mrf.mxu0
    %1093 = vdwg.mxu0
    %1094 = vmatpush.bf16.msra.mxu0 %v842
    %1095 = vmatpush.bf16.msra.mxu0 %v826
    %1096 = vmatpush.bf16.msra.mxu0 %v810
    %1097 = vmatpush.bf16.msra.mxu0 %v794
    %1098 = vmatpush.bf16.msra.mxu0 %v778
    %1099 = vmatpush.bf16.msra.mxu0 %v762
    %1100 = vmatpush.bf16.msra.mxu0 %v746
    %1101 = vmatpush.bf16.msra.mxu0 %v730
    %1102 = vmatmul.bf16.gmra.mxu0 %v172
    %v1103 = vpop.f32.mrf.mxu0
    %v1104 = vadd.f32 %v314, %v1103
    %v1105 = vpop.f32.mrf.mxu0
    %1106 = vdwg.mxu0
    %1107 = vmatpush.bf16.msra.mxu0 %v843
    %1108 = vmatpush.bf16.msra.mxu0 %v827
    %1109 = vmatpush.bf16.msra.mxu0 %v811
    %1110 = vmatpush.bf16.msra.mxu0 %v795
    %1111 = vmatpush.bf16.msra.mxu0 %v779
    %1112 = vmatpush.bf16.msra.mxu0 %v763
    %1113 = vmatpush.bf16.msra.mxu0 %v747
    %1114 = vmatpush.bf16.msra.mxu0 %v731
    %1115 = vmatmul.bf16.gmra.mxu0 %v172
    %v1116 = vpop.f32.mrf.mxu0
    %v1117 = vadd.f32 %v315, %v1116
    %v1118 = vpop.f32.mrf.mxu0
    %1119 = vdwg.mxu0
    %1120 = vmatpush.bf16.msra.mxu0 %v844
    %1121 = vmatpush.bf16.msra.mxu0 %v828
    %1122 = vmatpush.bf16.msra.mxu0 %v812
    %1123 = vmatpush.bf16.msra.mxu0 %v796
    %1124 = vmatpush.bf16.msra.mxu0 %v780
    %1125 = vmatpush.bf16.msra.mxu0 %v764
    %1126 = vmatpush.bf16.msra.mxu0 %v748
    %1127 = vmatpush.bf16.msra.mxu0 %v732
    %1128 = vmatmul.bf16.gmra.mxu0 %v172
    %v1129 = vpop.f32.mrf.mxu0
    %v1130 = vadd.f32 %v316, %v1129
    %v1131 = vpop.f32.mrf.mxu0
    %1132 = vdwg.mxu0
    %1133 = vmatpush.bf16.msra.mxu0 %v845
    %1134 = vmatpush.bf16.msra.mxu0 %v829
    %1135 = vmatpush.bf16.msra.mxu0 %v813
    %1136 = vmatpush.bf16.msra.mxu0 %v797
    %1137 = vmatpush.bf16.msra.mxu0 %v781
    %1138 = vmatpush.bf16.msra.mxu0 %v765
    %1139 = vmatpush.bf16.msra.mxu0 %v749
    %1140 = vmatpush.bf16.msra.mxu0 %v733
    %1141 = vmatmul.bf16.gmra.mxu0 %v172
    %v1142 = vpop.f32.mrf.mxu0
    %v1143 = vadd.f32 %v317, %v1142
    %v1144 = vpop.f32.mrf.mxu0
    %1145 = vdwg.mxu0
    %1146 = vmatpush.bf16.msra.mxu0 %v846
    %1147 = vmatpush.bf16.msra.mxu0 %v830
    %1148 = vmatpush.bf16.msra.mxu0 %v814
    %1149 = vmatpush.bf16.msra.mxu0 %v798
    %1150 = vmatpush.bf16.msra.mxu0 %v782
    %1151 = vmatpush.bf16.msra.mxu0 %v766
    %1152 = vmatpush.bf16.msra.mxu0 %v750
    %1153 = vmatpush.bf16.msra.mxu0 %v734
    %1154 = vmatmul.bf16.gmra.mxu0 %v172
    %v1155 = vpop.f32.mrf.mxu0
    %v1156 = vadd.f32 %v318, %v1155
    %v1157 = vpop.f32.mrf.mxu0
    %1158 = vdwg.mxu0
    %1159 = vmatpush.bf16.msra.mxu0 %v847
    %1160 = vmatpush.bf16.msra.mxu0 %v831
    %1161 = vmatpush.bf16.msra.mxu0 %v815
    %1162 = vmatpush.bf16.msra.mxu0 %v799
    %1163 = vmatpush.bf16.msra.mxu0 %v783
    %1164 = vmatpush.bf16.msra.mxu0 %v767
    %1165 = vmatpush.bf16.msra.mxu0 %v751
    %1166 = vmatpush.bf16.msra.mxu0 %v735
    %1167 = vmatmul.bf16.gmra.mxu0 %v172
    %v1168 = vpop.f32.mrf.mxu0
    %v1169 = vadd.f32 %v319, %v1168
    %v1170 = vpop.f32.mrf.mxu0
    %1171 = vdwg.mxu0
    %1172 = vmatpush.bf16.msra.mxu0 %v848
    %1173 = vmatpush.bf16.msra.mxu0 %v832
    %1174 = vmatpush.bf16.msra.mxu0 %v816
    %1175 = vmatpush.bf16.msra.mxu0 %v800
    %1176 = vmatpush.bf16.msra.mxu0 %v784
    %1177 = vmatpush.bf16.msra.mxu0 %v768
    %1178 = vmatpush.bf16.msra.mxu0 %v752
    %1179 = vmatpush.bf16.msra.mxu0 %v736
    %1180 = vmatmul.bf16.gmra.mxu0 %v172
    %v1181 = vpop.f32.mrf.mxu0
    %v1182 = vadd.f32 %v320, %v1181
    %v1183 = vpop.f32.mrf.mxu0
    %1184 = vdwg.mxu0
    %v1185 = vmax.f32 %v987, 0.0
    %v1186 = vmax.f32 %v1000, 0.0
    %v1187 = vmax.f32 %v1013, 0.0
    %v1188 = vmax.f32 %v1026, 0.0
    %v1189 = vmax.f32 %v1039, 0.0
    %v1190 = vmax.f32 %v1052, 0.0
    %v1191 = vmax.f32 %v1065, 0.0
    %v1192 = vmax.f32 %v1078, 0.0
    %v1193 = vmax.f32 %v1091, 0.0
    %v1194 = vmax.f32 %v1104, 0.0
    %v1195 = vmax.f32 %v1117, 0.0
    %v1196 = vmax.f32 %v1130, 0.0
    %v1197 = vmax.f32 %v1143, 0.0
    %v1198 = vmax.f32 %v1156, 0.0
    %v1199 = vmax.f32 %v1169, 0.0
    %v1200 = vmax.f32 %v1182, 0.0
    %v1201 = vpack.c.bf16 %v1185, %v1185
    %v1202 = vpack.c.bf16 %v1186, %v1186
    %v1203 = vpack.c.bf16 %v1187, %v1187
    %v1204 = vpack.c.bf16 %v1188, %v1188
    %v1205 = vpack.c.bf16 %v1189, %v1189
    %v1206 = vpack.c.bf16 %v1190, %v1190
    %v1207 = vpack.c.bf16 %v1191, %v1191
    %v1208 = vpack.c.bf16 %v1192, %v1192
    %v1209 = vpack.c.bf16 %v1193, %v1193
    %v1210 = vpack.c.bf16 %v1194, %v1194
    %v1211 = vpack.c.bf16 %v1195, %v1195
    %v1212 = vpack.c.bf16 %v1196, %v1196
    %v1213 = vpack.c.bf16 %v1197, %v1197
    %v1214 = vpack.c.bf16 %v1198, %v1198
    %v1215 = vpack.c.bf16 %v1199, %v1199
    %v1216 = vpack.c.bf16 %v1200, %v1200
    %v1217 = vld [vmem:[#allocation8] sm:$0xff]
    %v1218 = vld [vmem:[#allocation8 + $0x8] sm:$0xff]
    %v1219 = vld [vmem:[#allocation8 + $0x10] sm:$0xff]
    %v1220 = vld [vmem:[#allocation8 + $0x18] sm:$0xff]
    %v1221 = vld [vmem:[#allocation8 + $0x20] sm:$0xff]
    %v1222 = vld [vmem:[#allocation8 + $0x28] sm:$0xff]
    %v1223 = vld [vmem:[#allocation8 + $0x30] sm:$0xff]
    %v1224 = vld [vmem:[#allocation8 + $0x38] sm:$0xff]
    %v1225 = vld [vmem:[#allocation8 + $0x40] sm:$0xff]
    %v1226 = vld [vmem:[#allocation8 + $0x48] sm:$0xff]
    %v1227 = vld [vmem:[#allocation8 + $0x50] sm:$0xff]
    %v1228 = vld [vmem:[#allocation8 + $0x58] sm:$0xff]
    %v1229 = vld [vmem:[#allocation8 + $0x60] sm:$0xff]
    %v1230 = vld [vmem:[#allocation8 + $0x68] sm:$0xff]
    %v1231 = vld [vmem:[#allocation8 + $0x70] sm:$0xff]
    %v1232 = vld [vmem:[#allocation8 + $0x78] sm:$0xff]
    %v1233 = vld [vmem:[#allocation8 + $0x80] sm:$0xff]
    %v1234 = vld [vmem:[#allocation8 + $0x88] sm:$0xff]
    %v1235 = vld [vmem:[#allocation8 + $0x90] sm:$0xff]
    %v1236 = vld [vmem:[#allocation8 + $0x98] sm:$0xff]
    %v1237 = vld [vmem:[#allocation8 + $0xa0] sm:$0xff]
    %v1238 = vld [vmem:[#allocation8 + $0xa8] sm:$0xff]
    %v1239 = vld [vmem:[#allocation8 + $0xb0] sm:$0xff]
    %v1240 = vld [vmem:[#allocation8 + $0xb8] sm:$0xff]
    %v1241 = vld [vmem:[#allocation8 + $0xc0] sm:$0xff]
    %v1242 = vld [vmem:[#allocation8 + $0xc8] sm:$0xff]
    %v1243 = vld [vmem:[#allocation8 + $0xd0] sm:$0xff]
    %v1244 = vld [vmem:[#allocation8 + $0xd8] sm:$0xff]
    %v1245 = vld [vmem:[#allocation8 + $0xe0] sm:$0xff]
    %v1246 = vld [vmem:[#allocation8 + $0xe8] sm:$0xff]
    %v1247 = vld [vmem:[#allocation8 + $0xf0] sm:$0xff]
    %v1248 = vld [vmem:[#allocation8 + $0xf8] sm:$0xff]
    %v1249 = vld [vmem:[#allocation8 + $0x100] sm:$0xff]
    %v1250 = vld [vmem:[#allocation8 + $0x108] sm:$0xff]
    %v1251 = vld [vmem:[#allocation8 + $0x110] sm:$0xff]
    %v1252 = vld [vmem:[#allocation8 + $0x118] sm:$0xff]
    %v1253 = vld [vmem:[#allocation8 + $0x120] sm:$0xff]
    %v1254 = vld [vmem:[#allocation8 + $0x128] sm:$0xff]
    %v1255 = vld [vmem:[#allocation8 + $0x130] sm:$0xff]
    %v1256 = vld [vmem:[#allocation8 + $0x138] sm:$0xff]
    %v1257 = vld [vmem:[#allocation8 + $0x140] sm:$0xff]
    %v1258 = vld [vmem:[#allocation8 + $0x148] sm:$0xff]
    %v1259 = vld [vmem:[#allocation8 + $0x150] sm:$0xff]
    %v1260 = vld [vmem:[#allocation8 + $0x158] sm:$0xff]
    %v1261 = vld [vmem:[#allocation8 + $0x160] sm:$0xff]
    %v1262 = vld [vmem:[#allocation8 + $0x168] sm:$0xff]
    %v1263 = vld [vmem:[#allocation8 + $0x170] sm:$0xff]
    %v1264 = vld [vmem:[#allocation8 + $0x178] sm:$0xff]
    %v1265 = vld [vmem:[#allocation8 + $0x180] sm:$0xff]
    %v1266 = vld [vmem:[#allocation8 + $0x188] sm:$0xff]
    %v1267 = vld [vmem:[#allocation8 + $0x190] sm:$0xff]
    %v1268 = vld [vmem:[#allocation8 + $0x198] sm:$0xff]
    %v1269 = vld [vmem:[#allocation8 + $0x1a0] sm:$0xff]
    %v1270 = vld [vmem:[#allocation8 + $0x1a8] sm:$0xff]
    %v1271 = vld [vmem:[#allocation8 + $0x1b0] sm:$0xff]
    %v1272 = vld [vmem:[#allocation8 + $0x1b8] sm:$0xff]
    %v1273 = vld [vmem:[#allocation8 + $0x1c0] sm:$0xff]
    %v1274 = vld [vmem:[#allocation8 + $0x1c8] sm:$0xff]
    %v1275 = vld [vmem:[#allocation8 + $0x1d0] sm:$0xff]
    %v1276 = vld [vmem:[#allocation8 + $0x1d8] sm:$0xff]
    %v1277 = vld [vmem:[#allocation8 + $0x1e0] sm:$0xff]
    %v1278 = vld [vmem:[#allocation8 + $0x1e8] sm:$0xff]
    %v1279 = vld [vmem:[#allocation8 + $0x1f0] sm:$0xff]
    %v1280 = vld [vmem:[#allocation8 + $0x1f8] sm:$0xff]
    %v1281 = vld [vmem:[#allocation8 + $0x200] sm:$0xff]
    %v1282 = vld [vmem:[#allocation8 + $0x208] sm:$0xff]
    %v1283 = vld [vmem:[#allocation8 + $0x210] sm:$0xff]
    %v1284 = vld [vmem:[#allocation8 + $0x218] sm:$0xff]
    %v1285 = vld [vmem:[#allocation8 + $0x220] sm:$0xff]
    %v1286 = vld [vmem:[#allocation8 + $0x228] sm:$0xff]
    %v1287 = vld [vmem:[#allocation8 + $0x230] sm:$0xff]
    %v1288 = vld [vmem:[#allocation8 + $0x238] sm:$0xff]
    %v1289 = vld [vmem:[#allocation8 + $0x240] sm:$0xff]
    %v1290 = vld [vmem:[#allocation8 + $0x248] sm:$0xff]
    %v1291 = vld [vmem:[#allocation8 + $0x250] sm:$0xff]
    %v1292 = vld [vmem:[#allocation8 + $0x258] sm:$0xff]
    %v1293 = vld [vmem:[#allocation8 + $0x260] sm:$0xff]
    %v1294 = vld [vmem:[#allocation8 + $0x268] sm:$0xff]
    %v1295 = vld [vmem:[#allocation8 + $0x270] sm:$0xff]
    %v1296 = vld [vmem:[#allocation8 + $0x278] sm:$0xff]
    %v1297 = vld [vmem:[#allocation8 + $0x280] sm:$0xff]
    %v1298 = vld [vmem:[#allocation8 + $0x288] sm:$0xff]
    %v1299 = vld [vmem:[#allocation8 + $0x290] sm:$0xff]
    %v1300 = vld [vmem:[#allocation8 + $0x298] sm:$0xff]
    %v1301 = vld [vmem:[#allocation8 + $0x2a0] sm:$0xff]
    %v1302 = vld [vmem:[#allocation8 + $0x2a8] sm:$0xff]
    %v1303 = vld [vmem:[#allocation8 + $0x2b0] sm:$0xff]
    %v1304 = vld [vmem:[#allocation8 + $0x2b8] sm:$0xff]
    %v1305 = vld [vmem:[#allocation8 + $0x2c0] sm:$0xff]
    %v1306 = vld [vmem:[#allocation8 + $0x2c8] sm:$0xff]
    %v1307 = vld [vmem:[#allocation8 + $0x2d0] sm:$0xff]
    %v1308 = vld [vmem:[#allocation8 + $0x2d8] sm:$0xff]
    %v1309 = vld [vmem:[#allocation8 + $0x2e0] sm:$0xff]
    %v1310 = vld [vmem:[#allocation8 + $0x2e8] sm:$0xff]
    %v1311 = vld [vmem:[#allocation8 + $0x2f0] sm:$0xff]
    %v1312 = vld [vmem:[#allocation8 + $0x2f8] sm:$0xff]
    %v1313 = vld [vmem:[#allocation8 + $0x300] sm:$0xff]
    %v1314 = vld [vmem:[#allocation8 + $0x308] sm:$0xff]
    %v1315 = vld [vmem:[#allocation8 + $0x310] sm:$0xff]
    %v1316 = vld [vmem:[#allocation8 + $0x318] sm:$0xff]
    %v1317 = vld [vmem:[#allocation8 + $0x320] sm:$0xff]
    %v1318 = vld [vmem:[#allocation8 + $0x328] sm:$0xff]
    %v1319 = vld [vmem:[#allocation8 + $0x330] sm:$0xff]
    %v1320 = vld [vmem:[#allocation8 + $0x338] sm:$0xff]
    %v1321 = vld [vmem:[#allocation8 + $0x340] sm:$0xff]
    %v1322 = vld [vmem:[#allocation8 + $0x348] sm:$0xff]
    %v1323 = vld [vmem:[#allocation8 + $0x350] sm:$0xff]
    %v1324 = vld [vmem:[#allocation8 + $0x358] sm:$0xff]
    %v1325 = vld [vmem:[#allocation8 + $0x360] sm:$0xff]
    %v1326 = vld [vmem:[#allocation8 + $0x368] sm:$0xff]
    %v1327 = vld [vmem:[#allocation8 + $0x370] sm:$0xff]
    %v1328 = vld [vmem:[#allocation8 + $0x378] sm:$0xff]
    %v1329 = vld [vmem:[#allocation8 + $0x380] sm:$0xff]
    %v1330 = vld [vmem:[#allocation8 + $0x388] sm:$0xff]
    %v1331 = vld [vmem:[#allocation8 + $0x390] sm:$0xff]
    %v1332 = vld [vmem:[#allocation8 + $0x398] sm:$0xff]
    %v1333 = vld [vmem:[#allocation8 + $0x3a0] sm:$0xff]
    %v1334 = vld [vmem:[#allocation8 + $0x3a8] sm:$0xff]
    %v1335 = vld [vmem:[#allocation8 + $0x3b0] sm:$0xff]
    %v1336 = vld [vmem:[#allocation8 + $0x3b8] sm:$0xff]
    %v1337 = vld [vmem:[#allocation8 + $0x3c0] sm:$0xff]
    %v1338 = vld [vmem:[#allocation8 + $0x3c8] sm:$0xff]
    %v1339 = vld [vmem:[#allocation8 + $0x3d0] sm:$0xff]
    %v1340 = vld [vmem:[#allocation8 + $0x3d8] sm:$0xff]
    %v1341 = vld [vmem:[#allocation8 + $0x3e0] sm:$0xff]
    %v1342 = vld [vmem:[#allocation8 + $0x3e8] sm:$0xff]
    %v1343 = vld [vmem:[#allocation8 + $0x3f0] sm:$0xff]
    %v1344 = vld [vmem:[#allocation8 + $0x3f8] sm:$0xff]
    %v1345 = vld [vmem:[#allocation8 + $0x400] sm:$0xff]
    %v1346 = vld [vmem:[#allocation8 + $0x408] sm:$0xff]
    %v1347 = vld [vmem:[#allocation8 + $0x410] sm:$0xff]
    %v1348 = vld [vmem:[#allocation8 + $0x418] sm:$0xff]
    %v1349 = vld [vmem:[#allocation8 + $0x420] sm:$0xff]
    %v1350 = vld [vmem:[#allocation8 + $0x428] sm:$0xff]
    %v1351 = vld [vmem:[#allocation8 + $0x430] sm:$0xff]
    %v1352 = vld [vmem:[#allocation8 + $0x438] sm:$0xff]
    %v1353 = vld [vmem:[#allocation8 + $0x440] sm:$0xff]
    %v1354 = vld [vmem:[#allocation8 + $0x448] sm:$0xff]
    %v1355 = vld [vmem:[#allocation8 + $0x450] sm:$0xff]
    %v1356 = vld [vmem:[#allocation8 + $0x458] sm:$0xff]
    %v1357 = vld [vmem:[#allocation8 + $0x460] sm:$0xff]
    %v1358 = vld [vmem:[#allocation8 + $0x468] sm:$0xff]
    %v1359 = vld [vmem:[#allocation8 + $0x470] sm:$0xff]
    %v1360 = vld [vmem:[#allocation8 + $0x478] sm:$0xff]
    %v1361 = vld [vmem:[#allocation8 + $0x480] sm:$0xff]
    %v1362 = vld [vmem:[#allocation8 + $0x488] sm:$0xff]
    %v1363 = vld [vmem:[#allocation8 + $0x490] sm:$0xff]
    %v1364 = vld [vmem:[#allocation8 + $0x498] sm:$0xff]
    %v1365 = vld [vmem:[#allocation8 + $0x4a0] sm:$0xff]
    %v1366 = vld [vmem:[#allocation8 + $0x4a8] sm:$0xff]
    %v1367 = vld [vmem:[#allocation8 + $0x4b0] sm:$0xff]
    %v1368 = vld [vmem:[#allocation8 + $0x4b8] sm:$0xff]
    %v1369 = vld [vmem:[#allocation8 + $0x4c0] sm:$0xff]
    %v1370 = vld [vmem:[#allocation8 + $0x4c8] sm:$0xff]
    %v1371 = vld [vmem:[#allocation8 + $0x4d0] sm:$0xff]
    %v1372 = vld [vmem:[#allocation8 + $0x4d8] sm:$0xff]
    %v1373 = vld [vmem:[#allocation8 + $0x4e0] sm:$0xff]
    %v1374 = vld [vmem:[#allocation8 + $0x4e8] sm:$0xff]
    %v1375 = vld [vmem:[#allocation8 + $0x4f0] sm:$0xff]
    %v1376 = vld [vmem:[#allocation8 + $0x4f8] sm:$0xff]
    %v1377 = vld [vmem:[#allocation8 + $0x500] sm:$0xff]
    %v1378 = vld [vmem:[#allocation8 + $0x508] sm:$0xff]
    %v1379 = vld [vmem:[#allocation8 + $0x510] sm:$0xff]
    %v1380 = vld [vmem:[#allocation8 + $0x518] sm:$0xff]
    %v1381 = vld [vmem:[#allocation8 + $0x520] sm:$0xff]
    %v1382 = vld [vmem:[#allocation8 + $0x528] sm:$0xff]
    %v1383 = vld [vmem:[#allocation8 + $0x530] sm:$0xff]
    %v1384 = vld [vmem:[#allocation8 + $0x538] sm:$0xff]
    %v1385 = vld [vmem:[#allocation8 + $0x540] sm:$0xff]
    %v1386 = vld [vmem:[#allocation8 + $0x548] sm:$0xff]
    %v1387 = vld [vmem:[#allocation8 + $0x550] sm:$0xff]
    %v1388 = vld [vmem:[#allocation8 + $0x558] sm:$0xff]
    %v1389 = vld [vmem:[#allocation8 + $0x560] sm:$0xff]
    %v1390 = vld [vmem:[#allocation8 + $0x568] sm:$0xff]
    %v1391 = vld [vmem:[#allocation8 + $0x570] sm:$0xff]
    %v1392 = vld [vmem:[#allocation8 + $0x578] sm:$0xff]
    %v1393 = vld [vmem:[#allocation8 + $0x580] sm:$0xff]
    %v1394 = vld [vmem:[#allocation8 + $0x588] sm:$0xff]
    %v1395 = vld [vmem:[#allocation8 + $0x590] sm:$0xff]
    %v1396 = vld [vmem:[#allocation8 + $0x598] sm:$0xff]
    %v1397 = vld [vmem:[#allocation8 + $0x5a0] sm:$0xff]
    %v1398 = vld [vmem:[#allocation8 + $0x5a8] sm:$0xff]
    %v1399 = vld [vmem:[#allocation8 + $0x5b0] sm:$0xff]
    %v1400 = vld [vmem:[#allocation8 + $0x5b8] sm:$0xff]
    %v1401 = vld [vmem:[#allocation8 + $0x5c0] sm:$0xff]
    %v1402 = vld [vmem:[#allocation8 + $0x5c8] sm:$0xff]
    %v1403 = vld [vmem:[#allocation8 + $0x5d0] sm:$0xff]
    %v1404 = vld [vmem:[#allocation8 + $0x5d8] sm:$0xff]
    %v1405 = vld [vmem:[#allocation8 + $0x5e0] sm:$0xff]
    %v1406 = vld [vmem:[#allocation8 + $0x5e8] sm:$0xff]
    %v1407 = vld [vmem:[#allocation8 + $0x5f0] sm:$0xff]
    %v1408 = vld [vmem:[#allocation8 + $0x5f8] sm:$0xff]
    %v1409 = vld [vmem:[#allocation8 + $0x600] sm:$0xff]
    %v1410 = vld [vmem:[#allocation8 + $0x608] sm:$0xff]
    %v1411 = vld [vmem:[#allocation8 + $0x610] sm:$0xff]
    %v1412 = vld [vmem:[#allocation8 + $0x618] sm:$0xff]
    %v1413 = vld [vmem:[#allocation8 + $0x620] sm:$0xff]
    %v1414 = vld [vmem:[#allocation8 + $0x628] sm:$0xff]
    %v1415 = vld [vmem:[#allocation8 + $0x630] sm:$0xff]
    %v1416 = vld [vmem:[#allocation8 + $0x638] sm:$0xff]
    %v1417 = vld [vmem:[#allocation8 + $0x640] sm:$0xff]
    %v1418 = vld [vmem:[#allocation8 + $0x648] sm:$0xff]
    %v1419 = vld [vmem:[#allocation8 + $0x650] sm:$0xff]
    %v1420 = vld [vmem:[#allocation8 + $0x658] sm:$0xff]
    %v1421 = vld [vmem:[#allocation8 + $0x660] sm:$0xff]
    %v1422 = vld [vmem:[#allocation8 + $0x668] sm:$0xff]
    %v1423 = vld [vmem:[#allocation8 + $0x670] sm:$0xff]
    %v1424 = vld [vmem:[#allocation8 + $0x678] sm:$0xff]
    %v1425 = vld [vmem:[#allocation8 + $0x680] sm:$0xff]
    %v1426 = vld [vmem:[#allocation8 + $0x688] sm:$0xff]
    %v1427 = vld [vmem:[#allocation8 + $0x690] sm:$0xff]
    %v1428 = vld [vmem:[#allocation8 + $0x698] sm:$0xff]
    %v1429 = vld [vmem:[#allocation8 + $0x6a0] sm:$0xff]
    %v1430 = vld [vmem:[#allocation8 + $0x6a8] sm:$0xff]
    %v1431 = vld [vmem:[#allocation8 + $0x6b0] sm:$0xff]
    %v1432 = vld [vmem:[#allocation8 + $0x6b8] sm:$0xff]
    %v1433 = vld [vmem:[#allocation8 + $0x6c0] sm:$0xff]
    %v1434 = vld [vmem:[#allocation8 + $0x6c8] sm:$0xff]
    %v1435 = vld [vmem:[#allocation8 + $0x6d0] sm:$0xff]
    %v1436 = vld [vmem:[#allocation8 + $0x6d8] sm:$0xff]
    %v1437 = vld [vmem:[#allocation8 + $0x6e0] sm:$0xff]
    %v1438 = vld [vmem:[#allocation8 + $0x6e8] sm:$0xff]
    %v1439 = vld [vmem:[#allocation8 + $0x6f0] sm:$0xff]
    %v1440 = vld [vmem:[#allocation8 + $0x6f8] sm:$0xff]
    %v1441 = vld [vmem:[#allocation8 + $0x700] sm:$0xff]
    %v1442 = vld [vmem:[#allocation8 + $0x708] sm:$0xff]
    %v1443 = vld [vmem:[#allocation8 + $0x710] sm:$0xff]
    %v1444 = vld [vmem:[#allocation8 + $0x718] sm:$0xff]
    %v1445 = vld [vmem:[#allocation8 + $0x720] sm:$0xff]
    %v1446 = vld [vmem:[#allocation8 + $0x728] sm:$0xff]
    %v1447 = vld [vmem:[#allocation8 + $0x730] sm:$0xff]
    %v1448 = vld [vmem:[#allocation8 + $0x738] sm:$0xff]
    %v1449 = vld [vmem:[#allocation8 + $0x740] sm:$0xff]
    %v1450 = vld [vmem:[#allocation8 + $0x748] sm:$0xff]
    %v1451 = vld [vmem:[#allocation8 + $0x750] sm:$0xff]
    %v1452 = vld [vmem:[#allocation8 + $0x758] sm:$0xff]
    %v1453 = vld [vmem:[#allocation8 + $0x760] sm:$0xff]
    %v1454 = vld [vmem:[#allocation8 + $0x768] sm:$0xff]
    %v1455 = vld [vmem:[#allocation8 + $0x770] sm:$0xff]
    %v1456 = vld [vmem:[#allocation8 + $0x778] sm:$0xff]
    %v1457 = vld [vmem:[#allocation8 + $0x780] sm:$0xff]
    %v1458 = vld [vmem:[#allocation8 + $0x788] sm:$0xff]
    %v1459 = vld [vmem:[#allocation8 + $0x790] sm:$0xff]
    %v1460 = vld [vmem:[#allocation8 + $0x798] sm:$0xff]
    %v1461 = vld [vmem:[#allocation8 + $0x7a0] sm:$0xff]
    %v1462 = vld [vmem:[#allocation8 + $0x7a8] sm:$0xff]
    %v1463 = vld [vmem:[#allocation8 + $0x7b0] sm:$0xff]
    %v1464 = vld [vmem:[#allocation8 + $0x7b8] sm:$0xff]
    %v1465 = vld [vmem:[#allocation8 + $0x7c0] sm:$0xff]
    %v1466 = vld [vmem:[#allocation8 + $0x7c8] sm:$0xff]
    %v1467 = vld [vmem:[#allocation8 + $0x7d0] sm:$0xff]
    %v1468 = vld [vmem:[#allocation8 + $0x7d8] sm:$0xff]
    %v1469 = vld [vmem:[#allocation8 + $0x7e0] sm:$0xff]
    %v1470 = vld [vmem:[#allocation8 + $0x7e8] sm:$0xff]
    %v1471 = vld [vmem:[#allocation8 + $0x7f0] sm:$0xff]
    %v1472 = vld [vmem:[#allocation8 + $0x7f8] sm:$0xff]
    %v1473 = vld [vmem:[#allocation8 + $0x800] sm:$0xff]
    %v1474 = vld [vmem:[#allocation8 + $0x808] sm:$0xff]
    %v1475 = vld [vmem:[#allocation8 + $0x810] sm:$0xff]
    %v1476 = vld [vmem:[#allocation8 + $0x818] sm:$0xff]
    %v1477 = vld [vmem:[#allocation8 + $0x820] sm:$0xff]
    %v1478 = vld [vmem:[#allocation8 + $0x828] sm:$0xff]
    %v1479 = vld [vmem:[#allocation8 + $0x830] sm:$0xff]
    %v1480 = vld [vmem:[#allocation8 + $0x838] sm:$0xff]
    %v1481 = vld [vmem:[#allocation8 + $0x840] sm:$0xff]
    %v1482 = vld [vmem:[#allocation8 + $0x848] sm:$0xff]
    %v1483 = vld [vmem:[#allocation8 + $0x850] sm:$0xff]
    %v1484 = vld [vmem:[#allocation8 + $0x858] sm:$0xff]
    %v1485 = vld [vmem:[#allocation8 + $0x860] sm:$0xff]
    %v1486 = vld [vmem:[#allocation8 + $0x868] sm:$0xff]
    %v1487 = vld [vmem:[#allocation8 + $0x870] sm:$0xff]
    %v1488 = vld [vmem:[#allocation8 + $0x878] sm:$0xff]
    %v1489 = vld [vmem:[#allocation8 + $0x880] sm:$0xff]
    %v1490 = vld [vmem:[#allocation8 + $0x888] sm:$0xff]
    %v1491 = vld [vmem:[#allocation8 + $0x890] sm:$0xff]
    %v1492 = vld [vmem:[#allocation8 + $0x898] sm:$0xff]
    %v1493 = vld [vmem:[#allocation8 + $0x8a0] sm:$0xff]
    %v1494 = vld [vmem:[#allocation8 + $0x8a8] sm:$0xff]
    %v1495 = vld [vmem:[#allocation8 + $0x8b0] sm:$0xff]
    %v1496 = vld [vmem:[#allocation8 + $0x8b8] sm:$0xff]
    %v1497 = vld [vmem:[#allocation8 + $0x8c0] sm:$0xff]
    %v1498 = vld [vmem:[#allocation8 + $0x8c8] sm:$0xff]
    %v1499 = vld [vmem:[#allocation8 + $0x8d0] sm:$0xff]
    %v1500 = vld [vmem:[#allocation8 + $0x8d8] sm:$0xff]
    %v1501 = vld [vmem:[#allocation8 + $0x8e0] sm:$0xff]
    %v1502 = vld [vmem:[#allocation8 + $0x8e8] sm:$0xff]
    %v1503 = vld [vmem:[#allocation8 + $0x8f0] sm:$0xff]
    %v1504 = vld [vmem:[#allocation8 + $0x8f8] sm:$0xff]
    %v1505 = vld [vmem:[#allocation8 + $0x900] sm:$0xff]
    %v1506 = vld [vmem:[#allocation8 + $0x908] sm:$0xff]
    %v1507 = vld [vmem:[#allocation8 + $0x910] sm:$0xff]
    %v1508 = vld [vmem:[#allocation8 + $0x918] sm:$0xff]
    %v1509 = vld [vmem:[#allocation8 + $0x920] sm:$0xff]
    %v1510 = vld [vmem:[#allocation8 + $0x928] sm:$0xff]
    %v1511 = vld [vmem:[#allocation8 + $0x930] sm:$0xff]
    %v1512 = vld [vmem:[#allocation8 + $0x938] sm:$0xff]
    %v1513 = vld [vmem:[#allocation8 + $0x940] sm:$0xff]
    %v1514 = vld [vmem:[#allocation8 + $0x948] sm:$0xff]
    %v1515 = vld [vmem:[#allocation8 + $0x950] sm:$0xff]
    %v1516 = vld [vmem:[#allocation8 + $0x958] sm:$0xff]
    %v1517 = vld [vmem:[#allocation8 + $0x960] sm:$0xff]
    %v1518 = vld [vmem:[#allocation8 + $0x968] sm:$0xff]
    %v1519 = vld [vmem:[#allocation8 + $0x970] sm:$0xff]
    %v1520 = vld [vmem:[#allocation8 + $0x978] sm:$0xff]
    %v1521 = vld [vmem:[#allocation8 + $0x980] sm:$0xff]
    %v1522 = vld [vmem:[#allocation8 + $0x988] sm:$0xff]
    %v1523 = vld [vmem:[#allocation8 + $0x990] sm:$0xff]
    %v1524 = vld [vmem:[#allocation8 + $0x998] sm:$0xff]
    %v1525 = vld [vmem:[#allocation8 + $0x9a0] sm:$0xff]
    %v1526 = vld [vmem:[#allocation8 + $0x9a8] sm:$0xff]
    %v1527 = vld [vmem:[#allocation8 + $0x9b0] sm:$0xff]
    %v1528 = vld [vmem:[#allocation8 + $0x9b8] sm:$0xff]
    %v1529 = vld [vmem:[#allocation8 + $0x9c0] sm:$0xff]
    %v1530 = vld [vmem:[#allocation8 + $0x9c8] sm:$0xff]
    %v1531 = vld [vmem:[#allocation8 + $0x9d0] sm:$0xff]
    %v1532 = vld [vmem:[#allocation8 + $0x9d8] sm:$0xff]
    %v1533 = vld [vmem:[#allocation8 + $0x9e0] sm:$0xff]
    %v1534 = vld [vmem:[#allocation8 + $0x9e8] sm:$0xff]
    %v1535 = vld [vmem:[#allocation8 + $0x9f0] sm:$0xff]
    %v1536 = vld [vmem:[#allocation8 + $0x9f8] sm:$0xff]
    %v1537 = vld [vmem:[#allocation8 + $0xa00] sm:$0xff]
    %v1538 = vld [vmem:[#allocation8 + $0xa08] sm:$0xff]
    %v1539 = vld [vmem:[#allocation8 + $0xa10] sm:$0xff]
    %v1540 = vld [vmem:[#allocation8 + $0xa18] sm:$0xff]
    %v1541 = vld [vmem:[#allocation8 + $0xa20] sm:$0xff]
    %v1542 = vld [vmem:[#allocation8 + $0xa28] sm:$0xff]
    %v1543 = vld [vmem:[#allocation8 + $0xa30] sm:$0xff]
    %v1544 = vld [vmem:[#allocation8 + $0xa38] sm:$0xff]
    %v1545 = vld [vmem:[#allocation8 + $0xa40] sm:$0xff]
    %v1546 = vld [vmem:[#allocation8 + $0xa48] sm:$0xff]
    %v1547 = vld [vmem:[#allocation8 + $0xa50] sm:$0xff]
    %v1548 = vld [vmem:[#allocation8 + $0xa58] sm:$0xff]
    %v1549 = vld [vmem:[#allocation8 + $0xa60] sm:$0xff]
    %v1550 = vld [vmem:[#allocation8 + $0xa68] sm:$0xff]
    %v1551 = vld [vmem:[#allocation8 + $0xa70] sm:$0xff]
    %v1552 = vld [vmem:[#allocation8 + $0xa78] sm:$0xff]
    %v1553 = vld [vmem:[#allocation8 + $0xa80] sm:$0xff]
    %v1554 = vld [vmem:[#allocation8 + $0xa88] sm:$0xff]
    %v1555 = vld [vmem:[#allocation8 + $0xa90] sm:$0xff]
    %v1556 = vld [vmem:[#allocation8 + $0xa98] sm:$0xff]
    %v1557 = vld [vmem:[#allocation8 + $0xaa0] sm:$0xff]
    %v1558 = vld [vmem:[#allocation8 + $0xaa8] sm:$0xff]
    %v1559 = vld [vmem:[#allocation8 + $0xab0] sm:$0xff]
    %v1560 = vld [vmem:[#allocation8 + $0xab8] sm:$0xff]
    %v1561 = vld [vmem:[#allocation8 + $0xac0] sm:$0xff]
    %v1562 = vld [vmem:[#allocation8 + $0xac8] sm:$0xff]
    %v1563 = vld [vmem:[#allocation8 + $0xad0] sm:$0xff]
    %v1564 = vld [vmem:[#allocation8 + $0xad8] sm:$0xff]
    %v1565 = vld [vmem:[#allocation8 + $0xae0] sm:$0xff]
    %v1566 = vld [vmem:[#allocation8 + $0xae8] sm:$0xff]
    %v1567 = vld [vmem:[#allocation8 + $0xaf0] sm:$0xff]
    %v1568 = vld [vmem:[#allocation8 + $0xaf8] sm:$0xff]
    %v1569 = vld [vmem:[#allocation8 + $0xb00] sm:$0xff]
    %v1570 = vld [vmem:[#allocation8 + $0xb08] sm:$0xff]
    %v1571 = vld [vmem:[#allocation8 + $0xb10] sm:$0xff]
    %v1572 = vld [vmem:[#allocation8 + $0xb18] sm:$0xff]
    %v1573 = vld [vmem:[#allocation8 + $0xb20] sm:$0xff]
    %v1574 = vld [vmem:[#allocation8 + $0xb28] sm:$0xff]
    %v1575 = vld [vmem:[#allocation8 + $0xb30] sm:$0xff]
    %v1576 = vld [vmem:[#allocation8 + $0xb38] sm:$0xff]
    %v1577 = vld [vmem:[#allocation8 + $0xb40] sm:$0xff]
    %v1578 = vld [vmem:[#allocation8 + $0xb48] sm:$0xff]
    %v1579 = vld [vmem:[#allocation8 + $0xb50] sm:$0xff]
    %v1580 = vld [vmem:[#allocation8 + $0xb58] sm:$0xff]
    %v1581 = vld [vmem:[#allocation8 + $0xb60] sm:$0xff]
    %v1582 = vld [vmem:[#allocation8 + $0xb68] sm:$0xff]
    %v1583 = vld [vmem:[#allocation8 + $0xb70] sm:$0xff]
    %v1584 = vld [vmem:[#allocation8 + $0xb78] sm:$0xff]
    %v1585 = vld [vmem:[#allocation8 + $0xb80] sm:$0xff]
    %v1586 = vld [vmem:[#allocation8 + $0xb88] sm:$0xff]
    %v1587 = vld [vmem:[#allocation8 + $0xb90] sm:$0xff]
    %v1588 = vld [vmem:[#allocation8 + $0xb98] sm:$0xff]
    %v1589 = vld [vmem:[#allocation8 + $0xba0] sm:$0xff]
    %v1590 = vld [vmem:[#allocation8 + $0xba8] sm:$0xff]
    %v1591 = vld [vmem:[#allocation8 + $0xbb0] sm:$0xff]
    %v1592 = vld [vmem:[#allocation8 + $0xbb8] sm:$0xff]
    %v1593 = vld [vmem:[#allocation8 + $0xbc0] sm:$0xff]
    %v1594 = vld [vmem:[#allocation8 + $0xbc8] sm:$0xff]
    %v1595 = vld [vmem:[#allocation8 + $0xbd0] sm:$0xff]
    %v1596 = vld [vmem:[#allocation8 + $0xbd8] sm:$0xff]
    %v1597 = vld [vmem:[#allocation8 + $0xbe0] sm:$0xff]
    %v1598 = vld [vmem:[#allocation8 + $0xbe8] sm:$0xff]
    %v1599 = vld [vmem:[#allocation8 + $0xbf0] sm:$0xff]
    %v1600 = vld [vmem:[#allocation8 + $0xbf8] sm:$0xff]
    %v1601 = vld [vmem:[#allocation8 + $0xc00] sm:$0xff]
    %v1602 = vld [vmem:[#allocation8 + $0xc08] sm:$0xff]
    %v1603 = vld [vmem:[#allocation8 + $0xc10] sm:$0xff]
    %v1604 = vld [vmem:[#allocation8 + $0xc18] sm:$0xff]
    %v1605 = vld [vmem:[#allocation8 + $0xc20] sm:$0xff]
    %v1606 = vld [vmem:[#allocation8 + $0xc28] sm:$0xff]
    %v1607 = vld [vmem:[#allocation8 + $0xc30] sm:$0xff]
    %v1608 = vld [vmem:[#allocation8 + $0xc38] sm:$0xff]
    %v1609 = vld [vmem:[#allocation8 + $0xc40] sm:$0xff]
    %v1610 = vld [vmem:[#allocation8 + $0xc48] sm:$0xff]
    %v1611 = vld [vmem:[#allocation8 + $0xc50] sm:$0xff]
    %v1612 = vld [vmem:[#allocation8 + $0xc58] sm:$0xff]
    %v1613 = vld [vmem:[#allocation8 + $0xc60] sm:$0xff]
    %v1614 = vld [vmem:[#allocation8 + $0xc68] sm:$0xff]
    %v1615 = vld [vmem:[#allocation8 + $0xc70] sm:$0xff]
    %v1616 = vld [vmem:[#allocation8 + $0xc78] sm:$0xff]
    %v1617 = vld [vmem:[#allocation8 + $0xc80] sm:$0xff]
    %v1618 = vld [vmem:[#allocation8 + $0xc88] sm:$0xff]
    %v1619 = vld [vmem:[#allocation8 + $0xc90] sm:$0xff]
    %v1620 = vld [vmem:[#allocation8 + $0xc98] sm:$0xff]
    %v1621 = vld [vmem:[#allocation8 + $0xca0] sm:$0xff]
    %v1622 = vld [vmem:[#allocation8 + $0xca8] sm:$0xff]
    %v1623 = vld [vmem:[#allocation8 + $0xcb0] sm:$0xff]
    %v1624 = vld [vmem:[#allocation8 + $0xcb8] sm:$0xff]
    %v1625 = vld [vmem:[#allocation8 + $0xcc0] sm:$0xff]
    %v1626 = vld [vmem:[#allocation8 + $0xcc8] sm:$0xff]
    %v1627 = vld [vmem:[#allocation8 + $0xcd0] sm:$0xff]
    %v1628 = vld [vmem:[#allocation8 + $0xcd8] sm:$0xff]
    %v1629 = vld [vmem:[#allocation8 + $0xce0] sm:$0xff]
    %v1630 = vld [vmem:[#allocation8 + $0xce8] sm:$0xff]
    %v1631 = vld [vmem:[#allocation8 + $0xcf0] sm:$0xff]
    %v1632 = vld [vmem:[#allocation8 + $0xcf8] sm:$0xff]
    %v1633 = vld [vmem:[#allocation8 + $0xd00] sm:$0xff]
    %v1634 = vld [vmem:[#allocation8 + $0xd08] sm:$0xff]
    %v1635 = vld [vmem:[#allocation8 + $0xd10] sm:$0xff]
    %v1636 = vld [vmem:[#allocation8 + $0xd18] sm:$0xff]
    %v1637 = vld [vmem:[#allocation8 + $0xd20] sm:$0xff]
    %v1638 = vld [vmem:[#allocation8 + $0xd28] sm:$0xff]
    %v1639 = vld [vmem:[#allocation8 + $0xd30] sm:$0xff]
    %v1640 = vld [vmem:[#allocation8 + $0xd38] sm:$0xff]
    %v1641 = vld [vmem:[#allocation8 + $0xd40] sm:$0xff]
    %v1642 = vld [vmem:[#allocation8 + $0xd48] sm:$0xff]
    %v1643 = vld [vmem:[#allocation8 + $0xd50] sm:$0xff]
    %v1644 = vld [vmem:[#allocation8 + $0xd58] sm:$0xff]
    %v1645 = vld [vmem:[#allocation8 + $0xd60] sm:$0xff]
    %v1646 = vld [vmem:[#allocation8 + $0xd68] sm:$0xff]
    %v1647 = vld [vmem:[#allocation8 + $0xd70] sm:$0xff]
    %v1648 = vld [vmem:[#allocation8 + $0xd78] sm:$0xff]
    %v1649 = vld [vmem:[#allocation8 + $0xd80] sm:$0xff]
    %v1650 = vld [vmem:[#allocation8 + $0xd88] sm:$0xff]
    %v1651 = vld [vmem:[#allocation8 + $0xd90] sm:$0xff]
    %v1652 = vld [vmem:[#allocation8 + $0xd98] sm:$0xff]
    %v1653 = vld [vmem:[#allocation8 + $0xda0] sm:$0xff]
    %v1654 = vld [vmem:[#allocation8 + $0xda8] sm:$0xff]
    %v1655 = vld [vmem:[#allocation8 + $0xdb0] sm:$0xff]
    %v1656 = vld [vmem:[#allocation8 + $0xdb8] sm:$0xff]
    %v1657 = vld [vmem:[#allocation8 + $0xdc0] sm:$0xff]
    %v1658 = vld [vmem:[#allocation8 + $0xdc8] sm:$0xff]
    %v1659 = vld [vmem:[#allocation8 + $0xdd0] sm:$0xff]
    %v1660 = vld [vmem:[#allocation8 + $0xdd8] sm:$0xff]
    %v1661 = vld [vmem:[#allocation8 + $0xde0] sm:$0xff]
    %v1662 = vld [vmem:[#allocation8 + $0xde8] sm:$0xff]
    %v1663 = vld [vmem:[#allocation8 + $0xdf0] sm:$0xff]
    %v1664 = vld [vmem:[#allocation8 + $0xdf8] sm:$0xff]
    %v1665 = vld [vmem:[#allocation8 + $0xe00] sm:$0xff]
    %v1666 = vld [vmem:[#allocation8 + $0xe08] sm:$0xff]
    %v1667 = vld [vmem:[#allocation8 + $0xe10] sm:$0xff]
    %v1668 = vld [vmem:[#allocation8 + $0xe18] sm:$0xff]
    %v1669 = vld [vmem:[#allocation8 + $0xe20] sm:$0xff]
    %v1670 = vld [vmem:[#allocation8 + $0xe28] sm:$0xff]
    %v1671 = vld [vmem:[#allocation8 + $0xe30] sm:$0xff]
    %v1672 = vld [vmem:[#allocation8 + $0xe38] sm:$0xff]
    %v1673 = vld [vmem:[#allocation8 + $0xe40] sm:$0xff]
    %v1674 = vld [vmem:[#allocation8 + $0xe48] sm:$0xff]
    %v1675 = vld [vmem:[#allocation8 + $0xe50] sm:$0xff]
    %v1676 = vld [vmem:[#allocation8 + $0xe58] sm:$0xff]
    %v1677 = vld [vmem:[#allocation8 + $0xe60] sm:$0xff]
    %v1678 = vld [vmem:[#allocation8 + $0xe68] sm:$0xff]
    %v1679 = vld [vmem:[#allocation8 + $0xe70] sm:$0xff]
    %v1680 = vld [vmem:[#allocation8 + $0xe78] sm:$0xff]
    %v1681 = vld [vmem:[#allocation8 + $0xe80] sm:$0xff]
    %v1682 = vld [vmem:[#allocation8 + $0xe88] sm:$0xff]
    %v1683 = vld [vmem:[#allocation8 + $0xe90] sm:$0xff]
    %v1684 = vld [vmem:[#allocation8 + $0xe98] sm:$0xff]
    %v1685 = vld [vmem:[#allocation8 + $0xea0] sm:$0xff]
    %v1686 = vld [vmem:[#allocation8 + $0xea8] sm:$0xff]
    %v1687 = vld [vmem:[#allocation8 + $0xeb0] sm:$0xff]
    %v1688 = vld [vmem:[#allocation8 + $0xeb8] sm:$0xff]
    %v1689 = vld [vmem:[#allocation8 + $0xec0] sm:$0xff]
    %v1690 = vld [vmem:[#allocation8 + $0xec8] sm:$0xff]
    %v1691 = vld [vmem:[#allocation8 + $0xed0] sm:$0xff]
    %v1692 = vld [vmem:[#allocation8 + $0xed8] sm:$0xff]
    %v1693 = vld [vmem:[#allocation8 + $0xee0] sm:$0xff]
    %v1694 = vld [vmem:[#allocation8 + $0xee8] sm:$0xff]
    %v1695 = vld [vmem:[#allocation8 + $0xef0] sm:$0xff]
    %v1696 = vld [vmem:[#allocation8 + $0xef8] sm:$0xff]
    %v1697 = vld [vmem:[#allocation8 + $0xf00] sm:$0xff]
    %v1698 = vld [vmem:[#allocation8 + $0xf08] sm:$0xff]
    %v1699 = vld [vmem:[#allocation8 + $0xf10] sm:$0xff]
    %v1700 = vld [vmem:[#allocation8 + $0xf18] sm:$0xff]
    %v1701 = vld [vmem:[#allocation8 + $0xf20] sm:$0xff]
    %v1702 = vld [vmem:[#allocation8 + $0xf28] sm:$0xff]
    %v1703 = vld [vmem:[#allocation8 + $0xf30] sm:$0xff]
    %v1704 = vld [vmem:[#allocation8 + $0xf38] sm:$0xff]
    %v1705 = vld [vmem:[#allocation8 + $0xf40] sm:$0xff]
    %v1706 = vld [vmem:[#allocation8 + $0xf48] sm:$0xff]
    %v1707 = vld [vmem:[#allocation8 + $0xf50] sm:$0xff]
    %v1708 = vld [vmem:[#allocation8 + $0xf58] sm:$0xff]
    %v1709 = vld [vmem:[#allocation8 + $0xf60] sm:$0xff]
    %v1710 = vld [vmem:[#allocation8 + $0xf68] sm:$0xff]
    %v1711 = vld [vmem:[#allocation8 + $0xf70] sm:$0xff]
    %v1712 = vld [vmem:[#allocation8 + $0xf78] sm:$0xff]
    %v1713 = vld [vmem:[#allocation8 + $0xf80] sm:$0xff]
    %v1714 = vld [vmem:[#allocation8 + $0xf88] sm:$0xff]
    %v1715 = vld [vmem:[#allocation8 + $0xf90] sm:$0xff]
    %v1716 = vld [vmem:[#allocation8 + $0xf98] sm:$0xff]
    %v1717 = vld [vmem:[#allocation8 + $0xfa0] sm:$0xff]
    %v1718 = vld [vmem:[#allocation8 + $0xfa8] sm:$0xff]
    %v1719 = vld [vmem:[#allocation8 + $0xfb0] sm:$0xff]
    %v1720 = vld [vmem:[#allocation8 + $0xfb8] sm:$0xff]
    %v1721 = vld [vmem:[#allocation8 + $0xfc0] sm:$0xff]
    %v1722 = vld [vmem:[#allocation8 + $0xfc8] sm:$0xff]
    %v1723 = vld [vmem:[#allocation8 + $0xfd0] sm:$0xff]
    %v1724 = vld [vmem:[#allocation8 + $0xfd8] sm:$0xff]
    %v1725 = vld [vmem:[#allocation8 + $0xfe0] sm:$0xff]
    %v1726 = vld [vmem:[#allocation8 + $0xfe8] sm:$0xff]
    %v1727 = vld [vmem:[#allocation8 + $0xff0] sm:$0xff]
    %v1728 = vld [vmem:[#allocation8 + $0xff8] sm:$0xff]
    %v1729 = vld [vmem:[#allocation10] sm:$0xf]
    %v1731 = vperm.slane %v1729, 0
    %v1732 = vperm.slane %v1729, 1
    %v1733 = vperm.slane %v1729, 2
    %v1734 = vperm.slane %v1729, 3
    %v2251 = vunpack.c.l.b16 %v1217
    %v2252 = vunpack.c.h.b16 %v1217
    %v2253 = vunpack.c.l.b16 %v1218
    %v2254 = vunpack.c.h.b16 %v1218
    %v2255 = vunpack.c.l.b16 %v1219
    %v2256 = vunpack.c.h.b16 %v1219
    %v2257 = vunpack.c.l.b16 %v1220
    %v2258 = vunpack.c.h.b16 %v1220
    %v2259 = vunpack.c.l.b16 %v1221
    %v2260 = vunpack.c.h.b16 %v1221
    %v2261 = vunpack.c.l.b16 %v1222
    %v2262 = vunpack.c.h.b16 %v1222
    %v2263 = vunpack.c.l.b16 %v1223
    %v2264 = vunpack.c.h.b16 %v1223
    %v2265 = vunpack.c.l.b16 %v1224
    %v2266 = vunpack.c.h.b16 %v1224
    %v2267 = vunpack.c.l.b16 %v1225
    %v2268 = vunpack.c.h.b16 %v1225
    %v2269 = vunpack.c.l.b16 %v1226
    %v2270 = vunpack.c.h.b16 %v1226
    %v2271 = vunpack.c.l.b16 %v1227
    %v2272 = vunpack.c.h.b16 %v1227
    %v2273 = vunpack.c.l.b16 %v1228
    %v2274 = vunpack.c.h.b16 %v1228
    %v2275 = vunpack.c.l.b16 %v1229
    %v2276 = vunpack.c.h.b16 %v1229
    %v2277 = vunpack.c.l.b16 %v1230
    %v2278 = vunpack.c.h.b16 %v1230
    %v2279 = vunpack.c.l.b16 %v1231
    %v2280 = vunpack.c.h.b16 %v1231
    %v2281 = vunpack.c.l.b16 %v1232
    %v2282 = vunpack.c.h.b16 %v1232
    %v2283 = vunpack.c.l.b16 %v1233
    %v2284 = vunpack.c.h.b16 %v1233
    %v2285 = vunpack.c.l.b16 %v1234
    %v2286 = vunpack.c.h.b16 %v1234
    %v2287 = vunpack.c.l.b16 %v1235
    %v2288 = vunpack.c.h.b16 %v1235
    %v2289 = vunpack.c.l.b16 %v1236
    %v2290 = vunpack.c.h.b16 %v1236
    %v2291 = vunpack.c.l.b16 %v1237
    %v2292 = vunpack.c.h.b16 %v1237
    %v2293 = vunpack.c.l.b16 %v1238
    %v2294 = vunpack.c.h.b16 %v1238
    %v2295 = vunpack.c.l.b16 %v1239
    %v2296 = vunpack.c.h.b16 %v1239
    %v2297 = vunpack.c.l.b16 %v1240
    %v2298 = vunpack.c.h.b16 %v1240
    %v2299 = vunpack.c.l.b16 %v1241
    %v2300 = vunpack.c.h.b16 %v1241
    %v2301 = vunpack.c.l.b16 %v1242
    %v2302 = vunpack.c.h.b16 %v1242
    %v2303 = vunpack.c.l.b16 %v1243
    %v2304 = vunpack.c.h.b16 %v1243
    %v2305 = vunpack.c.l.b16 %v1244
    %v2306 = vunpack.c.h.b16 %v1244
    %v2307 = vunpack.c.l.b16 %v1245
    %v2308 = vunpack.c.h.b16 %v1245
    %v2309 = vunpack.c.l.b16 %v1246
    %v2310 = vunpack.c.h.b16 %v1246
    %v2311 = vunpack.c.l.b16 %v1247
    %v2312 = vunpack.c.h.b16 %v1247
    %v2313 = vunpack.c.l.b16 %v1248
    %v2314 = vunpack.c.h.b16 %v1248
    %v2315 = vunpack.c.l.b16 %v1249
    %v2316 = vunpack.c.h.b16 %v1249
    %v2317 = vunpack.c.l.b16 %v1250
    %v2318 = vunpack.c.h.b16 %v1250
    %v2319 = vunpack.c.l.b16 %v1251
    %v2320 = vunpack.c.h.b16 %v1251
    %v2321 = vunpack.c.l.b16 %v1252
    %v2322 = vunpack.c.h.b16 %v1252
    %v2323 = vunpack.c.l.b16 %v1253
    %v2324 = vunpack.c.h.b16 %v1253
    %v2325 = vunpack.c.l.b16 %v1254
    %v2326 = vunpack.c.h.b16 %v1254
    %v2327 = vunpack.c.l.b16 %v1255
    %v2328 = vunpack.c.h.b16 %v1255
    %v2329 = vunpack.c.l.b16 %v1256
    %v2330 = vunpack.c.h.b16 %v1256
    %v2331 = vunpack.c.l.b16 %v1257
    %v2332 = vunpack.c.h.b16 %v1257
    %v2333 = vunpack.c.l.b16 %v1258
    %v2334 = vunpack.c.h.b16 %v1258
    %v2335 = vunpack.c.l.b16 %v1259
    %v2336 = vunpack.c.h.b16 %v1259
    %v2337 = vunpack.c.l.b16 %v1260
    %v2338 = vunpack.c.h.b16 %v1260
    %v2339 = vunpack.c.l.b16 %v1261
    %v2340 = vunpack.c.h.b16 %v1261
    %v2341 = vunpack.c.l.b16 %v1262
    %v2342 = vunpack.c.h.b16 %v1262
    %v2343 = vunpack.c.l.b16 %v1263
    %v2344 = vunpack.c.h.b16 %v1263
    %v2345 = vunpack.c.l.b16 %v1264
    %v2346 = vunpack.c.h.b16 %v1264
    %v2347 = vunpack.c.l.b16 %v1265
    %v2348 = vunpack.c.h.b16 %v1265
    %v2349 = vunpack.c.l.b16 %v1266
    %v2350 = vunpack.c.h.b16 %v1266
    %v2351 = vunpack.c.l.b16 %v1267
    %v2352 = vunpack.c.h.b16 %v1267
    %v2353 = vunpack.c.l.b16 %v1268
    %v2354 = vunpack.c.h.b16 %v1268
    %v2355 = vunpack.c.l.b16 %v1269
    %v2356 = vunpack.c.h.b16 %v1269
    %v2357 = vunpack.c.l.b16 %v1270
    %v2358 = vunpack.c.h.b16 %v1270
    %v2359 = vunpack.c.l.b16 %v1271
    %v2360 = vunpack.c.h.b16 %v1271
    %v2361 = vunpack.c.l.b16 %v1272
    %v2362 = vunpack.c.h.b16 %v1272
    %v2363 = vunpack.c.l.b16 %v1273
    %v2364 = vunpack.c.h.b16 %v1273
    %v2365 = vunpack.c.l.b16 %v1274
    %v2366 = vunpack.c.h.b16 %v1274
    %v2367 = vunpack.c.l.b16 %v1275
    %v2368 = vunpack.c.h.b16 %v1275
    %v2369 = vunpack.c.l.b16 %v1276
    %v2370 = vunpack.c.h.b16 %v1276
    %v2371 = vunpack.c.l.b16 %v1277
    %v2372 = vunpack.c.h.b16 %v1277
    %v2373 = vunpack.c.l.b16 %v1278
    %v2374 = vunpack.c.h.b16 %v1278
    %v2375 = vunpack.c.l.b16 %v1279
    %v2376 = vunpack.c.h.b16 %v1279
    %v2377 = vunpack.c.l.b16 %v1280
    %v2378 = vunpack.c.h.b16 %v1280
    %v2379 = vunpack.c.l.b16 %v1281
    %v2380 = vunpack.c.h.b16 %v1281
    %v2381 = vunpack.c.l.b16 %v1282
    %v2382 = vunpack.c.h.b16 %v1282
    %v2383 = vunpack.c.l.b16 %v1283
    %v2384 = vunpack.c.h.b16 %v1283
    %v2385 = vunpack.c.l.b16 %v1284
    %v2386 = vunpack.c.h.b16 %v1284
    %v2387 = vunpack.c.l.b16 %v1285
    %v2388 = vunpack.c.h.b16 %v1285
    %v2389 = vunpack.c.l.b16 %v1286
    %v2390 = vunpack.c.h.b16 %v1286
    %v2391 = vunpack.c.l.b16 %v1287
    %v2392 = vunpack.c.h.b16 %v1287
    %v2393 = vunpack.c.l.b16 %v1288
    %v2394 = vunpack.c.h.b16 %v1288
    %v2395 = vunpack.c.l.b16 %v1289
    %v2396 = vunpack.c.h.b16 %v1289
    %v2397 = vunpack.c.l.b16 %v1290
    %v2398 = vunpack.c.h.b16 %v1290
    %v2399 = vunpack.c.l.b16 %v1291
    %v2400 = vunpack.c.h.b16 %v1291
    %v2401 = vunpack.c.l.b16 %v1292
    %v2402 = vunpack.c.h.b16 %v1292
    %v2403 = vunpack.c.l.b16 %v1293
    %v2404 = vunpack.c.h.b16 %v1293
    %v2405 = vunpack.c.l.b16 %v1294
    %v2406 = vunpack.c.h.b16 %v1294
    %v2407 = vunpack.c.l.b16 %v1295
    %v2408 = vunpack.c.h.b16 %v1295
    %v2409 = vunpack.c.l.b16 %v1296
    %v2410 = vunpack.c.h.b16 %v1296
    %v2411 = vunpack.c.l.b16 %v1297
    %v2412 = vunpack.c.h.b16 %v1297
    %v2413 = vunpack.c.l.b16 %v1298
    %v2414 = vunpack.c.h.b16 %v1298
    %v2415 = vunpack.c.l.b16 %v1299
    %v2416 = vunpack.c.h.b16 %v1299
    %v2417 = vunpack.c.l.b16 %v1300
    %v2418 = vunpack.c.h.b16 %v1300
    %v2419 = vunpack.c.l.b16 %v1301
    %v2420 = vunpack.c.h.b16 %v1301
    %v2421 = vunpack.c.l.b16 %v1302
    %v2422 = vunpack.c.h.b16 %v1302
    %v2423 = vunpack.c.l.b16 %v1303
    %v2424 = vunpack.c.h.b16 %v1303
    %v2425 = vunpack.c.l.b16 %v1304
    %v2426 = vunpack.c.h.b16 %v1304
    %v2427 = vunpack.c.l.b16 %v1305
    %v2428 = vunpack.c.h.b16 %v1305
    %v2429 = vunpack.c.l.b16 %v1306
    %v2430 = vunpack.c.h.b16 %v1306
    %v2431 = vunpack.c.l.b16 %v1307
    %v2432 = vunpack.c.h.b16 %v1307
    %v2433 = vunpack.c.l.b16 %v1308
    %v2434 = vunpack.c.h.b16 %v1308
    %v2435 = vunpack.c.l.b16 %v1309
    %v2436 = vunpack.c.h.b16 %v1309
    %v2437 = vunpack.c.l.b16 %v1310
    %v2438 = vunpack.c.h.b16 %v1310
    %v2439 = vunpack.c.l.b16 %v1311
    %v2440 = vunpack.c.h.b16 %v1311
    %v2441 = vunpack.c.l.b16 %v1312
    %v2442 = vunpack.c.h.b16 %v1312
    %v2443 = vunpack.c.l.b16 %v1313
    %v2444 = vunpack.c.h.b16 %v1313
    %v2445 = vunpack.c.l.b16 %v1314
    %v2446 = vunpack.c.h.b16 %v1314
    %v2447 = vunpack.c.l.b16 %v1315
    %v2448 = vunpack.c.h.b16 %v1315
    %v2449 = vunpack.c.l.b16 %v1316
    %v2450 = vunpack.c.h.b16 %v1316
    %v2451 = vunpack.c.l.b16 %v1317
    %v2452 = vunpack.c.h.b16 %v1317
    %v2453 = vunpack.c.l.b16 %v1318
    %v2454 = vunpack.c.h.b16 %v1318
    %v2455 = vunpack.c.l.b16 %v1319
    %v2456 = vunpack.c.h.b16 %v1319
    %v2457 = vunpack.c.l.b16 %v1320
    %v2458 = vunpack.c.h.b16 %v1320
    %v2459 = vunpack.c.l.b16 %v1321
    %v2460 = vunpack.c.h.b16 %v1321
    %v2461 = vunpack.c.l.b16 %v1322
    %v2462 = vunpack.c.h.b16 %v1322
    %v2463 = vunpack.c.l.b16 %v1323
    %v2464 = vunpack.c.h.b16 %v1323
    %v2465 = vunpack.c.l.b16 %v1324
    %v2466 = vunpack.c.h.b16 %v1324
    %v2467 = vunpack.c.l.b16 %v1325
    %v2468 = vunpack.c.h.b16 %v1325
    %v2469 = vunpack.c.l.b16 %v1326
    %v2470 = vunpack.c.h.b16 %v1326
    %v2471 = vunpack.c.l.b16 %v1327
    %v2472 = vunpack.c.h.b16 %v1327
    %v2473 = vunpack.c.l.b16 %v1328
    %v2474 = vunpack.c.h.b16 %v1328
    %v2475 = vunpack.c.l.b16 %v1329
    %v2476 = vunpack.c.h.b16 %v1329
    %v2477 = vunpack.c.l.b16 %v1330
    %v2478 = vunpack.c.h.b16 %v1330
    %v2479 = vunpack.c.l.b16 %v1331
    %v2480 = vunpack.c.h.b16 %v1331
    %v2481 = vunpack.c.l.b16 %v1332
    %v2482 = vunpack.c.h.b16 %v1332
    %v2483 = vunpack.c.l.b16 %v1333
    %v2484 = vunpack.c.h.b16 %v1333
    %v2485 = vunpack.c.l.b16 %v1334
    %v2486 = vunpack.c.h.b16 %v1334
    %v2487 = vunpack.c.l.b16 %v1335
    %v2488 = vunpack.c.h.b16 %v1335
    %v2489 = vunpack.c.l.b16 %v1336
    %v2490 = vunpack.c.h.b16 %v1336
    %v2491 = vunpack.c.l.b16 %v1337
    %v2492 = vunpack.c.h.b16 %v1337
    %v2493 = vunpack.c.l.b16 %v1338
    %v2494 = vunpack.c.h.b16 %v1338
    %v2495 = vunpack.c.l.b16 %v1339
    %v2496 = vunpack.c.h.b16 %v1339
    %v2497 = vunpack.c.l.b16 %v1340
    %v2498 = vunpack.c.h.b16 %v1340
    %v2499 = vunpack.c.l.b16 %v1341
    %v2500 = vunpack.c.h.b16 %v1341
    %v2501 = vunpack.c.l.b16 %v1342
    %v2502 = vunpack.c.h.b16 %v1342
    %v2503 = vunpack.c.l.b16 %v1343
    %v2504 = vunpack.c.h.b16 %v1343
    %v2505 = vunpack.c.l.b16 %v1344
    %v2506 = vunpack.c.h.b16 %v1344
    %v2507 = vunpack.c.l.b16 %v1345
    %v2508 = vunpack.c.h.b16 %v1345
    %v2509 = vunpack.c.l.b16 %v1346
    %v2510 = vunpack.c.h.b16 %v1346
    %v2511 = vunpack.c.l.b16 %v1347
    %v2512 = vunpack.c.h.b16 %v1347
    %v2513 = vunpack.c.l.b16 %v1348
    %v2514 = vunpack.c.h.b16 %v1348
    %v2515 = vunpack.c.l.b16 %v1349
    %v2516 = vunpack.c.h.b16 %v1349
    %v2517 = vunpack.c.l.b16 %v1350
    %v2518 = vunpack.c.h.b16 %v1350
    %v2519 = vunpack.c.l.b16 %v1351
    %v2520 = vunpack.c.h.b16 %v1351
    %v2521 = vunpack.c.l.b16 %v1352
    %v2522 = vunpack.c.h.b16 %v1352
    %v2523 = vunpack.c.l.b16 %v1353
    %v2524 = vunpack.c.h.b16 %v1353
    %v2525 = vunpack.c.l.b16 %v1354
    %v2526 = vunpack.c.h.b16 %v1354
    %v2527 = vunpack.c.l.b16 %v1355
    %v2528 = vunpack.c.h.b16 %v1355
    %v2529 = vunpack.c.l.b16 %v1356
    %v2530 = vunpack.c.h.b16 %v1356
    %v2531 = vunpack.c.l.b16 %v1357
    %v2532 = vunpack.c.h.b16 %v1357
    %v2533 = vunpack.c.l.b16 %v1358
    %v2534 = vunpack.c.h.b16 %v1358
    %v2535 = vunpack.c.l.b16 %v1359
    %v2536 = vunpack.c.h.b16 %v1359
    %v2537 = vunpack.c.l.b16 %v1360
    %v2538 = vunpack.c.h.b16 %v1360
    %v2539 = vunpack.c.l.b16 %v1361
    %v2540 = vunpack.c.h.b16 %v1361
    %v2541 = vunpack.c.l.b16 %v1362
    %v2542 = vunpack.c.h.b16 %v1362
    %v2543 = vunpack.c.l.b16 %v1363
    %v2544 = vunpack.c.h.b16 %v1363
    %v2545 = vunpack.c.l.b16 %v1364
    %v2546 = vunpack.c.h.b16 %v1364
    %v2547 = vunpack.c.l.b16 %v1365
    %v2548 = vunpack.c.h.b16 %v1365
    %v2549 = vunpack.c.l.b16 %v1366
    %v2550 = vunpack.c.h.b16 %v1366
    %v2551 = vunpack.c.l.b16 %v1367
    %v2552 = vunpack.c.h.b16 %v1367
    %v2553 = vunpack.c.l.b16 %v1368
    %v2554 = vunpack.c.h.b16 %v1368
    %v2555 = vunpack.c.l.b16 %v1369
    %v2556 = vunpack.c.h.b16 %v1369
    %v2557 = vunpack.c.l.b16 %v1370
    %v2558 = vunpack.c.h.b16 %v1370
    %v2559 = vunpack.c.l.b16 %v1371
    %v2560 = vunpack.c.h.b16 %v1371
    %v2561 = vunpack.c.l.b16 %v1372
    %v2562 = vunpack.c.h.b16 %v1372
    %v2563 = vunpack.c.l.b16 %v1373
    %v2564 = vunpack.c.h.b16 %v1373
    %v2565 = vunpack.c.l.b16 %v1374
    %v2566 = vunpack.c.h.b16 %v1374
    %v2567 = vunpack.c.l.b16 %v1375
    %v2568 = vunpack.c.h.b16 %v1375
    %v2569 = vunpack.c.l.b16 %v1376
    %v2570 = vunpack.c.h.b16 %v1376
    %v2571 = vunpack.c.l.b16 %v1377
    %v2572 = vunpack.c.h.b16 %v1377
    %v2573 = vunpack.c.l.b16 %v1378
    %v2574 = vunpack.c.h.b16 %v1378
    %v2575 = vunpack.c.l.b16 %v1379
    %v2576 = vunpack.c.h.b16 %v1379
    %v2577 = vunpack.c.l.b16 %v1380
    %v2578 = vunpack.c.h.b16 %v1380
    %v2579 = vunpack.c.l.b16 %v1381
    %v2580 = vunpack.c.h.b16 %v1381
    %v2581 = vunpack.c.l.b16 %v1382
    %v2582 = vunpack.c.h.b16 %v1382
    %v2583 = vunpack.c.l.b16 %v1383
    %v2584 = vunpack.c.h.b16 %v1383
    %v2585 = vunpack.c.l.b16 %v1384
    %v2586 = vunpack.c.h.b16 %v1384
    %v2587 = vunpack.c.l.b16 %v1385
    %v2588 = vunpack.c.h.b16 %v1385
    %v2589 = vunpack.c.l.b16 %v1386
    %v2590 = vunpack.c.h.b16 %v1386
    %v2591 = vunpack.c.l.b16 %v1387
    %v2592 = vunpack.c.h.b16 %v1387
    %v2593 = vunpack.c.l.b16 %v1388
    %v2594 = vunpack.c.h.b16 %v1388
    %v2595 = vunpack.c.l.b16 %v1389
    %v2596 = vunpack.c.h.b16 %v1389
    %v2597 = vunpack.c.l.b16 %v1390
    %v2598 = vunpack.c.h.b16 %v1390
    %v2599 = vunpack.c.l.b16 %v1391
    %v2600 = vunpack.c.h.b16 %v1391
    %v2601 = vunpack.c.l.b16 %v1392
    %v2602 = vunpack.c.h.b16 %v1392
    %v2603 = vunpack.c.l.b16 %v1393
    %v2604 = vunpack.c.h.b16 %v1393
    %v2605 = vunpack.c.l.b16 %v1394
    %v2606 = vunpack.c.h.b16 %v1394
    %v2607 = vunpack.c.l.b16 %v1395
    %v2608 = vunpack.c.h.b16 %v1395
    %v2609 = vunpack.c.l.b16 %v1396
    %v2610 = vunpack.c.h.b16 %v1396
    %v2611 = vunpack.c.l.b16 %v1397
    %v2612 = vunpack.c.h.b16 %v1397
    %v2613 = vunpack.c.l.b16 %v1398
    %v2614 = vunpack.c.h.b16 %v1398
    %v2615 = vunpack.c.l.b16 %v1399
    %v2616 = vunpack.c.h.b16 %v1399
    %v2617 = vunpack.c.l.b16 %v1400
    %v2618 = vunpack.c.h.b16 %v1400
    %v2619 = vunpack.c.l.b16 %v1401
    %v2620 = vunpack.c.h.b16 %v1401
    %v2621 = vunpack.c.l.b16 %v1402
    %v2622 = vunpack.c.h.b16 %v1402
    %v2623 = vunpack.c.l.b16 %v1403
    %v2624 = vunpack.c.h.b16 %v1403
    %v2625 = vunpack.c.l.b16 %v1404
    %v2626 = vunpack.c.h.b16 %v1404
    %v2627 = vunpack.c.l.b16 %v1405
    %v2628 = vunpack.c.h.b16 %v1405
    %v2629 = vunpack.c.l.b16 %v1406
    %v2630 = vunpack.c.h.b16 %v1406
    %v2631 = vunpack.c.l.b16 %v1407
    %v2632 = vunpack.c.h.b16 %v1407
    %v2633 = vunpack.c.l.b16 %v1408
    %v2634 = vunpack.c.h.b16 %v1408
    %v2635 = vunpack.c.l.b16 %v1409
    %v2636 = vunpack.c.h.b16 %v1409
    %v2637 = vunpack.c.l.b16 %v1410
    %v2638 = vunpack.c.h.b16 %v1410
    %v2639 = vunpack.c.l.b16 %v1411
    %v2640 = vunpack.c.h.b16 %v1411
    %v2641 = vunpack.c.l.b16 %v1412
    %v2642 = vunpack.c.h.b16 %v1412
    %v2643 = vunpack.c.l.b16 %v1413
    %v2644 = vunpack.c.h.b16 %v1413
    %v2645 = vunpack.c.l.b16 %v1414
    %v2646 = vunpack.c.h.b16 %v1414
    %v2647 = vunpack.c.l.b16 %v1415
    %v2648 = vunpack.c.h.b16 %v1415
    %v2649 = vunpack.c.l.b16 %v1416
    %v2650 = vunpack.c.h.b16 %v1416
    %v2651 = vunpack.c.l.b16 %v1417
    %v2652 = vunpack.c.h.b16 %v1417
    %v2653 = vunpack.c.l.b16 %v1418
    %v2654 = vunpack.c.h.b16 %v1418
    %v2655 = vunpack.c.l.b16 %v1419
    %v2656 = vunpack.c.h.b16 %v1419
    %v2657 = vunpack.c.l.b16 %v1420
    %v2658 = vunpack.c.h.b16 %v1420
    %v2659 = vunpack.c.l.b16 %v1421
    %v2660 = vunpack.c.h.b16 %v1421
    %v2661 = vunpack.c.l.b16 %v1422
    %v2662 = vunpack.c.h.b16 %v1422
    %v2663 = vunpack.c.l.b16 %v1423
    %v2664 = vunpack.c.h.b16 %v1423
    %v2665 = vunpack.c.l.b16 %v1424
    %v2666 = vunpack.c.h.b16 %v1424
    %v2667 = vunpack.c.l.b16 %v1425
    %v2668 = vunpack.c.h.b16 %v1425
    %v2669 = vunpack.c.l.b16 %v1426
    %v2670 = vunpack.c.h.b16 %v1426
    %v2671 = vunpack.c.l.b16 %v1427
    %v2672 = vunpack.c.h.b16 %v1427
    %v2673 = vunpack.c.l.b16 %v1428
    %v2674 = vunpack.c.h.b16 %v1428
    %v2675 = vunpack.c.l.b16 %v1429
    %v2676 = vunpack.c.h.b16 %v1429
    %v2677 = vunpack.c.l.b16 %v1430
    %v2678 = vunpack.c.h.b16 %v1430
    %v2679 = vunpack.c.l.b16 %v1431
    %v2680 = vunpack.c.h.b16 %v1431
    %v2681 = vunpack.c.l.b16 %v1432
    %v2682 = vunpack.c.h.b16 %v1432
    %v2683 = vunpack.c.l.b16 %v1433
    %v2684 = vunpack.c.h.b16 %v1433
    %v2685 = vunpack.c.l.b16 %v1434
    %v2686 = vunpack.c.h.b16 %v1434
    %v2687 = vunpack.c.l.b16 %v1435
    %v2688 = vunpack.c.h.b16 %v1435
    %v2689 = vunpack.c.l.b16 %v1436
    %v2690 = vunpack.c.h.b16 %v1436
    %v2691 = vunpack.c.l.b16 %v1437
    %v2692 = vunpack.c.h.b16 %v1437
    %v2693 = vunpack.c.l.b16 %v1438
    %v2694 = vunpack.c.h.b16 %v1438
    %v2695 = vunpack.c.l.b16 %v1439
    %v2696 = vunpack.c.h.b16 %v1439
    %v2697 = vunpack.c.l.b16 %v1440
    %v2698 = vunpack.c.h.b16 %v1440
    %v2699 = vunpack.c.l.b16 %v1441
    %v2700 = vunpack.c.h.b16 %v1441
    %v2701 = vunpack.c.l.b16 %v1442
    %v2702 = vunpack.c.h.b16 %v1442
    %v2703 = vunpack.c.l.b16 %v1443
    %v2704 = vunpack.c.h.b16 %v1443
    %v2705 = vunpack.c.l.b16 %v1444
    %v2706 = vunpack.c.h.b16 %v1444
    %v2707 = vunpack.c.l.b16 %v1445
    %v2708 = vunpack.c.h.b16 %v1445
    %v2709 = vunpack.c.l.b16 %v1446
    %v2710 = vunpack.c.h.b16 %v1446
    %v2711 = vunpack.c.l.b16 %v1447
    %v2712 = vunpack.c.h.b16 %v1447
    %v2713 = vunpack.c.l.b16 %v1448
    %v2714 = vunpack.c.h.b16 %v1448
    %v2715 = vunpack.c.l.b16 %v1449
    %v2716 = vunpack.c.h.b16 %v1449
    %v2717 = vunpack.c.l.b16 %v1450
    %v2718 = vunpack.c.h.b16 %v1450
    %v2719 = vunpack.c.l.b16 %v1451
    %v2720 = vunpack.c.h.b16 %v1451
    %v2721 = vunpack.c.l.b16 %v1452
    %v2722 = vunpack.c.h.b16 %v1452
    %v2723 = vunpack.c.l.b16 %v1453
    %v2724 = vunpack.c.h.b16 %v1453
    %v2725 = vunpack.c.l.b16 %v1454
    %v2726 = vunpack.c.h.b16 %v1454
    %v2727 = vunpack.c.l.b16 %v1455
    %v2728 = vunpack.c.h.b16 %v1455
    %v2729 = vunpack.c.l.b16 %v1456
    %v2730 = vunpack.c.h.b16 %v1456
    %v2731 = vunpack.c.l.b16 %v1457
    %v2732 = vunpack.c.h.b16 %v1457
    %v2733 = vunpack.c.l.b16 %v1458
    %v2734 = vunpack.c.h.b16 %v1458
    %v2735 = vunpack.c.l.b16 %v1459
    %v2736 = vunpack.c.h.b16 %v1459
    %v2737 = vunpack.c.l.b16 %v1460
    %v2738 = vunpack.c.h.b16 %v1460
    %v2739 = vunpack.c.l.b16 %v1461
    %v2740 = vunpack.c.h.b16 %v1461
    %v2741 = vunpack.c.l.b16 %v1462
    %v2742 = vunpack.c.h.b16 %v1462
    %v2743 = vunpack.c.l.b16 %v1463
    %v2744 = vunpack.c.h.b16 %v1463
    %v2745 = vunpack.c.l.b16 %v1464
    %v2746 = vunpack.c.h.b16 %v1464
    %v2747 = vunpack.c.l.b16 %v1465
    %v2748 = vunpack.c.h.b16 %v1465
    %v2749 = vunpack.c.l.b16 %v1466
    %v2750 = vunpack.c.h.b16 %v1466
    %v2751 = vunpack.c.l.b16 %v1467
    %v2752 = vunpack.c.h.b16 %v1467
    %v2753 = vunpack.c.l.b16 %v1468
    %v2754 = vunpack.c.h.b16 %v1468
    %v2755 = vunpack.c.l.b16 %v1469
    %v2756 = vunpack.c.h.b16 %v1469
    %v2757 = vunpack.c.l.b16 %v1470
    %v2758 = vunpack.c.h.b16 %v1470
    %v2759 = vunpack.c.l.b16 %v1471
    %v2760 = vunpack.c.h.b16 %v1471
    %v2761 = vunpack.c.l.b16 %v1472
    %v2762 = vunpack.c.h.b16 %v1472
    %v2763 = vunpack.c.l.b16 %v1473
    %v2764 = vunpack.c.h.b16 %v1473
    %v2765 = vunpack.c.l.b16 %v1474
    %v2766 = vunpack.c.h.b16 %v1474
    %v2767 = vunpack.c.l.b16 %v1475
    %v2768 = vunpack.c.h.b16 %v1475
    %v2769 = vunpack.c.l.b16 %v1476
    %v2770 = vunpack.c.h.b16 %v1476
    %v2771 = vunpack.c.l.b16 %v1477
    %v2772 = vunpack.c.h.b16 %v1477
    %v2773 = vunpack.c.l.b16 %v1478
    %v2774 = vunpack.c.h.b16 %v1478
    %v2775 = vunpack.c.l.b16 %v1479
    %v2776 = vunpack.c.h.b16 %v1479
    %v2777 = vunpack.c.l.b16 %v1480
    %v2778 = vunpack.c.h.b16 %v1480
    %v2779 = vunpack.c.l.b16 %v1481
    %v2780 = vunpack.c.h.b16 %v1481
    %v2781 = vunpack.c.l.b16 %v1482
    %v2782 = vunpack.c.h.b16 %v1482
    %v2783 = vunpack.c.l.b16 %v1483
    %v2784 = vunpack.c.h.b16 %v1483
    %v2785 = vunpack.c.l.b16 %v1484
    %v2786 = vunpack.c.h.b16 %v1484
    %v2787 = vunpack.c.l.b16 %v1485
    %v2788 = vunpack.c.h.b16 %v1485
    %v2789 = vunpack.c.l.b16 %v1486
    %v2790 = vunpack.c.h.b16 %v1486
    %v2791 = vunpack.c.l.b16 %v1487
    %v2792 = vunpack.c.h.b16 %v1487
    %v2793 = vunpack.c.l.b16 %v1488
    %v2794 = vunpack.c.h.b16 %v1488
    %v2795 = vunpack.c.l.b16 %v1489
    %v2796 = vunpack.c.h.b16 %v1489
    %v2797 = vunpack.c.l.b16 %v1490
    %v2798 = vunpack.c.h.b16 %v1490
    %v2799 = vunpack.c.l.b16 %v1491
    %v2800 = vunpack.c.h.b16 %v1491
    %v2801 = vunpack.c.l.b16 %v1492
    %v2802 = vunpack.c.h.b16 %v1492
    %v2803 = vunpack.c.l.b16 %v1493
    %v2804 = vunpack.c.h.b16 %v1493
    %v2805 = vunpack.c.l.b16 %v1494
    %v2806 = vunpack.c.h.b16 %v1494
    %v2807 = vunpack.c.l.b16 %v1495
    %v2808 = vunpack.c.h.b16 %v1495
    %v2809 = vunpack.c.l.b16 %v1496
    %v2810 = vunpack.c.h.b16 %v1496
    %v2811 = vunpack.c.l.b16 %v1497
    %v2812 = vunpack.c.h.b16 %v1497
    %v2813 = vunpack.c.l.b16 %v1498
    %v2814 = vunpack.c.h.b16 %v1498
    %v2815 = vunpack.c.l.b16 %v1499
    %v2816 = vunpack.c.h.b16 %v1499
    %v2817 = vunpack.c.l.b16 %v1500
    %v2818 = vunpack.c.h.b16 %v1500
    %v2819 = vunpack.c.l.b16 %v1501
    %v2820 = vunpack.c.h.b16 %v1501
    %v2821 = vunpack.c.l.b16 %v1502
    %v2822 = vunpack.c.h.b16 %v1502
    %v2823 = vunpack.c.l.b16 %v1503
    %v2824 = vunpack.c.h.b16 %v1503
    %v2825 = vunpack.c.l.b16 %v1504
    %v2826 = vunpack.c.h.b16 %v1504
    %v2827 = vunpack.c.l.b16 %v1505
    %v2828 = vunpack.c.h.b16 %v1505
    %v2829 = vunpack.c.l.b16 %v1506
    %v2830 = vunpack.c.h.b16 %v1506
    %v2831 = vunpack.c.l.b16 %v1507
    %v2832 = vunpack.c.h.b16 %v1507
    %v2833 = vunpack.c.l.b16 %v1508
    %v2834 = vunpack.c.h.b16 %v1508
    %v2835 = vunpack.c.l.b16 %v1509
    %v2836 = vunpack.c.h.b16 %v1509
    %v2837 = vunpack.c.l.b16 %v1510
    %v2838 = vunpack.c.h.b16 %v1510
    %v2839 = vunpack.c.l.b16 %v1511
    %v2840 = vunpack.c.h.b16 %v1511
    %v2841 = vunpack.c.l.b16 %v1512
    %v2842 = vunpack.c.h.b16 %v1512
    %v2843 = vunpack.c.l.b16 %v1513
    %v2844 = vunpack.c.h.b16 %v1513
    %v2845 = vunpack.c.l.b16 %v1514
    %v2846 = vunpack.c.h.b16 %v1514
    %v2847 = vunpack.c.l.b16 %v1515
    %v2848 = vunpack.c.h.b16 %v1515
    %v2849 = vunpack.c.l.b16 %v1516
    %v2850 = vunpack.c.h.b16 %v1516
    %v2851 = vunpack.c.l.b16 %v1517
    %v2852 = vunpack.c.h.b16 %v1517
    %v2853 = vunpack.c.l.b16 %v1518
    %v2854 = vunpack.c.h.b16 %v1518
    %v2855 = vunpack.c.l.b16 %v1519
    %v2856 = vunpack.c.h.b16 %v1519
    %v2857 = vunpack.c.l.b16 %v1520
    %v2858 = vunpack.c.h.b16 %v1520
    %v2859 = vunpack.c.l.b16 %v1521
    %v2860 = vunpack.c.h.b16 %v1521
    %v2861 = vunpack.c.l.b16 %v1522
    %v2862 = vunpack.c.h.b16 %v1522
    %v2863 = vunpack.c.l.b16 %v1523
    %v2864 = vunpack.c.h.b16 %v1523
    %v2865 = vunpack.c.l.b16 %v1524
    %v2866 = vunpack.c.h.b16 %v1524
    %v2867 = vunpack.c.l.b16 %v1525
    %v2868 = vunpack.c.h.b16 %v1525
    %v2869 = vunpack.c.l.b16 %v1526
    %v2870 = vunpack.c.h.b16 %v1526
    %v2871 = vunpack.c.l.b16 %v1527
    %v2872 = vunpack.c.h.b16 %v1527
    %v2873 = vunpack.c.l.b16 %v1528
    %v2874 = vunpack.c.h.b16 %v1528
    %v2875 = vunpack.c.l.b16 %v1529
    %v2876 = vunpack.c.h.b16 %v1529
    %v2877 = vunpack.c.l.b16 %v1530
    %v2878 = vunpack.c.h.b16 %v1530
    %v2879 = vunpack.c.l.b16 %v1531
    %v2880 = vunpack.c.h.b16 %v1531
    %v2881 = vunpack.c.l.b16 %v1532
    %v2882 = vunpack.c.h.b16 %v1532
    %v2883 = vunpack.c.l.b16 %v1533
    %v2884 = vunpack.c.h.b16 %v1533
    %v2885 = vunpack.c.l.b16 %v1534
    %v2886 = vunpack.c.h.b16 %v1534
    %v2887 = vunpack.c.l.b16 %v1535
    %v2888 = vunpack.c.h.b16 %v1535
    %v2889 = vunpack.c.l.b16 %v1536
    %v2890 = vunpack.c.h.b16 %v1536
    %v2891 = vunpack.c.l.b16 %v1537
    %v2892 = vunpack.c.h.b16 %v1537
    %v2893 = vunpack.c.l.b16 %v1538
    %v2894 = vunpack.c.h.b16 %v1538
    %v2895 = vunpack.c.l.b16 %v1539
    %v2896 = vunpack.c.h.b16 %v1539
    %v2897 = vunpack.c.l.b16 %v1540
    %v2898 = vunpack.c.h.b16 %v1540
    %v2899 = vunpack.c.l.b16 %v1541
    %v2900 = vunpack.c.h.b16 %v1541
    %v2901 = vunpack.c.l.b16 %v1542
    %v2902 = vunpack.c.h.b16 %v1542
    %v2903 = vunpack.c.l.b16 %v1543
    %v2904 = vunpack.c.h.b16 %v1543
    %v2905 = vunpack.c.l.b16 %v1544
    %v2906 = vunpack.c.h.b16 %v1544
    %v2907 = vunpack.c.l.b16 %v1545
    %v2908 = vunpack.c.h.b16 %v1545
    %v2909 = vunpack.c.l.b16 %v1546
    %v2910 = vunpack.c.h.b16 %v1546
    %v2911 = vunpack.c.l.b16 %v1547
    %v2912 = vunpack.c.h.b16 %v1547
    %v2913 = vunpack.c.l.b16 %v1548
    %v2914 = vunpack.c.h.b16 %v1548
    %v2915 = vunpack.c.l.b16 %v1549
    %v2916 = vunpack.c.h.b16 %v1549
    %v2917 = vunpack.c.l.b16 %v1550
    %v2918 = vunpack.c.h.b16 %v1550
    %v2919 = vunpack.c.l.b16 %v1551
    %v2920 = vunpack.c.h.b16 %v1551
    %v2921 = vunpack.c.l.b16 %v1552
    %v2922 = vunpack.c.h.b16 %v1552
    %v2923 = vunpack.c.l.b16 %v1553
    %v2924 = vunpack.c.h.b16 %v1553
    %v2925 = vunpack.c.l.b16 %v1554
    %v2926 = vunpack.c.h.b16 %v1554
    %v2927 = vunpack.c.l.b16 %v1555
    %v2928 = vunpack.c.h.b16 %v1555
    %v2929 = vunpack.c.l.b16 %v1556
    %v2930 = vunpack.c.h.b16 %v1556
    %v2931 = vunpack.c.l.b16 %v1557
    %v2932 = vunpack.c.h.b16 %v1557
    %v2933 = vunpack.c.l.b16 %v1558
    %v2934 = vunpack.c.h.b16 %v1558
    %v2935 = vunpack.c.l.b16 %v1559
    %v2936 = vunpack.c.h.b16 %v1559
    %v2937 = vunpack.c.l.b16 %v1560
    %v2938 = vunpack.c.h.b16 %v1560
    %v2939 = vunpack.c.l.b16 %v1561
    %v2940 = vunpack.c.h.b16 %v1561
    %v2941 = vunpack.c.l.b16 %v1562
    %v2942 = vunpack.c.h.b16 %v1562
    %v2943 = vunpack.c.l.b16 %v1563
    %v2944 = vunpack.c.h.b16 %v1563
    %v2945 = vunpack.c.l.b16 %v1564
    %v2946 = vunpack.c.h.b16 %v1564
    %v2947 = vunpack.c.l.b16 %v1565
    %v2948 = vunpack.c.h.b16 %v1565
    %v2949 = vunpack.c.l.b16 %v1566
    %v2950 = vunpack.c.h.b16 %v1566
    %v2951 = vunpack.c.l.b16 %v1567
    %v2952 = vunpack.c.h.b16 %v1567
    %v2953 = vunpack.c.l.b16 %v1568
    %v2954 = vunpack.c.h.b16 %v1568
    %v2955 = vunpack.c.l.b16 %v1569
    %v2956 = vunpack.c.h.b16 %v1569
    %v2957 = vunpack.c.l.b16 %v1570
    %v2958 = vunpack.c.h.b16 %v1570
    %v2959 = vunpack.c.l.b16 %v1571
    %v2960 = vunpack.c.h.b16 %v1571
    %v2961 = vunpack.c.l.b16 %v1572
    %v2962 = vunpack.c.h.b16 %v1572
    %v2963 = vunpack.c.l.b16 %v1573
    %v2964 = vunpack.c.h.b16 %v1573
    %v2965 = vunpack.c.l.b16 %v1574
    %v2966 = vunpack.c.h.b16 %v1574
    %v2967 = vunpack.c.l.b16 %v1575
    %v2968 = vunpack.c.h.b16 %v1575
    %v2969 = vunpack.c.l.b16 %v1576
    %v2970 = vunpack.c.h.b16 %v1576
    %v2971 = vunpack.c.l.b16 %v1577
    %v2972 = vunpack.c.h.b16 %v1577
    %v2973 = vunpack.c.l.b16 %v1578
    %v2974 = vunpack.c.h.b16 %v1578
    %v2975 = vunpack.c.l.b16 %v1579
    %v2976 = vunpack.c.h.b16 %v1579
    %v2977 = vunpack.c.l.b16 %v1580
    %v2978 = vunpack.c.h.b16 %v1580
    %v2979 = vunpack.c.l.b16 %v1581
    %v2980 = vunpack.c.h.b16 %v1581
    %v2981 = vunpack.c.l.b16 %v1582
    %v2982 = vunpack.c.h.b16 %v1582
    %v2983 = vunpack.c.l.b16 %v1583
    %v2984 = vunpack.c.h.b16 %v1583
    %v2985 = vunpack.c.l.b16 %v1584
    %v2986 = vunpack.c.h.b16 %v1584
    %v2987 = vunpack.c.l.b16 %v1585
    %v2988 = vunpack.c.h.b16 %v1585
    %v2989 = vunpack.c.l.b16 %v1586
    %v2990 = vunpack.c.h.b16 %v1586
    %v2991 = vunpack.c.l.b16 %v1587
    %v2992 = vunpack.c.h.b16 %v1587
    %v2993 = vunpack.c.l.b16 %v1588
    %v2994 = vunpack.c.h.b16 %v1588
    %v2995 = vunpack.c.l.b16 %v1589
    %v2996 = vunpack.c.h.b16 %v1589
    %v2997 = vunpack.c.l.b16 %v1590
    %v2998 = vunpack.c.h.b16 %v1590
    %v2999 = vunpack.c.l.b16 %v1591
    %v3000 = vunpack.c.h.b16 %v1591
    %v3001 = vunpack.c.l.b16 %v1592
    %v3002 = vunpack.c.h.b16 %v1592
    %v3003 = vunpack.c.l.b16 %v1593
    %v3004 = vunpack.c.h.b16 %v1593
    %v3005 = vunpack.c.l.b16 %v1594
    %v3006 = vunpack.c.h.b16 %v1594
    %v3007 = vunpack.c.l.b16 %v1595
    %v3008 = vunpack.c.h.b16 %v1595
    %v3009 = vunpack.c.l.b16 %v1596
    %v3010 = vunpack.c.h.b16 %v1596
    %v3011 = vunpack.c.l.b16 %v1597
    %v3012 = vunpack.c.h.b16 %v1597
    %v3013 = vunpack.c.l.b16 %v1598
    %v3014 = vunpack.c.h.b16 %v1598
    %v3015 = vunpack.c.l.b16 %v1599
    %v3016 = vunpack.c.h.b16 %v1599
    %v3017 = vunpack.c.l.b16 %v1600
    %v3018 = vunpack.c.h.b16 %v1600
    %v3019 = vunpack.c.l.b16 %v1601
    %v3020 = vunpack.c.h.b16 %v1601
    %v3021 = vunpack.c.l.b16 %v1602
    %v3022 = vunpack.c.h.b16 %v1602
    %v3023 = vunpack.c.l.b16 %v1603
    %v3024 = vunpack.c.h.b16 %v1603
    %v3025 = vunpack.c.l.b16 %v1604
    %v3026 = vunpack.c.h.b16 %v1604
    %v3027 = vunpack.c.l.b16 %v1605
    %v3028 = vunpack.c.h.b16 %v1605
    %v3029 = vunpack.c.l.b16 %v1606
    %v3030 = vunpack.c.h.b16 %v1606
    %v3031 = vunpack.c.l.b16 %v1607
    %v3032 = vunpack.c.h.b16 %v1607
    %v3033 = vunpack.c.l.b16 %v1608
    %v3034 = vunpack.c.h.b16 %v1608
    %v3035 = vunpack.c.l.b16 %v1609
    %v3036 = vunpack.c.h.b16 %v1609
    %v3037 = vunpack.c.l.b16 %v1610
    %v3038 = vunpack.c.h.b16 %v1610
    %v3039 = vunpack.c.l.b16 %v1611
    %v3040 = vunpack.c.h.b16 %v1611
    %v3041 = vunpack.c.l.b16 %v1612
    %v3042 = vunpack.c.h.b16 %v1612
    %v3043 = vunpack.c.l.b16 %v1613
    %v3044 = vunpack.c.h.b16 %v1613
    %v3045 = vunpack.c.l.b16 %v1614
    %v3046 = vunpack.c.h.b16 %v1614
    %v3047 = vunpack.c.l.b16 %v1615
    %v3048 = vunpack.c.h.b16 %v1615
    %v3049 = vunpack.c.l.b16 %v1616
    %v3050 = vunpack.c.h.b16 %v1616
    %v3051 = vunpack.c.l.b16 %v1617
    %v3052 = vunpack.c.h.b16 %v1617
    %v3053 = vunpack.c.l.b16 %v1618
    %v3054 = vunpack.c.h.b16 %v1618
    %v3055 = vunpack.c.l.b16 %v1619
    %v3056 = vunpack.c.h.b16 %v1619
    %v3057 = vunpack.c.l.b16 %v1620
    %v3058 = vunpack.c.h.b16 %v1620
    %v3059 = vunpack.c.l.b16 %v1621
    %v3060 = vunpack.c.h.b16 %v1621
    %v3061 = vunpack.c.l.b16 %v1622
    %v3062 = vunpack.c.h.b16 %v1622
    %v3063 = vunpack.c.l.b16 %v1623
    %v3064 = vunpack.c.h.b16 %v1623
    %v3065 = vunpack.c.l.b16 %v1624
    %v3066 = vunpack.c.h.b16 %v1624
    %v3067 = vunpack.c.l.b16 %v1625
    %v3068 = vunpack.c.h.b16 %v1625
    %v3069 = vunpack.c.l.b16 %v1626
    %v3070 = vunpack.c.h.b16 %v1626
    %v3071 = vunpack.c.l.b16 %v1627
    %v3072 = vunpack.c.h.b16 %v1627
    %v3073 = vunpack.c.l.b16 %v1628
    %v3074 = vunpack.c.h.b16 %v1628
    %v3075 = vunpack.c.l.b16 %v1629
    %v3076 = vunpack.c.h.b16 %v1629
    %v3077 = vunpack.c.l.b16 %v1630
    %v3078 = vunpack.c.h.b16 %v1630
    %v3079 = vunpack.c.l.b16 %v1631
    %v3080 = vunpack.c.h.b16 %v1631
    %v3081 = vunpack.c.l.b16 %v1632
    %v3082 = vunpack.c.h.b16 %v1632
    %v3083 = vunpack.c.l.b16 %v1633
    %v3084 = vunpack.c.h.b16 %v1633
    %v3085 = vunpack.c.l.b16 %v1634
    %v3086 = vunpack.c.h.b16 %v1634
    %v3087 = vunpack.c.l.b16 %v1635
    %v3088 = vunpack.c.h.b16 %v1635
    %v3089 = vunpack.c.l.b16 %v1636
    %v3090 = vunpack.c.h.b16 %v1636
    %v3091 = vunpack.c.l.b16 %v1637
    %v3092 = vunpack.c.h.b16 %v1637
    %v3093 = vunpack.c.l.b16 %v1638
    %v3094 = vunpack.c.h.b16 %v1638
    %v3095 = vunpack.c.l.b16 %v1639
    %v3096 = vunpack.c.h.b16 %v1639
    %v3097 = vunpack.c.l.b16 %v1640
    %v3098 = vunpack.c.h.b16 %v1640
    %v3099 = vunpack.c.l.b16 %v1641
    %v3100 = vunpack.c.h.b16 %v1641
    %v3101 = vunpack.c.l.b16 %v1642
    %v3102 = vunpack.c.h.b16 %v1642
    %v3103 = vunpack.c.l.b16 %v1643
    %v3104 = vunpack.c.h.b16 %v1643
    %v3105 = vunpack.c.l.b16 %v1644
    %v3106 = vunpack.c.h.b16 %v1644
    %v3107 = vunpack.c.l.b16 %v1645
    %v3108 = vunpack.c.h.b16 %v1645
    %v3109 = vunpack.c.l.b16 %v1646
    %v3110 = vunpack.c.h.b16 %v1646
    %v3111 = vunpack.c.l.b16 %v1647
    %v3112 = vunpack.c.h.b16 %v1647
    %v3113 = vunpack.c.l.b16 %v1648
    %v3114 = vunpack.c.h.b16 %v1648
    %v3115 = vunpack.c.l.b16 %v1649
    %v3116 = vunpack.c.h.b16 %v1649
    %v3117 = vunpack.c.l.b16 %v1650
    %v3118 = vunpack.c.h.b16 %v1650
    %v3119 = vunpack.c.l.b16 %v1651
    %v3120 = vunpack.c.h.b16 %v1651
    %v3121 = vunpack.c.l.b16 %v1652
    %v3122 = vunpack.c.h.b16 %v1652
    %v3123 = vunpack.c.l.b16 %v1653
    %v3124 = vunpack.c.h.b16 %v1653
    %v3125 = vunpack.c.l.b16 %v1654
    %v3126 = vunpack.c.h.b16 %v1654
    %v3127 = vunpack.c.l.b16 %v1655
    %v3128 = vunpack.c.h.b16 %v1655
    %v3129 = vunpack.c.l.b16 %v1656
    %v3130 = vunpack.c.h.b16 %v1656
    %v3131 = vunpack.c.l.b16 %v1657
    %v3132 = vunpack.c.h.b16 %v1657
    %v3133 = vunpack.c.l.b16 %v1658
    %v3134 = vunpack.c.h.b16 %v1658
    %v3135 = vunpack.c.l.b16 %v1659
    %v3136 = vunpack.c.h.b16 %v1659
    %v3137 = vunpack.c.l.b16 %v1660
    %v3138 = vunpack.c.h.b16 %v1660
    %v3139 = vunpack.c.l.b16 %v1661
    %v3140 = vunpack.c.h.b16 %v1661
    %v3141 = vunpack.c.l.b16 %v1662
    %v3142 = vunpack.c.h.b16 %v1662
    %v3143 = vunpack.c.l.b16 %v1663
    %v3144 = vunpack.c.h.b16 %v1663
    %v3145 = vunpack.c.l.b16 %v1664
    %v3146 = vunpack.c.h.b16 %v1664
    %v3147 = vunpack.c.l.b16 %v1665
    %v3148 = vunpack.c.h.b16 %v1665
    %v3149 = vunpack.c.l.b16 %v1666
    %v3150 = vunpack.c.h.b16 %v1666
    %v3151 = vunpack.c.l.b16 %v1667
    %v3152 = vunpack.c.h.b16 %v1667
    %v3153 = vunpack.c.l.b16 %v1668
    %v3154 = vunpack.c.h.b16 %v1668
    %v3155 = vunpack.c.l.b16 %v1669
    %v3156 = vunpack.c.h.b16 %v1669
    %v3157 = vunpack.c.l.b16 %v1670
    %v3158 = vunpack.c.h.b16 %v1670
    %v3159 = vunpack.c.l.b16 %v1671
    %v3160 = vunpack.c.h.b16 %v1671
    %v3161 = vunpack.c.l.b16 %v1672
    %v3162 = vunpack.c.h.b16 %v1672
    %v3163 = vunpack.c.l.b16 %v1673
    %v3164 = vunpack.c.h.b16 %v1673
    %v3165 = vunpack.c.l.b16 %v1674
    %v3166 = vunpack.c.h.b16 %v1674
    %v3167 = vunpack.c.l.b16 %v1675
    %v3168 = vunpack.c.h.b16 %v1675
    %v3169 = vunpack.c.l.b16 %v1676
    %v3170 = vunpack.c.h.b16 %v1676
    %v3171 = vunpack.c.l.b16 %v1677
    %v3172 = vunpack.c.h.b16 %v1677
    %v3173 = vunpack.c.l.b16 %v1678
    %v3174 = vunpack.c.h.b16 %v1678
    %v3175 = vunpack.c.l.b16 %v1679
    %v3176 = vunpack.c.h.b16 %v1679
    %v3177 = vunpack.c.l.b16 %v1680
    %v3178 = vunpack.c.h.b16 %v1680
    %v3179 = vunpack.c.l.b16 %v1681
    %v3180 = vunpack.c.h.b16 %v1681
    %v3181 = vunpack.c.l.b16 %v1682
    %v3182 = vunpack.c.h.b16 %v1682
    %v3183 = vunpack.c.l.b16 %v1683
    %v3184 = vunpack.c.h.b16 %v1683
    %v3185 = vunpack.c.l.b16 %v1684
    %v3186 = vunpack.c.h.b16 %v1684
    %v3187 = vunpack.c.l.b16 %v1685
    %v3188 = vunpack.c.h.b16 %v1685
    %v3189 = vunpack.c.l.b16 %v1686
    %v3190 = vunpack.c.h.b16 %v1686
    %v3191 = vunpack.c.l.b16 %v1687
    %v3192 = vunpack.c.h.b16 %v1687
    %v3193 = vunpack.c.l.b16 %v1688
    %v3194 = vunpack.c.h.b16 %v1688
    %v3195 = vunpack.c.l.b16 %v1689
    %v3196 = vunpack.c.h.b16 %v1689
    %v3197 = vunpack.c.l.b16 %v1690
    %v3198 = vunpack.c.h.b16 %v1690
    %v3199 = vunpack.c.l.b16 %v1691
    %v3200 = vunpack.c.h.b16 %v1691
    %v3201 = vunpack.c.l.b16 %v1692
    %v3202 = vunpack.c.h.b16 %v1692
    %v3203 = vunpack.c.l.b16 %v1693
    %v3204 = vunpack.c.h.b16 %v1693
    %v3205 = vunpack.c.l.b16 %v1694
    %v3206 = vunpack.c.h.b16 %v1694
    %v3207 = vunpack.c.l.b16 %v1695
    %v3208 = vunpack.c.h.b16 %v1695
    %v3209 = vunpack.c.l.b16 %v1696
    %v3210 = vunpack.c.h.b16 %v1696
    %v3211 = vunpack.c.l.b16 %v1697
    %v3212 = vunpack.c.h.b16 %v1697
    %v3213 = vunpack.c.l.b16 %v1698
    %v3214 = vunpack.c.h.b16 %v1698
    %v3215 = vunpack.c.l.b16 %v1699
    %v3216 = vunpack.c.h.b16 %v1699
    %v3217 = vunpack.c.l.b16 %v1700
    %v3218 = vunpack.c.h.b16 %v1700
    %v3219 = vunpack.c.l.b16 %v1701
    %v3220 = vunpack.c.h.b16 %v1701
    %v3221 = vunpack.c.l.b16 %v1702
    %v3222 = vunpack.c.h.b16 %v1702
    %v3223 = vunpack.c.l.b16 %v1703
    %v3224 = vunpack.c.h.b16 %v1703
    %v3225 = vunpack.c.l.b16 %v1704
    %v3226 = vunpack.c.h.b16 %v1704
    %v3227 = vunpack.c.l.b16 %v1705
    %v3228 = vunpack.c.h.b16 %v1705
    %v3229 = vunpack.c.l.b16 %v1706
    %v3230 = vunpack.c.h.b16 %v1706
    %v3231 = vunpack.c.l.b16 %v1707
    %v3232 = vunpack.c.h.b16 %v1707
    %v3233 = vunpack.c.l.b16 %v1708
    %v3234 = vunpack.c.h.b16 %v1708
    %v3235 = vunpack.c.l.b16 %v1709
    %v3236 = vunpack.c.h.b16 %v1709
    %v3237 = vunpack.c.l.b16 %v1710
    %v3238 = vunpack.c.h.b16 %v1710
    %v3239 = vunpack.c.l.b16 %v1711
    %v3240 = vunpack.c.h.b16 %v1711
    %v3241 = vunpack.c.l.b16 %v1712
    %v3242 = vunpack.c.h.b16 %v1712
    %v3243 = vunpack.c.l.b16 %v1713
    %v3244 = vunpack.c.h.b16 %v1713
    %v3245 = vunpack.c.l.b16 %v1714
    %v3246 = vunpack.c.h.b16 %v1714
    %v3247 = vunpack.c.l.b16 %v1715
    %v3248 = vunpack.c.h.b16 %v1715
    %v3249 = vunpack.c.l.b16 %v1716
    %v3250 = vunpack.c.h.b16 %v1716
    %v3251 = vunpack.c.l.b16 %v1717
    %v3252 = vunpack.c.h.b16 %v1717
    %v3253 = vunpack.c.l.b16 %v1718
    %v3254 = vunpack.c.h.b16 %v1718
    %v3255 = vunpack.c.l.b16 %v1719
    %v3256 = vunpack.c.h.b16 %v1719
    %v3257 = vunpack.c.l.b16 %v1720
    %v3258 = vunpack.c.h.b16 %v1720
    %v3259 = vunpack.c.l.b16 %v1721
    %v3260 = vunpack.c.h.b16 %v1721
    %v3261 = vunpack.c.l.b16 %v1722
    %v3262 = vunpack.c.h.b16 %v1722
    %v3263 = vunpack.c.l.b16 %v1723
    %v3264 = vunpack.c.h.b16 %v1723
    %v3265 = vunpack.c.l.b16 %v1724
    %v3266 = vunpack.c.h.b16 %v1724
    %v3267 = vunpack.c.l.b16 %v1725
    %v3268 = vunpack.c.h.b16 %v1725
    %v3269 = vunpack.c.l.b16 %v1726
    %v3270 = vunpack.c.h.b16 %v1726
    %v3271 = vunpack.c.l.b16 %v1727
    %v3272 = vunpack.c.h.b16 %v1727
    %v3273 = vunpack.c.l.b16 %v1728
    %v3274 = vunpack.c.h.b16 %v1728
    %v3275 = vpack.c.b16 %v2255, %v2251
    %v3276 = vpack.c.b16 %v2256, %v2252
    %v3277 = vpack.c.b16 %v2257, %v2253
    %v3278 = vpack.c.b16 %v2258, %v2254
    %v3279 = vpack.c.b16 %v2263, %v2259
    %v3280 = vpack.c.b16 %v2264, %v2260
    %v3281 = vpack.c.b16 %v2265, %v2261
    %v3282 = vpack.c.b16 %v2266, %v2262
    %v3283 = vpack.c.b16 %v2271, %v2267
    %v3284 = vpack.c.b16 %v2272, %v2268
    %v3285 = vpack.c.b16 %v2273, %v2269
    %v3286 = vpack.c.b16 %v2274, %v2270
    %v3287 = vpack.c.b16 %v2279, %v2275
    %v3288 = vpack.c.b16 %v2280, %v2276
    %v3289 = vpack.c.b16 %v2281, %v2277
    %v3290 = vpack.c.b16 %v2282, %v2278
    %v3291 = vpack.c.b16 %v2287, %v2283
    %v3292 = vpack.c.b16 %v2288, %v2284
    %v3293 = vpack.c.b16 %v2289, %v2285
    %v3294 = vpack.c.b16 %v2290, %v2286
    %v3295 = vpack.c.b16 %v2295, %v2291
    %v3296 = vpack.c.b16 %v2296, %v2292
    %v3297 = vpack.c.b16 %v2297, %v2293
    %v3298 = vpack.c.b16 %v2298, %v2294
    %v3299 = vpack.c.b16 %v2303, %v2299
    %v3300 = vpack.c.b16 %v2304, %v2300
    %v3301 = vpack.c.b16 %v2305, %v2301
    %v3302 = vpack.c.b16 %v2306, %v2302
    %v3303 = vpack.c.b16 %v2311, %v2307
    %v3304 = vpack.c.b16 %v2312, %v2308
    %v3305 = vpack.c.b16 %v2313, %v2309
    %v3306 = vpack.c.b16 %v2314, %v2310
    %v3307 = vpack.c.b16 %v2319, %v2315
    %v3308 = vpack.c.b16 %v2320, %v2316
    %v3309 = vpack.c.b16 %v2321, %v2317
    %v3310 = vpack.c.b16 %v2322, %v2318
    %v3311 = vpack.c.b16 %v2327, %v2323
    %v3312 = vpack.c.b16 %v2328, %v2324
    %v3313 = vpack.c.b16 %v2329, %v2325
    %v3314 = vpack.c.b16 %v2330, %v2326
    %v3315 = vpack.c.b16 %v2335, %v2331
    %v3316 = vpack.c.b16 %v2336, %v2332
    %v3317 = vpack.c.b16 %v2337, %v2333
    %v3318 = vpack.c.b16 %v2338, %v2334
    %v3319 = vpack.c.b16 %v2343, %v2339
    %v3320 = vpack.c.b16 %v2344, %v2340
    %v3321 = vpack.c.b16 %v2345, %v2341
    %v3322 = vpack.c.b16 %v2346, %v2342
    %v3323 = vpack.c.b16 %v2351, %v2347
    %v3324 = vpack.c.b16 %v2352, %v2348
    %v3325 = vpack.c.b16 %v2353, %v2349
    %v3326 = vpack.c.b16 %v2354, %v2350
    %v3327 = vpack.c.b16 %v2359, %v2355
    %v3328 = vpack.c.b16 %v2360, %v2356
    %v3329 = vpack.c.b16 %v2361, %v2357
    %v3330 = vpack.c.b16 %v2362, %v2358
    %v3331 = vpack.c.b16 %v2367, %v2363
    %v3332 = vpack.c.b16 %v2368, %v2364
    %v3333 = vpack.c.b16 %v2369, %v2365
    %v3334 = vpack.c.b16 %v2370, %v2366
    %v3335 = vpack.c.b16 %v2375, %v2371
    %v3336 = vpack.c.b16 %v2376, %v2372
    %v3337 = vpack.c.b16 %v2377, %v2373
    %v3338 = vpack.c.b16 %v2378, %v2374
    %v3339 = vpack.c.b16 %v2383, %v2379
    %v3340 = vpack.c.b16 %v2384, %v2380
    %v3341 = vpack.c.b16 %v2385, %v2381
    %v3342 = vpack.c.b16 %v2386, %v2382
    %v3343 = vpack.c.b16 %v2391, %v2387
    %v3344 = vpack.c.b16 %v2392, %v2388
    %v3345 = vpack.c.b16 %v2393, %v2389
    %v3346 = vpack.c.b16 %v2394, %v2390
    %v3347 = vpack.c.b16 %v2399, %v2395
    %v3348 = vpack.c.b16 %v2400, %v2396
    %v3349 = vpack.c.b16 %v2401, %v2397
    %v3350 = vpack.c.b16 %v2402, %v2398
    %v3351 = vpack.c.b16 %v2407, %v2403
    %v3352 = vpack.c.b16 %v2408, %v2404
    %v3353 = vpack.c.b16 %v2409, %v2405
    %v3354 = vpack.c.b16 %v2410, %v2406
    %v3355 = vpack.c.b16 %v2415, %v2411
    %v3356 = vpack.c.b16 %v2416, %v2412
    %v3357 = vpack.c.b16 %v2417, %v2413
    %v3358 = vpack.c.b16 %v2418, %v2414
    %v3359 = vpack.c.b16 %v2423, %v2419
    %v3360 = vpack.c.b16 %v2424, %v2420
    %v3361 = vpack.c.b16 %v2425, %v2421
    %v3362 = vpack.c.b16 %v2426, %v2422
    %v3363 = vpack.c.b16 %v2431, %v2427
    %v3364 = vpack.c.b16 %v2432, %v2428
    %v3365 = vpack.c.b16 %v2433, %v2429
    %v3366 = vpack.c.b16 %v2434, %v2430
    %v3367 = vpack.c.b16 %v2439, %v2435
    %v3368 = vpack.c.b16 %v2440, %v2436
    %v3369 = vpack.c.b16 %v2441, %v2437
    %v3370 = vpack.c.b16 %v2442, %v2438
    %v3371 = vpack.c.b16 %v2447, %v2443
    %v3372 = vpack.c.b16 %v2448, %v2444
    %v3373 = vpack.c.b16 %v2449, %v2445
    %v3374 = vpack.c.b16 %v2450, %v2446
    %v3375 = vpack.c.b16 %v2455, %v2451
    %v3376 = vpack.c.b16 %v2456, %v2452
    %v3377 = vpack.c.b16 %v2457, %v2453
    %v3378 = vpack.c.b16 %v2458, %v2454
    %v3379 = vpack.c.b16 %v2463, %v2459
    %v3380 = vpack.c.b16 %v2464, %v2460
    %v3381 = vpack.c.b16 %v2465, %v2461
    %v3382 = vpack.c.b16 %v2466, %v2462
    %v3383 = vpack.c.b16 %v2471, %v2467
    %v3384 = vpack.c.b16 %v2472, %v2468
    %v3385 = vpack.c.b16 %v2473, %v2469
    %v3386 = vpack.c.b16 %v2474, %v2470
    %v3387 = vpack.c.b16 %v2479, %v2475
    %v3388 = vpack.c.b16 %v2480, %v2476
    %v3389 = vpack.c.b16 %v2481, %v2477
    %v3390 = vpack.c.b16 %v2482, %v2478
    %v3391 = vpack.c.b16 %v2487, %v2483
    %v3392 = vpack.c.b16 %v2488, %v2484
    %v3393 = vpack.c.b16 %v2489, %v2485
    %v3394 = vpack.c.b16 %v2490, %v2486
    %v3395 = vpack.c.b16 %v2495, %v2491
    %v3396 = vpack.c.b16 %v2496, %v2492
    %v3397 = vpack.c.b16 %v2497, %v2493
    %v3398 = vpack.c.b16 %v2498, %v2494
    %v3399 = vpack.c.b16 %v2503, %v2499
    %v3400 = vpack.c.b16 %v2504, %v2500
    %v3401 = vpack.c.b16 %v2505, %v2501
    %v3402 = vpack.c.b16 %v2506, %v2502
    %v3403 = vpack.c.b16 %v2511, %v2507
    %v3404 = vpack.c.b16 %v2512, %v2508
    %v3405 = vpack.c.b16 %v2513, %v2509
    %v3406 = vpack.c.b16 %v2514, %v2510
    %v3407 = vpack.c.b16 %v2519, %v2515
    %v3408 = vpack.c.b16 %v2520, %v2516
    %v3409 = vpack.c.b16 %v2521, %v2517
    %v3410 = vpack.c.b16 %v2522, %v2518
    %v3411 = vpack.c.b16 %v2527, %v2523
    %v3412 = vpack.c.b16 %v2528, %v2524
    %v3413 = vpack.c.b16 %v2529, %v2525
    %v3414 = vpack.c.b16 %v2530, %v2526
    %v3415 = vpack.c.b16 %v2535, %v2531
    %v3416 = vpack.c.b16 %v2536, %v2532
    %v3417 = vpack.c.b16 %v2537, %v2533
    %v3418 = vpack.c.b16 %v2538, %v2534
    %v3419 = vpack.c.b16 %v2543, %v2539
    %v3420 = vpack.c.b16 %v2544, %v2540
    %v3421 = vpack.c.b16 %v2545, %v2541
    %v3422 = vpack.c.b16 %v2546, %v2542
    %v3423 = vpack.c.b16 %v2551, %v2547
    %v3424 = vpack.c.b16 %v2552, %v2548
    %v3425 = vpack.c.b16 %v2553, %v2549
    %v3426 = vpack.c.b16 %v2554, %v2550
    %v3427 = vpack.c.b16 %v2559, %v2555
    %v3428 = vpack.c.b16 %v2560, %v2556
    %v3429 = vpack.c.b16 %v2561, %v2557
    %v3430 = vpack.c.b16 %v2562, %v2558
    %v3431 = vpack.c.b16 %v2567, %v2563
    %v3432 = vpack.c.b16 %v2568, %v2564
    %v3433 = vpack.c.b16 %v2569, %v2565
    %v3434 = vpack.c.b16 %v2570, %v2566
    %v3435 = vpack.c.b16 %v2575, %v2571
    %v3436 = vpack.c.b16 %v2576, %v2572
    %v3437 = vpack.c.b16 %v2577, %v2573
    %v3438 = vpack.c.b16 %v2578, %v2574
    %v3439 = vpack.c.b16 %v2583, %v2579
    %v3440 = vpack.c.b16 %v2584, %v2580
    %v3441 = vpack.c.b16 %v2585, %v2581
    %v3442 = vpack.c.b16 %v2586, %v2582
    %v3443 = vpack.c.b16 %v2591, %v2587
    %v3444 = vpack.c.b16 %v2592, %v2588
    %v3445 = vpack.c.b16 %v2593, %v2589
    %v3446 = vpack.c.b16 %v2594, %v2590
    %v3447 = vpack.c.b16 %v2599, %v2595
    %v3448 = vpack.c.b16 %v2600, %v2596
    %v3449 = vpack.c.b16 %v2601, %v2597
    %v3450 = vpack.c.b16 %v2602, %v2598
    %v3451 = vpack.c.b16 %v2607, %v2603
    %v3452 = vpack.c.b16 %v2608, %v2604
    %v3453 = vpack.c.b16 %v2609, %v2605
    %v3454 = vpack.c.b16 %v2610, %v2606
    %v3455 = vpack.c.b16 %v2615, %v2611
    %v3456 = vpack.c.b16 %v2616, %v2612
    %v3457 = vpack.c.b16 %v2617, %v2613
    %v3458 = vpack.c.b16 %v2618, %v2614
    %v3459 = vpack.c.b16 %v2623, %v2619
    %v3460 = vpack.c.b16 %v2624, %v2620
    %v3461 = vpack.c.b16 %v2625, %v2621
    %v3462 = vpack.c.b16 %v2626, %v2622
    %v3463 = vpack.c.b16 %v2631, %v2627
    %v3464 = vpack.c.b16 %v2632, %v2628
    %v3465 = vpack.c.b16 %v2633, %v2629
    %v3466 = vpack.c.b16 %v2634, %v2630
    %v3467 = vpack.c.b16 %v2639, %v2635
    %v3468 = vpack.c.b16 %v2640, %v2636
    %v3469 = vpack.c.b16 %v2641, %v2637
    %v3470 = vpack.c.b16 %v2642, %v2638
    %v3471 = vpack.c.b16 %v2647, %v2643
    %v3472 = vpack.c.b16 %v2648, %v2644
    %v3473 = vpack.c.b16 %v2649, %v2645
    %v3474 = vpack.c.b16 %v2650, %v2646
    %v3475 = vpack.c.b16 %v2655, %v2651
    %v3476 = vpack.c.b16 %v2656, %v2652
    %v3477 = vpack.c.b16 %v2657, %v2653
    %v3478 = vpack.c.b16 %v2658, %v2654
    %v3479 = vpack.c.b16 %v2663, %v2659
    %v3480 = vpack.c.b16 %v2664, %v2660
    %v3481 = vpack.c.b16 %v2665, %v2661
    %v3482 = vpack.c.b16 %v2666, %v2662
    %v3483 = vpack.c.b16 %v2671, %v2667
    %v3484 = vpack.c.b16 %v2672, %v2668
    %v3485 = vpack.c.b16 %v2673, %v2669
    %v3486 = vpack.c.b16 %v2674, %v2670
    %v3487 = vpack.c.b16 %v2679, %v2675
    %v3488 = vpack.c.b16 %v2680, %v2676
    %v3489 = vpack.c.b16 %v2681, %v2677
    %v3490 = vpack.c.b16 %v2682, %v2678
    %v3491 = vpack.c.b16 %v2687, %v2683
    %v3492 = vpack.c.b16 %v2688, %v2684
    %v3493 = vpack.c.b16 %v2689, %v2685
    %v3494 = vpack.c.b16 %v2690, %v2686
    %v3495 = vpack.c.b16 %v2695, %v2691
    %v3496 = vpack.c.b16 %v2696, %v2692
    %v3497 = vpack.c.b16 %v2697, %v2693
    %v3498 = vpack.c.b16 %v2698, %v2694
    %v3499 = vpack.c.b16 %v2703, %v2699
    %v3500 = vpack.c.b16 %v2704, %v2700
    %v3501 = vpack.c.b16 %v2705, %v2701
    %v3502 = vpack.c.b16 %v2706, %v2702
    %v3503 = vpack.c.b16 %v2711, %v2707
    %v3504 = vpack.c.b16 %v2712, %v2708
    %v3505 = vpack.c.b16 %v2713, %v2709
    %v3506 = vpack.c.b16 %v2714, %v2710
    %v3507 = vpack.c.b16 %v2719, %v2715
    %v3508 = vpack.c.b16 %v2720, %v2716
    %v3509 = vpack.c.b16 %v2721, %v2717
    %v3510 = vpack.c.b16 %v2722, %v2718
    %v3511 = vpack.c.b16 %v2727, %v2723
    %v3512 = vpack.c.b16 %v2728, %v2724
    %v3513 = vpack.c.b16 %v2729, %v2725
    %v3514 = vpack.c.b16 %v2730, %v2726
    %v3515 = vpack.c.b16 %v2735, %v2731
    %v3516 = vpack.c.b16 %v2736, %v2732
    %v3517 = vpack.c.b16 %v2737, %v2733
    %v3518 = vpack.c.b16 %v2738, %v2734
    %v3519 = vpack.c.b16 %v2743, %v2739
    %v3520 = vpack.c.b16 %v2744, %v2740
    %v3521 = vpack.c.b16 %v2745, %v2741
    %v3522 = vpack.c.b16 %v2746, %v2742
    %v3523 = vpack.c.b16 %v2751, %v2747
    %v3524 = vpack.c.b16 %v2752, %v2748
    %v3525 = vpack.c.b16 %v2753, %v2749
    %v3526 = vpack.c.b16 %v2754, %v2750
    %v3527 = vpack.c.b16 %v2759, %v2755
    %v3528 = vpack.c.b16 %v2760, %v2756
    %v3529 = vpack.c.b16 %v2761, %v2757
    %v3530 = vpack.c.b16 %v2762, %v2758
    %v3531 = vpack.c.b16 %v2767, %v2763
    %v3532 = vpack.c.b16 %v2768, %v2764
    %v3533 = vpack.c.b16 %v2769, %v2765
    %v3534 = vpack.c.b16 %v2770, %v2766
    %v3535 = vpack.c.b16 %v2775, %v2771
    %v3536 = vpack.c.b16 %v2776, %v2772
    %v3537 = vpack.c.b16 %v2777, %v2773
    %v3538 = vpack.c.b16 %v2778, %v2774
    %v3539 = vpack.c.b16 %v2783, %v2779
    %v3540 = vpack.c.b16 %v2784, %v2780
    %v3541 = vpack.c.b16 %v2785, %v2781
    %v3542 = vpack.c.b16 %v2786, %v2782
    %v3543 = vpack.c.b16 %v2791, %v2787
    %v3544 = vpack.c.b16 %v2792, %v2788
    %v3545 = vpack.c.b16 %v2793, %v2789
    %v3546 = vpack.c.b16 %v2794, %v2790
    %v3547 = vpack.c.b16 %v2799, %v2795
    %v3548 = vpack.c.b16 %v2800, %v2796
    %v3549 = vpack.c.b16 %v2801, %v2797
    %v3550 = vpack.c.b16 %v2802, %v2798
    %v3551 = vpack.c.b16 %v2807, %v2803
    %v3552 = vpack.c.b16 %v2808, %v2804
    %v3553 = vpack.c.b16 %v2809, %v2805
    %v3554 = vpack.c.b16 %v2810, %v2806
    %v3555 = vpack.c.b16 %v2815, %v2811
    %v3556 = vpack.c.b16 %v2816, %v2812
    %v3557 = vpack.c.b16 %v2817, %v2813
    %v3558 = vpack.c.b16 %v2818, %v2814
    %v3559 = vpack.c.b16 %v2823, %v2819
    %v3560 = vpack.c.b16 %v2824, %v2820
    %v3561 = vpack.c.b16 %v2825, %v2821
    %v3562 = vpack.c.b16 %v2826, %v2822
    %v3563 = vpack.c.b16 %v2831, %v2827
    %v3564 = vpack.c.b16 %v2832, %v2828
    %v3565 = vpack.c.b16 %v2833, %v2829
    %v3566 = vpack.c.b16 %v2834, %v2830
    %v3567 = vpack.c.b16 %v2839, %v2835
    %v3568 = vpack.c.b16 %v2840, %v2836
    %v3569 = vpack.c.b16 %v2841, %v2837
    %v3570 = vpack.c.b16 %v2842, %v2838
    %v3571 = vpack.c.b16 %v2847, %v2843
    %v3572 = vpack.c.b16 %v2848, %v2844
    %v3573 = vpack.c.b16 %v2849, %v2845
    %v3574 = vpack.c.b16 %v2850, %v2846
    %v3575 = vpack.c.b16 %v2855, %v2851
    %v3576 = vpack.c.b16 %v2856, %v2852
    %v3577 = vpack.c.b16 %v2857, %v2853
    %v3578 = vpack.c.b16 %v2858, %v2854
    %v3579 = vpack.c.b16 %v2863, %v2859
    %v3580 = vpack.c.b16 %v2864, %v2860
    %v3581 = vpack.c.b16 %v2865, %v2861
    %v3582 = vpack.c.b16 %v2866, %v2862
    %v3583 = vpack.c.b16 %v2871, %v2867
    %v3584 = vpack.c.b16 %v2872, %v2868
    %v3585 = vpack.c.b16 %v2873, %v2869
    %v3586 = vpack.c.b16 %v2874, %v2870
    %v3587 = vpack.c.b16 %v2879, %v2875
    %v3588 = vpack.c.b16 %v2880, %v2876
    %v3589 = vpack.c.b16 %v2881, %v2877
    %v3590 = vpack.c.b16 %v2882, %v2878
    %v3591 = vpack.c.b16 %v2887, %v2883
    %v3592 = vpack.c.b16 %v2888, %v2884
    %v3593 = vpack.c.b16 %v2889, %v2885
    %v3594 = vpack.c.b16 %v2890, %v2886
    %v3595 = vpack.c.b16 %v2895, %v2891
    %v3596 = vpack.c.b16 %v2896, %v2892
    %v3597 = vpack.c.b16 %v2897, %v2893
    %v3598 = vpack.c.b16 %v2898, %v2894
    %v3599 = vpack.c.b16 %v2903, %v2899
    %v3600 = vpack.c.b16 %v2904, %v2900
    %v3601 = vpack.c.b16 %v2905, %v2901
    %v3602 = vpack.c.b16 %v2906, %v2902
    %v3603 = vpack.c.b16 %v2911, %v2907
    %v3604 = vpack.c.b16 %v2912, %v2908
    %v3605 = vpack.c.b16 %v2913, %v2909
    %v3606 = vpack.c.b16 %v2914, %v2910
    %v3607 = vpack.c.b16 %v2919, %v2915
    %v3608 = vpack.c.b16 %v2920, %v2916
    %v3609 = vpack.c.b16 %v2921, %v2917
    %v3610 = vpack.c.b16 %v2922, %v2918
    %v3611 = vpack.c.b16 %v2927, %v2923
    %v3612 = vpack.c.b16 %v2928, %v2924
    %v3613 = vpack.c.b16 %v2929, %v2925
    %v3614 = vpack.c.b16 %v2930, %v2926
    %v3615 = vpack.c.b16 %v2935, %v2931
    %v3616 = vpack.c.b16 %v2936, %v2932
    %v3617 = vpack.c.b16 %v2937, %v2933
    %v3618 = vpack.c.b16 %v2938, %v2934
    %v3619 = vpack.c.b16 %v2943, %v2939
    %v3620 = vpack.c.b16 %v2944, %v2940
    %v3621 = vpack.c.b16 %v2945, %v2941
    %v3622 = vpack.c.b16 %v2946, %v2942
    %v3623 = vpack.c.b16 %v2951, %v2947
    %v3624 = vpack.c.b16 %v2952, %v2948
    %v3625 = vpack.c.b16 %v2953, %v2949
    %v3626 = vpack.c.b16 %v2954, %v2950
    %v3627 = vpack.c.b16 %v2959, %v2955
    %v3628 = vpack.c.b16 %v2960, %v2956
    %v3629 = vpack.c.b16 %v2961, %v2957
    %v3630 = vpack.c.b16 %v2962, %v2958
    %v3631 = vpack.c.b16 %v2967, %v2963
    %v3632 = vpack.c.b16 %v2968, %v2964
    %v3633 = vpack.c.b16 %v2969, %v2965
    %v3634 = vpack.c.b16 %v2970, %v2966
    %v3635 = vpack.c.b16 %v2975, %v2971
    %v3636 = vpack.c.b16 %v2976, %v2972
    %v3637 = vpack.c.b16 %v2977, %v2973
    %v3638 = vpack.c.b16 %v2978, %v2974
    %v3639 = vpack.c.b16 %v2983, %v2979
    %v3640 = vpack.c.b16 %v2984, %v2980
    %v3641 = vpack.c.b16 %v2985, %v2981
    %v3642 = vpack.c.b16 %v2986, %v2982
    %v3643 = vpack.c.b16 %v2991, %v2987
    %v3644 = vpack.c.b16 %v2992, %v2988
    %v3645 = vpack.c.b16 %v2993, %v2989
    %v3646 = vpack.c.b16 %v2994, %v2990
    %v3647 = vpack.c.b16 %v2999, %v2995
    %v3648 = vpack.c.b16 %v3000, %v2996
    %v3649 = vpack.c.b16 %v3001, %v2997
    %v3650 = vpack.c.b16 %v3002, %v2998
    %v3651 = vpack.c.b16 %v3007, %v3003
    %v3652 = vpack.c.b16 %v3008, %v3004
    %v3653 = vpack.c.b16 %v3009, %v3005
    %v3654 = vpack.c.b16 %v3010, %v3006
    %v3655 = vpack.c.b16 %v3015, %v3011
    %v3656 = vpack.c.b16 %v3016, %v3012
    %v3657 = vpack.c.b16 %v3017, %v3013
    %v3658 = vpack.c.b16 %v3018, %v3014
    %v3659 = vpack.c.b16 %v3023, %v3019
    %v3660 = vpack.c.b16 %v3024, %v3020
    %v3661 = vpack.c.b16 %v3025, %v3021
    %v3662 = vpack.c.b16 %v3026, %v3022
    %v3663 = vpack.c.b16 %v3031, %v3027
    %v3664 = vpack.c.b16 %v3032, %v3028
    %v3665 = vpack.c.b16 %v3033, %v3029
    %v3666 = vpack.c.b16 %v3034, %v3030
    %v3667 = vpack.c.b16 %v3039, %v3035
    %v3668 = vpack.c.b16 %v3040, %v3036
    %v3669 = vpack.c.b16 %v3041, %v3037
    %v3670 = vpack.c.b16 %v3042, %v3038
    %v3671 = vpack.c.b16 %v3047, %v3043
    %v3672 = vpack.c.b16 %v3048, %v3044
    %v3673 = vpack.c.b16 %v3049, %v3045
    %v3674 = vpack.c.b16 %v3050, %v3046
    %v3675 = vpack.c.b16 %v3055, %v3051
    %v3676 = vpack.c.b16 %v3056, %v3052
    %v3677 = vpack.c.b16 %v3057, %v3053
    %v3678 = vpack.c.b16 %v3058, %v3054
    %v3679 = vpack.c.b16 %v3063, %v3059
    %v3680 = vpack.c.b16 %v3064, %v3060
    %v3681 = vpack.c.b16 %v3065, %v3061
    %v3682 = vpack.c.b16 %v3066, %v3062
    %v3683 = vpack.c.b16 %v3071, %v3067
    %v3684 = vpack.c.b16 %v3072, %v3068
    %v3685 = vpack.c.b16 %v3073, %v3069
    %v3686 = vpack.c.b16 %v3074, %v3070
    %v3687 = vpack.c.b16 %v3079, %v3075
    %v3688 = vpack.c.b16 %v3080, %v3076
    %v3689 = vpack.c.b16 %v3081, %v3077
    %v3690 = vpack.c.b16 %v3082, %v3078
    %v3691 = vpack.c.b16 %v3087, %v3083
    %v3692 = vpack.c.b16 %v3088, %v3084
    %v3693 = vpack.c.b16 %v3089, %v3085
    %v3694 = vpack.c.b16 %v3090, %v3086
    %v3695 = vpack.c.b16 %v3095, %v3091
    %v3696 = vpack.c.b16 %v3096, %v3092
    %v3697 = vpack.c.b16 %v3097, %v3093
    %v3698 = vpack.c.b16 %v3098, %v3094
    %v3699 = vpack.c.b16 %v3103, %v3099
    %v3700 = vpack.c.b16 %v3104, %v3100
    %v3701 = vpack.c.b16 %v3105, %v3101
    %v3702 = vpack.c.b16 %v3106, %v3102
    %v3703 = vpack.c.b16 %v3111, %v3107
    %v3704 = vpack.c.b16 %v3112, %v3108
    %v3705 = vpack.c.b16 %v3113, %v3109
    %v3706 = vpack.c.b16 %v3114, %v3110
    %v3707 = vpack.c.b16 %v3119, %v3115
    %v3708 = vpack.c.b16 %v3120, %v3116
    %v3709 = vpack.c.b16 %v3121, %v3117
    %v3710 = vpack.c.b16 %v3122, %v3118
    %v3711 = vpack.c.b16 %v3127, %v3123
    %v3712 = vpack.c.b16 %v3128, %v3124
    %v3713 = vpack.c.b16 %v3129, %v3125
    %v3714 = vpack.c.b16 %v3130, %v3126
    %v3715 = vpack.c.b16 %v3135, %v3131
    %v3716 = vpack.c.b16 %v3136, %v3132
    %v3717 = vpack.c.b16 %v3137, %v3133
    %v3718 = vpack.c.b16 %v3138, %v3134
    %v3719 = vpack.c.b16 %v3143, %v3139
    %v3720 = vpack.c.b16 %v3144, %v3140
    %v3721 = vpack.c.b16 %v3145, %v3141
    %v3722 = vpack.c.b16 %v3146, %v3142
    %v3723 = vpack.c.b16 %v3151, %v3147
    %v3724 = vpack.c.b16 %v3152, %v3148
    %v3725 = vpack.c.b16 %v3153, %v3149
    %v3726 = vpack.c.b16 %v3154, %v3150
    %v3727 = vpack.c.b16 %v3159, %v3155
    %v3728 = vpack.c.b16 %v3160, %v3156
    %v3729 = vpack.c.b16 %v3161, %v3157
    %v3730 = vpack.c.b16 %v3162, %v3158
    %v3731 = vpack.c.b16 %v3167, %v3163
    %v3732 = vpack.c.b16 %v3168, %v3164
    %v3733 = vpack.c.b16 %v3169, %v3165
    %v3734 = vpack.c.b16 %v3170, %v3166
    %v3735 = vpack.c.b16 %v3175, %v3171
    %v3736 = vpack.c.b16 %v3176, %v3172
    %v3737 = vpack.c.b16 %v3177, %v3173
    %v3738 = vpack.c.b16 %v3178, %v3174
    %v3739 = vpack.c.b16 %v3183, %v3179
    %v3740 = vpack.c.b16 %v3184, %v3180
    %v3741 = vpack.c.b16 %v3185, %v3181
    %v3742 = vpack.c.b16 %v3186, %v3182
    %v3743 = vpack.c.b16 %v3191, %v3187
    %v3744 = vpack.c.b16 %v3192, %v3188
    %v3745 = vpack.c.b16 %v3193, %v3189
    %v3746 = vpack.c.b16 %v3194, %v3190
    %v3747 = vpack.c.b16 %v3199, %v3195
    %v3748 = vpack.c.b16 %v3200, %v3196
    %v3749 = vpack.c.b16 %v3201, %v3197
    %v3750 = vpack.c.b16 %v3202, %v3198
    %v3751 = vpack.c.b16 %v3207, %v3203
    %v3752 = vpack.c.b16 %v3208, %v3204
    %v3753 = vpack.c.b16 %v3209, %v3205
    %v3754 = vpack.c.b16 %v3210, %v3206
    %v3755 = vpack.c.b16 %v3215, %v3211
    %v3756 = vpack.c.b16 %v3216, %v3212
    %v3757 = vpack.c.b16 %v3217, %v3213
    %v3758 = vpack.c.b16 %v3218, %v3214
    %v3759 = vpack.c.b16 %v3223, %v3219
    %v3760 = vpack.c.b16 %v3224, %v3220
    %v3761 = vpack.c.b16 %v3225, %v3221
    %v3762 = vpack.c.b16 %v3226, %v3222
    %v3763 = vpack.c.b16 %v3231, %v3227
    %v3764 = vpack.c.b16 %v3232, %v3228
    %v3765 = vpack.c.b16 %v3233, %v3229
    %v3766 = vpack.c.b16 %v3234, %v3230
    %v3767 = vpack.c.b16 %v3239, %v3235
    %v3768 = vpack.c.b16 %v3240, %v3236
    %v3769 = vpack.c.b16 %v3241, %v3237
    %v3770 = vpack.c.b16 %v3242, %v3238
    %v3771 = vpack.c.b16 %v3247, %v3243
    %v3772 = vpack.c.b16 %v3248, %v3244
    %v3773 = vpack.c.b16 %v3249, %v3245
    %v3774 = vpack.c.b16 %v3250, %v3246
    %v3775 = vpack.c.b16 %v3255, %v3251
    %v3776 = vpack.c.b16 %v3256, %v3252
    %v3777 = vpack.c.b16 %v3257, %v3253
    %v3778 = vpack.c.b16 %v3258, %v3254
    %v3779 = vpack.c.b16 %v3263, %v3259
    %v3780 = vpack.c.b16 %v3264, %v3260
    %v3781 = vpack.c.b16 %v3265, %v3261
    %v3782 = vpack.c.b16 %v3266, %v3262
    %v3783 = vpack.c.b16 %v3271, %v3267
    %v3784 = vpack.c.b16 %v3272, %v3268
    %v3785 = vpack.c.b16 %v3273, %v3269
    %v3786 = vpack.c.b16 %v3274, %v3270
    %4299 = vmatpush.bf16.msra.mxu0 %v3303
    %4300 = vmatpush.bf16.msra.mxu0 %v3299
    %4301 = vmatpush.bf16.msra.mxu0 %v3295
    %4302 = vmatpush.bf16.msra.mxu0 %v3291
    %4303 = vmatpush.bf16.msra.mxu0 %v3287
    %4304 = vmatpush.bf16.msra.mxu0 %v3283
    %4305 = vmatpush.bf16.msra.mxu0 %v3279
    %4306 = vmatpush.bf16.msra.mxu0 %v3275
    %4307 = vmatmul.bf16.gmra.mxu0 %v1201
    %v4308 = vpop.f32.mrf.mxu0
    %v4309 = vadd.f32 %v1731, %v4308
    %v4310 = vpop.f32.mrf.mxu0
    %4311 = vdwg.mxu0
    %4312 = vmatpush.bf16.msra.mxu0 %v3335
    %4313 = vmatpush.bf16.msra.mxu0 %v3331
    %4314 = vmatpush.bf16.msra.mxu0 %v3327
    %4315 = vmatpush.bf16.msra.mxu0 %v3323
    %4316 = vmatpush.bf16.msra.mxu0 %v3319
    %4317 = vmatpush.bf16.msra.mxu0 %v3315
    %4318 = vmatpush.bf16.msra.mxu0 %v3311
    %4319 = vmatpush.bf16.msra.mxu0 %v3307
    %4320 = vmatmul.bf16.gmra.mxu0 %v1202
    %v4321 = vpop.f32.mrf.mxu0
    %v4322 = vadd.f32 %v4309, %v4321
    %v4323 = vpop.f32.mrf.mxu0
    %4324 = vdwg.mxu0
    %4325 = vmatpush.bf16.msra.mxu0 %v3367
    %4326 = vmatpush.bf16.msra.mxu0 %v3363
    %4327 = vmatpush.bf16.msra.mxu0 %v3359
    %4328 = vmatpush.bf16.msra.mxu0 %v3355
    %4329 = vmatpush.bf16.msra.mxu0 %v3351
    %4330 = vmatpush.bf16.msra.mxu0 %v3347
    %4331 = vmatpush.bf16.msra.mxu0 %v3343
    %4332 = vmatpush.bf16.msra.mxu0 %v3339
    %4333 = vmatmul.bf16.gmra.mxu0 %v1203
    %v4334 = vpop.f32.mrf.mxu0
    %v4335 = vadd.f32 %v4322, %v4334
    %v4336 = vpop.f32.mrf.mxu0
    %4337 = vdwg.mxu0
    %4338 = vmatpush.bf16.msra.mxu0 %v3399
    %4339 = vmatpush.bf16.msra.mxu0 %v3395
    %4340 = vmatpush.bf16.msra.mxu0 %v3391
    %4341 = vmatpush.bf16.msra.mxu0 %v3387
    %4342 = vmatpush.bf16.msra.mxu0 %v3383
    %4343 = vmatpush.bf16.msra.mxu0 %v3379
    %4344 = vmatpush.bf16.msra.mxu0 %v3375
    %4345 = vmatpush.bf16.msra.mxu0 %v3371
    %4346 = vmatmul.bf16.gmra.mxu0 %v1204
    %v4347 = vpop.f32.mrf.mxu0
    %v4348 = vadd.f32 %v4335, %v4347
    %v4349 = vpop.f32.mrf.mxu0
    %4350 = vdwg.mxu0
    %4351 = vmatpush.bf16.msra.mxu0 %v3431
    %4352 = vmatpush.bf16.msra.mxu0 %v3427
    %4353 = vmatpush.bf16.msra.mxu0 %v3423
    %4354 = vmatpush.bf16.msra.mxu0 %v3419
    %4355 = vmatpush.bf16.msra.mxu0 %v3415
    %4356 = vmatpush.bf16.msra.mxu0 %v3411
    %4357 = vmatpush.bf16.msra.mxu0 %v3407
    %4358 = vmatpush.bf16.msra.mxu0 %v3403
    %4359 = vmatmul.bf16.gmra.mxu0 %v1205
    %v4360 = vpop.f32.mrf.mxu0
    %v4361 = vadd.f32 %v4348, %v4360
    %v4362 = vpop.f32.mrf.mxu0
    %4363 = vdwg.mxu0
    %4364 = vmatpush.bf16.msra.mxu0 %v3463
    %4365 = vmatpush.bf16.msra.mxu0 %v3459
    %4366 = vmatpush.bf16.msra.mxu0 %v3455
    %4367 = vmatpush.bf16.msra.mxu0 %v3451
    %4368 = vmatpush.bf16.msra.mxu0 %v3447
    %4369 = vmatpush.bf16.msra.mxu0 %v3443
    %4370 = vmatpush.bf16.msra.mxu0 %v3439
    %4371 = vmatpush.bf16.msra.mxu0 %v3435
    %4372 = vmatmul.bf16.gmra.mxu0 %v1206
    %v4373 = vpop.f32.mrf.mxu0
    %v4374 = vadd.f32 %v4361, %v4373
    %v4375 = vpop.f32.mrf.mxu0
    %4376 = vdwg.mxu0
    %4377 = vmatpush.bf16.msra.mxu0 %v3495
    %4378 = vmatpush.bf16.msra.mxu0 %v3491
    %4379 = vmatpush.bf16.msra.mxu0 %v3487
    %4380 = vmatpush.bf16.msra.mxu0 %v3483
    %4381 = vmatpush.bf16.msra.mxu0 %v3479
    %4382 = vmatpush.bf16.msra.mxu0 %v3475
    %4383 = vmatpush.bf16.msra.mxu0 %v3471
    %4384 = vmatpush.bf16.msra.mxu0 %v3467
    %4385 = vmatmul.bf16.gmra.mxu0 %v1207
    %v4386 = vpop.f32.mrf.mxu0
    %v4387 = vadd.f32 %v4374, %v4386
    %v4388 = vpop.f32.mrf.mxu0
    %4389 = vdwg.mxu0
    %4390 = vmatpush.bf16.msra.mxu0 %v3527
    %4391 = vmatpush.bf16.msra.mxu0 %v3523
    %4392 = vmatpush.bf16.msra.mxu0 %v3519
    %4393 = vmatpush.bf16.msra.mxu0 %v3515
    %4394 = vmatpush.bf16.msra.mxu0 %v3511
    %4395 = vmatpush.bf16.msra.mxu0 %v3507
    %4396 = vmatpush.bf16.msra.mxu0 %v3503
    %4397 = vmatpush.bf16.msra.mxu0 %v3499
    %4398 = vmatmul.bf16.gmra.mxu0 %v1208
    %v4399 = vpop.f32.mrf.mxu0
    %v4400 = vadd.f32 %v4387, %v4399
    %v4401 = vpop.f32.mrf.mxu0
    %4402 = vdwg.mxu0
    %4403 = vmatpush.bf16.msra.mxu0 %v3559
    %4404 = vmatpush.bf16.msra.mxu0 %v3555
    %4405 = vmatpush.bf16.msra.mxu0 %v3551
    %4406 = vmatpush.bf16.msra.mxu0 %v3547
    %4407 = vmatpush.bf16.msra.mxu0 %v3543
    %4408 = vmatpush.bf16.msra.mxu0 %v3539
    %4409 = vmatpush.bf16.msra.mxu0 %v3535
    %4410 = vmatpush.bf16.msra.mxu0 %v3531
    %4411 = vmatmul.bf16.gmra.mxu0 %v1209
    %v4412 = vpop.f32.mrf.mxu0
    %v4413 = vadd.f32 %v4400, %v4412
    %v4414 = vpop.f32.mrf.mxu0
    %4415 = vdwg.mxu0
    %4416 = vmatpush.bf16.msra.mxu0 %v3591
    %4417 = vmatpush.bf16.msra.mxu0 %v3587
    %4418 = vmatpush.bf16.msra.mxu0 %v3583
    %4419 = vmatpush.bf16.msra.mxu0 %v3579
    %4420 = vmatpush.bf16.msra.mxu0 %v3575
    %4421 = vmatpush.bf16.msra.mxu0 %v3571
    %4422 = vmatpush.bf16.msra.mxu0 %v3567
    %4423 = vmatpush.bf16.msra.mxu0 %v3563
    %4424 = vmatmul.bf16.gmra.mxu0 %v1210
    %v4425 = vpop.f32.mrf.mxu0
    %v4426 = vadd.f32 %v4413, %v4425
    %v4427 = vpop.f32.mrf.mxu0
    %4428 = vdwg.mxu0
    %4429 = vmatpush.bf16.msra.mxu0 %v3623
    %4430 = vmatpush.bf16.msra.mxu0 %v3619
    %4431 = vmatpush.bf16.msra.mxu0 %v3615
    %4432 = vmatpush.bf16.msra.mxu0 %v3611
    %4433 = vmatpush.bf16.msra.mxu0 %v3607
    %4434 = vmatpush.bf16.msra.mxu0 %v3603
    %4435 = vmatpush.bf16.msra.mxu0 %v3599
    %4436 = vmatpush.bf16.msra.mxu0 %v3595
    %4437 = vmatmul.bf16.gmra.mxu0 %v1211
    %v4438 = vpop.f32.mrf.mxu0
    %v4439 = vadd.f32 %v4426, %v4438
    %v4440 = vpop.f32.mrf.mxu0
    %4441 = vdwg.mxu0
    %4442 = vmatpush.bf16.msra.mxu0 %v3655
    %4443 = vmatpush.bf16.msra.mxu0 %v3651
    %4444 = vmatpush.bf16.msra.mxu0 %v3647
    %4445 = vmatpush.bf16.msra.mxu0 %v3643
    %4446 = vmatpush.bf16.msra.mxu0 %v3639
    %4447 = vmatpush.bf16.msra.mxu0 %v3635
    %4448 = vmatpush.bf16.msra.mxu0 %v3631
    %4449 = vmatpush.bf16.msra.mxu0 %v3627
    %4450 = vmatmul.bf16.gmra.mxu0 %v1212
    %v4451 = vpop.f32.mrf.mxu0
    %v4452 = vadd.f32 %v4439, %v4451
    %v4453 = vpop.f32.mrf.mxu0
    %4454 = vdwg.mxu0
    %4455 = vmatpush.bf16.msra.mxu0 %v3687
    %4456 = vmatpush.bf16.msra.mxu0 %v3683
    %4457 = vmatpush.bf16.msra.mxu0 %v3679
    %4458 = vmatpush.bf16.msra.mxu0 %v3675
    %4459 = vmatpush.bf16.msra.mxu0 %v3671
    %4460 = vmatpush.bf16.msra.mxu0 %v3667
    %4461 = vmatpush.bf16.msra.mxu0 %v3663
    %4462 = vmatpush.bf16.msra.mxu0 %v3659
    %4463 = vmatmul.bf16.gmra.mxu0 %v1213
    %v4464 = vpop.f32.mrf.mxu0
    %v4465 = vadd.f32 %v4452, %v4464
    %v4466 = vpop.f32.mrf.mxu0
    %4467 = vdwg.mxu0
    %4468 = vmatpush.bf16.msra.mxu0 %v3719
    %4469 = vmatpush.bf16.msra.mxu0 %v3715
    %4470 = vmatpush.bf16.msra.mxu0 %v3711
    %4471 = vmatpush.bf16.msra.mxu0 %v3707
    %4472 = vmatpush.bf16.msra.mxu0 %v3703
    %4473 = vmatpush.bf16.msra.mxu0 %v3699
    %4474 = vmatpush.bf16.msra.mxu0 %v3695
    %4475 = vmatpush.bf16.msra.mxu0 %v3691
    %4476 = vmatmul.bf16.gmra.mxu0 %v1214
    %v4477 = vpop.f32.mrf.mxu0
    %v4478 = vadd.f32 %v4465, %v4477
    %v4479 = vpop.f32.mrf.mxu0
    %4480 = vdwg.mxu0
    %4481 = vmatpush.bf16.msra.mxu0 %v3751
    %4482 = vmatpush.bf16.msra.mxu0 %v3747
    %4483 = vmatpush.bf16.msra.mxu0 %v3743
    %4484 = vmatpush.bf16.msra.mxu0 %v3739
    %4485 = vmatpush.bf16.msra.mxu0 %v3735
    %4486 = vmatpush.bf16.msra.mxu0 %v3731
    %4487 = vmatpush.bf16.msra.mxu0 %v3727
    %4488 = vmatpush.bf16.msra.mxu0 %v3723
    %4489 = vmatmul.bf16.gmra.mxu0 %v1215
    %v4490 = vpop.f32.mrf.mxu0
    %v4491 = vadd.f32 %v4478, %v4490
    %v4492 = vpop.f32.mrf.mxu0
    %4493 = vdwg.mxu0
    %4494 = vmatpush.bf16.msra.mxu0 %v3783
    %4495 = vmatpush.bf16.msra.mxu0 %v3779
    %4496 = vmatpush.bf16.msra.mxu0 %v3775
    %4497 = vmatpush.bf16.msra.mxu0 %v3771
    %4498 = vmatpush.bf16.msra.mxu0 %v3767
    %4499 = vmatpush.bf16.msra.mxu0 %v3763
    %4500 = vmatpush.bf16.msra.mxu0 %v3759
    %4501 = vmatpush.bf16.msra.mxu0 %v3755
    %4502 = vmatmul.bf16.gmra.mxu0 %v1216
    %v4503 = vpop.f32.mrf.mxu0
    %v4504 = vadd.f32 %v4491, %v4503
    %v4505 = vpop.f32.mrf.mxu0
    %4506 = vdwg.mxu0
    %4507 = vmatpush.bf16.msra.mxu0 %v3304
    %4508 = vmatpush.bf16.msra.mxu0 %v3300
    %4509 = vmatpush.bf16.msra.mxu0 %v3296
    %4510 = vmatpush.bf16.msra.mxu0 %v3292
    %4511 = vmatpush.bf16.msra.mxu0 %v3288
    %4512 = vmatpush.bf16.msra.mxu0 %v3284
    %4513 = vmatpush.bf16.msra.mxu0 %v3280
    %4514 = vmatpush.bf16.msra.mxu0 %v3276
    %4515 = vmatmul.bf16.gmra.mxu0 %v1201
    %v4516 = vpop.f32.mrf.mxu0
    %v4517 = vadd.f32 %v1732, %v4516
    %v4518 = vpop.f32.mrf.mxu0
    %4519 = vdwg.mxu0
    %4520 = vmatpush.bf16.msra.mxu0 %v3336
    %4521 = vmatpush.bf16.msra.mxu0 %v3332
    %4522 = vmatpush.bf16.msra.mxu0 %v3328
    %4523 = vmatpush.bf16.msra.mxu0 %v3324
    %4524 = vmatpush.bf16.msra.mxu0 %v3320
    %4525 = vmatpush.bf16.msra.mxu0 %v3316
    %4526 = vmatpush.bf16.msra.mxu0 %v3312
    %4527 = vmatpush.bf16.msra.mxu0 %v3308
    %4528 = vmatmul.bf16.gmra.mxu0 %v1202
    %v4529 = vpop.f32.mrf.mxu0
    %v4530 = vadd.f32 %v4517, %v4529
    %v4531 = vpop.f32.mrf.mxu0
    %4532 = vdwg.mxu0
    %4533 = vmatpush.bf16.msra.mxu0 %v3368
    %4534 = vmatpush.bf16.msra.mxu0 %v3364
    %4535 = vmatpush.bf16.msra.mxu0 %v3360
    %4536 = vmatpush.bf16.msra.mxu0 %v3356
    %4537 = vmatpush.bf16.msra.mxu0 %v3352
    %4538 = vmatpush.bf16.msra.mxu0 %v3348
    %4539 = vmatpush.bf16.msra.mxu0 %v3344
    %4540 = vmatpush.bf16.msra.mxu0 %v3340
    %4541 = vmatmul.bf16.gmra.mxu0 %v1203
    %v4542 = vpop.f32.mrf.mxu0
    %v4543 = vadd.f32 %v4530, %v4542
    %v4544 = vpop.f32.mrf.mxu0
    %4545 = vdwg.mxu0
    %4546 = vmatpush.bf16.msra.mxu0 %v3400
    %4547 = vmatpush.bf16.msra.mxu0 %v3396
    %4548 = vmatpush.bf16.msra.mxu0 %v3392
    %4549 = vmatpush.bf16.msra.mxu0 %v3388
    %4550 = vmatpush.bf16.msra.mxu0 %v3384
    %4551 = vmatpush.bf16.msra.mxu0 %v3380
    %4552 = vmatpush.bf16.msra.mxu0 %v3376
    %4553 = vmatpush.bf16.msra.mxu0 %v3372
    %4554 = vmatmul.bf16.gmra.mxu0 %v1204
    %v4555 = vpop.f32.mrf.mxu0
    %v4556 = vadd.f32 %v4543, %v4555
    %v4557 = vpop.f32.mrf.mxu0
    %4558 = vdwg.mxu0
    %4559 = vmatpush.bf16.msra.mxu0 %v3432
    %4560 = vmatpush.bf16.msra.mxu0 %v3428
    %4561 = vmatpush.bf16.msra.mxu0 %v3424
    %4562 = vmatpush.bf16.msra.mxu0 %v3420
    %4563 = vmatpush.bf16.msra.mxu0 %v3416
    %4564 = vmatpush.bf16.msra.mxu0 %v3412
    %4565 = vmatpush.bf16.msra.mxu0 %v3408
    %4566 = vmatpush.bf16.msra.mxu0 %v3404
    %4567 = vmatmul.bf16.gmra.mxu0 %v1205
    %v4568 = vpop.f32.mrf.mxu0
    %v4569 = vadd.f32 %v4556, %v4568
    %v4570 = vpop.f32.mrf.mxu0
    %4571 = vdwg.mxu0
    %4572 = vmatpush.bf16.msra.mxu0 %v3464
    %4573 = vmatpush.bf16.msra.mxu0 %v3460
    %4574 = vmatpush.bf16.msra.mxu0 %v3456
    %4575 = vmatpush.bf16.msra.mxu0 %v3452
    %4576 = vmatpush.bf16.msra.mxu0 %v3448
    %4577 = vmatpush.bf16.msra.mxu0 %v3444
    %4578 = vmatpush.bf16.msra.mxu0 %v3440
    %4579 = vmatpush.bf16.msra.mxu0 %v3436
    %4580 = vmatmul.bf16.gmra.mxu0 %v1206
    %v4581 = vpop.f32.mrf.mxu0
    %v4582 = vadd.f32 %v4569, %v4581
    %v4583 = vpop.f32.mrf.mxu0
    %4584 = vdwg.mxu0
    %4585 = vmatpush.bf16.msra.mxu0 %v3496
    %4586 = vmatpush.bf16.msra.mxu0 %v3492
    %4587 = vmatpush.bf16.msra.mxu0 %v3488
    %4588 = vmatpush.bf16.msra.mxu0 %v3484
    %4589 = vmatpush.bf16.msra.mxu0 %v3480
    %4590 = vmatpush.bf16.msra.mxu0 %v3476
    %4591 = vmatpush.bf16.msra.mxu0 %v3472
    %4592 = vmatpush.bf16.msra.mxu0 %v3468
    %4593 = vmatmul.bf16.gmra.mxu0 %v1207
    %v4594 = vpop.f32.mrf.mxu0
    %v4595 = vadd.f32 %v4582, %v4594
    %v4596 = vpop.f32.mrf.mxu0
    %4597 = vdwg.mxu0
    %4598 = vmatpush.bf16.msra.mxu0 %v3528
    %4599 = vmatpush.bf16.msra.mxu0 %v3524
    %4600 = vmatpush.bf16.msra.mxu0 %v3520
    %4601 = vmatpush.bf16.msra.mxu0 %v3516
    %4602 = vmatpush.bf16.msra.mxu0 %v3512
    %4603 = vmatpush.bf16.msra.mxu0 %v3508
    %4604 = vmatpush.bf16.msra.mxu0 %v3504
    %4605 = vmatpush.bf16.msra.mxu0 %v3500
    %4606 = vmatmul.bf16.gmra.mxu0 %v1208
    %v4607 = vpop.f32.mrf.mxu0
    %v4608 = vadd.f32 %v4595, %v4607
    %v4609 = vpop.f32.mrf.mxu0
    %4610 = vdwg.mxu0
    %4611 = vmatpush.bf16.msra.mxu0 %v3560
    %4612 = vmatpush.bf16.msra.mxu0 %v3556
    %4613 = vmatpush.bf16.msra.mxu0 %v3552
    %4614 = vmatpush.bf16.msra.mxu0 %v3548
    %4615 = vmatpush.bf16.msra.mxu0 %v3544
    %4616 = vmatpush.bf16.msra.mxu0 %v3540
    %4617 = vmatpush.bf16.msra.mxu0 %v3536
    %4618 = vmatpush.bf16.msra.mxu0 %v3532
    %4619 = vmatmul.bf16.gmra.mxu0 %v1209
    %v4620 = vpop.f32.mrf.mxu0
    %v4621 = vadd.f32 %v4608, %v4620
    %v4622 = vpop.f32.mrf.mxu0
    %4623 = vdwg.mxu0
    %4624 = vmatpush.bf16.msra.mxu0 %v3592
    %4625 = vmatpush.bf16.msra.mxu0 %v3588
    %4626 = vmatpush.bf16.msra.mxu0 %v3584
    %4627 = vmatpush.bf16.msra.mxu0 %v3580
    %4628 = vmatpush.bf16.msra.mxu0 %v3576
    %4629 = vmatpush.bf16.msra.mxu0 %v3572
    %4630 = vmatpush.bf16.msra.mxu0 %v3568
    %4631 = vmatpush.bf16.msra.mxu0 %v3564
    %4632 = vmatmul.bf16.gmra.mxu0 %v1210
    %v4633 = vpop.f32.mrf.mxu0
    %v4634 = vadd.f32 %v4621, %v4633
    %v4635 = vpop.f32.mrf.mxu0
    %4636 = vdwg.mxu0
    %4637 = vmatpush.bf16.msra.mxu0 %v3624
    %4638 = vmatpush.bf16.msra.mxu0 %v3620
    %4639 = vmatpush.bf16.msra.mxu0 %v3616
    %4640 = vmatpush.bf16.msra.mxu0 %v3612
    %4641 = vmatpush.bf16.msra.mxu0 %v3608
    %4642 = vmatpush.bf16.msra.mxu0 %v3604
    %4643 = vmatpush.bf16.msra.mxu0 %v3600
    %4644 = vmatpush.bf16.msra.mxu0 %v3596
    %4645 = vmatmul.bf16.gmra.mxu0 %v1211
    %v4646 = vpop.f32.mrf.mxu0
    %v4647 = vadd.f32 %v4634, %v4646
    %v4648 = vpop.f32.mrf.mxu0
    %4649 = vdwg.mxu0
    %4650 = vmatpush.bf16.msra.mxu0 %v3656
    %4651 = vmatpush.bf16.msra.mxu0 %v3652
    %4652 = vmatpush.bf16.msra.mxu0 %v3648
    %4653 = vmatpush.bf16.msra.mxu0 %v3644
    %4654 = vmatpush.bf16.msra.mxu0 %v3640
    %4655 = vmatpush.bf16.msra.mxu0 %v3636
    %4656 = vmatpush.bf16.msra.mxu0 %v3632
    %4657 = vmatpush.bf16.msra.mxu0 %v3628
    %4658 = vmatmul.bf16.gmra.mxu0 %v1212
    %v4659 = vpop.f32.mrf.mxu0
    %v4660 = vadd.f32 %v4647, %v4659
    %v4661 = vpop.f32.mrf.mxu0
    %4662 = vdwg.mxu0
    %4663 = vmatpush.bf16.msra.mxu0 %v3688
    %4664 = vmatpush.bf16.msra.mxu0 %v3684
    %4665 = vmatpush.bf16.msra.mxu0 %v3680
    %4666 = vmatpush.bf16.msra.mxu0 %v3676
    %4667 = vmatpush.bf16.msra.mxu0 %v3672
    %4668 = vmatpush.bf16.msra.mxu0 %v3668
    %4669 = vmatpush.bf16.msra.mxu0 %v3664
    %4670 = vmatpush.bf16.msra.mxu0 %v3660
    %4671 = vmatmul.bf16.gmra.mxu0 %v1213
    %v4672 = vpop.f32.mrf.mxu0
    %v4673 = vadd.f32 %v4660, %v4672
    %v4674 = vpop.f32.mrf.mxu0
    %4675 = vdwg.mxu0
    %4676 = vmatpush.bf16.msra.mxu0 %v3720
    %4677 = vmatpush.bf16.msra.mxu0 %v3716
    %4678 = vmatpush.bf16.msra.mxu0 %v3712
    %4679 = vmatpush.bf16.msra.mxu0 %v3708
    %4680 = vmatpush.bf16.msra.mxu0 %v3704
    %4681 = vmatpush.bf16.msra.mxu0 %v3700
    %4682 = vmatpush.bf16.msra.mxu0 %v3696
    %4683 = vmatpush.bf16.msra.mxu0 %v3692
    %4684 = vmatmul.bf16.gmra.mxu0 %v1214
    %v4685 = vpop.f32.mrf.mxu0
    %v4686 = vadd.f32 %v4673, %v4685
    %v4687 = vpop.f32.mrf.mxu0
    %4688 = vdwg.mxu0
    %4689 = vmatpush.bf16.msra.mxu0 %v3752
    %4690 = vmatpush.bf16.msra.mxu0 %v3748
    %4691 = vmatpush.bf16.msra.mxu0 %v3744
    %4692 = vmatpush.bf16.msra.mxu0 %v3740
    %4693 = vmatpush.bf16.msra.mxu0 %v3736
    %4694 = vmatpush.bf16.msra.mxu0 %v3732
    %4695 = vmatpush.bf16.msra.mxu0 %v3728
    %4696 = vmatpush.bf16.msra.mxu0 %v3724
    %4697 = vmatmul.bf16.gmra.mxu0 %v1215
    %v4698 = vpop.f32.mrf.mxu0
    %v4699 = vadd.f32 %v4686, %v4698
    %v4700 = vpop.f32.mrf.mxu0
    %4701 = vdwg.mxu0
    %4702 = vmatpush.bf16.msra.mxu0 %v3784
    %4703 = vmatpush.bf16.msra.mxu0 %v3780
    %4704 = vmatpush.bf16.msra.mxu0 %v3776
    %4705 = vmatpush.bf16.msra.mxu0 %v3772
    %4706 = vmatpush.bf16.msra.mxu0 %v3768
    %4707 = vmatpush.bf16.msra.mxu0 %v3764
    %4708 = vmatpush.bf16.msra.mxu0 %v3760
    %4709 = vmatpush.bf16.msra.mxu0 %v3756
    %4710 = vmatmul.bf16.gmra.mxu0 %v1216
    %v4711 = vpop.f32.mrf.mxu0
    %v4712 = vadd.f32 %v4699, %v4711
    %v4713 = vpop.f32.mrf.mxu0
    %4714 = vdwg.mxu0
    %4715 = vmatpush.bf16.msra.mxu0 %v3305
    %4716 = vmatpush.bf16.msra.mxu0 %v3301
    %4717 = vmatpush.bf16.msra.mxu0 %v3297
    %4718 = vmatpush.bf16.msra.mxu0 %v3293
    %4719 = vmatpush.bf16.msra.mxu0 %v3289
    %4720 = vmatpush.bf16.msra.mxu0 %v3285
    %4721 = vmatpush.bf16.msra.mxu0 %v3281
    %4722 = vmatpush.bf16.msra.mxu0 %v3277
    %4723 = vmatmul.bf16.gmra.mxu0 %v1201
    %v4724 = vpop.f32.mrf.mxu0
    %v4725 = vadd.f32 %v1733, %v4724
    %v4726 = vpop.f32.mrf.mxu0
    %4727 = vdwg.mxu0
    %4728 = vmatpush.bf16.msra.mxu0 %v3337
    %4729 = vmatpush.bf16.msra.mxu0 %v3333
    %4730 = vmatpush.bf16.msra.mxu0 %v3329
    %4731 = vmatpush.bf16.msra.mxu0 %v3325
    %4732 = vmatpush.bf16.msra.mxu0 %v3321
    %4733 = vmatpush.bf16.msra.mxu0 %v3317
    %4734 = vmatpush.bf16.msra.mxu0 %v3313
    %4735 = vmatpush.bf16.msra.mxu0 %v3309
    %4736 = vmatmul.bf16.gmra.mxu0 %v1202
    %v4737 = vpop.f32.mrf.mxu0
    %v4738 = vadd.f32 %v4725, %v4737
    %v4739 = vpop.f32.mrf.mxu0
    %4740 = vdwg.mxu0
    %4741 = vmatpush.bf16.msra.mxu0 %v3369
    %4742 = vmatpush.bf16.msra.mxu0 %v3365
    %4743 = vmatpush.bf16.msra.mxu0 %v3361
    %4744 = vmatpush.bf16.msra.mxu0 %v3357
    %4745 = vmatpush.bf16.msra.mxu0 %v3353
    %4746 = vmatpush.bf16.msra.mxu0 %v3349
    %4747 = vmatpush.bf16.msra.mxu0 %v3345
    %4748 = vmatpush.bf16.msra.mxu0 %v3341
    %4749 = vmatmul.bf16.gmra.mxu0 %v1203
    %v4750 = vpop.f32.mrf.mxu0
    %v4751 = vadd.f32 %v4738, %v4750
    %v4752 = vpop.f32.mrf.mxu0
    %4753 = vdwg.mxu0
    %4754 = vmatpush.bf16.msra.mxu0 %v3401
    %4755 = vmatpush.bf16.msra.mxu0 %v3397
    %4756 = vmatpush.bf16.msra.mxu0 %v3393
    %4757 = vmatpush.bf16.msra.mxu0 %v3389
    %4758 = vmatpush.bf16.msra.mxu0 %v3385
    %4759 = vmatpush.bf16.msra.mxu0 %v3381
    %4760 = vmatpush.bf16.msra.mxu0 %v3377
    %4761 = vmatpush.bf16.msra.mxu0 %v3373
    %4762 = vmatmul.bf16.gmra.mxu0 %v1204
    %v4763 = vpop.f32.mrf.mxu0
    %v4764 = vadd.f32 %v4751, %v4763
    %v4765 = vpop.f32.mrf.mxu0
    %4766 = vdwg.mxu0
    %4767 = vmatpush.bf16.msra.mxu0 %v3433
    %4768 = vmatpush.bf16.msra.mxu0 %v3429
    %4769 = vmatpush.bf16.msra.mxu0 %v3425
    %4770 = vmatpush.bf16.msra.mxu0 %v3421
    %4771 = vmatpush.bf16.msra.mxu0 %v3417
    %4772 = vmatpush.bf16.msra.mxu0 %v3413
    %4773 = vmatpush.bf16.msra.mxu0 %v3409
    %4774 = vmatpush.bf16.msra.mxu0 %v3405
    %4775 = vmatmul.bf16.gmra.mxu0 %v1205
    %v4776 = vpop.f32.mrf.mxu0
    %v4777 = vadd.f32 %v4764, %v4776
    %v4778 = vpop.f32.mrf.mxu0
    %4779 = vdwg.mxu0
    %4780 = vmatpush.bf16.msra.mxu0 %v3465
    %4781 = vmatpush.bf16.msra.mxu0 %v3461
    %4782 = vmatpush.bf16.msra.mxu0 %v3457
    %4783 = vmatpush.bf16.msra.mxu0 %v3453
    %4784 = vmatpush.bf16.msra.mxu0 %v3449
    %4785 = vmatpush.bf16.msra.mxu0 %v3445
    %4786 = vmatpush.bf16.msra.mxu0 %v3441
    %4787 = vmatpush.bf16.msra.mxu0 %v3437
    %4788 = vmatmul.bf16.gmra.mxu0 %v1206
    %v4789 = vpop.f32.mrf.mxu0
    %v4790 = vadd.f32 %v4777, %v4789
    %v4791 = vpop.f32.mrf.mxu0
    %4792 = vdwg.mxu0
    %4793 = vmatpush.bf16.msra.mxu0 %v3497
    %4794 = vmatpush.bf16.msra.mxu0 %v3493
    %4795 = vmatpush.bf16.msra.mxu0 %v3489
    %4796 = vmatpush.bf16.msra.mxu0 %v3485
    %4797 = vmatpush.bf16.msra.mxu0 %v3481
    %4798 = vmatpush.bf16.msra.mxu0 %v3477
    %4799 = vmatpush.bf16.msra.mxu0 %v3473
    %4800 = vmatpush.bf16.msra.mxu0 %v3469
    %4801 = vmatmul.bf16.gmra.mxu0 %v1207
    %v4802 = vpop.f32.mrf.mxu0
    %v4803 = vadd.f32 %v4790, %v4802
    %v4804 = vpop.f32.mrf.mxu0
    %4805 = vdwg.mxu0
    %4806 = vmatpush.bf16.msra.mxu0 %v3529
    %4807 = vmatpush.bf16.msra.mxu0 %v3525
    %4808 = vmatpush.bf16.msra.mxu0 %v3521
    %4809 = vmatpush.bf16.msra.mxu0 %v3517
    %4810 = vmatpush.bf16.msra.mxu0 %v3513
    %4811 = vmatpush.bf16.msra.mxu0 %v3509
    %4812 = vmatpush.bf16.msra.mxu0 %v3505
    %4813 = vmatpush.bf16.msra.mxu0 %v3501
    %4814 = vmatmul.bf16.gmra.mxu0 %v1208
    %v4815 = vpop.f32.mrf.mxu0
    %v4816 = vadd.f32 %v4803, %v4815
    %v4817 = vpop.f32.mrf.mxu0
    %4818 = vdwg.mxu0
    %4819 = vmatpush.bf16.msra.mxu0 %v3561
    %4820 = vmatpush.bf16.msra.mxu0 %v3557
    %4821 = vmatpush.bf16.msra.mxu0 %v3553
    %4822 = vmatpush.bf16.msra.mxu0 %v3549
    %4823 = vmatpush.bf16.msra.mxu0 %v3545
    %4824 = vmatpush.bf16.msra.mxu0 %v3541
    %4825 = vmatpush.bf16.msra.mxu0 %v3537
    %4826 = vmatpush.bf16.msra.mxu0 %v3533
    %4827 = vmatmul.bf16.gmra.mxu0 %v1209
    %v4828 = vpop.f32.mrf.mxu0
    %v4829 = vadd.f32 %v4816, %v4828
    %v4830 = vpop.f32.mrf.mxu0
    %4831 = vdwg.mxu0
    %4832 = vmatpush.bf16.msra.mxu0 %v3593
    %4833 = vmatpush.bf16.msra.mxu0 %v3589
    %4834 = vmatpush.bf16.msra.mxu0 %v3585
    %4835 = vmatpush.bf16.msra.mxu0 %v3581
    %4836 = vmatpush.bf16.msra.mxu0 %v3577
    %4837 = vmatpush.bf16.msra.mxu0 %v3573
    %4838 = vmatpush.bf16.msra.mxu0 %v3569
    %4839 = vmatpush.bf16.msra.mxu0 %v3565
    %4840 = vmatmul.bf16.gmra.mxu0 %v1210
    %v4841 = vpop.f32.mrf.mxu0
    %v4842 = vadd.f32 %v4829, %v4841
    %v4843 = vpop.f32.mrf.mxu0
    %4844 = vdwg.mxu0
    %4845 = vmatpush.bf16.msra.mxu0 %v3625
    %4846 = vmatpush.bf16.msra.mxu0 %v3621
    %4847 = vmatpush.bf16.msra.mxu0 %v3617
    %4848 = vmatpush.bf16.msra.mxu0 %v3613
    %4849 = vmatpush.bf16.msra.mxu0 %v3609
    %4850 = vmatpush.bf16.msra.mxu0 %v3605
    %4851 = vmatpush.bf16.msra.mxu0 %v3601
    %4852 = vmatpush.bf16.msra.mxu0 %v3597
    %4853 = vmatmul.bf16.gmra.mxu0 %v1211
    %v4854 = vpop.f32.mrf.mxu0
    %v4855 = vadd.f32 %v4842, %v4854
    %v4856 = vpop.f32.mrf.mxu0
    %4857 = vdwg.mxu0
    %4858 = vmatpush.bf16.msra.mxu0 %v3657
    %4859 = vmatpush.bf16.msra.mxu0 %v3653
    %4860 = vmatpush.bf16.msra.mxu0 %v3649
    %4861 = vmatpush.bf16.msra.mxu0 %v3645
    %4862 = vmatpush.bf16.msra.mxu0 %v3641
    %4863 = vmatpush.bf16.msra.mxu0 %v3637
    %4864 = vmatpush.bf16.msra.mxu0 %v3633
    %4865 = vmatpush.bf16.msra.mxu0 %v3629
    %4866 = vmatmul.bf16.gmra.mxu0 %v1212
    %v4867 = vpop.f32.mrf.mxu0
    %v4868 = vadd.f32 %v4855, %v4867
    %v4869 = vpop.f32.mrf.mxu0
    %4870 = vdwg.mxu0
    %4871 = vmatpush.bf16.msra.mxu0 %v3689
    %4872 = vmatpush.bf16.msra.mxu0 %v3685
    %4873 = vmatpush.bf16.msra.mxu0 %v3681
    %4874 = vmatpush.bf16.msra.mxu0 %v3677
    %4875 = vmatpush.bf16.msra.mxu0 %v3673
    %4876 = vmatpush.bf16.msra.mxu0 %v3669
    %4877 = vmatpush.bf16.msra.mxu0 %v3665
    %4878 = vmatpush.bf16.msra.mxu0 %v3661
    %4879 = vmatmul.bf16.gmra.mxu0 %v1213
    %v4880 = vpop.f32.mrf.mxu0
    %v4881 = vadd.f32 %v4868, %v4880
    %v4882 = vpop.f32.mrf.mxu0
    %4883 = vdwg.mxu0
    %4884 = vmatpush.bf16.msra.mxu0 %v3721
    %4885 = vmatpush.bf16.msra.mxu0 %v3717
    %4886 = vmatpush.bf16.msra.mxu0 %v3713
    %4887 = vmatpush.bf16.msra.mxu0 %v3709
    %4888 = vmatpush.bf16.msra.mxu0 %v3705
    %4889 = vmatpush.bf16.msra.mxu0 %v3701
    %4890 = vmatpush.bf16.msra.mxu0 %v3697
    %4891 = vmatpush.bf16.msra.mxu0 %v3693
    %4892 = vmatmul.bf16.gmra.mxu0 %v1214
    %v4893 = vpop.f32.mrf.mxu0
    %v4894 = vadd.f32 %v4881, %v4893
    %v4895 = vpop.f32.mrf.mxu0
    %4896 = vdwg.mxu0
    %4897 = vmatpush.bf16.msra.mxu0 %v3753
    %4898 = vmatpush.bf16.msra.mxu0 %v3749
    %4899 = vmatpush.bf16.msra.mxu0 %v3745
    %4900 = vmatpush.bf16.msra.mxu0 %v3741
    %4901 = vmatpush.bf16.msra.mxu0 %v3737
    %4902 = vmatpush.bf16.msra.mxu0 %v3733
    %4903 = vmatpush.bf16.msra.mxu0 %v3729
    %4904 = vmatpush.bf16.msra.mxu0 %v3725
    %4905 = vmatmul.bf16.gmra.mxu0 %v1215
    %v4906 = vpop.f32.mrf.mxu0
    %v4907 = vadd.f32 %v4894, %v4906
    %v4908 = vpop.f32.mrf.mxu0
    %4909 = vdwg.mxu0
    %4910 = vmatpush.bf16.msra.mxu0 %v3785
    %4911 = vmatpush.bf16.msra.mxu0 %v3781
    %4912 = vmatpush.bf16.msra.mxu0 %v3777
    %4913 = vmatpush.bf16.msra.mxu0 %v3773
    %4914 = vmatpush.bf16.msra.mxu0 %v3769
    %4915 = vmatpush.bf16.msra.mxu0 %v3765
    %4916 = vmatpush.bf16.msra.mxu0 %v3761
    %4917 = vmatpush.bf16.msra.mxu0 %v3757
    %4918 = vmatmul.bf16.gmra.mxu0 %v1216
    %v4919 = vpop.f32.mrf.mxu0
    %v4920 = vadd.f32 %v4907, %v4919
    %v4921 = vpop.f32.mrf.mxu0
    %4922 = vdwg.mxu0
    %4923 = vmatpush.bf16.msra.mxu0 %v3306
    %4924 = vmatpush.bf16.msra.mxu0 %v3302
    %4925 = vmatpush.bf16.msra.mxu0 %v3298
    %4926 = vmatpush.bf16.msra.mxu0 %v3294
    %4927 = vmatpush.bf16.msra.mxu0 %v3290
    %4928 = vmatpush.bf16.msra.mxu0 %v3286
    %4929 = vmatpush.bf16.msra.mxu0 %v3282
    %4930 = vmatpush.bf16.msra.mxu0 %v3278
    %4931 = vmatmul.bf16.gmra.mxu0 %v1201
    %v4932 = vpop.f32.mrf.mxu0
    %v4933 = vadd.f32 %v1734, %v4932
    %v4934 = vpop.f32.mrf.mxu0
    %4935 = vdwg.mxu0
    %4936 = vmatpush.bf16.msra.mxu0 %v3338
    %4937 = vmatpush.bf16.msra.mxu0 %v3334
    %4938 = vmatpush.bf16.msra.mxu0 %v3330
    %4939 = vmatpush.bf16.msra.mxu0 %v3326
    %4940 = vmatpush.bf16.msra.mxu0 %v3322
    %4941 = vmatpush.bf16.msra.mxu0 %v3318
    %4942 = vmatpush.bf16.msra.mxu0 %v3314
    %4943 = vmatpush.bf16.msra.mxu0 %v3310
    %4944 = vmatmul.bf16.gmra.mxu0 %v1202
    %v4945 = vpop.f32.mrf.mxu0
    %v4946 = vadd.f32 %v4933, %v4945
    %v4947 = vpop.f32.mrf.mxu0
    %4948 = vdwg.mxu0
    %4949 = vmatpush.bf16.msra.mxu0 %v3370
    %4950 = vmatpush.bf16.msra.mxu0 %v3366
    %4951 = vmatpush.bf16.msra.mxu0 %v3362
    %4952 = vmatpush.bf16.msra.mxu0 %v3358
    %4953 = vmatpush.bf16.msra.mxu0 %v3354
    %4954 = vmatpush.bf16.msra.mxu0 %v3350
    %4955 = vmatpush.bf16.msra.mxu0 %v3346
    %4956 = vmatpush.bf16.msra.mxu0 %v3342
    %4957 = vmatmul.bf16.gmra.mxu0 %v1203
    %v4958 = vpop.f32.mrf.mxu0
    %v4959 = vadd.f32 %v4946, %v4958
    %v4960 = vpop.f32.mrf.mxu0
    %4961 = vdwg.mxu0
    %4962 = vmatpush.bf16.msra.mxu0 %v3402
    %4963 = vmatpush.bf16.msra.mxu0 %v3398
    %4964 = vmatpush.bf16.msra.mxu0 %v3394
    %4965 = vmatpush.bf16.msra.mxu0 %v3390
    %4966 = vmatpush.bf16.msra.mxu0 %v3386
    %4967 = vmatpush.bf16.msra.mxu0 %v3382
    %4968 = vmatpush.bf16.msra.mxu0 %v3378
    %4969 = vmatpush.bf16.msra.mxu0 %v3374
    %4970 = vmatmul.bf16.gmra.mxu0 %v1204
    %v4971 = vpop.f32.mrf.mxu0
    %v4972 = vadd.f32 %v4959, %v4971
    %v4973 = vpop.f32.mrf.mxu0
    %4974 = vdwg.mxu0
    %4975 = vmatpush.bf16.msra.mxu0 %v3434
    %4976 = vmatpush.bf16.msra.mxu0 %v3430
    %4977 = vmatpush.bf16.msra.mxu0 %v3426
    %4978 = vmatpush.bf16.msra.mxu0 %v3422
    %4979 = vmatpush.bf16.msra.mxu0 %v3418
    %4980 = vmatpush.bf16.msra.mxu0 %v3414
    %4981 = vmatpush.bf16.msra.mxu0 %v3410
    %4982 = vmatpush.bf16.msra.mxu0 %v3406
    %4983 = vmatmul.bf16.gmra.mxu0 %v1205
    %v4984 = vpop.f32.mrf.mxu0
    %v4985 = vadd.f32 %v4972, %v4984
    %v4986 = vpop.f32.mrf.mxu0
    %4987 = vdwg.mxu0
    %4988 = vmatpush.bf16.msra.mxu0 %v3466
    %4989 = vmatpush.bf16.msra.mxu0 %v3462
    %4990 = vmatpush.bf16.msra.mxu0 %v3458
    %4991 = vmatpush.bf16.msra.mxu0 %v3454
    %4992 = vmatpush.bf16.msra.mxu0 %v3450
    %4993 = vmatpush.bf16.msra.mxu0 %v3446
    %4994 = vmatpush.bf16.msra.mxu0 %v3442
    %4995 = vmatpush.bf16.msra.mxu0 %v3438
    %4996 = vmatmul.bf16.gmra.mxu0 %v1206
    %v4997 = vpop.f32.mrf.mxu0
    %v4998 = vadd.f32 %v4985, %v4997
    %v4999 = vpop.f32.mrf.mxu0
    %5000 = vdwg.mxu0
    %5001 = vmatpush.bf16.msra.mxu0 %v3498
    %5002 = vmatpush.bf16.msra.mxu0 %v3494
    %5003 = vmatpush.bf16.msra.mxu0 %v3490
    %5004 = vmatpush.bf16.msra.mxu0 %v3486
    %5005 = vmatpush.bf16.msra.mxu0 %v3482
    %5006 = vmatpush.bf16.msra.mxu0 %v3478
    %5007 = vmatpush.bf16.msra.mxu0 %v3474
    %5008 = vmatpush.bf16.msra.mxu0 %v3470
    %5009 = vmatmul.bf16.gmra.mxu0 %v1207
    %v5010 = vpop.f32.mrf.mxu0
    %v5011 = vadd.f32 %v4998, %v5010
    %v5012 = vpop.f32.mrf.mxu0
    %5013 = vdwg.mxu0
    %5014 = vmatpush.bf16.msra.mxu0 %v3530
    %5015 = vmatpush.bf16.msra.mxu0 %v3526
    %5016 = vmatpush.bf16.msra.mxu0 %v3522
    %5017 = vmatpush.bf16.msra.mxu0 %v3518
    %5018 = vmatpush.bf16.msra.mxu0 %v3514
    %5019 = vmatpush.bf16.msra.mxu0 %v3510
    %5020 = vmatpush.bf16.msra.mxu0 %v3506
    %5021 = vmatpush.bf16.msra.mxu0 %v3502
    %5022 = vmatmul.bf16.gmra.mxu0 %v1208
    %v5023 = vpop.f32.mrf.mxu0
    %v5024 = vadd.f32 %v5011, %v5023
    %v5025 = vpop.f32.mrf.mxu0
    %5026 = vdwg.mxu0
    %5027 = vmatpush.bf16.msra.mxu0 %v3562
    %5028 = vmatpush.bf16.msra.mxu0 %v3558
    %5029 = vmatpush.bf16.msra.mxu0 %v3554
    %5030 = vmatpush.bf16.msra.mxu0 %v3550
    %5031 = vmatpush.bf16.msra.mxu0 %v3546
    %5032 = vmatpush.bf16.msra.mxu0 %v3542
    %5033 = vmatpush.bf16.msra.mxu0 %v3538
    %5034 = vmatpush.bf16.msra.mxu0 %v3534
    %5035 = vmatmul.bf16.gmra.mxu0 %v1209
    %v5036 = vpop.f32.mrf.mxu0
    %v5037 = vadd.f32 %v5024, %v5036
    %v5038 = vpop.f32.mrf.mxu0
    %5039 = vdwg.mxu0
    %5040 = vmatpush.bf16.msra.mxu0 %v3594
    %5041 = vmatpush.bf16.msra.mxu0 %v3590
    %5042 = vmatpush.bf16.msra.mxu0 %v3586
    %5043 = vmatpush.bf16.msra.mxu0 %v3582
    %5044 = vmatpush.bf16.msra.mxu0 %v3578
    %5045 = vmatpush.bf16.msra.mxu0 %v3574
    %5046 = vmatpush.bf16.msra.mxu0 %v3570
    %5047 = vmatpush.bf16.msra.mxu0 %v3566
    %5048 = vmatmul.bf16.gmra.mxu0 %v1210
    %v5049 = vpop.f32.mrf.mxu0
    %v5050 = vadd.f32 %v5037, %v5049
    %v5051 = vpop.f32.mrf.mxu0
    %5052 = vdwg.mxu0
    %5053 = vmatpush.bf16.msra.mxu0 %v3626
    %5054 = vmatpush.bf16.msra.mxu0 %v3622
    %5055 = vmatpush.bf16.msra.mxu0 %v3618
    %5056 = vmatpush.bf16.msra.mxu0 %v3614
    %5057 = vmatpush.bf16.msra.mxu0 %v3610
    %5058 = vmatpush.bf16.msra.mxu0 %v3606
    %5059 = vmatpush.bf16.msra.mxu0 %v3602
    %5060 = vmatpush.bf16.msra.mxu0 %v3598
    %5061 = vmatmul.bf16.gmra.mxu0 %v1211
    %v5062 = vpop.f32.mrf.mxu0
    %v5063 = vadd.f32 %v5050, %v5062
    %v5064 = vpop.f32.mrf.mxu0
    %5065 = vdwg.mxu0
    %5066 = vmatpush.bf16.msra.mxu0 %v3658
    %5067 = vmatpush.bf16.msra.mxu0 %v3654
    %5068 = vmatpush.bf16.msra.mxu0 %v3650
    %5069 = vmatpush.bf16.msra.mxu0 %v3646
    %5070 = vmatpush.bf16.msra.mxu0 %v3642
    %5071 = vmatpush.bf16.msra.mxu0 %v3638
    %5072 = vmatpush.bf16.msra.mxu0 %v3634
    %5073 = vmatpush.bf16.msra.mxu0 %v3630
    %5074 = vmatmul.bf16.gmra.mxu0 %v1212
    %v5075 = vpop.f32.mrf.mxu0
    %v5076 = vadd.f32 %v5063, %v5075
    %v5077 = vpop.f32.mrf.mxu0
    %5078 = vdwg.mxu0
    %5079 = vmatpush.bf16.msra.mxu0 %v3690
    %5080 = vmatpush.bf16.msra.mxu0 %v3686
    %5081 = vmatpush.bf16.msra.mxu0 %v3682
    %5082 = vmatpush.bf16.msra.mxu0 %v3678
    %5083 = vmatpush.bf16.msra.mxu0 %v3674
    %5084 = vmatpush.bf16.msra.mxu0 %v3670
    %5085 = vmatpush.bf16.msra.mxu0 %v3666
    %5086 = vmatpush.bf16.msra.mxu0 %v3662
    %5087 = vmatmul.bf16.gmra.mxu0 %v1213
    %v5088 = vpop.f32.mrf.mxu0
    %v5089 = vadd.f32 %v5076, %v5088
    %v5090 = vpop.f32.mrf.mxu0
    %5091 = vdwg.mxu0
    %5092 = vmatpush.bf16.msra.mxu0 %v3722
    %5093 = vmatpush.bf16.msra.mxu0 %v3718
    %5094 = vmatpush.bf16.msra.mxu0 %v3714
    %5095 = vmatpush.bf16.msra.mxu0 %v3710
    %5096 = vmatpush.bf16.msra.mxu0 %v3706
    %5097 = vmatpush.bf16.msra.mxu0 %v3702
    %5098 = vmatpush.bf16.msra.mxu0 %v3698
    %5099 = vmatpush.bf16.msra.mxu0 %v3694
    %5100 = vmatmul.bf16.gmra.mxu0 %v1214
    %v5101 = vpop.f32.mrf.mxu0
    %v5102 = vadd.f32 %v5089, %v5101
    %v5103 = vpop.f32.mrf.mxu0
    %5104 = vdwg.mxu0
    %5105 = vmatpush.bf16.msra.mxu0 %v3754
    %5106 = vmatpush.bf16.msra.mxu0 %v3750
    %5107 = vmatpush.bf16.msra.mxu0 %v3746
    %5108 = vmatpush.bf16.msra.mxu0 %v3742
    %5109 = vmatpush.bf16.msra.mxu0 %v3738
    %5110 = vmatpush.bf16.msra.mxu0 %v3734
    %5111 = vmatpush.bf16.msra.mxu0 %v3730
    %5112 = vmatpush.bf16.msra.mxu0 %v3726
    %5113 = vmatmul.bf16.gmra.mxu0 %v1215
    %v5114 = vpop.f32.mrf.mxu0
    %v5115 = vadd.f32 %v5102, %v5114
    %v5116 = vpop.f32.mrf.mxu0
    %5117 = vdwg.mxu0
    %5118 = vmatpush.bf16.msra.mxu0 %v3786
    %5119 = vmatpush.bf16.msra.mxu0 %v3782
    %5120 = vmatpush.bf16.msra.mxu0 %v3778
    %5121 = vmatpush.bf16.msra.mxu0 %v3774
    %5122 = vmatpush.bf16.msra.mxu0 %v3770
    %5123 = vmatpush.bf16.msra.mxu0 %v3766
    %5124 = vmatpush.bf16.msra.mxu0 %v3762
    %5125 = vmatpush.bf16.msra.mxu0 %v3758
    %5126 = vmatmul.bf16.gmra.mxu0 %v1216
    %v5127 = vpop.f32.mrf.mxu0
    %v5128 = vadd.f32 %v5115, %v5127
    %v5129 = vpop.f32.mrf.mxu0
    %5130 = vdwg.mxu0
    %v5131 = vmax.f32 %v4504, 0.0
    %v5132 = vmax.f32 %v4712, 0.0
    %v5133 = vmax.f32 %v4920, 0.0
    %v5134 = vmax.f32 %v5128, 0.0
    %v5135 = vpack.c.bf16 %v5131, %v5131
    %v5136 = vpack.c.bf16 %v5132, %v5132
    %v5137 = vpack.c.bf16 %v5133, %v5133
    %v5138 = vpack.c.bf16 %v5134, %v5134
    %v5139 = vld [vmem:[#allocation11] sm:$0xf]
    %v5140 = vld [vmem:[#allocation11 + $0x4] sm:$0xf]
    %v5141 = vld [vmem:[#allocation11 + $0x8] sm:$0xf]
    %v5142 = vld [vmem:[#allocation11 + $0xc] sm:$0xf]
    %v5143 = vld [vmem:[#allocation11 + $0x10] sm:$0xf]
    %v5144 = vld [vmem:[#allocation11 + $0x14] sm:$0xf]
    %v5145 = vld [vmem:[#allocation11 + $0x18] sm:$0xf]
    %v5146 = vld [vmem:[#allocation11 + $0x1c] sm:$0xf]
    %v5147 = vld [vmem:[#allocation11 + $0x20] sm:$0xf]
    %v5148 = vld [vmem:[#allocation11 + $0x24] sm:$0xf]
    %v5149 = vld [vmem:[#allocation11 + $0x28] sm:$0xf]
    %v5150 = vld [vmem:[#allocation11 + $0x2c] sm:$0xf]
    %v5151 = vld [vmem:[#allocation11 + $0x30] sm:$0xf]
    %v5152 = vld [vmem:[#allocation11 + $0x34] sm:$0xf]
    %v5153 = vld [vmem:[#allocation11 + $0x38] sm:$0xf]
    %v5154 = vld [vmem:[#allocation11 + $0x3c] sm:$0xf]
    %v5155 = vld [vmem:[#allocation11 + $0x40] sm:$0xf]
    %v5156 = vld [vmem:[#allocation11 + $0x44] sm:$0xf]
    %v5157 = vld [vmem:[#allocation11 + $0x48] sm:$0xf]
    %v5158 = vld [vmem:[#allocation11 + $0x4c] sm:$0xf]
    %v5159 = vld [vmem:[#allocation11 + $0x50] sm:$0xf]
    %v5160 = vld [vmem:[#allocation11 + $0x54] sm:$0xf]
    %v5161 = vld [vmem:[#allocation11 + $0x58] sm:$0xf]
    %v5162 = vld [vmem:[#allocation11 + $0x5c] sm:$0xf]
    %v5163 = vld [vmem:[#allocation11 + $0x60] sm:$0xf]
    %v5164 = vld [vmem:[#allocation11 + $0x64] sm:$0xf]
    %v5165 = vld [vmem:[#allocation11 + $0x68] sm:$0xf]
    %v5166 = vld [vmem:[#allocation11 + $0x6c] sm:$0xf]
    %v5167 = vld [vmem:[#allocation11 + $0x70] sm:$0xf]
    %v5168 = vld [vmem:[#allocation11 + $0x74] sm:$0xf]
    %v5169 = vld [vmem:[#allocation11 + $0x78] sm:$0xf]
    %v5170 = vld [vmem:[#allocation11 + $0x7c] sm:$0xf]
    %v5171 = vld [vmem:[#allocation11 + $0x80] sm:$0xf]
    %v5172 = vld [vmem:[#allocation11 + $0x84] sm:$0xf]
    %v5173 = vld [vmem:[#allocation11 + $0x88] sm:$0xf]
    %v5174 = vld [vmem:[#allocation11 + $0x8c] sm:$0xf]
    %v5175 = vld [vmem:[#allocation11 + $0x90] sm:$0xf]
    %v5176 = vld [vmem:[#allocation11 + $0x94] sm:$0xf]
    %v5177 = vld [vmem:[#allocation11 + $0x98] sm:$0xf]
    %v5178 = vld [vmem:[#allocation11 + $0x9c] sm:$0xf]
    %v5179 = vld [vmem:[#allocation11 + $0xa0] sm:$0xf]
    %v5180 = vld [vmem:[#allocation11 + $0xa4] sm:$0xf]
    %v5181 = vld [vmem:[#allocation11 + $0xa8] sm:$0xf]
    %v5182 = vld [vmem:[#allocation11 + $0xac] sm:$0xf]
    %v5183 = vld [vmem:[#allocation11 + $0xb0] sm:$0xf]
    %v5184 = vld [vmem:[#allocation11 + $0xb4] sm:$0xf]
    %v5185 = vld [vmem:[#allocation11 + $0xb8] sm:$0xf]
    %v5186 = vld [vmem:[#allocation11 + $0xbc] sm:$0xf]
    %v5187 = vld [vmem:[#allocation11 + $0xc0] sm:$0xf]
    %v5188 = vld [vmem:[#allocation11 + $0xc4] sm:$0xf]
    %v5189 = vld [vmem:[#allocation11 + $0xc8] sm:$0xf]
    %v5190 = vld [vmem:[#allocation11 + $0xcc] sm:$0xf]
    %v5191 = vld [vmem:[#allocation11 + $0xd0] sm:$0xf]
    %v5192 = vld [vmem:[#allocation11 + $0xd4] sm:$0xf]
    %v5193 = vld [vmem:[#allocation11 + $0xd8] sm:$0xf]
    %v5194 = vld [vmem:[#allocation11 + $0xdc] sm:$0xf]
    %v5195 = vld [vmem:[#allocation11 + $0xe0] sm:$0xf]
    %v5196 = vld [vmem:[#allocation11 + $0xe4] sm:$0xf]
    %v5197 = vld [vmem:[#allocation11 + $0xe8] sm:$0xf]
    %v5198 = vld [vmem:[#allocation11 + $0xec] sm:$0xf]
    %v5199 = vld [vmem:[#allocation11 + $0xf0] sm:$0xf]
    %v5200 = vld [vmem:[#allocation11 + $0xf4] sm:$0xf]
    %v5201 = vld [vmem:[#allocation11 + $0xf8] sm:$0xf]
    %v5202 = vld [vmem:[#allocation11 + $0xfc] sm:$0xf]
    %v5203 = vld [vmem:[#allocation13] sm:$0x1]
    %v5205 = vperm.slane %v5203, 0
    %v5271 = vunpack.c.l.b16 %v5139
    %v5272 = vunpack.c.l.b16 %v5140
    %v5273 = vunpack.c.l.b16 %v5141
    %v5274 = vunpack.c.l.b16 %v5142
    %v5275 = vunpack.c.l.b16 %v5143
    %v5276 = vunpack.c.l.b16 %v5144
    %v5277 = vunpack.c.l.b16 %v5145
    %v5278 = vunpack.c.l.b16 %v5146
    %v5279 = vunpack.c.l.b16 %v5147
    %v5280 = vunpack.c.l.b16 %v5148
    %v5281 = vunpack.c.l.b16 %v5149
    %v5282 = vunpack.c.l.b16 %v5150
    %v5283 = vunpack.c.l.b16 %v5151
    %v5284 = vunpack.c.l.b16 %v5152
    %v5285 = vunpack.c.l.b16 %v5153
    %v5286 = vunpack.c.l.b16 %v5154
    %v5287 = vunpack.c.l.b16 %v5155
    %v5288 = vunpack.c.l.b16 %v5156
    %v5289 = vunpack.c.l.b16 %v5157
    %v5290 = vunpack.c.l.b16 %v5158
    %v5291 = vunpack.c.l.b16 %v5159
    %v5292 = vunpack.c.l.b16 %v5160
    %v5293 = vunpack.c.l.b16 %v5161
    %v5294 = vunpack.c.l.b16 %v5162
    %v5295 = vunpack.c.l.b16 %v5163
    %v5296 = vunpack.c.l.b16 %v5164
    %v5297 = vunpack.c.l.b16 %v5165
    %v5298 = vunpack.c.l.b16 %v5166
    %v5299 = vunpack.c.l.b16 %v5167
    %v5300 = vunpack.c.l.b16 %v5168
    %v5301 = vunpack.c.l.b16 %v5169
    %v5302 = vunpack.c.l.b16 %v5170
    %v5303 = vunpack.c.l.b16 %v5171
    %v5304 = vunpack.c.l.b16 %v5172
    %v5305 = vunpack.c.l.b16 %v5173
    %v5306 = vunpack.c.l.b16 %v5174
    %v5307 = vunpack.c.l.b16 %v5175
    %v5308 = vunpack.c.l.b16 %v5176
    %v5309 = vunpack.c.l.b16 %v5177
    %v5310 = vunpack.c.l.b16 %v5178
    %v5311 = vunpack.c.l.b16 %v5179
    %v5312 = vunpack.c.l.b16 %v5180
    %v5313 = vunpack.c.l.b16 %v5181
    %v5314 = vunpack.c.l.b16 %v5182
    %v5315 = vunpack.c.l.b16 %v5183
    %v5316 = vunpack.c.l.b16 %v5184
    %v5317 = vunpack.c.l.b16 %v5185
    %v5318 = vunpack.c.l.b16 %v5186
    %v5319 = vunpack.c.l.b16 %v5187
    %v5320 = vunpack.c.l.b16 %v5188
    %v5321 = vunpack.c.l.b16 %v5189
    %v5322 = vunpack.c.l.b16 %v5190
    %v5323 = vunpack.c.l.b16 %v5191
    %v5324 = vunpack.c.l.b16 %v5192
    %v5325 = vunpack.c.l.b16 %v5193
    %v5326 = vunpack.c.l.b16 %v5194
    %v5327 = vunpack.c.l.b16 %v5195
    %v5328 = vunpack.c.l.b16 %v5196
    %v5329 = vunpack.c.l.b16 %v5197
    %v5330 = vunpack.c.l.b16 %v5198
    %v5331 = vunpack.c.l.b16 %v5199
    %v5332 = vunpack.c.l.b16 %v5200
    %v5333 = vunpack.c.l.b16 %v5201
    %v5334 = vunpack.c.l.b16 %v5202
    %v5335 = vpack.c.b16 %v5272, %v5271
    %v5336 = vpack.c.b16 %v5274, %v5273
    %v5337 = vpack.c.b16 %v5276, %v5275
    %v5338 = vpack.c.b16 %v5278, %v5277
    %v5339 = vpack.c.b16 %v5280, %v5279
    %v5340 = vpack.c.b16 %v5282, %v5281
    %v5341 = vpack.c.b16 %v5284, %v5283
    %v5342 = vpack.c.b16 %v5286, %v5285
    %v5343 = vpack.c.b16 %v5288, %v5287
    %v5344 = vpack.c.b16 %v5290, %v5289
    %v5345 = vpack.c.b16 %v5292, %v5291
    %v5346 = vpack.c.b16 %v5294, %v5293
    %v5347 = vpack.c.b16 %v5296, %v5295
    %v5348 = vpack.c.b16 %v5298, %v5297
    %v5349 = vpack.c.b16 %v5300, %v5299
    %v5350 = vpack.c.b16 %v5302, %v5301
    %v5351 = vpack.c.b16 %v5304, %v5303
    %v5352 = vpack.c.b16 %v5306, %v5305
    %v5353 = vpack.c.b16 %v5308, %v5307
    %v5354 = vpack.c.b16 %v5310, %v5309
    %v5355 = vpack.c.b16 %v5312, %v5311
    %v5356 = vpack.c.b16 %v5314, %v5313
    %v5357 = vpack.c.b16 %v5316, %v5315
    %v5358 = vpack.c.b16 %v5318, %v5317
    %v5359 = vpack.c.b16 %v5320, %v5319
    %v5360 = vpack.c.b16 %v5322, %v5321
    %v5361 = vpack.c.b16 %v5324, %v5323
    %v5362 = vpack.c.b16 %v5326, %v5325
    %v5363 = vpack.c.b16 %v5328, %v5327
    %v5364 = vpack.c.b16 %v5330, %v5329
    %v5365 = vpack.c.b16 %v5332, %v5331
    %v5366 = vpack.c.b16 %v5334, %v5333
    %5399 = vmatpush.bf16.msra.mxu0 %v5342
    %5400 = vmatpush.bf16.msra.mxu0 %v5341
    %5401 = vmatpush.bf16.msra.mxu0 %v5340
    %5402 = vmatpush.bf16.msra.mxu0 %v5339
    %5403 = vmatpush.bf16.msra.mxu0 %v5338
    %5404 = vmatpush.bf16.msra.mxu0 %v5337
    %5405 = vmatpush.bf16.msra.mxu0 %v5336
    %5406 = vmatpush.bf16.msra.mxu0 %v5335
    %5407 = vmatmul.bf16.gmra.mxu0 %v5135
    %v5408 = vpop.f32.mrf.mxu0
    %v5409 = vadd.f32 %v5205, %v5408
    %v5410 = vpop.f32.mrf.mxu0
    %5411 = vdwg.mxu0
    %5412 = vmatpush.bf16.msra.mxu0 %v5350
    %5413 = vmatpush.bf16.msra.mxu0 %v5349
    %5414 = vmatpush.bf16.msra.mxu0 %v5348
    %5415 = vmatpush.bf16.msra.mxu0 %v5347
    %5416 = vmatpush.bf16.msra.mxu0 %v5346
    %5417 = vmatpush.bf16.msra.mxu0 %v5345
    %5418 = vmatpush.bf16.msra.mxu0 %v5344
    %5419 = vmatpush.bf16.msra.mxu0 %v5343
    %5420 = vmatmul.bf16.gmra.mxu0 %v5136
    %v5421 = vpop.f32.mrf.mxu0
    %v5422 = vadd.f32 %v5409, %v5421
    %v5423 = vpop.f32.mrf.mxu0
    %5424 = vdwg.mxu0
    %5425 = vmatpush.bf16.msra.mxu0 %v5358
    %5426 = vmatpush.bf16.msra.mxu0 %v5357
    %5427 = vmatpush.bf16.msra.mxu0 %v5356
    %5428 = vmatpush.bf16.msra.mxu0 %v5355
    %5429 = vmatpush.bf16.msra.mxu0 %v5354
    %5430 = vmatpush.bf16.msra.mxu0 %v5353
    %5431 = vmatpush.bf16.msra.mxu0 %v5352
    %5432 = vmatpush.bf16.msra.mxu0 %v5351
    %5433 = vmatmul.bf16.gmra.mxu0 %v5137
    %v5434 = vpop.f32.mrf.mxu0
    %v5435 = vadd.f32 %v5422, %v5434
    %v5436 = vpop.f32.mrf.mxu0
    %5437 = vdwg.mxu0
    %5438 = vmatpush.bf16.msra.mxu0 %v5366
    %5439 = vmatpush.bf16.msra.mxu0 %v5365
    %5440 = vmatpush.bf16.msra.mxu0 %v5364
    %5441 = vmatpush.bf16.msra.mxu0 %v5363
    %5442 = vmatpush.bf16.msra.mxu0 %v5362
    %5443 = vmatpush.bf16.msra.mxu0 %v5361
    %5444 = vmatpush.bf16.msra.mxu0 %v5360
    %5445 = vmatpush.bf16.msra.mxu0 %v5359
    %5446 = vmatmul.bf16.gmra.mxu0 %v5138
    %v5447 = vpop.f32.mrf.mxu0
    %v5448 = vadd.f32 %v5435, %v5447
    %v5449 = vpop.f32.mrf.mxu0
    %5450 = vdwg.mxu0
    %v5451 = vmax.f32 %v5448, 0.0
    %v5452 = vpack.c.bf16 %v5451, %v5451
    %v5453 = vld [vmem:[%s7] sm:$0xf]
    %v5454 = vld [vmem:[%s7 + $0x4] sm:$0xf]
    %v5455 = vld [vmem:[%s7 + $0x8] sm:$0xf]
    %v5456 = vld [vmem:[%s7 + $0xc] sm:$0xf]
    %v5457 = vld [vmem:[%s7 + $0x10] sm:$0xf]
    %v5458 = vld [vmem:[%s7 + $0x14] sm:$0xf]
    %v5459 = vld [vmem:[%s7 + $0x18] sm:$0xf]
    %v5460 = vld [vmem:[%s7 + $0x1c] sm:$0xf]
    %v5461 = vld [vmem:[%s7 + $0x20] sm:$0xf]
    %v5462 = vld [vmem:[%s7 + $0x24] sm:$0xf]
    %v5463 = vld [vmem:[%s7 + $0x28] sm:$0xf]
    %v5464 = vld [vmem:[%s7 + $0x2c] sm:$0xf]
    %v5465 = vld [vmem:[%s7 + $0x30] sm:$0xf]
    %v5466 = vld [vmem:[%s7 + $0x34] sm:$0xf]
    %v5467 = vld [vmem:[%s7 + $0x38] sm:$0xf]
    %v5468 = vld [vmem:[%s7 + $0x3c] sm:$0xf]
    %v5469 = vld [vmem:[#allocation14] sm:$0x1]
    %v5471 = vperm.slane %v5469, 0
    %v5489 = vunpack.c.l.b16 %v5453
    %v5490 = vunpack.c.l.b16 %v5454
    %v5491 = vunpack.c.l.b16 %v5455
    %v5492 = vunpack.c.l.b16 %v5456
    %v5493 = vunpack.c.l.b16 %v5457
    %v5494 = vunpack.c.l.b16 %v5458
    %v5495 = vunpack.c.l.b16 %v5459
    %v5496 = vunpack.c.l.b16 %v5460
    %v5497 = vunpack.c.l.b16 %v5461
    %v5498 = vunpack.c.l.b16 %v5462
    %v5499 = vunpack.c.l.b16 %v5463
    %v5500 = vunpack.c.l.b16 %v5464
    %v5501 = vunpack.c.l.b16 %v5465
    %v5502 = vunpack.c.l.b16 %v5466
    %v5503 = vunpack.c.l.b16 %v5467
    %v5504 = vunpack.c.l.b16 %v5468
    %v5505 = vpack.c.b16 %v5490, %v5489
    %v5506 = vpack.c.b16 %v5492, %v5491
    %v5507 = vpack.c.b16 %v5494, %v5493
    %v5508 = vpack.c.b16 %v5496, %v5495
    %v5509 = vpack.c.b16 %v5498, %v5497
    %v5510 = vpack.c.b16 %v5500, %v5499
    %v5511 = vpack.c.b16 %v5502, %v5501
    %v5512 = vpack.c.b16 %v5504, %v5503
    %5521 = vmatpush.bf16.msra.mxu0 %v5512
    %5522 = vmatpush.bf16.msra.mxu0 %v5511
    %5523 = vmatpush.bf16.msra.mxu0 %v5510
    %5524 = vmatpush.bf16.msra.mxu0 %v5509
    %5525 = vmatpush.bf16.msra.mxu0 %v5508
    %5526 = vmatpush.bf16.msra.mxu0 %v5507
    %5527 = vmatpush.bf16.msra.mxu0 %v5506
    %5528 = vmatpush.bf16.msra.mxu0 %v5505
    %5529 = vmatmul.bf16.gmra.mxu0 %v5452
    %v5530 = vpop.f32.mrf.mxu0
    %v5531 = vadd.f32 %v5471, %v5530
    %v5532 = vpop.f32.mrf.mxu0
    %5533 = vdwg.mxu0
    %v5534 = vmax.f32 %v5531, 0.0
    %v5535 = vpack.c.bf16 %v5534, %v5534
    %v5536 = vld [vmem:[%s9] sm:$0xf]
    %v5537 = vld [vmem:[%s9 + $0x4] sm:$0xf]
    %v5538 = vld [vmem:[%s9 + $0x8] sm:$0xf]
    %v5539 = vld [vmem:[%s9 + $0xc] sm:$0xf]
    %v5540 = vld [vmem:[#allocation16] sm:$0x1]
    %v5542 = vperm.slane %v5540, 0
    %v5548 = vunpack.c.l.b16 %v5536
    %v5549 = vunpack.c.l.b16 %v5537
    %v5550 = vunpack.c.l.b16 %v5538
    %v5551 = vunpack.c.l.b16 %v5539
    %v5552 = vpack.c.b16 %v5549, %v5548
    %v5553 = vpack.c.b16 %v5551, %v5550
    %vm5556 = vcmask 261120
    %v5558 = vsel %vm5556, %v5535, 0
    %5560 = vmatpush.bf16.msra.mxu0 0
    %5561 = vmatpush.bf16.msra.mxu0 0
    %5562 = vmatpush.bf16.msra.mxu0 0
    %5563 = vmatpush.bf16.msra.mxu0 0
    %5564 = vmatpush.bf16.msra.mxu0 0
    %5565 = vmatpush.bf16.msra.mxu0 0
    %5566 = vmatpush.bf16.msra.mxu0 %v5553
    %5567 = vmatpush.bf16.msra.mxu0 %v5552
    %5568 = vmatmul.bf16.gmra.mxu0 %v5558
    %v5569 = vpop.f32.mrf.mxu0
    %v5570 = vadd.f32 %v5542, %v5569
    %v5571 = vpop.f32.mrf.mxu0
    %5572 = vdwg.mxu0
    %vm5573 = vcmask 15360
    %v5574 = vsel %vm5573, %v5570, -inf
    %5575 = vmax.xlane.f32.xlu0 %v5574
    %v5576 = vpop.xlane.xlu0 %5575
    %v5577 = vsub.f32 %v5570, %v5576
    %v5578 = vmul.f32 %v5577, 1.442695
    %v5579 = vpow.pop %v5578
    %v5580 = vsel %vm5573, %v5579, 0.0
    %5581 = vadd.xlane.f32.xlu0 %v5580
    %v5582 = vpop.xlane.xlu0 %5581
    %v5583 = vrcp.pop %v5582
    %v5584 = vmul.f32 %v5582, %v5583
    %v5585 = vsub.f32 1.0, %v5584
    %v5586 = vmul.f32 %v5583, %v5585
    %v5587 = vadd.f32 %v5583, %v5586
    %vm5588 = vweird.f32 %v5582
    %vm5589 = vweird.f32 %v5583
    %vm5590 = vmor %vm5588, %vm5589
    %v5591 = vsel %vm5590, %v5583, %v5587
    %v5592 = vand.u32 2147483647, %v5582
    %vm5593 = vcmp.eq.f32.partialorder %v5592, 8.507059e+37
    %v5594 = vand.u32 %v5582, 2147483648
    %v5595 = vor.u32 1.1754944e-38, %v5594
    %v5596 = vsel %vm5593, %v5595, %v5591
    %v5597 = vmul.f32 %v5579, %v5596
    %5598 = vst.msk [vmem:[%s11] sm:$0xff] %vm5573, %v5597
    // Predicated region
    $region82: #{_mlp_pallas.1} parent=1 // pred_check
      _
    $region83: #{_mlp_pallas.1} parent=1 // pred_check_branch
      %5600 = sbr.rel (0) target = $region85
    $region84: #{_mlp_pallas.1} parent=1 // pred_region
      _
    $region85: #{_mlp_pallas.1} parent=1 // pred_fallthru
      _
    // Predicated region
    $region86: #{_mlp_pallas.1} parent=1 // pred_check
      _
    $region87: #{_mlp_pallas.1} parent=1 // pred_check_branch
      %5602 = sbr.rel (0) target = $region89
    $region88: #{_mlp_pallas.1} parent=1 // pred_region
      _
    $region89: #{_mlp_pallas.1} parent=1 // pred_fallthru
      _
    %5603 = vsyncpa [#allocation4], 1
    %5604 = vsyncpa [#allocation6], 1
    %5605 = vsyncpa [#allocation9], 1
    %5606 = vsyncpa [#allocation12], 1
    %5607 = vsyncpa [#allocation15], 1

// kernel: _mlp_pallas.1
$region0: #{_mlp_pallas.1}
  #allocation0 [shape = 'u32[]', space=smem, size = 0x4, offset = 0x4, fixed_abs, tag = 'smem constant byte address 0x4 - core index']
  #allocation1 [shape = 'u32[72,128]{1,0:T(1,128)}', space=vmem, size = 0x9000, scoped, tag = 'internal scratch']
  #allocation2 [shape = 'bf16[8,128]{1,0:T(8,128)(2,1)}', space=vmem, size = 0x800, scoped, tag = 'scratch operand']
  %s0 = inlined_call_operand.hbm [shape: f32[8,100], index: 0, kind: input, shape index: {}]
  %s1 = inlined_call_operand.hbm [shape: bf16[128,2048], index: 1, kind: input, shape index: {}]
  %s2 = inlined_call_operand.hbm [shape: f32[1,2048], index: 2, kind: input, shape index: {}]
  %s3 = inlined_call_operand.hbm [shape: bf16[2048,512], index: 3, kind: input, shape index: {}]
  %s4 = inlined_call_operand.hbm [shape: f32[1,512], index: 4, kind: input, shape index: {}]
  %s5 = inlined_call_operand.hbm [shape: bf16[512,128], index: 5, kind: input, shape index: {}]
  %s6 = inlined_call_operand.hbm [shape: f32[1,128], index: 6, kind: input, shape index: {}]
  %s7 = inlined_call_operand.vmem [shape: bf16[128,32], index: 7, kind: input, shape index: {}]
  %s8 = inlined_call_operand.hbm [shape: f32[1,32], index: 8, kind: input, shape index: {}]
  %s9 = inlined_call_operand.vmem [shape: bf16[32,2], index: 9, kind: input, shape index: {}]
  %s10 = inlined_call_operand.hbm [shape: f32[1,2], index: 10, kind: input, shape index: {}]
  %s11 = inlined_call_operand.vmem [shape: f32[8,2], index: 11, kind: output, shape index: {}]
  %s12 = sld [smem:[#allocation0]]
  $region90: #{_mlp_pallas.1} parent=0
    _
  %s14 = ssub.s32 1, %s12
  %s15 = scalar_select 0, %s14, %s12
  $region1: #{_mlp_pallas.1} parent=0
    #allocation3 [shape = 'u8[4096]{0}', space=vmem, size = 0x1000, scoped, tag = 'input window, operand 0, single buffered']
    #allocation4 [shape = 's32[1]{0}', space=sflag, size = 0x4, scoped, tag = 'scoped memory for _mlp_pallas.1']
    #allocation5 [shape = 'u8[524288]{0}', space=vmem, size = 0x80000, scoped, tag = 'input window, operand 1, single buffered']
    #allocation6 [shape = 's32[1]{0}', space=sflag, size = 0x4, scoped, tag = 'scoped memory for _mlp_pallas.1']
    #allocation7 [shape = 'u8[8192]{0}', space=vmem, size = 0x2000, scoped, tag = 'input window, operand 2, single buffered']
    #allocation8 [shape = 'u8[2097152]{0}', space=vmem, size = 0x200000, scoped, tag = 'input window, operand 3, single buffered']
    #allocation9 [shape = 's32[1]{0}', space=sflag, size = 0x4, scoped, tag = 'scoped memory for _mlp_pallas.1']
    #allocation10 [shape = 'u8[2048]{0}', space=vmem, size = 0x800, scoped, tag = 'input window, operand 4, single buffered']
    #allocation11 [shape = 'u8[131072]{0}', space=vmem, size = 0x20000, scoped, tag = 'input window, operand 5, single buffered']
    #allocation12 [shape = 's32[1]{0}', space=sflag, size = 0x4, scoped, tag = 'scoped memory for _mlp_pallas.1']
    #allocation13 [shape = 'u8[512]{0}', space=vmem, size = 0x400, scoped, tag = 'input window, operand 6, single buffered']
    #allocation14 [shape = 'u8[512]{0}', space=vmem, size = 0x400, scoped, tag = 'input window, operand 8, single buffered']
    #allocation15 [shape = 's32[1]{0}', space=sflag, size = 0x4, scoped, tag = 'scoped memory for _mlp_pallas.1']
    #allocation16 [shape = 'u8[512]{0}', space=vmem, size = 0x400, scoped, tag = 'input window, operand 10, single buffered']
    %16 = vsyncpa [#allocation4], 0
    %17 = vsyncpa [#allocation6], 0
    %18 = vsyncpa [#allocation9], 0
    %19 = vsyncpa [#allocation12], 0
    %20 = vsyncpa [#allocation15], 0
    // Predicated region
    $region2: #{_mlp_pallas.1} parent=1 // pred_check
      _
    $region3: #{_mlp_pallas.1} parent=1 // pred_check_branch
      %22 = sbr.rel (0) target = $region5
    $region4: #{_mlp_pallas.1} parent=1 // pred_region
      %24 = vsyncadd [#allocation4], 0
      %s26 = sshll.u32 %s0, 4
      %s27 = int_to_ptr.hbm [resolvable:$true] %s26
      %s28 = sshll.u32 [#allocation3], 4
      %s29 = int_to_ptr.vmem [resolvable:$true] %s28
      %31 = dma.hbm_to_vmem [thread:$0]  %s27, 128, %s29, [#allocation4]
    $region5: #{_mlp_pallas.1} parent=1 // pred_fallthru
      _
    // Predicated region
    $region6: #{_mlp_pallas.1} parent=1 // pred_check
      _
    $region7: #{_mlp_pallas.1} parent=1 // pred_check_branch
      %33 = sbr.rel (0) target = $region9
    $region8: #{_mlp_pallas.1} parent=1 // pred_region
      %35 = vsyncadd [#allocation6], 0
      %s36 = sshll.u32 %s1, 4
      %s37 = int_to_ptr.hbm [resolvable:$true] %s36
      %s38 = sshll.u32 [#allocation5], 4
      %s39 = int_to_ptr.vmem [resolvable:$true] %s38
      %44 = dma.hbm_to_vmem [thread:$0]  %s37, 16384, %s39, [#allocation6], 1024, 1024, 64
    $region9: #{_mlp_pallas.1} parent=1 // pred_fallthru
      _
    // Predicated region
    $region10: #{_mlp_pallas.1} parent=1 // pred_check
      _
    $region11: #{_mlp_pallas.1} parent=1 // pred_check_branch
      %46 = sbr.rel (0) target = $region13
    $region12: #{_mlp_pallas.1} parent=1 // pred_region
      %48 = vsyncadd [#allocation6], 0
      %s50 = sshll.u32 %s2, 4
      %s51 = int_to_ptr.hbm [resolvable:$true] %s50
      %s52 = sshll.u32 [#allocation7], 4
      %s53 = int_to_ptr.vmem [resolvable:$true] %s52
      %55 = dma.hbm_to_vmem [thread:$0]  %s51, 256, %s53, [#allocation6]
    $region13: #{_mlp_pallas.1} parent=1 // pred_fallthru
      _
    // Predicated region
    $region14: #{_mlp_pallas.1} parent=1 // pred_check
      _
    $region15: #{_mlp_pallas.1} parent=1 // pred_check_branch
      %57 = sbr.rel (0) target = $region17
    $region16: #{_mlp_pallas.1} parent=1 // pred_region
      %59 = vsyncadd [#allocation9], 0
      %s60 = sshll.u32 %s3, 4
      %s61 = int_to_ptr.hbm [resolvable:$true] %s60
      %s62 = sshll.u32 [#allocation8], 4
      %s63 = int_to_ptr.vmem [resolvable:$true] %s62
      %68 = dma.hbm_to_vmem [thread:$0]  %s61, 65536, %s63, [#allocation9], 256, 256, 16
    $region17: #{_mlp_pallas.1} parent=1 // pred_fallthru
      _
    // Predicated region
    $region18: #{_mlp_pallas.1} parent=1 // pred_check
      _
    $region19: #{_mlp_pallas.1} parent=1 // pred_check_branch
      %70 = sbr.rel (0) target = $region21
    $region20: #{_mlp_pallas.1} parent=1 // pred_region
      %72 = vsyncadd [#allocation9], 0
      %s74 = sshll.u32 %s4, 4
      %s75 = int_to_ptr.hbm [resolvable:$true] %s74
      %s76 = sshll.u32 [#allocation10], 4
      %s77 = int_to_ptr.vmem [resolvable:$true] %s76
      %79 = dma.hbm_to_vmem [thread:$0]  %s75, 64, %s77, [#allocation9]
    $region21: #{_mlp_pallas.1} parent=1 // pred_fallthru
      _
    // Predicated region
    $region22: #{_mlp_pallas.1} parent=1 // pred_check
      _
    $region23: #{_mlp_pallas.1} parent=1 // pred_check_branch
      %81 = sbr.rel (0) target = $region25
    $region24: #{_mlp_pallas.1} parent=1 // pred_region
      %83 = vsyncadd [#allocation12], 0
      %s84 = sshll.u32 %s5, 4
      %s85 = int_to_ptr.hbm [resolvable:$true] %s84
      %s86 = sshll.u32 [#allocation11], 4
      %s87 = int_to_ptr.vmem [resolvable:$true] %s86
      %92 = dma.hbm_to_vmem [thread:$0]  %s85, 4096, %s87, [#allocation12], 64, 64, 4
    $region25: #{_mlp_pallas.1} parent=1 // pred_fallthru
      _
    // Predicated region
    $region26: #{_mlp_pallas.1} parent=1 // pred_check
      _
    $region27: #{_mlp_pallas.1} parent=1 // pred_check_branch
      %94 = sbr.rel (0) target = $region29
    $region28: #{_mlp_pallas.1} parent=1 // pred_region
      %96 = vsyncadd [#allocation12], 0
      %s98 = sshll.u32 %s6, 4
      %s99 = int_to_ptr.hbm [resolvable:$true] %s98
      %s100 = sshll.u32 [#allocation13], 4
      %s101 = int_to_ptr.vmem [resolvable:$true] %s100
      %103 = dma.hbm_to_vmem [thread:$0]  %s99, 16, %s101, [#allocation12]
    $region29: #{_mlp_pallas.1} parent=1 // pred_fallthru
      _
    // Predicated region
    $region30: #{_mlp_pallas.1} parent=1 // pred_check
      _
    $region31: #{_mlp_pallas.1} parent=1 // pred_check_branch
      %105 = sbr.rel (0) target = $region33
    $region32: #{_mlp_pallas.1} parent=1 // pred_region
      _
    $region33: #{_mlp_pallas.1} parent=1 // pred_fallthru
      _
    // Predicated region
    $region34: #{_mlp_pallas.1} parent=1 // pred_check
      _
    $region35: #{_mlp_pallas.1} parent=1 // pred_check_branch
      %107 = sbr.rel (0) target = $region37
    $region36: #{_mlp_pallas.1} parent=1 // pred_region
      %109 = vsyncadd [#allocation15], 0
      %s111 = sshll.u32 %s8, 4
      %s112 = int_to_ptr.hbm [resolvable:$true] %s111
      %s113 = sshll.u32 [#allocation14], 4
      %s114 = int_to_ptr.vmem [resolvable:$true] %s113
      %116 = dma.hbm_to_vmem [thread:$0]  %s112, 16, %s114, [#allocation15]
    $region37: #{_mlp_pallas.1} parent=1 // pred_fallthru
      _
    // Predicated region
    $region38: #{_mlp_pallas.1} parent=1 // pred_check
      _
    $region39: #{_mlp_pallas.1} parent=1 // pred_check_branch
      %118 = sbr.rel (0) target = $region41
    $region40: #{_mlp_pallas.1} parent=1 // pred_region
      _
    $region41: #{_mlp_pallas.1} parent=1 // pred_fallthru
      _
    // Predicated region
    $region42: #{_mlp_pallas.1} parent=1 // pred_check
      _
    $region43: #{_mlp_pallas.1} parent=1 // pred_check_branch
      %120 = sbr.rel (0) target = $region45
    $region44: #{_mlp_pallas.1} parent=1 // pred_region
      %122 = vsyncadd [#allocation15], 0
      %s124 = sshll.u32 %s10, 4
      %s125 = int_to_ptr.hbm [resolvable:$true] %s124
      %s126 = sshll.u32 [#allocation16], 4
      %s127 = int_to_ptr.vmem [resolvable:$true] %s126
      %129 = dma.hbm_to_vmem [thread:$0]  %s125, 16, %s127, [#allocation15]
    $region45: #{_mlp_pallas.1} parent=1 // pred_fallthru
      _
    // Predicated region
    $region46: #{_mlp_pallas.1} parent=1 // pred_check
      _
    $region47: #{_mlp_pallas.1} parent=1 // pred_check_branch
      %131 = sbr.rel (0) target = $region49
    $region48: #{_mlp_pallas.1} parent=1 // pred_region
      %133 = dma.done [#allocation4], 128
    $region49: #{_mlp_pallas.1} parent=1 // pred_fallthru
      _
    // Predicated region
    $region50: #{_mlp_pallas.1} parent=1 // pred_check
      _
    $region51: #{_mlp_pallas.1} parent=1 // pred_check_branch
      %135 = sbr.rel (0) target = $region53
    $region52: #{_mlp_pallas.1} parent=1 // pred_region
      %137 = dma.done [#allocation6], 16384
    $region53: #{_mlp_pallas.1} parent=1 // pred_fallthru
      _
    // Predicated region
    $region54: #{_mlp_pallas.1} parent=1 // pred_check
      _
    $region55: #{_mlp_pallas.1} parent=1 // pred_check_branch
      %139 = sbr.rel (0) target = $region57
    $region56: #{_mlp_pallas.1} parent=1 // pred_region
      %141 = dma.done [#allocation6], 256
    $region57: #{_mlp_pallas.1} parent=1 // pred_fallthru
      _
    // Predicated region
    $region58: #{_mlp_pallas.1} parent=1 // pred_check
      _
    $region59: #{_mlp_pallas.1} parent=1 // pred_check_branch
      %143 = sbr.rel (0) target = $region61
    $region60: #{_mlp_pallas.1} parent=1 // pred_region
      %145 = dma.done [#allocation9], 65536
    $region61: #{_mlp_pallas.1} parent=1 // pred_fallthru
      _
    // Predicated region
    $region62: #{_mlp_pallas.1} parent=1 // pred_check
      _
    $region63: #{_mlp_pallas.1} parent=1 // pred_check_branch
      %147 = sbr.rel (0) target = $region65
    $region64: #{_mlp_pallas.1} parent=1 // pred_region
      %149 = dma.done [#allocation9], 64
    $region65: #{_mlp_pallas.1} parent=1 // pred_fallthru
      _
    // Predicated region
    $region66: #{_mlp_pallas.1} parent=1 // pred_check
      _
    $region67: #{_mlp_pallas.1} parent=1 // pred_check_branch
      %151 = sbr.rel (0) target = $region69
    $region68: #{_mlp_pallas.1} parent=1 // pred_region
      %153 = dma.done [#allocation12], 4096
    $region69: #{_mlp_pallas.1} parent=1 // pred_fallthru
      _
    // Predicated region
    $region70: #{_mlp_pallas.1} parent=1 // pred_check
      _
    $region71: #{_mlp_pallas.1} parent=1 // pred_check_branch
      %155 = sbr.rel (0) target = $region73
    $region72: #{_mlp_pallas.1} parent=1 // pred_region
      %157 = dma.done [#allocation12], 16
    $region73: #{_mlp_pallas.1} parent=1 // pred_fallthru
      _
    // Predicated region
    $region74: #{_mlp_pallas.1} parent=1 // pred_check
      _
    $region75: #{_mlp_pallas.1} parent=1 // pred_check_branch
      %159 = sbr.rel (0) target = $region77
    $region76: #{_mlp_pallas.1} parent=1 // pred_region
      %161 = dma.done [#allocation15], 16
    $region77: #{_mlp_pallas.1} parent=1 // pred_fallthru
      _
    // Predicated region
    $region78: #{_mlp_pallas.1} parent=1 // pred_check
      _
    $region79: #{_mlp_pallas.1} parent=1 // pred_check_branch
      %163 = sbr.rel (0) target = $region81
    $region80: #{_mlp_pallas.1} parent=1 // pred_region
      %165 = dma.done [#allocation15], 16
    $region81: #{_mlp_pallas.1} parent=1 // pred_fallthru
      _
    %167 = vst [vmem:[#allocation2] sm:$0xf] 0
    %v168 = vld [vmem:[#allocation3] sm:$0xff]
    %v169 = vpack.c.bf16 %v168, %v168
    %vm170 = vcmask 814080
    %171 = vst.msk [vmem:[#allocation2] sm:$0xf] %vm170, %v169
    %v172 = vld [vmem:[#allocation2] sm:$0xf]
    %v173 = vld [vmem:[#allocation5] sm:$0xff]
    %v174 = vld [vmem:[#allocation5 + $0x8] sm:$0xff]
    %v175 = vld [vmem:[#allocation5 + $0x10] sm:$0xff]
    %v176 = vld [vmem:[#allocation5 + $0x18] sm:$0xff]
    %v177 = vld [vmem:[#allocation5 + $0x20] sm:$0xff]
    %v178 = vld [vmem:[#allocation5 + $0x28] sm:$0xff]
    %v179 = vld [vmem:[#allocation5 + $0x30] sm:$0xff]
    %v180 = vld [vmem:[#allocation5 + $0x38] sm:$0xff]
    %v181 = vld [vmem:[#allocation5 + $0x40] sm:$0xff]
    %v182 = vld [vmem:[#allocation5 + $0x48] sm:$0xff]
    %v183 = vld [vmem:[#allocation5 + $0x50] sm:$0xff]
    %v184 = vld [vmem:[#allocation5 + $0x58] sm:$0xff]
    %v185 = vld [vmem:[#allocation5 + $0x60] sm:$0xff]
    %v186 = vld [vmem:[#allocation5 + $0x68] sm:$0xff]
    %v187 = vld [vmem:[#allocation5 + $0x70] sm:$0xff]
    %v188 = vld [vmem:[#allocation5 + $0x78] sm:$0xff]
    %v189 = vld [vmem:[#allocation5 + $0x80] sm:$0xff]
    %v190 = vld [vmem:[#allocation5 + $0x88] sm:$0xff]
    %v191 = vld [vmem:[#allocation5 + $0x90] sm:$0xff]
    %v192 = vld [vmem:[#allocation5 + $0x98] sm:$0xff]
    %v193 = vld [vmem:[#allocation5 + $0xa0] sm:$0xff]
    %v194 = vld [vmem:[#allocation5 + $0xa8] sm:$0xff]
    %v195 = vld [vmem:[#allocation5 + $0xb0] sm:$0xff]
    %v196 = vld [vmem:[#allocation5 + $0xb8] sm:$0xff]
    %v197 = vld [vmem:[#allocation5 + $0xc0] sm:$0xff]
    %v198 = vld [vmem:[#allocation5 + $0xc8] sm:$0xff]
    %v199 = vld [vmem:[#allocation5 + $0xd0] sm:$0xff]
    %v200 = vld [vmem:[#allocation5 + $0xd8] sm:$0xff]
    %v201 = vld [vmem:[#allocation5 + $0xe0] sm:$0xff]
    %v202 = vld [vmem:[#allocation5 + $0xe8] sm:$0xff]
    %v203 = vld [vmem:[#allocation5 + $0xf0] sm:$0xff]
    %v204 = vld [vmem:[#allocation5 + $0xf8] sm:$0xff]
    %v205 = vld [vmem:[#allocation5 + $0x100] sm:$0xff]
    %v206 = vld [vmem:[#allocation5 + $0x108] sm:$0xff]
    %v207 = vld [vmem:[#allocation5 + $0x110] sm:$0xff]
    %v208 = vld [vmem:[#allocation5 + $0x118] sm:$0xff]
    %v209 = vld [vmem:[#allocation5 + $0x120] sm:$0xff]
    %v210 = vld [vmem:[#allocation5 + $0x128] sm:$0xff]
    %v211 = vld [vmem:[#allocation5 + $0x130] sm:$0xff]
    %v212 = vld [vmem:[#allocation5 + $0x138] sm:$0xff]
    %v213 = vld [vmem:[#allocation5 + $0x140] sm:$0xff]
    %v214 = vld [vmem:[#allocation5 + $0x148] sm:$0xff]
    %v215 = vld [vmem:[#allocation5 + $0x150] sm:$0xff]
    %v216 = vld [vmem:[#allocation5 + $0x158] sm:$0xff]
    %v217 = vld [vmem:[#allocation5 + $0x160] sm:$0xff]
    %v218 = vld [vmem:[#allocation5 + $0x168] sm:$0xff]
    %v219 = vld [vmem:[#allocation5 + $0x170] sm:$0xff]
    %v220 = vld [vmem:[#allocation5 + $0x178] sm:$0xff]
    %v221 = vld [vmem:[#allocation5 + $0x180] sm:$0xff]
    %v222 = vld [vmem:[#allocation5 + $0x188] sm:$0xff]
    %v223 = vld [vmem:[#allocation5 + $0x190] sm:$0xff]
    %v224 = vld [vmem:[#allocation5 + $0x198] sm:$0xff]
    %v225 = vld [vmem:[#allocation5 + $0x1a0] sm:$0xff]
    %v226 = vld [vmem:[#allocation5 + $0x1a8] sm:$0xff]
    %v227 = vld [vmem:[#allocation5 + $0x1b0] sm:$0xff]
    %v228 = vld [vmem:[#allocation5 + $0x1b8] sm:$0xff]
    %v229 = vld [vmem:[#allocation5 + $0x1c0] sm:$0xff]
    %v230 = vld [vmem:[#allocation5 + $0x1c8] sm:$0xff]
    %v231 = vld [vmem:[#allocation5 + $0x1d0] sm:$0xff]
    %v232 = vld [vmem:[#allocation5 + $0x1d8] sm:$0xff]
    %v233 = vld [vmem:[#allocation5 + $0x1e0] sm:$0xff]
    %v234 = vld [vmem:[#allocation5 + $0x1e8] sm:$0xff]
    %v235 = vld [vmem:[#allocation5 + $0x1f0] sm:$0xff]
    %v236 = vld [vmem:[#allocation5 + $0x1f8] sm:$0xff]
    %v237 = vld [vmem:[#allocation5 + $0x200] sm:$0xff]
    %v238 = vld [vmem:[#allocation5 + $0x208] sm:$0xff]
    %v239 = vld [vmem:[#allocation5 + $0x210] sm:$0xff]
    %v240 = vld [vmem:[#allocation5 + $0x218] sm:$0xff]
    %v241 = vld [vmem:[#allocation5 + $0x220] sm:$0xff]
    %v242 = vld [vmem:[#allocation5 + $0x228] sm:$0xff]
    %v243 = vld [vmem:[#allocation5 + $0x230] sm:$0xff]
    %v244 = vld [vmem:[#allocation5 + $0x238] sm:$0xff]
    %v245 = vld [vmem:[#allocation5 + $0x240] sm:$0xff]
    %v246 = vld [vmem:[#allocation5 + $0x248] sm:$0xff]
    %v247 = vld [vmem:[#allocation5 + $0x250] sm:$0xff]
    %v248 = vld [vmem:[#allocation5 + $0x258] sm:$0xff]
    %v249 = vld [vmem:[#allocation5 + $0x260] sm:$0xff]
    %v250 = vld [vmem:[#allocation5 + $0x268] sm:$0xff]
    %v251 = vld [vmem:[#allocation5 + $0x270] sm:$0xff]
    %v252 = vld [vmem:[#allocation5 + $0x278] sm:$0xff]
    %v253 = vld [vmem:[#allocation5 + $0x280] sm:$0xff]
    %v254 = vld [vmem:[#allocation5 + $0x288] sm:$0xff]
    %v255 = vld [vmem:[#allocation5 + $0x290] sm:$0xff]
    %v256 = vld [vmem:[#allocation5 + $0x298] sm:$0xff]
    %v257 = vld [vmem:[#allocation5 + $0x2a0] sm:$0xff]
    %v258 = vld [vmem:[#allocation5 + $0x2a8] sm:$0xff]
    %v259 = vld [vmem:[#allocation5 + $0x2b0] sm:$0xff]
    %v260 = vld [vmem:[#allocation5 + $0x2b8] sm:$0xff]
    %v261 = vld [vmem:[#allocation5 + $0x2c0] sm:$0xff]
    %v262 = vld [vmem:[#allocation5 + $0x2c8] sm:$0xff]
    %v263 = vld [vmem:[#allocation5 + $0x2d0] sm:$0xff]
    %v264 = vld [vmem:[#allocation5 + $0x2d8] sm:$0xff]
    %v265 = vld [vmem:[#allocation5 + $0x2e0] sm:$0xff]
    %v266 = vld [vmem:[#allocation5 + $0x2e8] sm:$0xff]
    %v267 = vld [vmem:[#allocation5 + $0x2f0] sm:$0xff]
    %v268 = vld [vmem:[#allocation5 + $0x2f8] sm:$0xff]
    %v269 = vld [vmem:[#allocation5 + $0x300] sm:$0xff]
    %v270 = vld [vmem:[#allocation5 + $0x308] sm:$0xff]
    %v271 = vld [vmem:[#allocation5 + $0x310] sm:$0xff]
    %v272 = vld [vmem:[#allocation5 + $0x318] sm:$0xff]
    %v273 = vld [vmem:[#allocation5 + $0x320] sm:$0xff]
    %v274 = vld [vmem:[#allocation5 + $0x328] sm:$0xff]
    %v275 = vld [vmem:[#allocation5 + $0x330] sm:$0xff]
    %v276 = vld [vmem:[#allocation5 + $0x338] sm:$0xff]
    %v277 = vld [vmem:[#allocation5 + $0x340] sm:$0xff]
    %v278 = vld [vmem:[#allocation5 + $0x348] sm:$0xff]
    %v279 = vld [vmem:[#allocation5 + $0x350] sm:$0xff]
    %v280 = vld [vmem:[#allocation5 + $0x358] sm:$0xff]
    %v281 = vld [vmem:[#allocation5 + $0x360] sm:$0xff]
    %v282 = vld [vmem:[#allocation5 + $0x368] sm:$0xff]
    %v283 = vld [vmem:[#allocation5 + $0x370] sm:$0xff]
    %v284 = vld [vmem:[#allocation5 + $0x378] sm:$0xff]
    %v285 = vld [vmem:[#allocation5 + $0x380] sm:$0xff]
    %v286 = vld [vmem:[#allocation5 + $0x388] sm:$0xff]
    %v287 = vld [vmem:[#allocation5 + $0x390] sm:$0xff]
    %v288 = vld [vmem:[#allocation5 + $0x398] sm:$0xff]
    %v289 = vld [vmem:[#allocation5 + $0x3a0] sm:$0xff]
    %v290 = vld [vmem:[#allocation5 + $0x3a8] sm:$0xff]
    %v291 = vld [vmem:[#allocation5 + $0x3b0] sm:$0xff]
    %v292 = vld [vmem:[#allocation5 + $0x3b8] sm:$0xff]
    %v293 = vld [vmem:[#allocation5 + $0x3c0] sm:$0xff]
    %v294 = vld [vmem:[#allocation5 + $0x3c8] sm:$0xff]
    %v295 = vld [vmem:[#allocation5 + $0x3d0] sm:$0xff]
    %v296 = vld [vmem:[#allocation5 + $0x3d8] sm:$0xff]
    %v297 = vld [vmem:[#allocation5 + $0x3e0] sm:$0xff]
    %v298 = vld [vmem:[#allocation5 + $0x3e8] sm:$0xff]
    %v299 = vld [vmem:[#allocation5 + $0x3f0] sm:$0xff]
    %v300 = vld [vmem:[#allocation5 + $0x3f8] sm:$0xff]
    %v301 = vld [vmem:[#allocation7] sm:$0xff]
    %v302 = vld [vmem:[#allocation7 + $0x8] sm:$0xff]
    %v305 = vperm.slane %v301, 0
    %v306 = vperm.slane %v301, 1
    %v307 = vperm.slane %v301, 2
    %v308 = vperm.slane %v301, 3
    %v309 = vperm.slane %v301, 4
    %v310 = vperm.slane %v301, 5
    %v311 = vperm.slane %v301, 6
    %v312 = vperm.slane %v301, 7
    %v313 = vperm.slane %v302, 0
    %v314 = vperm.slane %v302, 1
    %v315 = vperm.slane %v302, 2
    %v316 = vperm.slane %v302, 3
    %v317 = vperm.slane %v302, 4
    %v318 = vperm.slane %v302, 5
    %v319 = vperm.slane %v302, 6
    %v320 = vperm.slane %v302, 7
    %v465 = vunpack.c.l.b16 %v173
    %v466 = vunpack.c.h.b16 %v173
    %v467 = vunpack.c.l.b16 %v174
    %v468 = vunpack.c.h.b16 %v174
    %v469 = vunpack.c.l.b16 %v175
    %v470 = vunpack.c.h.b16 %v175
    %v471 = vunpack.c.l.b16 %v176
    %v472 = vunpack.c.h.b16 %v176
    %v473 = vunpack.c.l.b16 %v177
    %v474 = vunpack.c.h.b16 %v177
    %v475 = vunpack.c.l.b16 %v178
    %v476 = vunpack.c.h.b16 %v178
    %v477 = vunpack.c.l.b16 %v179
    %v478 = vunpack.c.h.b16 %v179
    %v479 = vunpack.c.l.b16 %v180
    %v480 = vunpack.c.h.b16 %v180
    %v481 = vunpack.c.l.b16 %v181
    %v482 = vunpack.c.h.b16 %v181
    %v483 = vunpack.c.l.b16 %v182
    %v484 = vunpack.c.h.b16 %v182
    %v485 = vunpack.c.l.b16 %v183
    %v486 = vunpack.c.h.b16 %v183
    %v487 = vunpack.c.l.b16 %v184
    %v488 = vunpack.c.h.b16 %v184
    %v489 = vunpack.c.l.b16 %v185
    %v490 = vunpack.c.h.b16 %v185
    %v491 = vunpack.c.l.b16 %v186
    %v492 = vunpack.c.h.b16 %v186
    %v493 = vunpack.c.l.b16 %v187
    %v494 = vunpack.c.h.b16 %v187
    %v495 = vunpack.c.l.b16 %v188
    %v496 = vunpack.c.h.b16 %v188
    %v497 = vunpack.c.l.b16 %v189
    %v498 = vunpack.c.h.b16 %v189
    %v499 = vunpack.c.l.b16 %v190
    %v500 = vunpack.c.h.b16 %v190
    %v501 = vunpack.c.l.b16 %v191
    %v502 = vunpack.c.h.b16 %v191
    %v503 = vunpack.c.l.b16 %v192
    %v504 = vunpack.c.h.b16 %v192
    %v505 = vunpack.c.l.b16 %v193
    %v506 = vunpack.c.h.b16 %v193
    %v507 = vunpack.c.l.b16 %v194
    %v508 = vunpack.c.h.b16 %v194
    %v509 = vunpack.c.l.b16 %v195
    %v510 = vunpack.c.h.b16 %v195
    %v511 = vunpack.c.l.b16 %v196
    %v512 = vunpack.c.h.b16 %v196
    %v513 = vunpack.c.l.b16 %v197
    %v514 = vunpack.c.h.b16 %v197
    %v515 = vunpack.c.l.b16 %v198
    %v516 = vunpack.c.h.b16 %v198
    %v517 = vunpack.c.l.b16 %v199
    %v518 = vunpack.c.h.b16 %v199
    %v519 = vunpack.c.l.b16 %v200
    %v520 = vunpack.c.h.b16 %v200
    %v521 = vunpack.c.l.b16 %v201
    %v522 = vunpack.c.h.b16 %v201
    %v523 = vunpack.c.l.b16 %v202
    %v524 = vunpack.c.h.b16 %v202
    %v525 = vunpack.c.l.b16 %v203
    %v526 = vunpack.c.h.b16 %v203
    %v527 = vunpack.c.l.b16 %v204
    %v528 = vunpack.c.h.b16 %v204
    %v529 = vunpack.c.l.b16 %v205
    %v530 = vunpack.c.h.b16 %v205
    %v531 = vunpack.c.l.b16 %v206
    %v532 = vunpack.c.h.b16 %v206
    %v533 = vunpack.c.l.b16 %v207
    %v534 = vunpack.c.h.b16 %v207
    %v535 = vunpack.c.l.b16 %v208
    %v536 = vunpack.c.h.b16 %v208
    %v537 = vunpack.c.l.b16 %v209
    %v538 = vunpack.c.h.b16 %v209
    %v539 = vunpack.c.l.b16 %v210
    %v540 = vunpack.c.h.b16 %v210
    %v541 = vunpack.c.l.b16 %v211
    %v542 = vunpack.c.h.b16 %v211
    %v543 = vunpack.c.l.b16 %v212
    %v544 = vunpack.c.h.b16 %v212
    %v545 = vunpack.c.l.b16 %v213
    %v546 = vunpack.c.h.b16 %v213
    %v547 = vunpack.c.l.b16 %v214
    %v548 = vunpack.c.h.b16 %v214
    %v549 = vunpack.c.l.b16 %v215
    %v550 = vunpack.c.h.b16 %v215
    %v551 = vunpack.c.l.b16 %v216
    %v552 = vunpack.c.h.b16 %v216
    %v553 = vunpack.c.l.b16 %v217
    %v554 = vunpack.c.h.b16 %v217
    %v555 = vunpack.c.l.b16 %v218
    %v556 = vunpack.c.h.b16 %v218
    %v557 = vunpack.c.l.b16 %v219
    %v558 = vunpack.c.h.b16 %v219
    %v559 = vunpack.c.l.b16 %v220
    %v560 = vunpack.c.h.b16 %v220
    %v561 = vunpack.c.l.b16 %v221
    %v562 = vunpack.c.h.b16 %v221
    %v563 = vunpack.c.l.b16 %v222
    %v564 = vunpack.c.h.b16 %v222
    %v565 = vunpack.c.l.b16 %v223
    %v566 = vunpack.c.h.b16 %v223
    %v567 = vunpack.c.l.b16 %v224
    %v568 = vunpack.c.h.b16 %v224
    %v569 = vunpack.c.l.b16 %v225
    %v570 = vunpack.c.h.b16 %v225
    %v571 = vunpack.c.l.b16 %v226
    %v572 = vunpack.c.h.b16 %v226
    %v573 = vunpack.c.l.b16 %v227
    %v574 = vunpack.c.h.b16 %v227
    %v575 = vunpack.c.l.b16 %v228
    %v576 = vunpack.c.h.b16 %v228
    %v577 = vunpack.c.l.b16 %v229
    %v578 = vunpack.c.h.b16 %v229
    %v579 = vunpack.c.l.b16 %v230
    %v580 = vunpack.c.h.b16 %v230
    %v581 = vunpack.c.l.b16 %v231
    %v582 = vunpack.c.h.b16 %v231
    %v583 = vunpack.c.l.b16 %v232
    %v584 = vunpack.c.h.b16 %v232
    %v585 = vunpack.c.l.b16 %v233
    %v586 = vunpack.c.h.b16 %v233
    %v587 = vunpack.c.l.b16 %v234
    %v588 = vunpack.c.h.b16 %v234
    %v589 = vunpack.c.l.b16 %v235
    %v590 = vunpack.c.h.b16 %v235
    %v591 = vunpack.c.l.b16 %v236
    %v592 = vunpack.c.h.b16 %v236
    %v593 = vunpack.c.l.b16 %v237
    %v594 = vunpack.c.h.b16 %v237
    %v595 = vunpack.c.l.b16 %v238
    %v596 = vunpack.c.h.b16 %v238
    %v597 = vunpack.c.l.b16 %v239
    %v598 = vunpack.c.h.b16 %v239
    %v599 = vunpack.c.l.b16 %v240
    %v600 = vunpack.c.h.b16 %v240
    %v601 = vunpack.c.l.b16 %v241
    %v602 = vunpack.c.h.b16 %v241
    %v603 = vunpack.c.l.b16 %v242
    %v604 = vunpack.c.h.b16 %v242
    %v605 = vunpack.c.l.b16 %v243
    %v606 = vunpack.c.h.b16 %v243
    %v607 = vunpack.c.l.b16 %v244
    %v608 = vunpack.c.h.b16 %v244
    %v609 = vunpack.c.l.b16 %v245
    %v610 = vunpack.c.h.b16 %v245
    %v611 = vunpack.c.l.b16 %v246
    %v612 = vunpack.c.h.b16 %v246
    %v613 = vunpack.c.l.b16 %v247
    %v614 = vunpack.c.h.b16 %v247
    %v615 = vunpack.c.l.b16 %v248
    %v616 = vunpack.c.h.b16 %v248
    %v617 = vunpack.c.l.b16 %v249
    %v618 = vunpack.c.h.b16 %v249
    %v619 = vunpack.c.l.b16 %v250
    %v620 = vunpack.c.h.b16 %v250
    %v621 = vunpack.c.l.b16 %v251
    %v622 = vunpack.c.h.b16 %v251
    %v623 = vunpack.c.l.b16 %v252
    %v624 = vunpack.c.h.b16 %v252
    %v625 = vunpack.c.l.b16 %v253
    %v626 = vunpack.c.h.b16 %v253
    %v627 = vunpack.c.l.b16 %v254
    %v628 = vunpack.c.h.b16 %v254
    %v629 = vunpack.c.l.b16 %v255
    %v630 = vunpack.c.h.b16 %v255
    %v631 = vunpack.c.l.b16 %v256
    %v632 = vunpack.c.h.b16 %v256
    %v633 = vunpack.c.l.b16 %v257
    %v634 = vunpack.c.h.b16 %v257
    %v635 = vunpack.c.l.b16 %v258
    %v636 = vunpack.c.h.b16 %v258
    %v637 = vunpack.c.l.b16 %v259
    %v638 = vunpack.c.h.b16 %v259
    %v639 = vunpack.c.l.b16 %v260
    %v640 = vunpack.c.h.b16 %v260
    %v641 = vunpack.c.l.b16 %v261
    %v642 = vunpack.c.h.b16 %v261
    %v643 = vunpack.c.l.b16 %v262
    %v644 = vunpack.c.h.b16 %v262
    %v645 = vunpack.c.l.b16 %v263
    %v646 = vunpack.c.h.b16 %v263
    %v647 = vunpack.c.l.b16 %v264
    %v648 = vunpack.c.h.b16 %v264
    %v649 = vunpack.c.l.b16 %v265
    %v650 = vunpack.c.h.b16 %v265
    %v651 = vunpack.c.l.b16 %v266
    %v652 = vunpack.c.h.b16 %v266
    %v653 = vunpack.c.l.b16 %v267
    %v654 = vunpack.c.h.b16 %v267
    %v655 = vunpack.c.l.b16 %v268
    %v656 = vunpack.c.h.b16 %v268
    %v657 = vunpack.c.l.b16 %v269
    %v658 = vunpack.c.h.b16 %v269
    %v659 = vunpack.c.l.b16 %v270
    %v660 = vunpack.c.h.b16 %v270
    %v661 = vunpack.c.l.b16 %v271
    %v662 = vunpack.c.h.b16 %v271
    %v663 = vunpack.c.l.b16 %v272
    %v664 = vunpack.c.h.b16 %v272
    %v665 = vunpack.c.l.b16 %v273
    %v666 = vunpack.c.h.b16 %v273
    %v667 = vunpack.c.l.b16 %v274
    %v668 = vunpack.c.h.b16 %v274
    %v669 = vunpack.c.l.b16 %v275
    %v670 = vunpack.c.h.b16 %v275
    %v671 = vunpack.c.l.b16 %v276
    %v672 = vunpack.c.h.b16 %v276
    %v673 = vunpack.c.l.b16 %v277
    %v674 = vunpack.c.h.b16 %v277
    %v675 = vunpack.c.l.b16 %v278
    %v676 = vunpack.c.h.b16 %v278
    %v677 = vunpack.c.l.b16 %v279
    %v678 = vunpack.c.h.b16 %v279
    %v679 = vunpack.c.l.b16 %v280
    %v680 = vunpack.c.h.b16 %v280
    %v681 = vunpack.c.l.b16 %v281
    %v682 = vunpack.c.h.b16 %v281
    %v683 = vunpack.c.l.b16 %v282
    %v684 = vunpack.c.h.b16 %v282
    %v685 = vunpack.c.l.b16 %v283
    %v686 = vunpack.c.h.b16 %v283
    %v687 = vunpack.c.l.b16 %v284
    %v688 = vunpack.c.h.b16 %v284
    %v689 = vunpack.c.l.b16 %v285
    %v690 = vunpack.c.h.b16 %v285
    %v691 = vunpack.c.l.b16 %v286
    %v692 = vunpack.c.h.b16 %v286
    %v693 = vunpack.c.l.b16 %v287
    %v694 = vunpack.c.h.b16 %v287
    %v695 = vunpack.c.l.b16 %v288
    %v696 = vunpack.c.h.b16 %v288
    %v697 = vunpack.c.l.b16 %v289
    %v698 = vunpack.c.h.b16 %v289
    %v699 = vunpack.c.l.b16 %v290
    %v700 = vunpack.c.h.b16 %v290
    %v701 = vunpack.c.l.b16 %v291
    %v702 = vunpack.c.h.b16 %v291
    %v703 = vunpack.c.l.b16 %v292
    %v704 = vunpack.c.h.b16 %v292
    %v705 = vunpack.c.l.b16 %v293
    %v706 = vunpack.c.h.b16 %v293
    %v707 = vunpack.c.l.b16 %v294
    %v708 = vunpack.c.h.b16 %v294
    %v709 = vunpack.c.l.b16 %v295
    %v710 = vunpack.c.h.b16 %v295
    %v711 = vunpack.c.l.b16 %v296
    %v712 = vunpack.c.h.b16 %v296
    %v713 = vunpack.c.l.b16 %v297
    %v714 = vunpack.c.h.b16 %v297
    %v715 = vunpack.c.l.b16 %v298
    %v716 = vunpack.c.h.b16 %v298
    %v717 = vunpack.c.l.b16 %v299
    %v718 = vunpack.c.h.b16 %v299
    %v719 = vunpack.c.l.b16 %v300
    %v720 = vunpack.c.h.b16 %v300
    %v721 = vpack.c.b16 %v481, %v465
    %v722 = vpack.c.b16 %v482, %v466
    %v723 = vpack.c.b16 %v483, %v467
    %v724 = vpack.c.b16 %v484, %v468
    %v725 = vpack.c.b16 %v485, %v469
    %v726 = vpack.c.b16 %v486, %v470
    %v727 = vpack.c.b16 %v487, %v471
    %v728 = vpack.c.b16 %v488, %v472
    %v729 = vpack.c.b16 %v489, %v473
    %v730 = vpack.c.b16 %v490, %v474
    %v731 = vpack.c.b16 %v491, %v475
    %v732 = vpack.c.b16 %v492, %v476
    %v733 = vpack.c.b16 %v493, %v477
    %v734 = vpack.c.b16 %v494, %v478
    %v735 = vpack.c.b16 %v495, %v479
    %v736 = vpack.c.b16 %v496, %v480
    %v737 = vpack.c.b16 %v513, %v497
    %v738 = vpack.c.b16 %v514, %v498
    %v739 = vpack.c.b16 %v515, %v499
    %v740 = vpack.c.b16 %v516, %v500
    %v741 = vpack.c.b16 %v517, %v501
    %v742 = vpack.c.b16 %v518, %v502
    %v743 = vpack.c.b16 %v519, %v503
    %v744 = vpack.c.b16 %v520, %v504
    %v745 = vpack.c.b16 %v521, %v505
    %v746 = vpack.c.b16 %v522, %v506
    %v747 = vpack.c.b16 %v523, %v507
    %v748 = vpack.c.b16 %v524, %v508
    %v749 = vpack.c.b16 %v525, %v509
    %v750 = vpack.c.b16 %v526, %v510
    %v751 = vpack.c.b16 %v527, %v511
    %v752 = vpack.c.b16 %v528, %v512
    %v753 = vpack.c.b16 %v545, %v529
    %v754 = vpack.c.b16 %v546, %v530
    %v755 = vpack.c.b16 %v547, %v531
    %v756 = vpack.c.b16 %v548, %v532
    %v757 = vpack.c.b16 %v549, %v533
    %v758 = vpack.c.b16 %v550, %v534
    %v759 = vpack.c.b16 %v551, %v535
    %v760 = vpack.c.b16 %v552, %v536
    %v761 = vpack.c.b16 %v553, %v537
    %v762 = vpack.c.b16 %v554, %v538
    %v763 = vpack.c.b16 %v555, %v539
    %v764 = vpack.c.b16 %v556, %v540
    %v765 = vpack.c.b16 %v557, %v541
    %v766 = vpack.c.b16 %v558, %v542
    %v767 = vpack.c.b16 %v559, %v543
    %v768 = vpack.c.b16 %v560, %v544
    %v769 = vpack.c.b16 %v577, %v561
    %v770 = vpack.c.b16 %v578, %v562
    %v771 = vpack.c.b16 %v579, %v563
    %v772 = vpack.c.b16 %v580, %v564
    %v773 = vpack.c.b16 %v581, %v565
    %v774 = vpack.c.b16 %v582, %v566
    %v775 = vpack.c.b16 %v583, %v567
    %v776 = vpack.c.b16 %v584, %v568
    %v777 = vpack.c.b16 %v585, %v569
    %v778 = vpack.c.b16 %v586, %v570
    %v779 = vpack.c.b16 %v587, %v571
    %v780 = vpack.c.b16 %v588, %v572
    %v781 = vpack.c.b16 %v589, %v573
    %v782 = vpack.c.b16 %v590, %v574
    %v783 = vpack.c.b16 %v591, %v575
    %v784 = vpack.c.b16 %v592, %v576
    %v785 = vpack.c.b16 %v609, %v593
    %v786 = vpack.c.b16 %v610, %v594
    %v787 = vpack.c.b16 %v611, %v595
    %v788 = vpack.c.b16 %v612, %v596
    %v789 = vpack.c.b16 %v613, %v597
    %v790 = vpack.c.b16 %v614, %v598
    %v791 = vpack.c.b16 %v615, %v599
    %v792 = vpack.c.b16 %v616, %v600
    %v793 = vpack.c.b16 %v617, %v601
    %v794 = vpack.c.b16 %v618, %v602
    %v795 = vpack.c.b16 %v619, %v603
    %v796 = vpack.c.b16 %v620, %v604
    %v797 = vpack.c.b16 %v621, %v605
    %v798 = vpack.c.b16 %v622, %v606
    %v799 = vpack.c.b16 %v623, %v607
    %v800 = vpack.c.b16 %v624, %v608
    %v801 = vpack.c.b16 %v641, %v625
    %v802 = vpack.c.b16 %v642, %v626
    %v803 = vpack.c.b16 %v643, %v627
    %v804 = vpack.c.b16 %v644, %v628
    %v805 = vpack.c.b16 %v645, %v629
    %v806 = vpack.c.b16 %v646, %v630
    %v807 = vpack.c.b16 %v647, %v631
    %v808 = vpack.c.b16 %v648, %v632
    %v809 = vpack.c.b16 %v649, %v633
    %v810 = vpack.c.b16 %v650, %v634
    %v811 = vpack.c.b16 %v651, %v635
    %v812 = vpack.c.b16 %v652, %v636
    %v813 = vpack.c.b16 %v653, %v637
    %v814 = vpack.c.b16 %v654, %v638
    %v815 = vpack.c.b16 %v655, %v639
    %v816 = vpack.c.b16 %v656, %v640
    %v817 = vpack.c.b16 %v673, %v657
    %v818 = vpack.c.b16 %v674, %v658
    %v819 = vpack.c.b16 %v675, %v659
    %v820 = vpack.c.b16 %v676, %v660
    %v821 = vpack.c.b16 %v677, %v661
    %v822 = vpack.c.b16 %v678, %v662
    %v823 = vpack.c.b16 %v679, %v663
    %v824 = vpack.c.b16 %v680, %v664
    %v825 = vpack.c.b16 %v681, %v665
    %v826 = vpack.c.b16 %v682, %v666
    %v827 = vpack.c.b16 %v683, %v667
    %v828 = vpack.c.b16 %v684, %v668
    %v829 = vpack.c.b16 %v685, %v669
    %v830 = vpack.c.b16 %v686, %v670
    %v831 = vpack.c.b16 %v687, %v671
    %v832 = vpack.c.b16 %v688, %v672
    %v833 = vpack.c.b16 %v705, %v689
    %v834 = vpack.c.b16 %v706, %v690
    %v835 = vpack.c.b16 %v707, %v691
    %v836 = vpack.c.b16 %v708, %v692
    %v837 = vpack.c.b16 %v709, %v693
    %v838 = vpack.c.b16 %v710, %v694
    %v839 = vpack.c.b16 %v711, %v695
    %v840 = vpack.c.b16 %v712, %v696
    %v841 = vpack.c.b16 %v713, %v697
    %v842 = vpack.c.b16 %v714, %v698
    %v843 = vpack.c.b16 %v715, %v699
    %v844 = vpack.c.b16 %v716, %v700
    %v845 = vpack.c.b16 %v717, %v701
    %v846 = vpack.c.b16 %v718, %v702
    %v847 = vpack.c.b16 %v719, %v703
    %v848 = vpack.c.b16 %v720, %v704
    %977 = vmatpush.bf16.msra.mxu0 %v833
    %978 = vmatpush.bf16.msra.mxu0 %v817
    %979 = vmatpush.bf16.msra.mxu0 %v801
    %980 = vmatpush.bf16.msra.mxu0 %v785
    %981 = vmatpush.bf16.msra.mxu0 %v769
    %982 = vmatpush.bf16.msra.mxu0 %v753
    %983 = vmatpush.bf16.msra.mxu0 %v737
    %984 = vmatpush.bf16.msra.mxu0 %v721
    %985 = vmatmul.bf16.gmra.mxu0 %v172
    %v986 = vpop.f32.mrf.mxu0
    %v987 = vadd.f32 %v305, %v986
    %v988 = vpop.f32.mrf.mxu0
    %989 = vdwg.mxu0
    %990 = vmatpush.bf16.msra.mxu0 %v834
    %991 = vmatpush.bf16.msra.mxu0 %v818
    %992 = vmatpush.bf16.msra.mxu0 %v802
    %993 = vmatpush.bf16.msra.mxu0 %v786
    %994 = vmatpush.bf16.msra.mxu0 %v770
    %995 = vmatpush.bf16.msra.mxu0 %v754
    %996 = vmatpush.bf16.msra.mxu0 %v738
    %997 = vmatpush.bf16.msra.mxu0 %v722
    %998 = vmatmul.bf16.gmra.mxu0 %v172
    %v999 = vpop.f32.mrf.mxu0
    %v1000 = vadd.f32 %v306, %v999
    %v1001 = vpop.f32.mrf.mxu0
    %1002 = vdwg.mxu0
    %1003 = vmatpush.bf16.msra.mxu0 %v835
    %1004 = vmatpush.bf16.msra.mxu0 %v819
    %1005 = vmatpush.bf16.msra.mxu0 %v803
    %1006 = vmatpush.bf16.msra.mxu0 %v787
    %1007 = vmatpush.bf16.msra.mxu0 %v771
    %1008 = vmatpush.bf16.msra.mxu0 %v755
    %1009 = vmatpush.bf16.msra.mxu0 %v739
    %1010 = vmatpush.bf16.msra.mxu0 %v723
    %1011 = vmatmul.bf16.gmra.mxu0 %v172
    %v1012 = vpop.f32.mrf.mxu0
    %v1013 = vadd.f32 %v307, %v1012
    %v1014 = vpop.f32.mrf.mxu0
    %1015 = vdwg.mxu0
    %1016 = vmatpush.bf16.msra.mxu0 %v836
    %1017 = vmatpush.bf16.msra.mxu0 %v820
    %1018 = vmatpush.bf16.msra.mxu0 %v804
    %1019 = vmatpush.bf16.msra.mxu0 %v788
    %1020 = vmatpush.bf16.msra.mxu0 %v772
    %1021 = vmatpush.bf16.msra.mxu0 %v756
    %1022 = vmatpush.bf16.msra.mxu0 %v740
    %1023 = vmatpush.bf16.msra.mxu0 %v724
    %1024 = vmatmul.bf16.gmra.mxu0 %v172
    %v1025 = vpop.f32.mrf.mxu0
    %v1026 = vadd.f32 %v308, %v1025
    %v1027 = vpop.f32.mrf.mxu0
    %1028 = vdwg.mxu0
    %1029 = vmatpush.bf16.msra.mxu0 %v837
    %1030 = vmatpush.bf16.msra.mxu0 %v821
    %1031 = vmatpush.bf16.msra.mxu0 %v805
    %1032 = vmatpush.bf16.msra.mxu0 %v789
    %1033 = vmatpush.bf16.msra.mxu0 %v773
    %1034 = vmatpush.bf16.msra.mxu0 %v757
    %1035 = vmatpush.bf16.msra.mxu0 %v741
    %1036 = vmatpush.bf16.msra.mxu0 %v725
    %1037 = vmatmul.bf16.gmra.mxu0 %v172
    %v1038 = vpop.f32.mrf.mxu0
    %v1039 = vadd.f32 %v309, %v1038
    %v1040 = vpop.f32.mrf.mxu0
    %1041 = vdwg.mxu0
    %1042 = vmatpush.bf16.msra.mxu0 %v838
    %1043 = vmatpush.bf16.msra.mxu0 %v822
    %1044 = vmatpush.bf16.msra.mxu0 %v806
    %1045 = vmatpush.bf16.msra.mxu0 %v790
    %1046 = vmatpush.bf16.msra.mxu0 %v774
    %1047 = vmatpush.bf16.msra.mxu0 %v758
    %1048 = vmatpush.bf16.msra.mxu0 %v742
    %1049 = vmatpush.bf16.msra.mxu0 %v726
    %1050 = vmatmul.bf16.gmra.mxu0 %v172
    %v1051 = vpop.f32.mrf.mxu0
    %v1052 = vadd.f32 %v310, %v1051
    %v1053 = vpop.f32.mrf.mxu0
    %1054 = vdwg.mxu0
    %1055 = vmatpush.bf16.msra.mxu0 %v839
    %1056 = vmatpush.bf16.msra.mxu0 %v823
    %1057 = vmatpush.bf16.msra.mxu0 %v807
    %1058 = vmatpush.bf16.msra.mxu0 %v791
    %1059 = vmatpush.bf16.msra.mxu0 %v775
    %1060 = vmatpush.bf16.msra.mxu0 %v759
    %1061 = vmatpush.bf16.msra.mxu0 %v743
    %1062 = vmatpush.bf16.msra.mxu0 %v727
    %1063 = vmatmul.bf16.gmra.mxu0 %v172
    %v1064 = vpop.f32.mrf.mxu0
    %v1065 = vadd.f32 %v311, %v1064
    %v1066 = vpop.f32.mrf.mxu0
    %1067 = vdwg.mxu0
    %1068 = vmatpush.bf16.msra.mxu0 %v840
    %1069 = vmatpush.bf16.msra.mxu0 %v824
    %1070 = vmatpush.bf16.msra.mxu0 %v808
    %1071 = vmatpush.bf16.msra.mxu0 %v792
    %1072 = vmatpush.bf16.msra.mxu0 %v776
    %1073 = vmatpush.bf16.msra.mxu0 %v760
    %1074 = vmatpush.bf16.msra.mxu0 %v744
    %1075 = vmatpush.bf16.msra.mxu0 %v728
    %1076 = vmatmul.bf16.gmra.mxu0 %v172
    %v1077 = vpop.f32.mrf.mxu0
    %v1078 = vadd.f32 %v312, %v1077
    %v1079 = vpop.f32.mrf.mxu0
    %1080 = vdwg.mxu0
    %1081 = vmatpush.bf16.msra.mxu0 %v841
    %1082 = vmatpush.bf16.msra.mxu0 %v825
    %1083 = vmatpush.bf16.msra.mxu0 %v809
    %1084 = vmatpush.bf16.msra.mxu0 %v793
    %1085 = vmatpush.bf16.msra.mxu0 %v777
    %1086 = vmatpush.bf16.msra.mxu0 %v761
    %1087 = vmatpush.bf16.msra.mxu0 %v745
    %1088 = vmatpush.bf16.msra.mxu0 %v729
    %1089 = vmatmul.bf16.gmra.mxu0 %v172
    %v1090 = vpop.f32.mrf.mxu0
    %v1091 = vadd.f32 %v313, %v1090
    %v1092 = vpop.f32.mrf.mxu0
    %1093 = vdwg.mxu0
    %1094 = vmatpush.bf16.msra.mxu0 %v842
    %1095 = vmatpush.bf16.msra.mxu0 %v826
    %1096 = vmatpush.bf16.msra.mxu0 %v810
    %1097 = vmatpush.bf16.msra.mxu0 %v794
    %1098 = vmatpush.bf16.msra.mxu0 %v778
    %1099 = vmatpush.bf16.msra.mxu0 %v762
    %1100 = vmatpush.bf16.msra.mxu0 %v746
    %1101 = vmatpush.bf16.msra.mxu0 %v730
    %1102 = vmatmul.bf16.gmra.mxu0 %v172
    %v1103 = vpop.f32.mrf.mxu0
    %v1104 = vadd.f32 %v314, %v1103
    %v1105 = vpop.f32.mrf.mxu0
    %1106 = vdwg.mxu0
    %1107 = vmatpush.bf16.msra.mxu0 %v843
    %1108 = vmatpush.bf16.msra.mxu0 %v827
    %1109 = vmatpush.bf16.msra.mxu0 %v811
    %1110 = vmatpush.bf16.msra.mxu0 %v795
    %1111 = vmatpush.bf16.msra.mxu0 %v779
    %1112 = vmatpush.bf16.msra.mxu0 %v763
    %1113 = vmatpush.bf16.msra.mxu0 %v747
    %1114 = vmatpush.bf16.msra.mxu0 %v731
    %1115 = vmatmul.bf16.gmra.mxu0 %v172
    %v1116 = vpop.f32.mrf.mxu0
    %v1117 = vadd.f32 %v315, %v1116
    %v1118 = vpop.f32.mrf.mxu0
    %1119 = vdwg.mxu0
    %1120 = vmatpush.bf16.msra.mxu0 %v844
    %1121 = vmatpush.bf16.msra.mxu0 %v828
    %1122 = vmatpush.bf16.msra.mxu0 %v812
    %1123 = vmatpush.bf16.msra.mxu0 %v796
    %1124 = vmatpush.bf16.msra.mxu0 %v780
    %1125 = vmatpush.bf16.msra.mxu0 %v764
    %1126 = vmatpush.bf16.msra.mxu0 %v748
    %1127 = vmatpush.bf16.msra.mxu0 %v732
    %1128 = vmatmul.bf16.gmra.mxu0 %v172
    %v1129 = vpop.f32.mrf.mxu0
    %v1130 = vadd.f32 %v316, %v1129
    %v1131 = vpop.f32.mrf.mxu0
    %1132 = vdwg.mxu0
    %1133 = vmatpush.bf16.msra.mxu0 %v845
    %1134 = vmatpush.bf16.msra.mxu0 %v829
    %1135 = vmatpush.bf16.msra.mxu0 %v813
    %1136 = vmatpush.bf16.msra.mxu0 %v797
    %1137 = vmatpush.bf16.msra.mxu0 %v781
    %1138 = vmatpush.bf16.msra.mxu0 %v765
    %1139 = vmatpush.bf16.msra.mxu0 %v749
    %1140 = vmatpush.bf16.msra.mxu0 %v733
    %1141 = vmatmul.bf16.gmra.mxu0 %v172
    %v1142 = vpop.f32.mrf.mxu0
    %v1143 = vadd.f32 %v317, %v1142
    %v1144 = vpop.f32.mrf.mxu0
    %1145 = vdwg.mxu0
    %1146 = vmatpush.bf16.msra.mxu0 %v846
    %1147 = vmatpush.bf16.msra.mxu0 %v830
    %1148 = vmatpush.bf16.msra.mxu0 %v814
    %1149 = vmatpush.bf16.msra.mxu0 %v798
    %1150 = vmatpush.bf16.msra.mxu0 %v782
    %1151 = vmatpush.bf16.msra.mxu0 %v766
    %1152 = vmatpush.bf16.msra.mxu0 %v750
    %1153 = vmatpush.bf16.msra.mxu0 %v734
    %1154 = vmatmul.bf16.gmra.mxu0 %v172
    %v1155 = vpop.f32.mrf.mxu0
    %v1156 = vadd.f32 %v318, %v1155
    %v1157 = vpop.f32.mrf.mxu0
    %1158 = vdwg.mxu0
    %1159 = vmatpush.bf16.msra.mxu0 %v847
    %1160 = vmatpush.bf16.msra.mxu0 %v831
    %1161 = vmatpush.bf16.msra.mxu0 %v815
    %1162 = vmatpush.bf16.msra.mxu0 %v799
    %1163 = vmatpush.bf16.msra.mxu0 %v783
    %1164 = vmatpush.bf16.msra.mxu0 %v767
    %1165 = vmatpush.bf16.msra.mxu0 %v751
    %1166 = vmatpush.bf16.msra.mxu0 %v735
    %1167 = vmatmul.bf16.gmra.mxu0 %v172
    %v1168 = vpop.f32.mrf.mxu0
    %v1169 = vadd.f32 %v319, %v1168
    %v1170 = vpop.f32.mrf.mxu0
    %1171 = vdwg.mxu0
    %1172 = vmatpush.bf16.msra.mxu0 %v848
    %1173 = vmatpush.bf16.msra.mxu0 %v832
    %1174 = vmatpush.bf16.msra.mxu0 %v816
    %1175 = vmatpush.bf16.msra.mxu0 %v800
    %1176 = vmatpush.bf16.msra.mxu0 %v784
    %1177 = vmatpush.bf16.msra.mxu0 %v768
    %1178 = vmatpush.bf16.msra.mxu0 %v752
    %1179 = vmatpush.bf16.msra.mxu0 %v736
    %1180 = vmatmul.bf16.gmra.mxu0 %v172
    %v1181 = vpop.f32.mrf.mxu0
    %v1182 = vadd.f32 %v320, %v1181
    %v1183 = vpop.f32.mrf.mxu0
    %1184 = vdwg.mxu0
    %v1185 = vmax.f32 %v987, 0.0
    %v1186 = vmax.f32 %v1000, 0.0
    %v1187 = vmax.f32 %v1013, 0.0
    %v1188 = vmax.f32 %v1026, 0.0
    %v1189 = vmax.f32 %v1039, 0.0
    %v1190 = vmax.f32 %v1052, 0.0
    %v1191 = vmax.f32 %v1065, 0.0
    %v1192 = vmax.f32 %v1078, 0.0
    %v1193 = vmax.f32 %v1091, 0.0
    %v1194 = vmax.f32 %v1104, 0.0
    %v1195 = vmax.f32 %v1117, 0.0
    %v1196 = vmax.f32 %v1130, 0.0
    %v1197 = vmax.f32 %v1143, 0.0
    %v1198 = vmax.f32 %v1156, 0.0
    %v1199 = vmax.f32 %v1169, 0.0
    %v1200 = vmax.f32 %v1182, 0.0
    %v1201 = vpack.c.bf16 %v1185, %v1185
    %v1202 = vpack.c.bf16 %v1186, %v1186
    %v1203 = vpack.c.bf16 %v1187, %v1187
    %v1204 = vpack.c.bf16 %v1188, %v1188
    %v1205 = vpack.c.bf16 %v1189, %v1189
    %v1206 = vpack.c.bf16 %v1190, %v1190
    %v1207 = vpack.c.bf16 %v1191, %v1191
    %v1208 = vpack.c.bf16 %v1192, %v1192
    %v1209 = vpack.c.bf16 %v1193, %v1193
    %v1210 = vpack.c.bf16 %v1194, %v1194
    %v1211 = vpack.c.bf16 %v1195, %v1195
    %v1212 = vpack.c.bf16 %v1196, %v1196
    %v1213 = vpack.c.bf16 %v1197, %v1197
    %v1214 = vpack.c.bf16 %v1198, %v1198
    %v1215 = vpack.c.bf16 %v1199, %v1199
    %v1216 = vpack.c.bf16 %v1200, %v1200
    %v1217 = vld [vmem:[#allocation8] sm:$0xff]
    %v1218 = vld [vmem:[#allocation8 + $0x8] sm:$0xff]
    %v1219 = vld [vmem:[#allocation8 + $0x10] sm:$0xff]
    %v1220 = vld [vmem:[#allocation8 + $0x18] sm:$0xff]
    %v1221 = vld [vmem:[#allocation8 + $0x20] sm:$0xff]
    %v1222 = vld [vmem:[#allocation8 + $0x28] sm:$0xff]
    %v1223 = vld [vmem:[#allocation8 + $0x30] sm:$0xff]
    %v1224 = vld [vmem:[#allocation8 + $0x38] sm:$0xff]
    %v1225 = vld [vmem:[#allocation8 + $0x40] sm:$0xff]
    %v1226 = vld [vmem:[#allocation8 + $0x48] sm:$0xff]
    %v1227 = vld [vmem:[#allocation8 + $0x50] sm:$0xff]
    %v1228 = vld [vmem:[#allocation8 + $0x58] sm:$0xff]
    %v1229 = vld [vmem:[#allocation8 + $0x60] sm:$0xff]
    %v1230 = vld [vmem:[#allocation8 + $0x68] sm:$0xff]
    %v1231 = vld [vmem:[#allocation8 + $0x70] sm:$0xff]
    %v1232 = vld [vmem:[#allocation8 + $0x78] sm:$0xff]
    %v1233 = vld [vmem:[#allocation8 + $0x80] sm:$0xff]
    %v1234 = vld [vmem:[#allocation8 + $0x88] sm:$0xff]
    %v1235 = vld [vmem:[#allocation8 + $0x90] sm:$0xff]
    %v1236 = vld [vmem:[#allocation8 + $0x98] sm:$0xff]
    %v1237 = vld [vmem:[#allocation8 + $0xa0] sm:$0xff]
    %v1238 = vld [vmem:[#allocation8 + $0xa8] sm:$0xff]
    %v1239 = vld [vmem:[#allocation8 + $0xb0] sm:$0xff]
    %v1240 = vld [vmem:[#allocation8 + $0xb8] sm:$0xff]
    %v1241 = vld [vmem:[#allocation8 + $0xc0] sm:$0xff]
    %v1242 = vld [vmem:[#allocation8 + $0xc8] sm:$0xff]
    %v1243 = vld [vmem:[#allocation8 + $0xd0] sm:$0xff]
    %v1244 = vld [vmem:[#allocation8 + $0xd8] sm:$0xff]
    %v1245 = vld [vmem:[#allocation8 + $0xe0] sm:$0xff]
    %v1246 = vld [vmem:[#allocation8 + $0xe8] sm:$0xff]
    %v1247 = vld [vmem:[#allocation8 + $0xf0] sm:$0xff]
    %v1248 = vld [vmem:[#allocation8 + $0xf8] sm:$0xff]
    %v1249 = vld [vmem:[#allocation8 + $0x100] sm:$0xff]
    %v1250 = vld [vmem:[#allocation8 + $0x108] sm:$0xff]
    %v1251 = vld [vmem:[#allocation8 + $0x110] sm:$0xff]
    %v1252 = vld [vmem:[#allocation8 + $0x118] sm:$0xff]
    %v1253 = vld [vmem:[#allocation8 + $0x120] sm:$0xff]
    %v1254 = vld [vmem:[#allocation8 + $0x128] sm:$0xff]
    %v1255 = vld [vmem:[#allocation8 + $0x130] sm:$0xff]
    %v1256 = vld [vmem:[#allocation8 + $0x138] sm:$0xff]
    %v1257 = vld [vmem:[#allocation8 + $0x140] sm:$0xff]
    %v1258 = vld [vmem:[#allocation8 + $0x148] sm:$0xff]
    %v1259 = vld [vmem:[#allocation8 + $0x150] sm:$0xff]
    %v1260 = vld [vmem:[#allocation8 + $0x158] sm:$0xff]
    %v1261 = vld [vmem:[#allocation8 + $0x160] sm:$0xff]
    %v1262 = vld [vmem:[#allocation8 + $0x168] sm:$0xff]
    %v1263 = vld [vmem:[#allocation8 + $0x170] sm:$0xff]
    %v1264 = vld [vmem:[#allocation8 + $0x178] sm:$0xff]
    %v1265 = vld [vmem:[#allocation8 + $0x180] sm:$0xff]
    %v1266 = vld [vmem:[#allocation8 + $0x188] sm:$0xff]
    %v1267 = vld [vmem:[#allocation8 + $0x190] sm:$0xff]
    %v1268 = vld [vmem:[#allocation8 + $0x198] sm:$0xff]
    %v1269 = vld [vmem:[#allocation8 + $0x1a0] sm:$0xff]
    %v1270 = vld [vmem:[#allocation8 + $0x1a8] sm:$0xff]
    %v1271 = vld [vmem:[#allocation8 + $0x1b0] sm:$0xff]
    %v1272 = vld [vmem:[#allocation8 + $0x1b8] sm:$0xff]
    %v1273 = vld [vmem:[#allocation8 + $0x1c0] sm:$0xff]
    %v1274 = vld [vmem:[#allocation8 + $0x1c8] sm:$0xff]
    %v1275 = vld [vmem:[#allocation8 + $0x1d0] sm:$0xff]
    %v1276 = vld [vmem:[#allocation8 + $0x1d8] sm:$0xff]
    %v1277 = vld [vmem:[#allocation8 + $0x1e0] sm:$0xff]
    %v1278 = vld [vmem:[#allocation8 + $0x1e8] sm:$0xff]
    %v1279 = vld [vmem:[#allocation8 + $0x1f0] sm:$0xff]
    %v1280 = vld [vmem:[#allocation8 + $0x1f8] sm:$0xff]
    %v1281 = vld [vmem:[#allocation8 + $0x200] sm:$0xff]
    %v1282 = vld [vmem:[#allocation8 + $0x208] sm:$0xff]
    %v1283 = vld [vmem:[#allocation8 + $0x210] sm:$0xff]
    %v1284 = vld [vmem:[#allocation8 + $0x218] sm:$0xff]
    %v1285 = vld [vmem:[#allocation8 + $0x220] sm:$0xff]
    %v1286 = vld [vmem:[#allocation8 + $0x228] sm:$0xff]
    %v1287 = vld [vmem:[#allocation8 + $0x230] sm:$0xff]
    %v1288 = vld [vmem:[#allocation8 + $0x238] sm:$0xff]
    %v1289 = vld [vmem:[#allocation8 + $0x240] sm:$0xff]
    %v1290 = vld [vmem:[#allocation8 + $0x248] sm:$0xff]
    %v1291 = vld [vmem:[#allocation8 + $0x250] sm:$0xff]
    %v1292 = vld [vmem:[#allocation8 + $0x258] sm:$0xff]
    %v1293 = vld [vmem:[#allocation8 + $0x260] sm:$0xff]
    %v1294 = vld [vmem:[#allocation8 + $0x268] sm:$0xff]
    %v1295 = vld [vmem:[#allocation8 + $0x270] sm:$0xff]
    %v1296 = vld [vmem:[#allocation8 + $0x278] sm:$0xff]
    %v1297 = vld [vmem:[#allocation8 + $0x280] sm:$0xff]
    %v1298 = vld [vmem:[#allocation8 + $0x288] sm:$0xff]
    %v1299 = vld [vmem:[#allocation8 + $0x290] sm:$0xff]
    %v1300 = vld [vmem:[#allocation8 + $0x298] sm:$0xff]
    %v1301 = vld [vmem:[#allocation8 + $0x2a0] sm:$0xff]
    %v1302 = vld [vmem:[#allocation8 + $0x2a8] sm:$0xff]
    %v1303 = vld [vmem:[#allocation8 + $0x2b0] sm:$0xff]
    %v1304 = vld [vmem:[#allocation8 + $0x2b8] sm:$0xff]
    %v1305 = vld [vmem:[#allocation8 + $0x2c0] sm:$0xff]
    %v1306 = vld [vmem:[#allocation8 + $0x2c8] sm:$0xff]
    %v1307 = vld [vmem:[#allocation8 + $0x2d0] sm:$0xff]
    %v1308 = vld [vmem:[#allocation8 + $0x2d8] sm:$0xff]
    %v1309 = vld [vmem:[#allocation8 + $0x2e0] sm:$0xff]
    %v1310 = vld [vmem:[#allocation8 + $0x2e8] sm:$0xff]
    %v1311 = vld [vmem:[#allocation8 + $0x2f0] sm:$0xff]
    %v1312 = vld [vmem:[#allocation8 + $0x2f8] sm:$0xff]
    %v1313 = vld [vmem:[#allocation8 + $0x300] sm:$0xff]
    %v1314 = vld [vmem:[#allocation8 + $0x308] sm:$0xff]
    %v1315 = vld [vmem:[#allocation8 + $0x310] sm:$0xff]
    %v1316 = vld [vmem:[#allocation8 + $0x318] sm:$0xff]
    %v1317 = vld [vmem:[#allocation8 + $0x320] sm:$0xff]
    %v1318 = vld [vmem:[#allocation8 + $0x328] sm:$0xff]
    %v1319 = vld [vmem:[#allocation8 + $0x330] sm:$0xff]
    %v1320 = vld [vmem:[#allocation8 + $0x338] sm:$0xff]
    %v1321 = vld [vmem:[#allocation8 + $0x340] sm:$0xff]
    %v1322 = vld [vmem:[#allocation8 + $0x348] sm:$0xff]
    %v1323 = vld [vmem:[#allocation8 + $0x350] sm:$0xff]
    %v1324 = vld [vmem:[#allocation8 + $0x358] sm:$0xff]
    %v1325 = vld [vmem:[#allocation8 + $0x360] sm:$0xff]
    %v1326 = vld [vmem:[#allocation8 + $0x368] sm:$0xff]
    %v1327 = vld [vmem:[#allocation8 + $0x370] sm:$0xff]
    %v1328 = vld [vmem:[#allocation8 + $0x378] sm:$0xff]
    %v1329 = vld [vmem:[#allocation8 + $0x380] sm:$0xff]
    %v1330 = vld [vmem:[#allocation8 + $0x388] sm:$0xff]
    %v1331 = vld [vmem:[#allocation8 + $0x390] sm:$0xff]
    %v1332 = vld [vmem:[#allocation8 + $0x398] sm:$0xff]
    %v1333 = vld [vmem:[#allocation8 + $0x3a0] sm:$0xff]
    %v1334 = vld [vmem:[#allocation8 + $0x3a8] sm:$0xff]
    %v1335 = vld [vmem:[#allocation8 + $0x3b0] sm:$0xff]
    %v1336 = vld [vmem:[#allocation8 + $0x3b8] sm:$0xff]
    %v1337 = vld [vmem:[#allocation8 + $0x3c0] sm:$0xff]
    %v1338 = vld [vmem:[#allocation8 + $0x3c8] sm:$0xff]
    %v1339 = vld [vmem:[#allocation8 + $0x3d0] sm:$0xff]
    %v1340 = vld [vmem:[#allocation8 + $0x3d8] sm:$0xff]
    %v1341 = vld [vmem:[#allocation8 + $0x3e0] sm:$0xff]
    %v1342 = vld [vmem:[#allocation8 + $0x3e8] sm:$0xff]
    %v1343 = vld [vmem:[#allocation8 + $0x3f0] sm:$0xff]
    %v1344 = vld [vmem:[#allocation8 + $0x3f8] sm:$0xff]
    %v1345 = vld [vmem:[#allocation8 + $0x400] sm:$0xff]
    %v1346 = vld [vmem:[#allocation8 + $0x408] sm:$0xff]
    %v1347 = vld [vmem:[#allocation8 + $0x410] sm:$0xff]
    %v1348 = vld [vmem:[#allocation8 + $0x418] sm:$0xff]
    %v1349 = vld [vmem:[#allocation8 + $0x420] sm:$0xff]
    %v1350 = vld [vmem:[#allocation8 + $0x428] sm:$0xff]
    %v1351 = vld [vmem:[#allocation8 + $0x430] sm:$0xff]
    %v1352 = vld [vmem:[#allocation8 + $0x438] sm:$0xff]
    %v1353 = vld [vmem:[#allocation8 + $0x440] sm:$0xff]
    %v1354 = vld [vmem:[#allocation8 + $0x448] sm:$0xff]
    %v1355 = vld [vmem:[#allocation8 + $0x450] sm:$0xff]
    %v1356 = vld [vmem:[#allocation8 + $0x458] sm:$0xff]
    %v1357 = vld [vmem:[#allocation8 + $0x460] sm:$0xff]
    %v1358 = vld [vmem:[#allocation8 + $0x468] sm:$0xff]
    %v1359 = vld [vmem:[#allocation8 + $0x470] sm:$0xff]
    %v1360 = vld [vmem:[#allocation8 + $0x478] sm:$0xff]
    %v1361 = vld [vmem:[#allocation8 + $0x480] sm:$0xff]
    %v1362 = vld [vmem:[#allocation8 + $0x488] sm:$0xff]
    %v1363 = vld [vmem:[#allocation8 + $0x490] sm:$0xff]
    %v1364 = vld [vmem:[#allocation8 + $0x498] sm:$0xff]
    %v1365 = vld [vmem:[#allocation8 + $0x4a0] sm:$0xff]
    %v1366 = vld [vmem:[#allocation8 + $0x4a8] sm:$0xff]
    %v1367 = vld [vmem:[#allocation8 + $0x4b0] sm:$0xff]
    %v1368 = vld [vmem:[#allocation8 + $0x4b8] sm:$0xff]
    %v1369 = vld [vmem:[#allocation8 + $0x4c0] sm:$0xff]
    %v1370 = vld [vmem:[#allocation8 + $0x4c8] sm:$0xff]
    %v1371 = vld [vmem:[#allocation8 + $0x4d0] sm:$0xff]
    %v1372 = vld [vmem:[#allocation8 + $0x4d8] sm:$0xff]
    %v1373 = vld [vmem:[#allocation8 + $0x4e0] sm:$0xff]
    %v1374 = vld [vmem:[#allocation8 + $0x4e8] sm:$0xff]
    %v1375 = vld [vmem:[#allocation8 + $0x4f0] sm:$0xff]
    %v1376 = vld [vmem:[#allocation8 + $0x4f8] sm:$0xff]
    %v1377 = vld [vmem:[#allocation8 + $0x500] sm:$0xff]
    %v1378 = vld [vmem:[#allocation8 + $0x508] sm:$0xff]
    %v1379 = vld [vmem:[#allocation8 + $0x510] sm:$0xff]
    %v1380 = vld [vmem:[#allocation8 + $0x518] sm:$0xff]
    %v1381 = vld [vmem:[#allocation8 + $0x520] sm:$0xff]
    %v1382 = vld [vmem:[#allocation8 + $0x528] sm:$0xff]
    %v1383 = vld [vmem:[#allocation8 + $0x530] sm:$0xff]
    %v1384 = vld [vmem:[#allocation8 + $0x538] sm:$0xff]
    %v1385 = vld [vmem:[#allocation8 + $0x540] sm:$0xff]
    %v1386 = vld [vmem:[#allocation8 + $0x548] sm:$0xff]
    %v1387 = vld [vmem:[#allocation8 + $0x550] sm:$0xff]
    %v1388 = vld [vmem:[#allocation8 + $0x558] sm:$0xff]
    %v1389 = vld [vmem:[#allocation8 + $0x560] sm:$0xff]
    %v1390 = vld [vmem:[#allocation8 + $0x568] sm:$0xff]
    %v1391 = vld [vmem:[#allocation8 + $0x570] sm:$0xff]
    %v1392 = vld [vmem:[#allocation8 + $0x578] sm:$0xff]
    %v1393 = vld [vmem:[#allocation8 + $0x580] sm:$0xff]
    %v1394 = vld [vmem:[#allocation8 + $0x588] sm:$0xff]
    %v1395 = vld [vmem:[#allocation8 + $0x590] sm:$0xff]
    %v1396 = vld [vmem:[#allocation8 + $0x598] sm:$0xff]
    %v1397 = vld [vmem:[#allocation8 + $0x5a0] sm:$0xff]
    %v1398 = vld [vmem:[#allocation8 + $0x5a8] sm:$0xff]
    %v1399 = vld [vmem:[#allocation8 + $0x5b0] sm:$0xff]
    %v1400 = vld [vmem:[#allocation8 + $0x5b8] sm:$0xff]
    %v1401 = vld [vmem:[#allocation8 + $0x5c0] sm:$0xff]
    %v1402 = vld [vmem:[#allocation8 + $0x5c8] sm:$0xff]
    %v1403 = vld [vmem:[#allocation8 + $0x5d0] sm:$0xff]
    %v1404 = vld [vmem:[#allocation8 + $0x5d8] sm:$0xff]
    %v1405 = vld [vmem:[#allocation8 + $0x5e0] sm:$0xff]
    %v1406 = vld [vmem:[#allocation8 + $0x5e8] sm:$0xff]
    %v1407 = vld [vmem:[#allocation8 + $0x5f0] sm:$0xff]
    %v1408 = vld [vmem:[#allocation8 + $0x5f8] sm:$0xff]
    %v1409 = vld [vmem:[#allocation8 + $0x600] sm:$0xff]
    %v1410 = vld [vmem:[#allocation8 + $0x608] sm:$0xff]
    %v1411 = vld [vmem:[#allocation8 + $0x610] sm:$0xff]
    %v1412 = vld [vmem:[#allocation8 + $0x618] sm:$0xff]
    %v1413 = vld [vmem:[#allocation8 + $0x620] sm:$0xff]
    %v1414 = vld [vmem:[#allocation8 + $0x628] sm:$0xff]
    %v1415 = vld [vmem:[#allocation8 + $0x630] sm:$0xff]
    %v1416 = vld [vmem:[#allocation8 + $0x638] sm:$0xff]
    %v1417 = vld [vmem:[#allocation8 + $0x640] sm:$0xff]
    %v1418 = vld [vmem:[#allocation8 + $0x648] sm:$0xff]
    %v1419 = vld [vmem:[#allocation8 + $0x650] sm:$0xff]
    %v1420 = vld [vmem:[#allocation8 + $0x658] sm:$0xff]
    %v1421 = vld [vmem:[#allocation8 + $0x660] sm:$0xff]
    %v1422 = vld [vmem:[#allocation8 + $0x668] sm:$0xff]
    %v1423 = vld [vmem:[#allocation8 + $0x670] sm:$0xff]
    %v1424 = vld [vmem:[#allocation8 + $0x678] sm:$0xff]
    %v1425 = vld [vmem:[#allocation8 + $0x680] sm:$0xff]
    %v1426 = vld [vmem:[#allocation8 + $0x688] sm:$0xff]
    %v1427 = vld [vmem:[#allocation8 + $0x690] sm:$0xff]
    %v1428 = vld [vmem:[#allocation8 + $0x698] sm:$0xff]
    %v1429 = vld [vmem:[#allocation8 + $0x6a0] sm:$0xff]
    %v1430 = vld [vmem:[#allocation8 + $0x6a8] sm:$0xff]
    %v1431 = vld [vmem:[#allocation8 + $0x6b0] sm:$0xff]
    %v1432 = vld [vmem:[#allocation8 + $0x6b8] sm:$0xff]
    %v1433 = vld [vmem:[#allocation8 + $0x6c0] sm:$0xff]
    %v1434 = vld [vmem:[#allocation8 + $0x6c8] sm:$0xff]
    %v1435 = vld [vmem:[#allocation8 + $0x6d0] sm:$0xff]
    %v1436 = vld [vmem:[#allocation8 + $0x6d8] sm:$0xff]
    %v1437 = vld [vmem:[#allocation8 + $0x6e0] sm:$0xff]
    %v1438 = vld [vmem:[#allocation8 + $0x6e8] sm:$0xff]
    %v1439 = vld [vmem:[#allocation8 + $0x6f0] sm:$0xff]
    %v1440 = vld [vmem:[#allocation8 + $0x6f8] sm:$0xff]
    %v1441 = vld [vmem:[#allocation8 + $0x700] sm:$0xff]
    %v1442 = vld [vmem:[#allocation8 + $0x708] sm:$0xff]
    %v1443 = vld [vmem:[#allocation8 + $0x710] sm:$0xff]
    %v1444 = vld [vmem:[#allocation8 + $0x718] sm:$0xff]
    %v1445 = vld [vmem:[#allocation8 + $0x720] sm:$0xff]
    %v1446 = vld [vmem:[#allocation8 + $0x728] sm:$0xff]
    %v1447 = vld [vmem:[#allocation8 + $0x730] sm:$0xff]
    %v1448 = vld [vmem:[#allocation8 + $0x738] sm:$0xff]
    %v1449 = vld [vmem:[#allocation8 + $0x740] sm:$0xff]
    %v1450 = vld [vmem:[#allocation8 + $0x748] sm:$0xff]
    %v1451 = vld [vmem:[#allocation8 + $0x750] sm:$0xff]
    %v1452 = vld [vmem:[#allocation8 + $0x758] sm:$0xff]
    %v1453 = vld [vmem:[#allocation8 + $0x760] sm:$0xff]
    %v1454 = vld [vmem:[#allocation8 + $0x768] sm:$0xff]
    %v1455 = vld [vmem:[#allocation8 + $0x770] sm:$0xff]
    %v1456 = vld [vmem:[#allocation8 + $0x778] sm:$0xff]
    %v1457 = vld [vmem:[#allocation8 + $0x780] sm:$0xff]
    %v1458 = vld [vmem:[#allocation8 + $0x788] sm:$0xff]
    %v1459 = vld [vmem:[#allocation8 + $0x790] sm:$0xff]
    %v1460 = vld [vmem:[#allocation8 + $0x798] sm:$0xff]
    %v1461 = vld [vmem:[#allocation8 + $0x7a0] sm:$0xff]
    %v1462 = vld [vmem:[#allocation8 + $0x7a8] sm:$0xff]
    %v1463 = vld [vmem:[#allocation8 + $0x7b0] sm:$0xff]
    %v1464 = vld [vmem:[#allocation8 + $0x7b8] sm:$0xff]
    %v1465 = vld [vmem:[#allocation8 + $0x7c0] sm:$0xff]
    %v1466 = vld [vmem:[#allocation8 + $0x7c8] sm:$0xff]
    %v1467 = vld [vmem:[#allocation8 + $0x7d0] sm:$0xff]
    %v1468 = vld [vmem:[#allocation8 + $0x7d8] sm:$0xff]
    %v1469 = vld [vmem:[#allocation8 + $0x7e0] sm:$0xff]
    %v1470 = vld [vmem:[#allocation8 + $0x7e8] sm:$0xff]
    %v1471 = vld [vmem:[#allocation8 + $0x7f0] sm:$0xff]
    %v1472 = vld [vmem:[#allocation8 + $0x7f8] sm:$0xff]
    %v1473 = vld [vmem:[#allocation8 + $0x800] sm:$0xff]
    %v1474 = vld [vmem:[#allocation8 + $0x808] sm:$0xff]
    %v1475 = vld [vmem:[#allocation8 + $0x810] sm:$0xff]
    %v1476 = vld [vmem:[#allocation8 + $0x818] sm:$0xff]
    %v1477 = vld [vmem:[#allocation8 + $0x820] sm:$0xff]
    %v1478 = vld [vmem:[#allocation8 + $0x828] sm:$0xff]
    %v1479 = vld [vmem:[#allocation8 + $0x830] sm:$0xff]
    %v1480 = vld [vmem:[#allocation8 + $0x838] sm:$0xff]
    %v1481 = vld [vmem:[#allocation8 + $0x840] sm:$0xff]
    %v1482 = vld [vmem:[#allocation8 + $0x848] sm:$0xff]
    %v1483 = vld [vmem:[#allocation8 + $0x850] sm:$0xff]
    %v1484 = vld [vmem:[#allocation8 + $0x858] sm:$0xff]
    %v1485 = vld [vmem:[#allocation8 + $0x860] sm:$0xff]
    %v1486 = vld [vmem:[#allocation8 + $0x868] sm:$0xff]
    %v1487 = vld [vmem:[#allocation8 + $0x870] sm:$0xff]
    %v1488 = vld [vmem:[#allocation8 + $0x878] sm:$0xff]
    %v1489 = vld [vmem:[#allocation8 + $0x880] sm:$0xff]
    %v1490 = vld [vmem:[#allocation8 + $0x888] sm:$0xff]
    %v1491 = vld [vmem:[#allocation8 + $0x890] sm:$0xff]
    %v1492 = vld [vmem:[#allocation8 + $0x898] sm:$0xff]
    %v1493 = vld [vmem:[#allocation8 + $0x8a0] sm:$0xff]
    %v1494 = vld [vmem:[#allocation8 + $0x8a8] sm:$0xff]
    %v1495 = vld [vmem:[#allocation8 + $0x8b0] sm:$0xff]
    %v1496 = vld [vmem:[#allocation8 + $0x8b8] sm:$0xff]
    %v1497 = vld [vmem:[#allocation8 + $0x8c0] sm:$0xff]
    %v1498 = vld [vmem:[#allocation8 + $0x8c8] sm:$0xff]
    %v1499 = vld [vmem:[#allocation8 + $0x8d0] sm:$0xff]
    %v1500 = vld [vmem:[#allocation8 + $0x8d8] sm:$0xff]
    %v1501 = vld [vmem:[#allocation8 + $0x8e0] sm:$0xff]
    %v1502 = vld [vmem:[#allocation8 + $0x8e8] sm:$0xff]
    %v1503 = vld [vmem:[#allocation8 + $0x8f0] sm:$0xff]
    %v1504 = vld [vmem:[#allocation8 + $0x8f8] sm:$0xff]
    %v1505 = vld [vmem:[#allocation8 + $0x900] sm:$0xff]
    %v1506 = vld [vmem:[#allocation8 + $0x908] sm:$0xff]
    %v1507 = vld [vmem:[#allocation8 + $0x910] sm:$0xff]
    %v1508 = vld [vmem:[#allocation8 + $0x918] sm:$0xff]
    %v1509 = vld [vmem:[#allocation8 + $0x920] sm:$0xff]
    %v1510 = vld [vmem:[#allocation8 + $0x928] sm:$0xff]
    %v1511 = vld [vmem:[#allocation8 + $0x930] sm:$0xff]
    %v1512 = vld [vmem:[#allocation8 + $0x938] sm:$0xff]
    %v1513 = vld [vmem:[#allocation8 + $0x940] sm:$0xff]
    %v1514 = vld [vmem:[#allocation8 + $0x948] sm:$0xff]
    %v1515 = vld [vmem:[#allocation8 + $0x950] sm:$0xff]
    %v1516 = vld [vmem:[#allocation8 + $0x958] sm:$0xff]
    %v1517 = vld [vmem:[#allocation8 + $0x960] sm:$0xff]
    %v1518 = vld [vmem:[#allocation8 + $0x968] sm:$0xff]
    %v1519 = vld [vmem:[#allocation8 + $0x970] sm:$0xff]
    %v1520 = vld [vmem:[#allocation8 + $0x978] sm:$0xff]
    %v1521 = vld [vmem:[#allocation8 + $0x980] sm:$0xff]
    %v1522 = vld [vmem:[#allocation8 + $0x988] sm:$0xff]
    %v1523 = vld [vmem:[#allocation8 + $0x990] sm:$0xff]
    %v1524 = vld [vmem:[#allocation8 + $0x998] sm:$0xff]
    %v1525 = vld [vmem:[#allocation8 + $0x9a0] sm:$0xff]
    %v1526 = vld [vmem:[#allocation8 + $0x9a8] sm:$0xff]
    %v1527 = vld [vmem:[#allocation8 + $0x9b0] sm:$0xff]
    %v1528 = vld [vmem:[#allocation8 + $0x9b8] sm:$0xff]
    %v1529 = vld [vmem:[#allocation8 + $0x9c0] sm:$0xff]
    %v1530 = vld [vmem:[#allocation8 + $0x9c8] sm:$0xff]
    %v1531 = vld [vmem:[#allocation8 + $0x9d0] sm:$0xff]
    %v1532 = vld [vmem:[#allocation8 + $0x9d8] sm:$0xff]
    %v1533 = vld [vmem:[#allocation8 + $0x9e0] sm:$0xff]
    %v1534 = vld [vmem:[#allocation8 + $0x9e8] sm:$0xff]
    %v1535 = vld [vmem:[#allocation8 + $0x9f0] sm:$0xff]
    %v1536 = vld [vmem:[#allocation8 + $0x9f8] sm:$0xff]
    %v1537 = vld [vmem:[#allocation8 + $0xa00] sm:$0xff]
    %v1538 = vld [vmem:[#allocation8 + $0xa08] sm:$0xff]
    %v1539 = vld [vmem:[#allocation8 + $0xa10] sm:$0xff]
    %v1540 = vld [vmem:[#allocation8 + $0xa18] sm:$0xff]
    %v1541 = vld [vmem:[#allocation8 + $0xa20] sm:$0xff]
    %v1542 = vld [vmem:[#allocation8 + $0xa28] sm:$0xff]
    %v1543 = vld [vmem:[#allocation8 + $0xa30] sm:$0xff]
    %v1544 = vld [vmem:[#allocation8 + $0xa38] sm:$0xff]
    %v1545 = vld [vmem:[#allocation8 + $0xa40] sm:$0xff]
    %v1546 = vld [vmem:[#allocation8 + $0xa48] sm:$0xff]
    %v1547 = vld [vmem:[#allocation8 + $0xa50] sm:$0xff]
    %v1548 = vld [vmem:[#allocation8 + $0xa58] sm:$0xff]
    %v1549 = vld [vmem:[#allocation8 + $0xa60] sm:$0xff]
    %v1550 = vld [vmem:[#allocation8 + $0xa68] sm:$0xff]
    %v1551 = vld [vmem:[#allocation8 + $0xa70] sm:$0xff]
    %v1552 = vld [vmem:[#allocation8 + $0xa78] sm:$0xff]
    %v1553 = vld [vmem:[#allocation8 + $0xa80] sm:$0xff]
    %v1554 = vld [vmem:[#allocation8 + $0xa88] sm:$0xff]
    %v1555 = vld [vmem:[#allocation8 + $0xa90] sm:$0xff]
    %v1556 = vld [vmem:[#allocation8 + $0xa98] sm:$0xff]
    %v1557 = vld [vmem:[#allocation8 + $0xaa0] sm:$0xff]
    %v1558 = vld [vmem:[#allocation8 + $0xaa8] sm:$0xff]
    %v1559 = vld [vmem:[#allocation8 + $0xab0] sm:$0xff]
    %v1560 = vld [vmem:[#allocation8 + $0xab8] sm:$0xff]
    %v1561 = vld [vmem:[#allocation8 + $0xac0] sm:$0xff]
    %v1562 = vld [vmem:[#allocation8 + $0xac8] sm:$0xff]
    %v1563 = vld [vmem:[#allocation8 + $0xad0] sm:$0xff]
    %v1564 = vld [vmem:[#allocation8 + $0xad8] sm:$0xff]
    %v1565 = vld [vmem:[#allocation8 + $0xae0] sm:$0xff]
    %v1566 = vld [vmem:[#allocation8 + $0xae8] sm:$0xff]
    %v1567 = vld [vmem:[#allocation8 + $0xaf0] sm:$0xff]
    %v1568 = vld [vmem:[#allocation8 + $0xaf8] sm:$0xff]
    %v1569 = vld [vmem:[#allocation8 + $0xb00] sm:$0xff]
    %v1570 = vld [vmem:[#allocation8 + $0xb08] sm:$0xff]
    %v1571 = vld [vmem:[#allocation8 + $0xb10] sm:$0xff]
    %v1572 = vld [vmem:[#allocation8 + $0xb18] sm:$0xff]
    %v1573 = vld [vmem:[#allocation8 + $0xb20] sm:$0xff]
    %v1574 = vld [vmem:[#allocation8 + $0xb28] sm:$0xff]
    %v1575 = vld [vmem:[#allocation8 + $0xb30] sm:$0xff]
    %v1576 = vld [vmem:[#allocation8 + $0xb38] sm:$0xff]
    %v1577 = vld [vmem:[#allocation8 + $0xb40] sm:$0xff]
    %v1578 = vld [vmem:[#allocation8 + $0xb48] sm:$0xff]
    %v1579 = vld [vmem:[#allocation8 + $0xb50] sm:$0xff]
    %v1580 = vld [vmem:[#allocation8 + $0xb58] sm:$0xff]
    %v1581 = vld [vmem:[#allocation8 + $0xb60] sm:$0xff]
    %v1582 = vld [vmem:[#allocation8 + $0xb68] sm:$0xff]
    %v1583 = vld [vmem:[#allocation8 + $0xb70] sm:$0xff]
    %v1584 = vld [vmem:[#allocation8 + $0xb78] sm:$0xff]
    %v1585 = vld [vmem:[#allocation8 + $0xb80] sm:$0xff]
    %v1586 = vld [vmem:[#allocation8 + $0xb88] sm:$0xff]
    %v1587 = vld [vmem:[#allocation8 + $0xb90] sm:$0xff]
    %v1588 = vld [vmem:[#allocation8 + $0xb98] sm:$0xff]
    %v1589 = vld [vmem:[#allocation8 + $0xba0] sm:$0xff]
    %v1590 = vld [vmem:[#allocation8 + $0xba8] sm:$0xff]
    %v1591 = vld [vmem:[#allocation8 + $0xbb0] sm:$0xff]
    %v1592 = vld [vmem:[#allocation8 + $0xbb8] sm:$0xff]
    %v1593 = vld [vmem:[#allocation8 + $0xbc0] sm:$0xff]
    %v1594 = vld [vmem:[#allocation8 + $0xbc8] sm:$0xff]
    %v1595 = vld [vmem:[#allocation8 + $0xbd0] sm:$0xff]
    %v1596 = vld [vmem:[#allocation8 + $0xbd8] sm:$0xff]
    %v1597 = vld [vmem:[#allocation8 + $0xbe0] sm:$0xff]
    %v1598 = vld [vmem:[#allocation8 + $0xbe8] sm:$0xff]
    %v1599 = vld [vmem:[#allocation8 + $0xbf0] sm:$0xff]
    %v1600 = vld [vmem:[#allocation8 + $0xbf8] sm:$0xff]
    %v1601 = vld [vmem:[#allocation8 + $0xc00] sm:$0xff]
    %v1602 = vld [vmem:[#allocation8 + $0xc08] sm:$0xff]
    %v1603 = vld [vmem:[#allocation8 + $0xc10] sm:$0xff]
    %v1604 = vld [vmem:[#allocation8 + $0xc18] sm:$0xff]
    %v1605 = vld [vmem:[#allocation8 + $0xc20] sm:$0xff]
    %v1606 = vld [vmem:[#allocation8 + $0xc28] sm:$0xff]
    %v1607 = vld [vmem:[#allocation8 + $0xc30] sm:$0xff]
    %v1608 = vld [vmem:[#allocation8 + $0xc38] sm:$0xff]
    %v1609 = vld [vmem:[#allocation8 + $0xc40] sm:$0xff]
    %v1610 = vld [vmem:[#allocation8 + $0xc48] sm:$0xff]
    %v1611 = vld [vmem:[#allocation8 + $0xc50] sm:$0xff]
    %v1612 = vld [vmem:[#allocation8 + $0xc58] sm:$0xff]
    %v1613 = vld [vmem:[#allocation8 + $0xc60] sm:$0xff]
    %v1614 = vld [vmem:[#allocation8 + $0xc68] sm:$0xff]
    %v1615 = vld [vmem:[#allocation8 + $0xc70] sm:$0xff]
    %v1616 = vld [vmem:[#allocation8 + $0xc78] sm:$0xff]
    %v1617 = vld [vmem:[#allocation8 + $0xc80] sm:$0xff]
    %v1618 = vld [vmem:[#allocation8 + $0xc88] sm:$0xff]
    %v1619 = vld [vmem:[#allocation8 + $0xc90] sm:$0xff]
    %v1620 = vld [vmem:[#allocation8 + $0xc98] sm:$0xff]
    %v1621 = vld [vmem:[#allocation8 + $0xca0] sm:$0xff]
    %v1622 = vld [vmem:[#allocation8 + $0xca8] sm:$0xff]
    %v1623 = vld [vmem:[#allocation8 + $0xcb0] sm:$0xff]
    %v1624 = vld [vmem:[#allocation8 + $0xcb8] sm:$0xff]
    %v1625 = vld [vmem:[#allocation8 + $0xcc0] sm:$0xff]
    %v1626 = vld [vmem:[#allocation8 + $0xcc8] sm:$0xff]
    %v1627 = vld [vmem:[#allocation8 + $0xcd0] sm:$0xff]
    %v1628 = vld [vmem:[#allocation8 + $0xcd8] sm:$0xff]
    %v1629 = vld [vmem:[#allocation8 + $0xce0] sm:$0xff]
    %v1630 = vld [vmem:[#allocation8 + $0xce8] sm:$0xff]
    %v1631 = vld [vmem:[#allocation8 + $0xcf0] sm:$0xff]
    %v1632 = vld [vmem:[#allocation8 + $0xcf8] sm:$0xff]
    %v1633 = vld [vmem:[#allocation8 + $0xd00] sm:$0xff]
    %v1634 = vld [vmem:[#allocation8 + $0xd08] sm:$0xff]
    %v1635 = vld [vmem:[#allocation8 + $0xd10] sm:$0xff]
    %v1636 = vld [vmem:[#allocation8 + $0xd18] sm:$0xff]
    %v1637 = vld [vmem:[#allocation8 + $0xd20] sm:$0xff]
    %v1638 = vld [vmem:[#allocation8 + $0xd28] sm:$0xff]
    %v1639 = vld [vmem:[#allocation8 + $0xd30] sm:$0xff]
    %v1640 = vld [vmem:[#allocation8 + $0xd38] sm:$0xff]
    %v1641 = vld [vmem:[#allocation8 + $0xd40] sm:$0xff]
    %v1642 = vld [vmem:[#allocation8 + $0xd48] sm:$0xff]
    %v1643 = vld [vmem:[#allocation8 + $0xd50] sm:$0xff]
    %v1644 = vld [vmem:[#allocation8 + $0xd58] sm:$0xff]
    %v1645 = vld [vmem:[#allocation8 + $0xd60] sm:$0xff]
    %v1646 = vld [vmem:[#allocation8 + $0xd68] sm:$0xff]
    %v1647 = vld [vmem:[#allocation8 + $0xd70] sm:$0xff]
    %v1648 = vld [vmem:[#allocation8 + $0xd78] sm:$0xff]
    %v1649 = vld [vmem:[#allocation8 + $0xd80] sm:$0xff]
    %v1650 = vld [vmem:[#allocation8 + $0xd88] sm:$0xff]
    %v1651 = vld [vmem:[#allocation8 + $0xd90] sm:$0xff]
    %v1652 = vld [vmem:[#allocation8 + $0xd98] sm:$0xff]
    %v1653 = vld [vmem:[#allocation8 + $0xda0] sm:$0xff]
    %v1654 = vld [vmem:[#allocation8 + $0xda8] sm:$0xff]
    %v1655 = vld [vmem:[#allocation8 + $0xdb0] sm:$0xff]
    %v1656 = vld [vmem:[#allocation8 + $0xdb8] sm:$0xff]
    %v1657 = vld [vmem:[#allocation8 + $0xdc0] sm:$0xff]
    %v1658 = vld [vmem:[#allocation8 + $0xdc8] sm:$0xff]
    %v1659 = vld [vmem:[#allocation8 + $0xdd0] sm:$0xff]
    %v1660 = vld [vmem:[#allocation8 + $0xdd8] sm:$0xff]
    %v1661 = vld [vmem:[#allocation8 + $0xde0] sm:$0xff]
    %v1662 = vld [vmem:[#allocation8 + $0xde8] sm:$0xff]
    %v1663 = vld [vmem:[#allocation8 + $0xdf0] sm:$0xff]
    %v1664 = vld [vmem:[#allocation8 + $0xdf8] sm:$0xff]
    %v1665 = vld [vmem:[#allocation8 + $0xe00] sm:$0xff]
    %v1666 = vld [vmem:[#allocation8 + $0xe08] sm:$0xff]
    %v1667 = vld [vmem:[#allocation8 + $0xe10] sm:$0xff]
    %v1668 = vld [vmem:[#allocation8 + $0xe18] sm:$0xff]
    %v1669 = vld [vmem:[#allocation8 + $0xe20] sm:$0xff]
    %v1670 = vld [vmem:[#allocation8 + $0xe28] sm:$0xff]
    %v1671 = vld [vmem:[#allocation8 + $0xe30] sm:$0xff]
    %v1672 = vld [vmem:[#allocation8 + $0xe38] sm:$0xff]
    %v1673 = vld [vmem:[#allocation8 + $0xe40] sm:$0xff]
    %v1674 = vld [vmem:[#allocation8 + $0xe48] sm:$0xff]
    %v1675 = vld [vmem:[#allocation8 + $0xe50] sm:$0xff]
    %v1676 = vld [vmem:[#allocation8 + $0xe58] sm:$0xff]
    %v1677 = vld [vmem:[#allocation8 + $0xe60] sm:$0xff]
    %v1678 = vld [vmem:[#allocation8 + $0xe68] sm:$0xff]
    %v1679 = vld [vmem:[#allocation8 + $0xe70] sm:$0xff]
    %v1680 = vld [vmem:[#allocation8 + $0xe78] sm:$0xff]
    %v1681 = vld [vmem:[#allocation8 + $0xe80] sm:$0xff]
    %v1682 = vld [vmem:[#allocation8 + $0xe88] sm:$0xff]
    %v1683 = vld [vmem:[#allocation8 + $0xe90] sm:$0xff]
    %v1684 = vld [vmem:[#allocation8 + $0xe98] sm:$0xff]
    %v1685 = vld [vmem:[#allocation8 + $0xea0] sm:$0xff]
    %v1686 = vld [vmem:[#allocation8 + $0xea8] sm:$0xff]
    %v1687 = vld [vmem:[#allocation8 + $0xeb0] sm:$0xff]
    %v1688 = vld [vmem:[#allocation8 + $0xeb8] sm:$0xff]
    %v1689 = vld [vmem:[#allocation8 + $0xec0] sm:$0xff]
    %v1690 = vld [vmem:[#allocation8 + $0xec8] sm:$0xff]
    %v1691 = vld [vmem:[#allocation8 + $0xed0] sm:$0xff]
    %v1692 = vld [vmem:[#allocation8 + $0xed8] sm:$0xff]
    %v1693 = vld [vmem:[#allocation8 + $0xee0] sm:$0xff]
    %v1694 = vld [vmem:[#allocation8 + $0xee8] sm:$0xff]
    %v1695 = vld [vmem:[#allocation8 + $0xef0] sm:$0xff]
    %v1696 = vld [vmem:[#allocation8 + $0xef8] sm:$0xff]
    %v1697 = vld [vmem:[#allocation8 + $0xf00] sm:$0xff]
    %v1698 = vld [vmem:[#allocation8 + $0xf08] sm:$0xff]
    %v1699 = vld [vmem:[#allocation8 + $0xf10] sm:$0xff]
    %v1700 = vld [vmem:[#allocation8 + $0xf18] sm:$0xff]
    %v1701 = vld [vmem:[#allocation8 + $0xf20] sm:$0xff]
    %v1702 = vld [vmem:[#allocation8 + $0xf28] sm:$0xff]
    %v1703 = vld [vmem:[#allocation8 + $0xf30] sm:$0xff]
    %v1704 = vld [vmem:[#allocation8 + $0xf38] sm:$0xff]
    %v1705 = vld [vmem:[#allocation8 + $0xf40] sm:$0xff]
    %v1706 = vld [vmem:[#allocation8 + $0xf48] sm:$0xff]
    %v1707 = vld [vmem:[#allocation8 + $0xf50] sm:$0xff]
    %v1708 = vld [vmem:[#allocation8 + $0xf58] sm:$0xff]
    %v1709 = vld [vmem:[#allocation8 + $0xf60] sm:$0xff]
    %v1710 = vld [vmem:[#allocation8 + $0xf68] sm:$0xff]
    %v1711 = vld [vmem:[#allocation8 + $0xf70] sm:$0xff]
    %v1712 = vld [vmem:[#allocation8 + $0xf78] sm:$0xff]
    %v1713 = vld [vmem:[#allocation8 + $0xf80] sm:$0xff]
    %v1714 = vld [vmem:[#allocation8 + $0xf88] sm:$0xff]
    %v1715 = vld [vmem:[#allocation8 + $0xf90] sm:$0xff]
    %v1716 = vld [vmem:[#allocation8 + $0xf98] sm:$0xff]
    %v1717 = vld [vmem:[#allocation8 + $0xfa0] sm:$0xff]
    %v1718 = vld [vmem:[#allocation8 + $0xfa8] sm:$0xff]
    %v1719 = vld [vmem:[#allocation8 + $0xfb0] sm:$0xff]
    %v1720 = vld [vmem:[#allocation8 + $0xfb8] sm:$0xff]
    %v1721 = vld [vmem:[#allocation8 + $0xfc0] sm:$0xff]
    %v1722 = vld [vmem:[#allocation8 + $0xfc8] sm:$0xff]
    %v1723 = vld [vmem:[#allocation8 + $0xfd0] sm:$0xff]
    %v1724 = vld [vmem:[#allocation8 + $0xfd8] sm:$0xff]
    %v1725 = vld [vmem:[#allocation8 + $0xfe0] sm:$0xff]
    %v1726 = vld [vmem:[#allocation8 + $0xfe8] sm:$0xff]
    %v1727 = vld [vmem:[#allocation8 + $0xff0] sm:$0xff]
    %v1728 = vld [vmem:[#allocation8 + $0xff8] sm:$0xff]
    %v1729 = vld [vmem:[#allocation10] sm:$0xf]
    %v1731 = vperm.slane %v1729, 0
    %v1732 = vperm.slane %v1729, 1
    %v1733 = vperm.slane %v1729, 2
    %v1734 = vperm.slane %v1729, 3
    %v2251 = vunpack.c.l.b16 %v1217
    %v2252 = vunpack.c.h.b16 %v1217
    %v2253 = vunpack.c.l.b16 %v1218
    %v2254 = vunpack.c.h.b16 %v1218
    %v2255 = vunpack.c.l.b16 %v1219
    %v2256 = vunpack.c.h.b16 %v1219
    %v2257 = vunpack.c.l.b16 %v1220
    %v2258 = vunpack.c.h.b16 %v1220
    %v2259 = vunpack.c.l.b16 %v1221
    %v2260 = vunpack.c.h.b16 %v1221
    %v2261 = vunpack.c.l.b16 %v1222
    %v2262 = vunpack.c.h.b16 %v1222
    %v2263 = vunpack.c.l.b16 %v1223
    %v2264 = vunpack.c.h.b16 %v1223
    %v2265 = vunpack.c.l.b16 %v1224
    %v2266 = vunpack.c.h.b16 %v1224
    %v2267 = vunpack.c.l.b16 %v1225
    %v2268 = vunpack.c.h.b16 %v1225
    %v2269 = vunpack.c.l.b16 %v1226
    %v2270 = vunpack.c.h.b16 %v1226
    %v2271 = vunpack.c.l.b16 %v1227
    %v2272 = vunpack.c.h.b16 %v1227
    %v2273 = vunpack.c.l.b16 %v1228
    %v2274 = vunpack.c.h.b16 %v1228
    %v2275 = vunpack.c.l.b16 %v1229
    %v2276 = vunpack.c.h.b16 %v1229
    %v2277 = vunpack.c.l.b16 %v1230
    %v2278 = vunpack.c.h.b16 %v1230
    %v2279 = vunpack.c.l.b16 %v1231
    %v2280 = vunpack.c.h.b16 %v1231
    %v2281 = vunpack.c.l.b16 %v1232
    %v2282 = vunpack.c.h.b16 %v1232
    %v2283 = vunpack.c.l.b16 %v1233
    %v2284 = vunpack.c.h.b16 %v1233
    %v2285 = vunpack.c.l.b16 %v1234
    %v2286 = vunpack.c.h.b16 %v1234
    %v2287 = vunpack.c.l.b16 %v1235
    %v2288 = vunpack.c.h.b16 %v1235
    %v2289 = vunpack.c.l.b16 %v1236
    %v2290 = vunpack.c.h.b16 %v1236
    %v2291 = vunpack.c.l.b16 %v1237
    %v2292 = vunpack.c.h.b16 %v1237
    %v2293 = vunpack.c.l.b16 %v1238
    %v2294 = vunpack.c.h.b16 %v1238
    %v2295 = vunpack.c.l.b16 %v1239
    %v2296 = vunpack.c.h.b16 %v1239
    %v2297 = vunpack.c.l.b16 %v1240
    %v2298 = vunpack.c.h.b16 %v1240
    %v2299 = vunpack.c.l.b16 %v1241
    %v2300 = vunpack.c.h.b16 %v1241
    %v2301 = vunpack.c.l.b16 %v1242
    %v2302 = vunpack.c.h.b16 %v1242
    %v2303 = vunpack.c.l.b16 %v1243
    %v2304 = vunpack.c.h.b16 %v1243
    %v2305 = vunpack.c.l.b16 %v1244
    %v2306 = vunpack.c.h.b16 %v1244
    %v2307 = vunpack.c.l.b16 %v1245
    %v2308 = vunpack.c.h.b16 %v1245
    %v2309 = vunpack.c.l.b16 %v1246
    %v2310 = vunpack.c.h.b16 %v1246
    %v2311 = vunpack.c.l.b16 %v1247
    %v2312 = vunpack.c.h.b16 %v1247
    %v2313 = vunpack.c.l.b16 %v1248
    %v2314 = vunpack.c.h.b16 %v1248
    %v2315 = vunpack.c.l.b16 %v1249
    %v2316 = vunpack.c.h.b16 %v1249
    %v2317 = vunpack.c.l.b16 %v1250
    %v2318 = vunpack.c.h.b16 %v1250
    %v2319 = vunpack.c.l.b16 %v1251
    %v2320 = vunpack.c.h.b16 %v1251
    %v2321 = vunpack.c.l.b16 %v1252
    %v2322 = vunpack.c.h.b16 %v1252
    %v2323 = vunpack.c.l.b16 %v1253
    %v2324 = vunpack.c.h.b16 %v1253
    %v2325 = vunpack.c.l.b16 %v1254
    %v2326 = vunpack.c.h.b16 %v1254
    %v2327 = vunpack.c.l.b16 %v1255
    %v2328 = vunpack.c.h.b16 %v1255
    %v2329 = vunpack.c.l.b16 %v1256
    %v2330 = vunpack.c.h.b16 %v1256
    %v2331 = vunpack.c.l.b16 %v1257
    %v2332 = vunpack.c.h.b16 %v1257
    %v2333 = vunpack.c.l.b16 %v1258
    %v2334 = vunpack.c.h.b16 %v1258
    %v2335 = vunpack.c.l.b16 %v1259
    %v2336 = vunpack.c.h.b16 %v1259
    %v2337 = vunpack.c.l.b16 %v1260
    %v2338 = vunpack.c.h.b16 %v1260
    %v2339 = vunpack.c.l.b16 %v1261
    %v2340 = vunpack.c.h.b16 %v1261
    %v2341 = vunpack.c.l.b16 %v1262
    %v2342 = vunpack.c.h.b16 %v1262
    %v2343 = vunpack.c.l.b16 %v1263
    %v2344 = vunpack.c.h.b16 %v1263
    %v2345 = vunpack.c.l.b16 %v1264
    %v2346 = vunpack.c.h.b16 %v1264
    %v2347 = vunpack.c.l.b16 %v1265
    %v2348 = vunpack.c.h.b16 %v1265
    %v2349 = vunpack.c.l.b16 %v1266
    %v2350 = vunpack.c.h.b16 %v1266
    %v2351 = vunpack.c.l.b16 %v1267
    %v2352 = vunpack.c.h.b16 %v1267
    %v2353 = vunpack.c.l.b16 %v1268
    %v2354 = vunpack.c.h.b16 %v1268
    %v2355 = vunpack.c.l.b16 %v1269
    %v2356 = vunpack.c.h.b16 %v1269
    %v2357 = vunpack.c.l.b16 %v1270
    %v2358 = vunpack.c.h.b16 %v1270
    %v2359 = vunpack.c.l.b16 %v1271
    %v2360 = vunpack.c.h.b16 %v1271
    %v2361 = vunpack.c.l.b16 %v1272
    %v2362 = vunpack.c.h.b16 %v1272
    %v2363 = vunpack.c.l.b16 %v1273
    %v2364 = vunpack.c.h.b16 %v1273
    %v2365 = vunpack.c.l.b16 %v1274
    %v2366 = vunpack.c.h.b16 %v1274
    %v2367 = vunpack.c.l.b16 %v1275
    %v2368 = vunpack.c.h.b16 %v1275
    %v2369 = vunpack.c.l.b16 %v1276
    %v2370 = vunpack.c.h.b16 %v1276
    %v2371 = vunpack.c.l.b16 %v1277
    %v2372 = vunpack.c.h.b16 %v1277
    %v2373 = vunpack.c.l.b16 %v1278
    %v2374 = vunpack.c.h.b16 %v1278
    %v2375 = vunpack.c.l.b16 %v1279
    %v2376 = vunpack.c.h.b16 %v1279
    %v2377 = vunpack.c.l.b16 %v1280
    %v2378 = vunpack.c.h.b16 %v1280
    %v2379 = vunpack.c.l.b16 %v1281
    %v2380 = vunpack.c.h.b16 %v1281
    %v2381 = vunpack.c.l.b16 %v1282
    %v2382 = vunpack.c.h.b16 %v1282
    %v2383 = vunpack.c.l.b16 %v1283
    %v2384 = vunpack.c.h.b16 %v1283
    %v2385 = vunpack.c.l.b16 %v1284
    %v2386 = vunpack.c.h.b16 %v1284
    %v2387 = vunpack.c.l.b16 %v1285
    %v2388 = vunpack.c.h.b16 %v1285
    %v2389 = vunpack.c.l.b16 %v1286
    %v2390 = vunpack.c.h.b16 %v1286
    %v2391 = vunpack.c.l.b16 %v1287
    %v2392 = vunpack.c.h.b16 %v1287
    %v2393 = vunpack.c.l.b16 %v1288
    %v2394 = vunpack.c.h.b16 %v1288
    %v2395 = vunpack.c.l.b16 %v1289
    %v2396 = vunpack.c.h.b16 %v1289
    %v2397 = vunpack.c.l.b16 %v1290
    %v2398 = vunpack.c.h.b16 %v1290
    %v2399 = vunpack.c.l.b16 %v1291
    %v2400 = vunpack.c.h.b16 %v1291
    %v2401 = vunpack.c.l.b16 %v1292
    %v2402 = vunpack.c.h.b16 %v1292
    %v2403 = vunpack.c.l.b16 %v1293
    %v2404 = vunpack.c.h.b16 %v1293
    %v2405 = vunpack.c.l.b16 %v1294
    %v2406 = vunpack.c.h.b16 %v1294
    %v2407 = vunpack.c.l.b16 %v1295
    %v2408 = vunpack.c.h.b16 %v1295
    %v2409 = vunpack.c.l.b16 %v1296
    %v2410 = vunpack.c.h.b16 %v1296
    %v2411 = vunpack.c.l.b16 %v1297
    %v2412 = vunpack.c.h.b16 %v1297
    %v2413 = vunpack.c.l.b16 %v1298
    %v2414 = vunpack.c.h.b16 %v1298
    %v2415 = vunpack.c.l.b16 %v1299
    %v2416 = vunpack.c.h.b16 %v1299
    %v2417 = vunpack.c.l.b16 %v1300
    %v2418 = vunpack.c.h.b16 %v1300
    %v2419 = vunpack.c.l.b16 %v1301
    %v2420 = vunpack.c.h.b16 %v1301
    %v2421 = vunpack.c.l.b16 %v1302
    %v2422 = vunpack.c.h.b16 %v1302
    %v2423 = vunpack.c.l.b16 %v1303
    %v2424 = vunpack.c.h.b16 %v1303
    %v2425 = vunpack.c.l.b16 %v1304
    %v2426 = vunpack.c.h.b16 %v1304
    %v2427 = vunpack.c.l.b16 %v1305
    %v2428 = vunpack.c.h.b16 %v1305
    %v2429 = vunpack.c.l.b16 %v1306
    %v2430 = vunpack.c.h.b16 %v1306
    %v2431 = vunpack.c.l.b16 %v1307
    %v2432 = vunpack.c.h.b16 %v1307
    %v2433 = vunpack.c.l.b16 %v1308
    %v2434 = vunpack.c.h.b16 %v1308
    %v2435 = vunpack.c.l.b16 %v1309
    %v2436 = vunpack.c.h.b16 %v1309
    %v2437 = vunpack.c.l.b16 %v1310
    %v2438 = vunpack.c.h.b16 %v1310
    %v2439 = vunpack.c.l.b16 %v1311
    %v2440 = vunpack.c.h.b16 %v1311
    %v2441 = vunpack.c.l.b16 %v1312
    %v2442 = vunpack.c.h.b16 %v1312
    %v2443 = vunpack.c.l.b16 %v1313
    %v2444 = vunpack.c.h.b16 %v1313
    %v2445 = vunpack.c.l.b16 %v1314
    %v2446 = vunpack.c.h.b16 %v1314
    %v2447 = vunpack.c.l.b16 %v1315
    %v2448 = vunpack.c.h.b16 %v1315
    %v2449 = vunpack.c.l.b16 %v1316
    %v2450 = vunpack.c.h.b16 %v1316
    %v2451 = vunpack.c.l.b16 %v1317
    %v2452 = vunpack.c.h.b16 %v1317
    %v2453 = vunpack.c.l.b16 %v1318
    %v2454 = vunpack.c.h.b16 %v1318
    %v2455 = vunpack.c.l.b16 %v1319
    %v2456 = vunpack.c.h.b16 %v1319
    %v2457 = vunpack.c.l.b16 %v1320
    %v2458 = vunpack.c.h.b16 %v1320
    %v2459 = vunpack.c.l.b16 %v1321
    %v2460 = vunpack.c.h.b16 %v1321
    %v2461 = vunpack.c.l.b16 %v1322
    %v2462 = vunpack.c.h.b16 %v1322
    %v2463 = vunpack.c.l.b16 %v1323
    %v2464 = vunpack.c.h.b16 %v1323
    %v2465 = vunpack.c.l.b16 %v1324
    %v2466 = vunpack.c.h.b16 %v1324
    %v2467 = vunpack.c.l.b16 %v1325
    %v2468 = vunpack.c.h.b16 %v1325
    %v2469 = vunpack.c.l.b16 %v1326
    %v2470 = vunpack.c.h.b16 %v1326
    %v2471 = vunpack.c.l.b16 %v1327
    %v2472 = vunpack.c.h.b16 %v1327
    %v2473 = vunpack.c.l.b16 %v1328
    %v2474 = vunpack.c.h.b16 %v1328
    %v2475 = vunpack.c.l.b16 %v1329
    %v2476 = vunpack.c.h.b16 %v1329
    %v2477 = vunpack.c.l.b16 %v1330
    %v2478 = vunpack.c.h.b16 %v1330
    %v2479 = vunpack.c.l.b16 %v1331
    %v2480 = vunpack.c.h.b16 %v1331
    %v2481 = vunpack.c.l.b16 %v1332
    %v2482 = vunpack.c.h.b16 %v1332
    %v2483 = vunpack.c.l.b16 %v1333
    %v2484 = vunpack.c.h.b16 %v1333
    %v2485 = vunpack.c.l.b16 %v1334
    %v2486 = vunpack.c.h.b16 %v1334
    %v2487 = vunpack.c.l.b16 %v1335
    %v2488 = vunpack.c.h.b16 %v1335
    %v2489 = vunpack.c.l.b16 %v1336
    %v2490 = vunpack.c.h.b16 %v1336
    %v2491 = vunpack.c.l.b16 %v1337
    %v2492 = vunpack.c.h.b16 %v1337
    %v2493 = vunpack.c.l.b16 %v1338
    %v2494 = vunpack.c.h.b16 %v1338
    %v2495 = vunpack.c.l.b16 %v1339
    %v2496 = vunpack.c.h.b16 %v1339
    %v2497 = vunpack.c.l.b16 %v1340
    %v2498 = vunpack.c.h.b16 %v1340
    %v2499 = vunpack.c.l.b16 %v1341
    %v2500 = vunpack.c.h.b16 %v1341
    %v2501 = vunpack.c.l.b16 %v1342
    %v2502 = vunpack.c.h.b16 %v1342
    %v2503 = vunpack.c.l.b16 %v1343
    %v2504 = vunpack.c.h.b16 %v1343
    %v2505 = vunpack.c.l.b16 %v1344
    %v2506 = vunpack.c.h.b16 %v1344
    %v2507 = vunpack.c.l.b16 %v1345
    %v2508 = vunpack.c.h.b16 %v1345
    %v2509 = vunpack.c.l.b16 %v1346
    %v2510 = vunpack.c.h.b16 %v1346
    %v2511 = vunpack.c.l.b16 %v1347
    %v2512 = vunpack.c.h.b16 %v1347
    %v2513 = vunpack.c.l.b16 %v1348
    %v2514 = vunpack.c.h.b16 %v1348
    %v2515 = vunpack.c.l.b16 %v1349
    %v2516 = vunpack.c.h.b16 %v1349
    %v2517 = vunpack.c.l.b16 %v1350
    %v2518 = vunpack.c.h.b16 %v1350
    %v2519 = vunpack.c.l.b16 %v1351
    %v2520 = vunpack.c.h.b16 %v1351
    %v2521 = vunpack.c.l.b16 %v1352
    %v2522 = vunpack.c.h.b16 %v1352
    %v2523 = vunpack.c.l.b16 %v1353
    %v2524 = vunpack.c.h.b16 %v1353
    %v2525 = vunpack.c.l.b16 %v1354
    %v2526 = vunpack.c.h.b16 %v1354
    %v2527 = vunpack.c.l.b16 %v1355
    %v2528 = vunpack.c.h.b16 %v1355
    %v2529 = vunpack.c.l.b16 %v1356
    %v2530 = vunpack.c.h.b16 %v1356
    %v2531 = vunpack.c.l.b16 %v1357
    %v2532 = vunpack.c.h.b16 %v1357
    %v2533 = vunpack.c.l.b16 %v1358
    %v2534 = vunpack.c.h.b16 %v1358
    %v2535 = vunpack.c.l.b16 %v1359
    %v2536 = vunpack.c.h.b16 %v1359
    %v2537 = vunpack.c.l.b16 %v1360
    %v2538 = vunpack.c.h.b16 %v1360
    %v2539 = vunpack.c.l.b16 %v1361
    %v2540 = vunpack.c.h.b16 %v1361
    %v2541 = vunpack.c.l.b16 %v1362
    %v2542 = vunpack.c.h.b16 %v1362
    %v2543 = vunpack.c.l.b16 %v1363
    %v2544 = vunpack.c.h.b16 %v1363
    %v2545 = vunpack.c.l.b16 %v1364
    %v2546 = vunpack.c.h.b16 %v1364
    %v2547 = vunpack.c.l.b16 %v1365
    %v2548 = vunpack.c.h.b16 %v1365
    %v2549 = vunpack.c.l.b16 %v1366
    %v2550 = vunpack.c.h.b16 %v1366
    %v2551 = vunpack.c.l.b16 %v1367
    %v2552 = vunpack.c.h.b16 %v1367
    %v2553 = vunpack.c.l.b16 %v1368
    %v2554 = vunpack.c.h.b16 %v1368
    %v2555 = vunpack.c.l.b16 %v1369
    %v2556 = vunpack.c.h.b16 %v1369
    %v2557 = vunpack.c.l.b16 %v1370
    %v2558 = vunpack.c.h.b16 %v1370
    %v2559 = vunpack.c.l.b16 %v1371
    %v2560 = vunpack.c.h.b16 %v1371
    %v2561 = vunpack.c.l.b16 %v1372
    %v2562 = vunpack.c.h.b16 %v1372
    %v2563 = vunpack.c.l.b16 %v1373
    %v2564 = vunpack.c.h.b16 %v1373
    %v2565 = vunpack.c.l.b16 %v1374
    %v2566 = vunpack.c.h.b16 %v1374
    %v2567 = vunpack.c.l.b16 %v1375
    %v2568 = vunpack.c.h.b16 %v1375
    %v2569 = vunpack.c.l.b16 %v1376
    %v2570 = vunpack.c.h.b16 %v1376
    %v2571 = vunpack.c.l.b16 %v1377
    %v2572 = vunpack.c.h.b16 %v1377
    %v2573 = vunpack.c.l.b16 %v1378
    %v2574 = vunpack.c.h.b16 %v1378
    %v2575 = vunpack.c.l.b16 %v1379
    %v2576 = vunpack.c.h.b16 %v1379
    %v2577 = vunpack.c.l.b16 %v1380
    %v2578 = vunpack.c.h.b16 %v1380
    %v2579 = vunpack.c.l.b16 %v1381
    %v2580 = vunpack.c.h.b16 %v1381
    %v2581 = vunpack.c.l.b16 %v1382
    %v2582 = vunpack.c.h.b16 %v1382
    %v2583 = vunpack.c.l.b16 %v1383
    %v2584 = vunpack.c.h.b16 %v1383
    %v2585 = vunpack.c.l.b16 %v1384
    %v2586 = vunpack.c.h.b16 %v1384
    %v2587 = vunpack.c.l.b16 %v1385
    %v2588 = vunpack.c.h.b16 %v1385
    %v2589 = vunpack.c.l.b16 %v1386
    %v2590 = vunpack.c.h.b16 %v1386
    %v2591 = vunpack.c.l.b16 %v1387
    %v2592 = vunpack.c.h.b16 %v1387
    %v2593 = vunpack.c.l.b16 %v1388
    %v2594 = vunpack.c.h.b16 %v1388
    %v2595 = vunpack.c.l.b16 %v1389
    %v2596 = vunpack.c.h.b16 %v1389
    %v2597 = vunpack.c.l.b16 %v1390
    %v2598 = vunpack.c.h.b16 %v1390
    %v2599 = vunpack.c.l.b16 %v1391
    %v2600 = vunpack.c.h.b16 %v1391
    %v2601 = vunpack.c.l.b16 %v1392
    %v2602 = vunpack.c.h.b16 %v1392
    %v2603 = vunpack.c.l.b16 %v1393
    %v2604 = vunpack.c.h.b16 %v1393
    %v2605 = vunpack.c.l.b16 %v1394
    %v2606 = vunpack.c.h.b16 %v1394
    %v2607 = vunpack.c.l.b16 %v1395
    %v2608 = vunpack.c.h.b16 %v1395
    %v2609 = vunpack.c.l.b16 %v1396
    %v2610 = vunpack.c.h.b16 %v1396
    %v2611 = vunpack.c.l.b16 %v1397
    %v2612 = vunpack.c.h.b16 %v1397
    %v2613 = vunpack.c.l.b16 %v1398
    %v2614 = vunpack.c.h.b16 %v1398
    %v2615 = vunpack.c.l.b16 %v1399
    %v2616 = vunpack.c.h.b16 %v1399
    %v2617 = vunpack.c.l.b16 %v1400
    %v2618 = vunpack.c.h.b16 %v1400
    %v2619 = vunpack.c.l.b16 %v1401
    %v2620 = vunpack.c.h.b16 %v1401
    %v2621 = vunpack.c.l.b16 %v1402
    %v2622 = vunpack.c.h.b16 %v1402
    %v2623 = vunpack.c.l.b16 %v1403
    %v2624 = vunpack.c.h.b16 %v1403
    %v2625 = vunpack.c.l.b16 %v1404
    %v2626 = vunpack.c.h.b16 %v1404
    %v2627 = vunpack.c.l.b16 %v1405
    %v2628 = vunpack.c.h.b16 %v1405
    %v2629 = vunpack.c.l.b16 %v1406
    %v2630 = vunpack.c.h.b16 %v1406
    %v2631 = vunpack.c.l.b16 %v1407
    %v2632 = vunpack.c.h.b16 %v1407
    %v2633 = vunpack.c.l.b16 %v1408
    %v2634 = vunpack.c.h.b16 %v1408
    %v2635 = vunpack.c.l.b16 %v1409
    %v2636 = vunpack.c.h.b16 %v1409
    %v2637 = vunpack.c.l.b16 %v1410
    %v2638 = vunpack.c.h.b16 %v1410
    %v2639 = vunpack.c.l.b16 %v1411
    %v2640 = vunpack.c.h.b16 %v1411
    %v2641 = vunpack.c.l.b16 %v1412
    %v2642 = vunpack.c.h.b16 %v1412
    %v2643 = vunpack.c.l.b16 %v1413
    %v2644 = vunpack.c.h.b16 %v1413
    %v2645 = vunpack.c.l.b16 %v1414
    %v2646 = vunpack.c.h.b16 %v1414
    %v2647 = vunpack.c.l.b16 %v1415
    %v2648 = vunpack.c.h.b16 %v1415
    %v2649 = vunpack.c.l.b16 %v1416
    %v2650 = vunpack.c.h.b16 %v1416
    %v2651 = vunpack.c.l.b16 %v1417
    %v2652 = vunpack.c.h.b16 %v1417
    %v2653 = vunpack.c.l.b16 %v1418
    %v2654 = vunpack.c.h.b16 %v1418
    %v2655 = vunpack.c.l.b16 %v1419
    %v2656 = vunpack.c.h.b16 %v1419
    %v2657 = vunpack.c.l.b16 %v1420
    %v2658 = vunpack.c.h.b16 %v1420
    %v2659 = vunpack.c.l.b16 %v1421
    %v2660 = vunpack.c.h.b16 %v1421
    %v2661 = vunpack.c.l.b16 %v1422
    %v2662 = vunpack.c.h.b16 %v1422
    %v2663 = vunpack.c.l.b16 %v1423
    %v2664 = vunpack.c.h.b16 %v1423
    %v2665 = vunpack.c.l.b16 %v1424
    %v2666 = vunpack.c.h.b16 %v1424
    %v2667 = vunpack.c.l.b16 %v1425
    %v2668 = vunpack.c.h.b16 %v1425
    %v2669 = vunpack.c.l.b16 %v1426
    %v2670 = vunpack.c.h.b16 %v1426
    %v2671 = vunpack.c.l.b16 %v1427
    %v2672 = vunpack.c.h.b16 %v1427
    %v2673 = vunpack.c.l.b16 %v1428
    %v2674 = vunpack.c.h.b16 %v1428
    %v2675 = vunpack.c.l.b16 %v1429
    %v2676 = vunpack.c.h.b16 %v1429
    %v2677 = vunpack.c.l.b16 %v1430
    %v2678 = vunpack.c.h.b16 %v1430
    %v2679 = vunpack.c.l.b16 %v1431
    %v2680 = vunpack.c.h.b16 %v1431
    %v2681 = vunpack.c.l.b16 %v1432
    %v2682 = vunpack.c.h.b16 %v1432
    %v2683 = vunpack.c.l.b16 %v1433
    %v2684 = vunpack.c.h.b16 %v1433
    %v2685 = vunpack.c.l.b16 %v1434
    %v2686 = vunpack.c.h.b16 %v1434
    %v2687 = vunpack.c.l.b16 %v1435
    %v2688 = vunpack.c.h.b16 %v1435
    %v2689 = vunpack.c.l.b16 %v1436
    %v2690 = vunpack.c.h.b16 %v1436
    %v2691 = vunpack.c.l.b16 %v1437
    %v2692 = vunpack.c.h.b16 %v1437
    %v2693 = vunpack.c.l.b16 %v1438
    %v2694 = vunpack.c.h.b16 %v1438
    %v2695 = vunpack.c.l.b16 %v1439
    %v2696 = vunpack.c.h.b16 %v1439
    %v2697 = vunpack.c.l.b16 %v1440
    %v2698 = vunpack.c.h.b16 %v1440
    %v2699 = vunpack.c.l.b16 %v1441
    %v2700 = vunpack.c.h.b16 %v1441
    %v2701 = vunpack.c.l.b16 %v1442
    %v2702 = vunpack.c.h.b16 %v1442
    %v2703 = vunpack.c.l.b16 %v1443
    %v2704 = vunpack.c.h.b16 %v1443
    %v2705 = vunpack.c.l.b16 %v1444
    %v2706 = vunpack.c.h.b16 %v1444
    %v2707 = vunpack.c.l.b16 %v1445
    %v2708 = vunpack.c.h.b16 %v1445
    %v2709 = vunpack.c.l.b16 %v1446
    %v2710 = vunpack.c.h.b16 %v1446
    %v2711 = vunpack.c.l.b16 %v1447
    %v2712 = vunpack.c.h.b16 %v1447
    %v2713 = vunpack.c.l.b16 %v1448
    %v2714 = vunpack.c.h.b16 %v1448
    %v2715 = vunpack.c.l.b16 %v1449
    %v2716 = vunpack.c.h.b16 %v1449
    %v2717 = vunpack.c.l.b16 %v1450
    %v2718 = vunpack.c.h.b16 %v1450
    %v2719 = vunpack.c.l.b16 %v1451
    %v2720 = vunpack.c.h.b16 %v1451
    %v2721 = vunpack.c.l.b16 %v1452
    %v2722 = vunpack.c.h.b16 %v1452
    %v2723 = vunpack.c.l.b16 %v1453
    %v2724 = vunpack.c.h.b16 %v1453
    %v2725 = vunpack.c.l.b16 %v1454
    %v2726 = vunpack.c.h.b16 %v1454
    %v2727 = vunpack.c.l.b16 %v1455
    %v2728 = vunpack.c.h.b16 %v1455
    %v2729 = vunpack.c.l.b16 %v1456
    %v2730 = vunpack.c.h.b16 %v1456
    %v2731 = vunpack.c.l.b16 %v1457
    %v2732 = vunpack.c.h.b16 %v1457
    %v2733 = vunpack.c.l.b16 %v1458
    %v2734 = vunpack.c.h.b16 %v1458
    %v2735 = vunpack.c.l.b16 %v1459
    %v2736 = vunpack.c.h.b16 %v1459
    %v2737 = vunpack.c.l.b16 %v1460
    %v2738 = vunpack.c.h.b16 %v1460
    %v2739 = vunpack.c.l.b16 %v1461
    %v2740 = vunpack.c.h.b16 %v1461
    %v2741 = vunpack.c.l.b16 %v1462
    %v2742 = vunpack.c.h.b16 %v1462
    %v2743 = vunpack.c.l.b16 %v1463
    %v2744 = vunpack.c.h.b16 %v1463
    %v2745 = vunpack.c.l.b16 %v1464
    %v2746 = vunpack.c.h.b16 %v1464
    %v2747 = vunpack.c.l.b16 %v1465
    %v2748 = vunpack.c.h.b16 %v1465
    %v2749 = vunpack.c.l.b16 %v1466
    %v2750 = vunpack.c.h.b16 %v1466
    %v2751 = vunpack.c.l.b16 %v1467
    %v2752 = vunpack.c.h.b16 %v1467
    %v2753 = vunpack.c.l.b16 %v1468
    %v2754 = vunpack.c.h.b16 %v1468
    %v2755 = vunpack.c.l.b16 %v1469
    %v2756 = vunpack.c.h.b16 %v1469
    %v2757 = vunpack.c.l.b16 %v1470
    %v2758 = vunpack.c.h.b16 %v1470
    %v2759 = vunpack.c.l.b16 %v1471
    %v2760 = vunpack.c.h.b16 %v1471
    %v2761 = vunpack.c.l.b16 %v1472
    %v2762 = vunpack.c.h.b16 %v1472
    %v2763 = vunpack.c.l.b16 %v1473
    %v2764 = vunpack.c.h.b16 %v1473
    %v2765 = vunpack.c.l.b16 %v1474
    %v2766 = vunpack.c.h.b16 %v1474
    %v2767 = vunpack.c.l.b16 %v1475
    %v2768 = vunpack.c.h.b16 %v1475
    %v2769 = vunpack.c.l.b16 %v1476
    %v2770 = vunpack.c.h.b16 %v1476
    %v2771 = vunpack.c.l.b16 %v1477
    %v2772 = vunpack.c.h.b16 %v1477
    %v2773 = vunpack.c.l.b16 %v1478
    %v2774 = vunpack.c.h.b16 %v1478
    %v2775 = vunpack.c.l.b16 %v1479
    %v2776 = vunpack.c.h.b16 %v1479
    %v2777 = vunpack.c.l.b16 %v1480
    %v2778 = vunpack.c.h.b16 %v1480
    %v2779 = vunpack.c.l.b16 %v1481
    %v2780 = vunpack.c.h.b16 %v1481
    %v2781 = vunpack.c.l.b16 %v1482
    %v2782 = vunpack.c.h.b16 %v1482
    %v2783 = vunpack.c.l.b16 %v1483
    %v2784 = vunpack.c.h.b16 %v1483
    %v2785 = vunpack.c.l.b16 %v1484
    %v2786 = vunpack.c.h.b16 %v1484
    %v2787 = vunpack.c.l.b16 %v1485
    %v2788 = vunpack.c.h.b16 %v1485
    %v2789 = vunpack.c.l.b16 %v1486
    %v2790 = vunpack.c.h.b16 %v1486
    %v2791 = vunpack.c.l.b16 %v1487
    %v2792 = vunpack.c.h.b16 %v1487
    %v2793 = vunpack.c.l.b16 %v1488
    %v2794 = vunpack.c.h.b16 %v1488
    %v2795 = vunpack.c.l.b16 %v1489
    %v2796 = vunpack.c.h.b16 %v1489
    %v2797 = vunpack.c.l.b16 %v1490
    %v2798 = vunpack.c.h.b16 %v1490
    %v2799 = vunpack.c.l.b16 %v1491
    %v2800 = vunpack.c.h.b16 %v1491
    %v2801 = vunpack.c.l.b16 %v1492
    %v2802 = vunpack.c.h.b16 %v1492
    %v2803 = vunpack.c.l.b16 %v1493
    %v2804 = vunpack.c.h.b16 %v1493
    %v2805 = vunpack.c.l.b16 %v1494
    %v2806 = vunpack.c.h.b16 %v1494
    %v2807 = vunpack.c.l.b16 %v1495
    %v2808 = vunpack.c.h.b16 %v1495
    %v2809 = vunpack.c.l.b16 %v1496
    %v2810 = vunpack.c.h.b16 %v1496
    %v2811 = vunpack.c.l.b16 %v1497
    %v2812 = vunpack.c.h.b16 %v1497
    %v2813 = vunpack.c.l.b16 %v1498
    %v2814 = vunpack.c.h.b16 %v1498
    %v2815 = vunpack.c.l.b16 %v1499
    %v2816 = vunpack.c.h.b16 %v1499
    %v2817 = vunpack.c.l.b16 %v1500
    %v2818 = vunpack.c.h.b16 %v1500
    %v2819 = vunpack.c.l.b16 %v1501
    %v2820 = vunpack.c.h.b16 %v1501
    %v2821 = vunpack.c.l.b16 %v1502
    %v2822 = vunpack.c.h.b16 %v1502
    %v2823 = vunpack.c.l.b16 %v1503
    %v2824 = vunpack.c.h.b16 %v1503
    %v2825 = vunpack.c.l.b16 %v1504
    %v2826 = vunpack.c.h.b16 %v1504
    %v2827 = vunpack.c.l.b16 %v1505
    %v2828 = vunpack.c.h.b16 %v1505
    %v2829 = vunpack.c.l.b16 %v1506
    %v2830 = vunpack.c.h.b16 %v1506
    %v2831 = vunpack.c.l.b16 %v1507
    %v2832 = vunpack.c.h.b16 %v1507
    %v2833 = vunpack.c.l.b16 %v1508
    %v2834 = vunpack.c.h.b16 %v1508
    %v2835 = vunpack.c.l.b16 %v1509
    %v2836 = vunpack.c.h.b16 %v1509
    %v2837 = vunpack.c.l.b16 %v1510
    %v2838 = vunpack.c.h.b16 %v1510
    %v2839 = vunpack.c.l.b16 %v1511
    %v2840 = vunpack.c.h.b16 %v1511
    %v2841 = vunpack.c.l.b16 %v1512
    %v2842 = vunpack.c.h.b16 %v1512
    %v2843 = vunpack.c.l.b16 %v1513
    %v2844 = vunpack.c.h.b16 %v1513
    %v2845 = vunpack.c.l.b16 %v1514
    %v2846 = vunpack.c.h.b16 %v1514
    %v2847 = vunpack.c.l.b16 %v1515
    %v2848 = vunpack.c.h.b16 %v1515
    %v2849 = vunpack.c.l.b16 %v1516
    %v2850 = vunpack.c.h.b16 %v1516
    %v2851 = vunpack.c.l.b16 %v1517
    %v2852 = vunpack.c.h.b16 %v1517
    %v2853 = vunpack.c.l.b16 %v1518
    %v2854 = vunpack.c.h.b16 %v1518
    %v2855 = vunpack.c.l.b16 %v1519
    %v2856 = vunpack.c.h.b16 %v1519
    %v2857 = vunpack.c.l.b16 %v1520
    %v2858 = vunpack.c.h.b16 %v1520
    %v2859 = vunpack.c.l.b16 %v1521
    %v2860 = vunpack.c.h.b16 %v1521
    %v2861 = vunpack.c.l.b16 %v1522
    %v2862 = vunpack.c.h.b16 %v1522
    %v2863 = vunpack.c.l.b16 %v1523
    %v2864 = vunpack.c.h.b16 %v1523
    %v2865 = vunpack.c.l.b16 %v1524
    %v2866 = vunpack.c.h.b16 %v1524
    %v2867 = vunpack.c.l.b16 %v1525
    %v2868 = vunpack.c.h.b16 %v1525
    %v2869 = vunpack.c.l.b16 %v1526
    %v2870 = vunpack.c.h.b16 %v1526
    %v2871 = vunpack.c.l.b16 %v1527
    %v2872 = vunpack.c.h.b16 %v1527
    %v2873 = vunpack.c.l.b16 %v1528
    %v2874 = vunpack.c.h.b16 %v1528
    %v2875 = vunpack.c.l.b16 %v1529
    %v2876 = vunpack.c.h.b16 %v1529
    %v2877 = vunpack.c.l.b16 %v1530
    %v2878 = vunpack.c.h.b16 %v1530
    %v2879 = vunpack.c.l.b16 %v1531
    %v2880 = vunpack.c.h.b16 %v1531
    %v2881 = vunpack.c.l.b16 %v1532
    %v2882 = vunpack.c.h.b16 %v1532
    %v2883 = vunpack.c.l.b16 %v1533
    %v2884 = vunpack.c.h.b16 %v1533
    %v2885 = vunpack.c.l.b16 %v1534
    %v2886 = vunpack.c.h.b16 %v1534
    %v2887 = vunpack.c.l.b16 %v1535
    %v2888 = vunpack.c.h.b16 %v1535
    %v2889 = vunpack.c.l.b16 %v1536
    %v2890 = vunpack.c.h.b16 %v1536
    %v2891 = vunpack.c.l.b16 %v1537
    %v2892 = vunpack.c.h.b16 %v1537
    %v2893 = vunpack.c.l.b16 %v1538
    %v2894 = vunpack.c.h.b16 %v1538
    %v2895 = vunpack.c.l.b16 %v1539
    %v2896 = vunpack.c.h.b16 %v1539
    %v2897 = vunpack.c.l.b16 %v1540
    %v2898 = vunpack.c.h.b16 %v1540
    %v2899 = vunpack.c.l.b16 %v1541
    %v2900 = vunpack.c.h.b16 %v1541
    %v2901 = vunpack.c.l.b16 %v1542
    %v2902 = vunpack.c.h.b16 %v1542
    %v2903 = vunpack.c.l.b16 %v1543
    %v2904 = vunpack.c.h.b16 %v1543
    %v2905 = vunpack.c.l.b16 %v1544
    %v2906 = vunpack.c.h.b16 %v1544
    %v2907 = vunpack.c.l.b16 %v1545
    %v2908 = vunpack.c.h.b16 %v1545
    %v2909 = vunpack.c.l.b16 %v1546
    %v2910 = vunpack.c.h.b16 %v1546
    %v2911 = vunpack.c.l.b16 %v1547
    %v2912 = vunpack.c.h.b16 %v1547
    %v2913 = vunpack.c.l.b16 %v1548
    %v2914 = vunpack.c.h.b16 %v1548
    %v2915 = vunpack.c.l.b16 %v1549
    %v2916 = vunpack.c.h.b16 %v1549
    %v2917 = vunpack.c.l.b16 %v1550
    %v2918 = vunpack.c.h.b16 %v1550
    %v2919 = vunpack.c.l.b16 %v1551
    %v2920 = vunpack.c.h.b16 %v1551
    %v2921 = vunpack.c.l.b16 %v1552
    %v2922 = vunpack.c.h.b16 %v1552
    %v2923 = vunpack.c.l.b16 %v1553
    %v2924 = vunpack.c.h.b16 %v1553
    %v2925 = vunpack.c.l.b16 %v1554
    %v2926 = vunpack.c.h.b16 %v1554
    %v2927 = vunpack.c.l.b16 %v1555
    %v2928 = vunpack.c.h.b16 %v1555
    %v2929 = vunpack.c.l.b16 %v1556
    %v2930 = vunpack.c.h.b16 %v1556
    %v2931 = vunpack.c.l.b16 %v1557
    %v2932 = vunpack.c.h.b16 %v1557
    %v2933 = vunpack.c.l.b16 %v1558
    %v2934 = vunpack.c.h.b16 %v1558
    %v2935 = vunpack.c.l.b16 %v1559
    %v2936 = vunpack.c.h.b16 %v1559
    %v2937 = vunpack.c.l.b16 %v1560
    %v2938 = vunpack.c.h.b16 %v1560
    %v2939 = vunpack.c.l.b16 %v1561
    %v2940 = vunpack.c.h.b16 %v1561
    %v2941 = vunpack.c.l.b16 %v1562
    %v2942 = vunpack.c.h.b16 %v1562
    %v2943 = vunpack.c.l.b16 %v1563
    %v2944 = vunpack.c.h.b16 %v1563
    %v2945 = vunpack.c.l.b16 %v1564
    %v2946 = vunpack.c.h.b16 %v1564
    %v2947 = vunpack.c.l.b16 %v1565
    %v2948 = vunpack.c.h.b16 %v1565
    %v2949 = vunpack.c.l.b16 %v1566
    %v2950 = vunpack.c.h.b16 %v1566
    %v2951 = vunpack.c.l.b16 %v1567
    %v2952 = vunpack.c.h.b16 %v1567
    %v2953 = vunpack.c.l.b16 %v1568
    %v2954 = vunpack.c.h.b16 %v1568
    %v2955 = vunpack.c.l.b16 %v1569
    %v2956 = vunpack.c.h.b16 %v1569
    %v2957 = vunpack.c.l.b16 %v1570
    %v2958 = vunpack.c.h.b16 %v1570
    %v2959 = vunpack.c.l.b16 %v1571
    %v2960 = vunpack.c.h.b16 %v1571
    %v2961 = vunpack.c.l.b16 %v1572
    %v2962 = vunpack.c.h.b16 %v1572
    %v2963 = vunpack.c.l.b16 %v1573
    %v2964 = vunpack.c.h.b16 %v1573
    %v2965 = vunpack.c.l.b16 %v1574
    %v2966 = vunpack.c.h.b16 %v1574
    %v2967 = vunpack.c.l.b16 %v1575
    %v2968 = vunpack.c.h.b16 %v1575
    %v2969 = vunpack.c.l.b16 %v1576
    %v2970 = vunpack.c.h.b16 %v1576
    %v2971 = vunpack.c.l.b16 %v1577
    %v2972 = vunpack.c.h.b16 %v1577
    %v2973 = vunpack.c.l.b16 %v1578
    %v2974 = vunpack.c.h.b16 %v1578
    %v2975 = vunpack.c.l.b16 %v1579
    %v2976 = vunpack.c.h.b16 %v1579
    %v2977 = vunpack.c.l.b16 %v1580
    %v2978 = vunpack.c.h.b16 %v1580
    %v2979 = vunpack.c.l.b16 %v1581
    %v2980 = vunpack.c.h.b16 %v1581
    %v2981 = vunpack.c.l.b16 %v1582
    %v2982 = vunpack.c.h.b16 %v1582
    %v2983 = vunpack.c.l.b16 %v1583
    %v2984 = vunpack.c.h.b16 %v1583
    %v2985 = vunpack.c.l.b16 %v1584
    %v2986 = vunpack.c.h.b16 %v1584
    %v2987 = vunpack.c.l.b16 %v1585
    %v2988 = vunpack.c.h.b16 %v1585
    %v2989 = vunpack.c.l.b16 %v1586
    %v2990 = vunpack.c.h.b16 %v1586
    %v2991 = vunpack.c.l.b16 %v1587
    %v2992 = vunpack.c.h.b16 %v1587
    %v2993 = vunpack.c.l.b16 %v1588
    %v2994 = vunpack.c.h.b16 %v1588
    %v2995 = vunpack.c.l.b16 %v1589
    %v2996 = vunpack.c.h.b16 %v1589
    %v2997 = vunpack.c.l.b16 %v1590
    %v2998 = vunpack.c.h.b16 %v1590
    %v2999 = vunpack.c.l.b16 %v1591
    %v3000 = vunpack.c.h.b16 %v1591
    %v3001 = vunpack.c.l.b16 %v1592
    %v3002 = vunpack.c.h.b16 %v1592
    %v3003 = vunpack.c.l.b16 %v1593
    %v3004 = vunpack.c.h.b16 %v1593
    %v3005 = vunpack.c.l.b16 %v1594
    %v3006 = vunpack.c.h.b16 %v1594
    %v3007 = vunpack.c.l.b16 %v1595
    %v3008 = vunpack.c.h.b16 %v1595
    %v3009 = vunpack.c.l.b16 %v1596
    %v3010 = vunpack.c.h.b16 %v1596
    %v3011 = vunpack.c.l.b16 %v1597
    %v3012 = vunpack.c.h.b16 %v1597
    %v3013 = vunpack.c.l.b16 %v1598
    %v3014 = vunpack.c.h.b16 %v1598
    %v3015 = vunpack.c.l.b16 %v1599
    %v3016 = vunpack.c.h.b16 %v1599
    %v3017 = vunpack.c.l.b16 %v1600
    %v3018 = vunpack.c.h.b16 %v1600
    %v3019 = vunpack.c.l.b16 %v1601
    %v3020 = vunpack.c.h.b16 %v1601
    %v3021 = vunpack.c.l.b16 %v1602
    %v3022 = vunpack.c.h.b16 %v1602
    %v3023 = vunpack.c.l.b16 %v1603
    %v3024 = vunpack.c.h.b16 %v1603
    %v3025 = vunpack.c.l.b16 %v1604
    %v3026 = vunpack.c.h.b16 %v1604
    %v3027 = vunpack.c.l.b16 %v1605
    %v3028 = vunpack.c.h.b16 %v1605
    %v3029 = vunpack.c.l.b16 %v1606
    %v3030 = vunpack.c.h.b16 %v1606
    %v3031 = vunpack.c.l.b16 %v1607
    %v3032 = vunpack.c.h.b16 %v1607
    %v3033 = vunpack.c.l.b16 %v1608
    %v3034 = vunpack.c.h.b16 %v1608
    %v3035 = vunpack.c.l.b16 %v1609
    %v3036 = vunpack.c.h.b16 %v1609
    %v3037 = vunpack.c.l.b16 %v1610
    %v3038 = vunpack.c.h.b16 %v1610
    %v3039 = vunpack.c.l.b16 %v1611
    %v3040 = vunpack.c.h.b16 %v1611
    %v3041 = vunpack.c.l.b16 %v1612
    %v3042 = vunpack.c.h.b16 %v1612
    %v3043 = vunpack.c.l.b16 %v1613
    %v3044 = vunpack.c.h.b16 %v1613
    %v3045 = vunpack.c.l.b16 %v1614
    %v3046 = vunpack.c.h.b16 %v1614
    %v3047 = vunpack.c.l.b16 %v1615
    %v3048 = vunpack.c.h.b16 %v1615
    %v3049 = vunpack.c.l.b16 %v1616
    %v3050 = vunpack.c.h.b16 %v1616
    %v3051 = vunpack.c.l.b16 %v1617
    %v3052 = vunpack.c.h.b16 %v1617
    %v3053 = vunpack.c.l.b16 %v1618
    %v3054 = vunpack.c.h.b16 %v1618
    %v3055 = vunpack.c.l.b16 %v1619
    %v3056 = vunpack.c.h.b16 %v1619
    %v3057 = vunpack.c.l.b16 %v1620
    %v3058 = vunpack.c.h.b16 %v1620
    %v3059 = vunpack.c.l.b16 %v1621
    %v3060 = vunpack.c.h.b16 %v1621
    %v3061 = vunpack.c.l.b16 %v1622
    %v3062 = vunpack.c.h.b16 %v1622
    %v3063 = vunpack.c.l.b16 %v1623
    %v3064 = vunpack.c.h.b16 %v1623
    %v3065 = vunpack.c.l.b16 %v1624
    %v3066 = vunpack.c.h.b16 %v1624
    %v3067 = vunpack.c.l.b16 %v1625
    %v3068 = vunpack.c.h.b16 %v1625
    %v3069 = vunpack.c.l.b16 %v1626
    %v3070 = vunpack.c.h.b16 %v1626
    %v3071 = vunpack.c.l.b16 %v1627
    %v3072 = vunpack.c.h.b16 %v1627
    %v3073 = vunpack.c.l.b16 %v1628
    %v3074 = vunpack.c.h.b16 %v1628
    %v3075 = vunpack.c.l.b16 %v1629
    %v3076 = vunpack.c.h.b16 %v1629
    %v3077 = vunpack.c.l.b16 %v1630
    %v3078 = vunpack.c.h.b16 %v1630
    %v3079 = vunpack.c.l.b16 %v1631
    %v3080 = vunpack.c.h.b16 %v1631
    %v3081 = vunpack.c.l.b16 %v1632
    %v3082 = vunpack.c.h.b16 %v1632
    %v3083 = vunpack.c.l.b16 %v1633
    %v3084 = vunpack.c.h.b16 %v1633
    %v3085 = vunpack.c.l.b16 %v1634
    %v3086 = vunpack.c.h.b16 %v1634
    %v3087 = vunpack.c.l.b16 %v1635
    %v3088 = vunpack.c.h.b16 %v1635
    %v3089 = vunpack.c.l.b16 %v1636
    %v3090 = vunpack.c.h.b16 %v1636
    %v3091 = vunpack.c.l.b16 %v1637
    %v3092 = vunpack.c.h.b16 %v1637
    %v3093 = vunpack.c.l.b16 %v1638
    %v3094 = vunpack.c.h.b16 %v1638
    %v3095 = vunpack.c.l.b16 %v1639
    %v3096 = vunpack.c.h.b16 %v1639
    %v3097 = vunpack.c.l.b16 %v1640
    %v3098 = vunpack.c.h.b16 %v1640
    %v3099 = vunpack.c.l.b16 %v1641
    %v3100 = vunpack.c.h.b16 %v1641
    %v3101 = vunpack.c.l.b16 %v1642
    %v3102 = vunpack.c.h.b16 %v1642
    %v3103 = vunpack.c.l.b16 %v1643
    %v3104 = vunpack.c.h.b16 %v1643
    %v3105 = vunpack.c.l.b16 %v1644
    %v3106 = vunpack.c.h.b16 %v1644
    %v3107 = vunpack.c.l.b16 %v1645
    %v3108 = vunpack.c.h.b16 %v1645
    %v3109 = vunpack.c.l.b16 %v1646
    %v3110 = vunpack.c.h.b16 %v1646
    %v3111 = vunpack.c.l.b16 %v1647
    %v3112 = vunpack.c.h.b16 %v1647
    %v3113 = vunpack.c.l.b16 %v1648
    %v3114 = vunpack.c.h.b16 %v1648
    %v3115 = vunpack.c.l.b16 %v1649
    %v3116 = vunpack.c.h.b16 %v1649
    %v3117 = vunpack.c.l.b16 %v1650
    %v3118 = vunpack.c.h.b16 %v1650
    %v3119 = vunpack.c.l.b16 %v1651
    %v3120 = vunpack.c.h.b16 %v1651
    %v3121 = vunpack.c.l.b16 %v1652
    %v3122 = vunpack.c.h.b16 %v1652
    %v3123 = vunpack.c.l.b16 %v1653
    %v3124 = vunpack.c.h.b16 %v1653
    %v3125 = vunpack.c.l.b16 %v1654
    %v3126 = vunpack.c.h.b16 %v1654
    %v3127 = vunpack.c.l.b16 %v1655
    %v3128 = vunpack.c.h.b16 %v1655
    %v3129 = vunpack.c.l.b16 %v1656
    %v3130 = vunpack.c.h.b16 %v1656
    %v3131 = vunpack.c.l.b16 %v1657
    %v3132 = vunpack.c.h.b16 %v1657
    %v3133 = vunpack.c.l.b16 %v1658
    %v3134 = vunpack.c.h.b16 %v1658
    %v3135 = vunpack.c.l.b16 %v1659
    %v3136 = vunpack.c.h.b16 %v1659
    %v3137 = vunpack.c.l.b16 %v1660
    %v3138 = vunpack.c.h.b16 %v1660
    %v3139 = vunpack.c.l.b16 %v1661
    %v3140 = vunpack.c.h.b16 %v1661
    %v3141 = vunpack.c.l.b16 %v1662
    %v3142 = vunpack.c.h.b16 %v1662
    %v3143 = vunpack.c.l.b16 %v1663
    %v3144 = vunpack.c.h.b16 %v1663
    %v3145 = vunpack.c.l.b16 %v1664
    %v3146 = vunpack.c.h.b16 %v1664
    %v3147 = vunpack.c.l.b16 %v1665
    %v3148 = vunpack.c.h.b16 %v1665
    %v3149 = vunpack.c.l.b16 %v1666
    %v3150 = vunpack.c.h.b16 %v1666
    %v3151 = vunpack.c.l.b16 %v1667
    %v3152 = vunpack.c.h.b16 %v1667
    %v3153 = vunpack.c.l.b16 %v1668
    %v3154 = vunpack.c.h.b16 %v1668
    %v3155 = vunpack.c.l.b16 %v1669
    %v3156 = vunpack.c.h.b16 %v1669
    %v3157 = vunpack.c.l.b16 %v1670
    %v3158 = vunpack.c.h.b16 %v1670
    %v3159 = vunpack.c.l.b16 %v1671
    %v3160 = vunpack.c.h.b16 %v1671
    %v3161 = vunpack.c.l.b16 %v1672
    %v3162 = vunpack.c.h.b16 %v1672
    %v3163 = vunpack.c.l.b16 %v1673
    %v3164 = vunpack.c.h.b16 %v1673
    %v3165 = vunpack.c.l.b16 %v1674
    %v3166 = vunpack.c.h.b16 %v1674
    %v3167 = vunpack.c.l.b16 %v1675
    %v3168 = vunpack.c.h.b16 %v1675
    %v3169 = vunpack.c.l.b16 %v1676
    %v3170 = vunpack.c.h.b16 %v1676
    %v3171 = vunpack.c.l.b16 %v1677
    %v3172 = vunpack.c.h.b16 %v1677
    %v3173 = vunpack.c.l.b16 %v1678
    %v3174 = vunpack.c.h.b16 %v1678
    %v3175 = vunpack.c.l.b16 %v1679
    %v3176 = vunpack.c.h.b16 %v1679
    %v3177 = vunpack.c.l.b16 %v1680
    %v3178 = vunpack.c.h.b16 %v1680
    %v3179 = vunpack.c.l.b16 %v1681
    %v3180 = vunpack.c.h.b16 %v1681
    %v3181 = vunpack.c.l.b16 %v1682
    %v3182 = vunpack.c.h.b16 %v1682
    %v3183 = vunpack.c.l.b16 %v1683
    %v3184 = vunpack.c.h.b16 %v1683
    %v3185 = vunpack.c.l.b16 %v1684
    %v3186 = vunpack.c.h.b16 %v1684
    %v3187 = vunpack.c.l.b16 %v1685
    %v3188 = vunpack.c.h.b16 %v1685
    %v3189 = vunpack.c.l.b16 %v1686
    %v3190 = vunpack.c.h.b16 %v1686
    %v3191 = vunpack.c.l.b16 %v1687
    %v3192 = vunpack.c.h.b16 %v1687
    %v3193 = vunpack.c.l.b16 %v1688
    %v3194 = vunpack.c.h.b16 %v1688
    %v3195 = vunpack.c.l.b16 %v1689
    %v3196 = vunpack.c.h.b16 %v1689
    %v3197 = vunpack.c.l.b16 %v1690
    %v3198 = vunpack.c.h.b16 %v1690
    %v3199 = vunpack.c.l.b16 %v1691
    %v3200 = vunpack.c.h.b16 %v1691
    %v3201 = vunpack.c.l.b16 %v1692
    %v3202 = vunpack.c.h.b16 %v1692
    %v3203 = vunpack.c.l.b16 %v1693
    %v3204 = vunpack.c.h.b16 %v1693
    %v3205 = vunpack.c.l.b16 %v1694
    %v3206 = vunpack.c.h.b16 %v1694
    %v3207 = vunpack.c.l.b16 %v1695
    %v3208 = vunpack.c.h.b16 %v1695
    %v3209 = vunpack.c.l.b16 %v1696
    %v3210 = vunpack.c.h.b16 %v1696
    %v3211 = vunpack.c.l.b16 %v1697
    %v3212 = vunpack.c.h.b16 %v1697
    %v3213 = vunpack.c.l.b16 %v1698
    %v3214 = vunpack.c.h.b16 %v1698
    %v3215 = vunpack.c.l.b16 %v1699
    %v3216 = vunpack.c.h.b16 %v1699
    %v3217 = vunpack.c.l.b16 %v1700
    %v3218 = vunpack.c.h.b16 %v1700
    %v3219 = vunpack.c.l.b16 %v1701
    %v3220 = vunpack.c.h.b16 %v1701
    %v3221 = vunpack.c.l.b16 %v1702
    %v3222 = vunpack.c.h.b16 %v1702
    %v3223 = vunpack.c.l.b16 %v1703
    %v3224 = vunpack.c.h.b16 %v1703
    %v3225 = vunpack.c.l.b16 %v1704
    %v3226 = vunpack.c.h.b16 %v1704
    %v3227 = vunpack.c.l.b16 %v1705
    %v3228 = vunpack.c.h.b16 %v1705
    %v3229 = vunpack.c.l.b16 %v1706
    %v3230 = vunpack.c.h.b16 %v1706
    %v3231 = vunpack.c.l.b16 %v1707
    %v3232 = vunpack.c.h.b16 %v1707
    %v3233 = vunpack.c.l.b16 %v1708
    %v3234 = vunpack.c.h.b16 %v1708
    %v3235 = vunpack.c.l.b16 %v1709
    %v3236 = vunpack.c.h.b16 %v1709
    %v3237 = vunpack.c.l.b16 %v1710
    %v3238 = vunpack.c.h.b16 %v1710
    %v3239 = vunpack.c.l.b16 %v1711
    %v3240 = vunpack.c.h.b16 %v1711
    %v3241 = vunpack.c.l.b16 %v1712
    %v3242 = vunpack.c.h.b16 %v1712
    %v3243 = vunpack.c.l.b16 %v1713
    %v3244 = vunpack.c.h.b16 %v1713
    %v3245 = vunpack.c.l.b16 %v1714
    %v3246 = vunpack.c.h.b16 %v1714
    %v3247 = vunpack.c.l.b16 %v1715
    %v3248 = vunpack.c.h.b16 %v1715
    %v3249 = vunpack.c.l.b16 %v1716
    %v3250 = vunpack.c.h.b16 %v1716
    %v3251 = vunpack.c.l.b16 %v1717
    %v3252 = vunpack.c.h.b16 %v1717
    %v3253 = vunpack.c.l.b16 %v1718
    %v3254 = vunpack.c.h.b16 %v1718
    %v3255 = vunpack.c.l.b16 %v1719
    %v3256 = vunpack.c.h.b16 %v1719
    %v3257 = vunpack.c.l.b16 %v1720
    %v3258 = vunpack.c.h.b16 %v1720
    %v3259 = vunpack.c.l.b16 %v1721
    %v3260 = vunpack.c.h.b16 %v1721
    %v3261 = vunpack.c.l.b16 %v1722
    %v3262 = vunpack.c.h.b16 %v1722
    %v3263 = vunpack.c.l.b16 %v1723
    %v3264 = vunpack.c.h.b16 %v1723
    %v3265 = vunpack.c.l.b16 %v1724
    %v3266 = vunpack.c.h.b16 %v1724
    %v3267 = vunpack.c.l.b16 %v1725
    %v3268 = vunpack.c.h.b16 %v1725
    %v3269 = vunpack.c.l.b16 %v1726
    %v3270 = vunpack.c.h.b16 %v1726
    %v3271 = vunpack.c.l.b16 %v1727
    %v3272 = vunpack.c.h.b16 %v1727
    %v3273 = vunpack.c.l.b16 %v1728
    %v3274 = vunpack.c.h.b16 %v1728
    %v3275 = vpack.c.b16 %v2255, %v2251
    %v3276 = vpack.c.b16 %v2256, %v2252
    %v3277 = vpack.c.b16 %v2257, %v2253
    %v3278 = vpack.c.b16 %v2258, %v2254
    %v3279 = vpack.c.b16 %v2263, %v2259
    %v3280 = vpack.c.b16 %v2264, %v2260
    %v3281 = vpack.c.b16 %v2265, %v2261
    %v3282 = vpack.c.b16 %v2266, %v2262
    %v3283 = vpack.c.b16 %v2271, %v2267
    %v3284 = vpack.c.b16 %v2272, %v2268
    %v3285 = vpack.c.b16 %v2273, %v2269
    %v3286 = vpack.c.b16 %v2274, %v2270
    %v3287 = vpack.c.b16 %v2279, %v2275
    %v3288 = vpack.c.b16 %v2280, %v2276
    %v3289 = vpack.c.b16 %v2281, %v2277
    %v3290 = vpack.c.b16 %v2282, %v2278
    %v3291 = vpack.c.b16 %v2287, %v2283
    %v3292 = vpack.c.b16 %v2288, %v2284
    %v3293 = vpack.c.b16 %v2289, %v2285
    %v3294 = vpack.c.b16 %v2290, %v2286
    %v3295 = vpack.c.b16 %v2295, %v2291
    %v3296 = vpack.c.b16 %v2296, %v2292
    %v3297 = vpack.c.b16 %v2297, %v2293
    %v3298 = vpack.c.b16 %v2298, %v2294
    %v3299 = vpack.c.b16 %v2303, %v2299
    %v3300 = vpack.c.b16 %v2304, %v2300
    %v3301 = vpack.c.b16 %v2305, %v2301
    %v3302 = vpack.c.b16 %v2306, %v2302
    %v3303 = vpack.c.b16 %v2311, %v2307
    %v3304 = vpack.c.b16 %v2312, %v2308
    %v3305 = vpack.c.b16 %v2313, %v2309
    %v3306 = vpack.c.b16 %v2314, %v2310
    %v3307 = vpack.c.b16 %v2319, %v2315
    %v3308 = vpack.c.b16 %v2320, %v2316
    %v3309 = vpack.c.b16 %v2321, %v2317
    %v3310 = vpack.c.b16 %v2322, %v2318
    %v3311 = vpack.c.b16 %v2327, %v2323
    %v3312 = vpack.c.b16 %v2328, %v2324
    %v3313 = vpack.c.b16 %v2329, %v2325
    %v3314 = vpack.c.b16 %v2330, %v2326
    %v3315 = vpack.c.b16 %v2335, %v2331
    %v3316 = vpack.c.b16 %v2336, %v2332
    %v3317 = vpack.c.b16 %v2337, %v2333
    %v3318 = vpack.c.b16 %v2338, %v2334
    %v3319 = vpack.c.b16 %v2343, %v2339
    %v3320 = vpack.c.b16 %v2344, %v2340
    %v3321 = vpack.c.b16 %v2345, %v2341
    %v3322 = vpack.c.b16 %v2346, %v2342
    %v3323 = vpack.c.b16 %v2351, %v2347
    %v3324 = vpack.c.b16 %v2352, %v2348
    %v3325 = vpack.c.b16 %v2353, %v2349
    %v3326 = vpack.c.b16 %v2354, %v2350
    %v3327 = vpack.c.b16 %v2359, %v2355
    %v3328 = vpack.c.b16 %v2360, %v2356
    %v3329 = vpack.c.b16 %v2361, %v2357
    %v3330 = vpack.c.b16 %v2362, %v2358
    %v3331 = vpack.c.b16 %v2367, %v2363
    %v3332 = vpack.c.b16 %v2368, %v2364
    %v3333 = vpack.c.b16 %v2369, %v2365
    %v3334 = vpack.c.b16 %v2370, %v2366
    %v3335 = vpack.c.b16 %v2375, %v2371
    %v3336 = vpack.c.b16 %v2376, %v2372
    %v3337 = vpack.c.b16 %v2377, %v2373
    %v3338 = vpack.c.b16 %v2378, %v2374
    %v3339 = vpack.c.b16 %v2383, %v2379
    %v3340 = vpack.c.b16 %v2384, %v2380
    %v3341 = vpack.c.b16 %v2385, %v2381
    %v3342 = vpack.c.b16 %v2386, %v2382
    %v3343 = vpack.c.b16 %v2391, %v2387
    %v3344 = vpack.c.b16 %v2392, %v2388
    %v3345 = vpack.c.b16 %v2393, %v2389
    %v3346 = vpack.c.b16 %v2394, %v2390
    %v3347 = vpack.c.b16 %v2399, %v2395
    %v3348 = vpack.c.b16 %v2400, %v2396
    %v3349 = vpack.c.b16 %v2401, %v2397
    %v3350 = vpack.c.b16 %v2402, %v2398
    %v3351 = vpack.c.b16 %v2407, %v2403
    %v3352 = vpack.c.b16 %v2408, %v2404
    %v3353 = vpack.c.b16 %v2409, %v2405
    %v3354 = vpack.c.b16 %v2410, %v2406
    %v3355 = vpack.c.b16 %v2415, %v2411
    %v3356 = vpack.c.b16 %v2416, %v2412
    %v3357 = vpack.c.b16 %v2417, %v2413
    %v3358 = vpack.c.b16 %v2418, %v2414
    %v3359 = vpack.c.b16 %v2423, %v2419
    %v3360 = vpack.c.b16 %v2424, %v2420
    %v3361 = vpack.c.b16 %v2425, %v2421
    %v3362 = vpack.c.b16 %v2426, %v2422
    %v3363 = vpack.c.b16 %v2431, %v2427
    %v3364 = vpack.c.b16 %v2432, %v2428
    %v3365 = vpack.c.b16 %v2433, %v2429
    %v3366 = vpack.c.b16 %v2434, %v2430
    %v3367 = vpack.c.b16 %v2439, %v2435
    %v3368 = vpack.c.b16 %v2440, %v2436
    %v3369 = vpack.c.b16 %v2441, %v2437
    %v3370 = vpack.c.b16 %v2442, %v2438
    %v3371 = vpack.c.b16 %v2447, %v2443
    %v3372 = vpack.c.b16 %v2448, %v2444
    %v3373 = vpack.c.b16 %v2449, %v2445
    %v3374 = vpack.c.b16 %v2450, %v2446
    %v3375 = vpack.c.b16 %v2455, %v2451
    %v3376 = vpack.c.b16 %v2456, %v2452
    %v3377 = vpack.c.b16 %v2457, %v2453
    %v3378 = vpack.c.b16 %v2458, %v2454
    %v3379 = vpack.c.b16 %v2463, %v2459
    %v3380 = vpack.c.b16 %v2464, %v2460
    %v3381 = vpack.c.b16 %v2465, %v2461
    %v3382 = vpack.c.b16 %v2466, %v2462
    %v3383 = vpack.c.b16 %v2471, %v2467
    %v3384 = vpack.c.b16 %v2472, %v2468
    %v3385 = vpack.c.b16 %v2473, %v2469
    %v3386 = vpack.c.b16 %v2474, %v2470
    %v3387 = vpack.c.b16 %v2479, %v2475
    %v3388 = vpack.c.b16 %v2480, %v2476
    %v3389 = vpack.c.b16 %v2481, %v2477
    %v3390 = vpack.c.b16 %v2482, %v2478
    %v3391 = vpack.c.b16 %v2487, %v2483
    %v3392 = vpack.c.b16 %v2488, %v2484
    %v3393 = vpack.c.b16 %v2489, %v2485
    %v3394 = vpack.c.b16 %v2490, %v2486
    %v3395 = vpack.c.b16 %v2495, %v2491
    %v3396 = vpack.c.b16 %v2496, %v2492
    %v3397 = vpack.c.b16 %v2497, %v2493
    %v3398 = vpack.c.b16 %v2498, %v2494
    %v3399 = vpack.c.b16 %v2503, %v2499
    %v3400 = vpack.c.b16 %v2504, %v2500
    %v3401 = vpack.c.b16 %v2505, %v2501
    %v3402 = vpack.c.b16 %v2506, %v2502
    %v3403 = vpack.c.b16 %v2511, %v2507
    %v3404 = vpack.c.b16 %v2512, %v2508
    %v3405 = vpack.c.b16 %v2513, %v2509
    %v3406 = vpack.c.b16 %v2514, %v2510
    %v3407 = vpack.c.b16 %v2519, %v2515
    %v3408 = vpack.c.b16 %v2520, %v2516
    %v3409 = vpack.c.b16 %v2521, %v2517
    %v3410 = vpack.c.b16 %v2522, %v2518
    %v3411 = vpack.c.b16 %v2527, %v2523
    %v3412 = vpack.c.b16 %v2528, %v2524
    %v3413 = vpack.c.b16 %v2529, %v2525
    %v3414 = vpack.c.b16 %v2530, %v2526
    %v3415 = vpack.c.b16 %v2535, %v2531
    %v3416 = vpack.c.b16 %v2536, %v2532
    %v3417 = vpack.c.b16 %v2537, %v2533
    %v3418 = vpack.c.b16 %v2538, %v2534
    %v3419 = vpack.c.b16 %v2543, %v2539
    %v3420 = vpack.c.b16 %v2544, %v2540
    %v3421 = vpack.c.b16 %v2545, %v2541
    %v3422 = vpack.c.b16 %v2546, %v2542
    %v3423 = vpack.c.b16 %v2551, %v2547
    %v3424 = vpack.c.b16 %v2552, %v2548
    %v3425 = vpack.c.b16 %v2553, %v2549
    %v3426 = vpack.c.b16 %v2554, %v2550
    %v3427 = vpack.c.b16 %v2559, %v2555
    %v3428 = vpack.c.b16 %v2560, %v2556
    %v3429 = vpack.c.b16 %v2561, %v2557
    %v3430 = vpack.c.b16 %v2562, %v2558
    %v3431 = vpack.c.b16 %v2567, %v2563
    %v3432 = vpack.c.b16 %v2568, %v2564
    %v3433 = vpack.c.b16 %v2569, %v2565
    %v3434 = vpack.c.b16 %v2570, %v2566
    %v3435 = vpack.c.b16 %v2575, %v2571
    %v3436 = vpack.c.b16 %v2576, %v2572
    %v3437 = vpack.c.b16 %v2577, %v2573
    %v3438 = vpack.c.b16 %v2578, %v2574
    %v3439 = vpack.c.b16 %v2583, %v2579
    %v3440 = vpack.c.b16 %v2584, %v2580
    %v3441 = vpack.c.b16 %v2585, %v2581
    %v3442 = vpack.c.b16 %v2586, %v2582
    %v3443 = vpack.c.b16 %v2591, %v2587
    %v3444 = vpack.c.b16 %v2592, %v2588
    %v3445 = vpack.c.b16 %v2593, %v2589
    %v3446 = vpack.c.b16 %v2594, %v2590
    %v3447 = vpack.c.b16 %v2599, %v2595
    %v3448 = vpack.c.b16 %v2600, %v2596
    %v3449 = vpack.c.b16 %v2601, %v2597
    %v3450 = vpack.c.b16 %v2602, %v2598
    %v3451 = vpack.c.b16 %v2607, %v2603
    %v3452 = vpack.c.b16 %v2608, %v2604
    %v3453 = vpack.c.b16 %v2609, %v2605
    %v3454 = vpack.c.b16 %v2610, %v2606
    %v3455 = vpack.c.b16 %v2615, %v2611
    %v3456 = vpack.c.b16 %v2616, %v2612
    %v3457 = vpack.c.b16 %v2617, %v2613
    %v3458 = vpack.c.b16 %v2618, %v2614
    %v3459 = vpack.c.b16 %v2623, %v2619
    %v3460 = vpack.c.b16 %v2624, %v2620
    %v3461 = vpack.c.b16 %v2625, %v2621
    %v3462 = vpack.c.b16 %v2626, %v2622
    %v3463 = vpack.c.b16 %v2631, %v2627
    %v3464 = vpack.c.b16 %v2632, %v2628
    %v3465 = vpack.c.b16 %v2633, %v2629
    %v3466 = vpack.c.b16 %v2634, %v2630
    %v3467 = vpack.c.b16 %v2639, %v2635
    %v3468 = vpack.c.b16 %v2640, %v2636
    %v3469 = vpack.c.b16 %v2641, %v2637
    %v3470 = vpack.c.b16 %v2642, %v2638
    %v3471 = vpack.c.b16 %v2647, %v2643
    %v3472 = vpack.c.b16 %v2648, %v2644
    %v3473 = vpack.c.b16 %v2649, %v2645
    %v3474 = vpack.c.b16 %v2650, %v2646
    %v3475 = vpack.c.b16 %v2655, %v2651
    %v3476 = vpack.c.b16 %v2656, %v2652
    %v3477 = vpack.c.b16 %v2657, %v2653
    %v3478 = vpack.c.b16 %v2658, %v2654
    %v3479 = vpack.c.b16 %v2663, %v2659
    %v3480 = vpack.c.b16 %v2664, %v2660
    %v3481 = vpack.c.b16 %v2665, %v2661
    %v3482 = vpack.c.b16 %v2666, %v2662
    %v3483 = vpack.c.b16 %v2671, %v2667
    %v3484 = vpack.c.b16 %v2672, %v2668
    %v3485 = vpack.c.b16 %v2673, %v2669
    %v3486 = vpack.c.b16 %v2674, %v2670
    %v3487 = vpack.c.b16 %v2679, %v2675
    %v3488 = vpack.c.b16 %v2680, %v2676
    %v3489 = vpack.c.b16 %v2681, %v2677
    %v3490 = vpack.c.b16 %v2682, %v2678
    %v3491 = vpack.c.b16 %v2687, %v2683
    %v3492 = vpack.c.b16 %v2688, %v2684
    %v3493 = vpack.c.b16 %v2689, %v2685
    %v3494 = vpack.c.b16 %v2690, %v2686
    %v3495 = vpack.c.b16 %v2695, %v2691
    %v3496 = vpack.c.b16 %v2696, %v2692
    %v3497 = vpack.c.b16 %v2697, %v2693
    %v3498 = vpack.c.b16 %v2698, %v2694
    %v3499 = vpack.c.b16 %v2703, %v2699
    %v3500 = vpack.c.b16 %v2704, %v2700
    %v3501 = vpack.c.b16 %v2705, %v2701
    %v3502 = vpack.c.b16 %v2706, %v2702
    %v3503 = vpack.c.b16 %v2711, %v2707
    %v3504 = vpack.c.b16 %v2712, %v2708
    %v3505 = vpack.c.b16 %v2713, %v2709
    %v3506 = vpack.c.b16 %v2714, %v2710
    %v3507 = vpack.c.b16 %v2719, %v2715
    %v3508 = vpack.c.b16 %v2720, %v2716
    %v3509 = vpack.c.b16 %v2721, %v2717
    %v3510 = vpack.c.b16 %v2722, %v2718
    %v3511 = vpack.c.b16 %v2727, %v2723
    %v3512 = vpack.c.b16 %v2728, %v2724
    %v3513 = vpack.c.b16 %v2729, %v2725
    %v3514 = vpack.c.b16 %v2730, %v2726
    %v3515 = vpack.c.b16 %v2735, %v2731
    %v3516 = vpack.c.b16 %v2736, %v2732
    %v3517 = vpack.c.b16 %v2737, %v2733
    %v3518 = vpack.c.b16 %v2738, %v2734
    %v3519 = vpack.c.b16 %v2743, %v2739
    %v3520 = vpack.c.b16 %v2744, %v2740
    %v3521 = vpack.c.b16 %v2745, %v2741
    %v3522 = vpack.c.b16 %v2746, %v2742
    %v3523 = vpack.c.b16 %v2751, %v2747
    %v3524 = vpack.c.b16 %v2752, %v2748
    %v3525 = vpack.c.b16 %v2753, %v2749
    %v3526 = vpack.c.b16 %v2754, %v2750
    %v3527 = vpack.c.b16 %v2759, %v2755
    %v3528 = vpack.c.b16 %v2760, %v2756
    %v3529 = vpack.c.b16 %v2761, %v2757
    %v3530 = vpack.c.b16 %v2762, %v2758
    %v3531 = vpack.c.b16 %v2767, %v2763
    %v3532 = vpack.c.b16 %v2768, %v2764
    %v3533 = vpack.c.b16 %v2769, %v2765
    %v3534 = vpack.c.b16 %v2770, %v2766
    %v3535 = vpack.c.b16 %v2775, %v2771
    %v3536 = vpack.c.b16 %v2776, %v2772
    %v3537 = vpack.c.b16 %v2777, %v2773
    %v3538 = vpack.c.b16 %v2778, %v2774
    %v3539 = vpack.c.b16 %v2783, %v2779
    %v3540 = vpack.c.b16 %v2784, %v2780
    %v3541 = vpack.c.b16 %v2785, %v2781
    %v3542 = vpack.c.b16 %v2786, %v2782
    %v3543 = vpack.c.b16 %v2791, %v2787
    %v3544 = vpack.c.b16 %v2792, %v2788
    %v3545 = vpack.c.b16 %v2793, %v2789
    %v3546 = vpack.c.b16 %v2794, %v2790
    %v3547 = vpack.c.b16 %v2799, %v2795
    %v3548 = vpack.c.b16 %v2800, %v2796
    %v3549 = vpack.c.b16 %v2801, %v2797
    %v3550 = vpack.c.b16 %v2802, %v2798
    %v3551 = vpack.c.b16 %v2807, %v2803
    %v3552 = vpack.c.b16 %v2808, %v2804
    %v3553 = vpack.c.b16 %v2809, %v2805
    %v3554 = vpack.c.b16 %v2810, %v2806
    %v3555 = vpack.c.b16 %v2815, %v2811
    %v3556 = vpack.c.b16 %v2816, %v2812
    %v3557 = vpack.c.b16 %v2817, %v2813
    %v3558 = vpack.c.b16 %v2818, %v2814
    %v3559 = vpack.c.b16 %v2823, %v2819
    %v3560 = vpack.c.b16 %v2824, %v2820
    %v3561 = vpack.c.b16 %v2825, %v2821
    %v3562 = vpack.c.b16 %v2826, %v2822
    %v3563 = vpack.c.b16 %v2831, %v2827
    %v3564 = vpack.c.b16 %v2832, %v2828
    %v3565 = vpack.c.b16 %v2833, %v2829
    %v3566 = vpack.c.b16 %v2834, %v2830
    %v3567 = vpack.c.b16 %v2839, %v2835
    %v3568 = vpack.c.b16 %v2840, %v2836
    %v3569 = vpack.c.b16 %v2841, %v2837
    %v3570 = vpack.c.b16 %v2842, %v2838
    %v3571 = vpack.c.b16 %v2847, %v2843
    %v3572 = vpack.c.b16 %v2848, %v2844
    %v3573 = vpack.c.b16 %v2849, %v2845
    %v3574 = vpack.c.b16 %v2850, %v2846
    %v3575 = vpack.c.b16 %v2855, %v2851
    %v3576 = vpack.c.b16 %v2856, %v2852
    %v3577 = vpack.c.b16 %v2857, %v2853
    %v3578 = vpack.c.b16 %v2858, %v2854
    %v3579 = vpack.c.b16 %v2863, %v2859
    %v3580 = vpack.c.b16 %v2864, %v2860
    %v3581 = vpack.c.b16 %v2865, %v2861
    %v3582 = vpack.c.b16 %v2866, %v2862
    %v3583 = vpack.c.b16 %v2871, %v2867
    %v3584 = vpack.c.b16 %v2872, %v2868
    %v3585 = vpack.c.b16 %v2873, %v2869
    %v3586 = vpack.c.b16 %v2874, %v2870
    %v3587 = vpack.c.b16 %v2879, %v2875
    %v3588 = vpack.c.b16 %v2880, %v2876
    %v3589 = vpack.c.b16 %v2881, %v2877
    %v3590 = vpack.c.b16 %v2882, %v2878
    %v3591 = vpack.c.b16 %v2887, %v2883
    %v3592 = vpack.c.b16 %v2888, %v2884
    %v3593 = vpack.c.b16 %v2889, %v2885
    %v3594 = vpack.c.b16 %v2890, %v2886
    %v3595 = vpack.c.b16 %v2895, %v2891
    %v3596 = vpack.c.b16 %v2896, %v2892
    %v3597 = vpack.c.b16 %v2897, %v2893
    %v3598 = vpack.c.b16 %v2898, %v2894
    %v3599 = vpack.c.b16 %v2903, %v2899
    %v3600 = vpack.c.b16 %v2904, %v2900
    %v3601 = vpack.c.b16 %v2905, %v2901
    %v3602 = vpack.c.b16 %v2906, %v2902
    %v3603 = vpack.c.b16 %v2911, %v2907
    %v3604 = vpack.c.b16 %v2912, %v2908
    %v3605 = vpack.c.b16 %v2913, %v2909
    %v3606 = vpack.c.b16 %v2914, %v2910
    %v3607 = vpack.c.b16 %v2919, %v2915
    %v3608 = vpack.c.b16 %v2920, %v2916
    %v3609 = vpack.c.b16 %v2921, %v2917
    %v3610 = vpack.c.b16 %v2922, %v2918
    %v3611 = vpack.c.b16 %v2927, %v2923
    %v3612 = vpack.c.b16 %v2928, %v2924
    %v3613 = vpack.c.b16 %v2929, %v2925
    %v3614 = vpack.c.b16 %v2930, %v2926
    %v3615 = vpack.c.b16 %v2935, %v2931
    %v3616 = vpack.c.b16 %v2936, %v2932
    %v3617 = vpack.c.b16 %v2937, %v2933
    %v3618 = vpack.c.b16 %v2938, %v2934
    %v3619 = vpack.c.b16 %v2943, %v2939
    %v3620 = vpack.c.b16 %v2944, %v2940
    %v3621 = vpack.c.b16 %v2945, %v2941
    %v3622 = vpack.c.b16 %v2946, %v2942
    %v3623 = vpack.c.b16 %v2951, %v2947
    %v3624 = vpack.c.b16 %v2952, %v2948
    %v3625 = vpack.c.b16 %v2953, %v2949
    %v3626 = vpack.c.b16 %v2954, %v2950
    %v3627 = vpack.c.b16 %v2959, %v2955
    %v3628 = vpack.c.b16 %v2960, %v2956
    %v3629 = vpack.c.b16 %v2961, %v2957
    %v3630 = vpack.c.b16 %v2962, %v2958
    %v3631 = vpack.c.b16 %v2967, %v2963
    %v3632 = vpack.c.b16 %v2968, %v2964
    %v3633 = vpack.c.b16 %v2969, %v2965
    %v3634 = vpack.c.b16 %v2970, %v2966
    %v3635 = vpack.c.b16 %v2975, %v2971
    %v3636 = vpack.c.b16 %v2976, %v2972
    %v3637 = vpack.c.b16 %v2977, %v2973
    %v3638 = vpack.c.b16 %v2978, %v2974
    %v3639 = vpack.c.b16 %v2983, %v2979
    %v3640 = vpack.c.b16 %v2984, %v2980
    %v3641 = vpack.c.b16 %v2985, %v2981
    %v3642 = vpack.c.b16 %v2986, %v2982
    %v3643 = vpack.c.b16 %v2991, %v2987
    %v3644 = vpack.c.b16 %v2992, %v2988
    %v3645 = vpack.c.b16 %v2993, %v2989
    %v3646 = vpack.c.b16 %v2994, %v2990
    %v3647 = vpack.c.b16 %v2999, %v2995
    %v3648 = vpack.c.b16 %v3000, %v2996
    %v3649 = vpack.c.b16 %v3001, %v2997
    %v3650 = vpack.c.b16 %v3002, %v2998
    %v3651 = vpack.c.b16 %v3007, %v3003
    %v3652 = vpack.c.b16 %v3008, %v3004
    %v3653 = vpack.c.b16 %v3009, %v3005
    %v3654 = vpack.c.b16 %v3010, %v3006
    %v3655 = vpack.c.b16 %v3015, %v3011
    %v3656 = vpack.c.b16 %v3016, %v3012
    %v3657 = vpack.c.b16 %v3017, %v3013
    %v3658 = vpack.c.b16 %v3018, %v3014
    %v3659 = vpack.c.b16 %v3023, %v3019
    %v3660 = vpack.c.b16 %v3024, %v3020
    %v3661 = vpack.c.b16 %v3025, %v3021
    %v3662 = vpack.c.b16 %v3026, %v3022
    %v3663 = vpack.c.b16 %v3031, %v3027
    %v3664 = vpack.c.b16 %v3032, %v3028
    %v3665 = vpack.c.b16 %v3033, %v3029
    %v3666 = vpack.c.b16 %v3034, %v3030
    %v3667 = vpack.c.b16 %v3039, %v3035
    %v3668 = vpack.c.b16 %v3040, %v3036
    %v3669 = vpack.c.b16 %v3041, %v3037
    %v3670 = vpack.c.b16 %v3042, %v3038
    %v3671 = vpack.c.b16 %v3047, %v3043
    %v3672 = vpack.c.b16 %v3048, %v3044
    %v3673 = vpack.c.b16 %v3049, %v3045
    %v3674 = vpack.c.b16 %v3050, %v3046
    %v3675 = vpack.c.b16 %v3055, %v3051
    %v3676 = vpack.c.b16 %v3056, %v3052
    %v3677 = vpack.c.b16 %v3057, %v3053
    %v3678 = vpack.c.b16 %v3058, %v3054
    %v3679 = vpack.c.b16 %v3063, %v3059
    %v3680 = vpack.c.b16 %v3064, %v3060
    %v3681 = vpack.c.b16 %v3065, %v3061
    %v3682 = vpack.c.b16 %v3066, %v3062
    %v3683 = vpack.c.b16 %v3071, %v3067
    %v3684 = vpack.c.b16 %v3072, %v3068
    %v3685 = vpack.c.b16 %v3073, %v3069
    %v3686 = vpack.c.b16 %v3074, %v3070
    %v3687 = vpack.c.b16 %v3079, %v3075
    %v3688 = vpack.c.b16 %v3080, %v3076
    %v3689 = vpack.c.b16 %v3081, %v3077
    %v3690 = vpack.c.b16 %v3082, %v3078
    %v3691 = vpack.c.b16 %v3087, %v3083
    %v3692 = vpack.c.b16 %v3088, %v3084
    %v3693 = vpack.c.b16 %v3089, %v3085
    %v3694 = vpack.c.b16 %v3090, %v3086
    %v3695 = vpack.c.b16 %v3095, %v3091
    %v3696 = vpack.c.b16 %v3096, %v3092
    %v3697 = vpack.c.b16 %v3097, %v3093
    %v3698 = vpack.c.b16 %v3098, %v3094
    %v3699 = vpack.c.b16 %v3103, %v3099
    %v3700 = vpack.c.b16 %v3104, %v3100
    %v3701 = vpack.c.b16 %v3105, %v3101
    %v3702 = vpack.c.b16 %v3106, %v3102
    %v3703 = vpack.c.b16 %v3111, %v3107
    %v3704 = vpack.c.b16 %v3112, %v3108
    %v3705 = vpack.c.b16 %v3113, %v3109
    %v3706 = vpack.c.b16 %v3114, %v3110
    %v3707 = vpack.c.b16 %v3119, %v3115
    %v3708 = vpack.c.b16 %v3120, %v3116
    %v3709 = vpack.c.b16 %v3121, %v3117
    %v3710 = vpack.c.b16 %v3122, %v3118
    %v3711 = vpack.c.b16 %v3127, %v3123
    %v3712 = vpack.c.b16 %v3128, %v3124
    %v3713 = vpack.c.b16 %v3129, %v3125
    %v3714 = vpack.c.b16 %v3130, %v3126
    %v3715 = vpack.c.b16 %v3135, %v3131
    %v3716 = vpack.c.b16 %v3136, %v3132
    %v3717 = vpack.c.b16 %v3137, %v3133
    %v3718 = vpack.c.b16 %v3138, %v3134
    %v3719 = vpack.c.b16 %v3143, %v3139
    %v3720 = vpack.c.b16 %v3144, %v3140
    %v3721 = vpack.c.b16 %v3145, %v3141
    %v3722 = vpack.c.b16 %v3146, %v3142
    %v3723 = vpack.c.b16 %v3151, %v3147
    %v3724 = vpack.c.b16 %v3152, %v3148
    %v3725 = vpack.c.b16 %v3153, %v3149
    %v3726 = vpack.c.b16 %v3154, %v3150
    %v3727 = vpack.c.b16 %v3159, %v3155
    %v3728 = vpack.c.b16 %v3160, %v3156
    %v3729 = vpack.c.b16 %v3161, %v3157
    %v3730 = vpack.c.b16 %v3162, %v3158
    %v3731 = vpack.c.b16 %v3167, %v3163
    %v3732 = vpack.c.b16 %v3168, %v3164
    %v3733 = vpack.c.b16 %v3169, %v3165
    %v3734 = vpack.c.b16 %v3170, %v3166
    %v3735 = vpack.c.b16 %v3175, %v3171
    %v3736 = vpack.c.b16 %v3176, %v3172
    %v3737 = vpack.c.b16 %v3177, %v3173
    %v3738 = vpack.c.b16 %v3178, %v3174
    %v3739 = vpack.c.b16 %v3183, %v3179
    %v3740 = vpack.c.b16 %v3184, %v3180
    %v3741 = vpack.c.b16 %v3185, %v3181
    %v3742 = vpack.c.b16 %v3186, %v3182
    %v3743 = vpack.c.b16 %v3191, %v3187
    %v3744 = vpack.c.b16 %v3192, %v3188
    %v3745 = vpack.c.b16 %v3193, %v3189
    %v3746 = vpack.c.b16 %v3194, %v3190
    %v3747 = vpack.c.b16 %v3199, %v3195
    %v3748 = vpack.c.b16 %v3200, %v3196
    %v3749 = vpack.c.b16 %v3201, %v3197
    %v3750 = vpack.c.b16 %v3202, %v3198
    %v3751 = vpack.c.b16 %v3207, %v3203
    %v3752 = vpack.c.b16 %v3208, %v3204
    %v3753 = vpack.c.b16 %v3209, %v3205
    %v3754 = vpack.c.b16 %v3210, %v3206
    %v3755 = vpack.c.b16 %v3215, %v3211
    %v3756 = vpack.c.b16 %v3216, %v3212
    %v3757 = vpack.c.b16 %v3217, %v3213
    %v3758 = vpack.c.b16 %v3218, %v3214
    %v3759 = vpack.c.b16 %v3223, %v3219
    %v3760 = vpack.c.b16 %v3224, %v3220
    %v3761 = vpack.c.b16 %v3225, %v3221
    %v3762 = vpack.c.b16 %v3226, %v3222
    %v3763 = vpack.c.b16 %v3231, %v3227
    %v3764 = vpack.c.b16 %v3232, %v3228
    %v3765 = vpack.c.b16 %v3233, %v3229
    %v3766 = vpack.c.b16 %v3234, %v3230
    %v3767 = vpack.c.b16 %v3239, %v3235
    %v3768 = vpack.c.b16 %v3240, %v3236
    %v3769 = vpack.c.b16 %v3241, %v3237
    %v3770 = vpack.c.b16 %v3242, %v3238
    %v3771 = vpack.c.b16 %v3247, %v3243
    %v3772 = vpack.c.b16 %v3248, %v3244
    %v3773 = vpack.c.b16 %v3249, %v3245
    %v3774 = vpack.c.b16 %v3250, %v3246
    %v3775 = vpack.c.b16 %v3255, %v3251
    %v3776 = vpack.c.b16 %v3256, %v3252
    %v3777 = vpack.c.b16 %v3257, %v3253
    %v3778 = vpack.c.b16 %v3258, %v3254
    %v3779 = vpack.c.b16 %v3263, %v3259
    %v3780 = vpack.c.b16 %v3264, %v3260
    %v3781 = vpack.c.b16 %v3265, %v3261
    %v3782 = vpack.c.b16 %v3266, %v3262
    %v3783 = vpack.c.b16 %v3271, %v3267
    %v3784 = vpack.c.b16 %v3272, %v3268
    %v3785 = vpack.c.b16 %v3273, %v3269
    %v3786 = vpack.c.b16 %v3274, %v3270
    %4299 = vmatpush.bf16.msra.mxu0 %v3303
    %4300 = vmatpush.bf16.msra.mxu0 %v3299
    %4301 = vmatpush.bf16.msra.mxu0 %v3295
    %4302 = vmatpush.bf16.msra.mxu0 %v3291
    %4303 = vmatpush.bf16.msra.mxu0 %v3287
    %4304 = vmatpush.bf16.msra.mxu0 %v3283
    %4305 = vmatpush.bf16.msra.mxu0 %v3279
    %4306 = vmatpush.bf16.msra.mxu0 %v3275
    %4307 = vmatmul.bf16.gmra.mxu0 %v1201
    %v4308 = vpop.f32.mrf.mxu0
    %v4309 = vadd.f32 %v1731, %v4308
    %v4310 = vpop.f32.mrf.mxu0
    %4311 = vdwg.mxu0
    %4312 = vmatpush.bf16.msra.mxu0 %v3335
    %4313 = vmatpush.bf16.msra.mxu0 %v3331
    %4314 = vmatpush.bf16.msra.mxu0 %v3327
    %4315 = vmatpush.bf16.msra.mxu0 %v3323
    %4316 = vmatpush.bf16.msra.mxu0 %v3319
    %4317 = vmatpush.bf16.msra.mxu0 %v3315
    %4318 = vmatpush.bf16.msra.mxu0 %v3311
    %4319 = vmatpush.bf16.msra.mxu0 %v3307
    %4320 = vmatmul.bf16.gmra.mxu0 %v1202
    %v4321 = vpop.f32.mrf.mxu0
    %v4322 = vadd.f32 %v4309, %v4321
    %v4323 = vpop.f32.mrf.mxu0
    %4324 = vdwg.mxu0
    %4325 = vmatpush.bf16.msra.mxu0 %v3367
    %4326 = vmatpush.bf16.msra.mxu0 %v3363
    %4327 = vmatpush.bf16.msra.mxu0 %v3359
    %4328 = vmatpush.bf16.msra.mxu0 %v3355
    %4329 = vmatpush.bf16.msra.mxu0 %v3351
    %4330 = vmatpush.bf16.msra.mxu0 %v3347
    %4331 = vmatpush.bf16.msra.mxu0 %v3343
    %4332 = vmatpush.bf16.msra.mxu0 %v3339
    %4333 = vmatmul.bf16.gmra.mxu0 %v1203
    %v4334 = vpop.f32.mrf.mxu0
    %v4335 = vadd.f32 %v4322, %v4334
    %v4336 = vpop.f32.mrf.mxu0
    %4337 = vdwg.mxu0
    %4338 = vmatpush.bf16.msra.mxu0 %v3399
    %4339 = vmatpush.bf16.msra.mxu0 %v3395
    %4340 = vmatpush.bf16.msra.mxu0 %v3391
    %4341 = vmatpush.bf16.msra.mxu0 %v3387
    %4342 = vmatpush.bf16.msra.mxu0 %v3383
    %4343 = vmatpush.bf16.msra.mxu0 %v3379
    %4344 = vmatpush.bf16.msra.mxu0 %v3375
    %4345 = vmatpush.bf16.msra.mxu0 %v3371
    %4346 = vmatmul.bf16.gmra.mxu0 %v1204
    %v4347 = vpop.f32.mrf.mxu0
    %v4348 = vadd.f32 %v4335, %v4347
    %v4349 = vpop.f32.mrf.mxu0
    %4350 = vdwg.mxu0
    %4351 = vmatpush.bf16.msra.mxu0 %v3431
    %4352 = vmatpush.bf16.msra.mxu0 %v3427
    %4353 = vmatpush.bf16.msra.mxu0 %v3423
    %4354 = vmatpush.bf16.msra.mxu0 %v3419
    %4355 = vmatpush.bf16.msra.mxu0 %v3415
    %4356 = vmatpush.bf16.msra.mxu0 %v3411
    %4357 = vmatpush.bf16.msra.mxu0 %v3407
    %4358 = vmatpush.bf16.msra.mxu0 %v3403
    %4359 = vmatmul.bf16.gmra.mxu0 %v1205
    %v4360 = vpop.f32.mrf.mxu0
    %v4361 = vadd.f32 %v4348, %v4360
    %v4362 = vpop.f32.mrf.mxu0
    %4363 = vdwg.mxu0
    %4364 = vmatpush.bf16.msra.mxu0 %v3463
    %4365 = vmatpush.bf16.msra.mxu0 %v3459
    %4366 = vmatpush.bf16.msra.mxu0 %v3455
    %4367 = vmatpush.bf16.msra.mxu0 %v3451
    %4368 = vmatpush.bf16.msra.mxu0 %v3447
    %4369 = vmatpush.bf16.msra.mxu0 %v3443
    %4370 = vmatpush.bf16.msra.mxu0 %v3439
    %4371 = vmatpush.bf16.msra.mxu0 %v3435
    %4372 = vmatmul.bf16.gmra.mxu0 %v1206
    %v4373 = vpop.f32.mrf.mxu0
    %v4374 = vadd.f32 %v4361, %v4373
    %v4375 = vpop.f32.mrf.mxu0
    %4376 = vdwg.mxu0
    %4377 = vmatpush.bf16.msra.mxu0 %v3495
    %4378 = vmatpush.bf16.msra.mxu0 %v3491
    %4379 = vmatpush.bf16.msra.mxu0 %v3487
    %4380 = vmatpush.bf16.msra.mxu0 %v3483
    %4381 = vmatpush.bf16.msra.mxu0 %v3479
    %4382 = vmatpush.bf16.msra.mxu0 %v3475
    %4383 = vmatpush.bf16.msra.mxu0 %v3471
    %4384 = vmatpush.bf16.msra.mxu0 %v3467
    %4385 = vmatmul.bf16.gmra.mxu0 %v1207
    %v4386 = vpop.f32.mrf.mxu0
    %v4387 = vadd.f32 %v4374, %v4386
    %v4388 = vpop.f32.mrf.mxu0
    %4389 = vdwg.mxu0
    %4390 = vmatpush.bf16.msra.mxu0 %v3527
    %4391 = vmatpush.bf16.msra.mxu0 %v3523
    %4392 = vmatpush.bf16.msra.mxu0 %v3519
    %4393 = vmatpush.bf16.msra.mxu0 %v3515
    %4394 = vmatpush.bf16.msra.mxu0 %v3511
    %4395 = vmatpush.bf16.msra.mxu0 %v3507
    %4396 = vmatpush.bf16.msra.mxu0 %v3503
    %4397 = vmatpush.bf16.msra.mxu0 %v3499
    %4398 = vmatmul.bf16.gmra.mxu0 %v1208
    %v4399 = vpop.f32.mrf.mxu0
    %v4400 = vadd.f32 %v4387, %v4399
    %v4401 = vpop.f32.mrf.mxu0
    %4402 = vdwg.mxu0
    %4403 = vmatpush.bf16.msra.mxu0 %v3559
    %4404 = vmatpush.bf16.msra.mxu0 %v3555
    %4405 = vmatpush.bf16.msra.mxu0 %v3551
    %4406 = vmatpush.bf16.msra.mxu0 %v3547
    %4407 = vmatpush.bf16.msra.mxu0 %v3543
    %4408 = vmatpush.bf16.msra.mxu0 %v3539
    %4409 = vmatpush.bf16.msra.mxu0 %v3535
    %4410 = vmatpush.bf16.msra.mxu0 %v3531
    %4411 = vmatmul.bf16.gmra.mxu0 %v1209
    %v4412 = vpop.f32.mrf.mxu0
    %v4413 = vadd.f32 %v4400, %v4412
    %v4414 = vpop.f32.mrf.mxu0
    %4415 = vdwg.mxu0
    %4416 = vmatpush.bf16.msra.mxu0 %v3591
    %4417 = vmatpush.bf16.msra.mxu0 %v3587
    %4418 = vmatpush.bf16.msra.mxu0 %v3583
    %4419 = vmatpush.bf16.msra.mxu0 %v3579
    %4420 = vmatpush.bf16.msra.mxu0 %v3575
    %4421 = vmatpush.bf16.msra.mxu0 %v3571
    %4422 = vmatpush.bf16.msra.mxu0 %v3567
    %4423 = vmatpush.bf16.msra.mxu0 %v3563
    %4424 = vmatmul.bf16.gmra.mxu0 %v1210
    %v4425 = vpop.f32.mrf.mxu0
    %v4426 = vadd.f32 %v4413, %v4425
    %v4427 = vpop.f32.mrf.mxu0
    %4428 = vdwg.mxu0
    %4429 = vmatpush.bf16.msra.mxu0 %v3623
    %4430 = vmatpush.bf16.msra.mxu0 %v3619
    %4431 = vmatpush.bf16.msra.mxu0 %v3615
    %4432 = vmatpush.bf16.msra.mxu0 %v3611
    %4433 = vmatpush.bf16.msra.mxu0 %v3607
    %4434 = vmatpush.bf16.msra.mxu0 %v3603
    %4435 = vmatpush.bf16.msra.mxu0 %v3599
    %4436 = vmatpush.bf16.msra.mxu0 %v3595
    %4437 = vmatmul.bf16.gmra.mxu0 %v1211
    %v4438 = vpop.f32.mrf.mxu0
    %v4439 = vadd.f32 %v4426, %v4438
    %v4440 = vpop.f32.mrf.mxu0
    %4441 = vdwg.mxu0
    %4442 = vmatpush.bf16.msra.mxu0 %v3655
    %4443 = vmatpush.bf16.msra.mxu0 %v3651
    %4444 = vmatpush.bf16.msra.mxu0 %v3647
    %4445 = vmatpush.bf16.msra.mxu0 %v3643
    %4446 = vmatpush.bf16.msra.mxu0 %v3639
    %4447 = vmatpush.bf16.msra.mxu0 %v3635
    %4448 = vmatpush.bf16.msra.mxu0 %v3631
    %4449 = vmatpush.bf16.msra.mxu0 %v3627
    %4450 = vmatmul.bf16.gmra.mxu0 %v1212
    %v4451 = vpop.f32.mrf.mxu0
    %v4452 = vadd.f32 %v4439, %v4451
    %v4453 = vpop.f32.mrf.mxu0
    %4454 = vdwg.mxu0
    %4455 = vmatpush.bf16.msra.mxu0 %v3687
    %4456 = vmatpush.bf16.msra.mxu0 %v3683
    %4457 = vmatpush.bf16.msra.mxu0 %v3679
    %4458 = vmatpush.bf16.msra.mxu0 %v3675
    %4459 = vmatpush.bf16.msra.mxu0 %v3671
    %4460 = vmatpush.bf16.msra.mxu0 %v3667
    %4461 = vmatpush.bf16.msra.mxu0 %v3663
    %4462 = vmatpush.bf16.msra.mxu0 %v3659
    %4463 = vmatmul.bf16.gmra.mxu0 %v1213
    %v4464 = vpop.f32.mrf.mxu0
    %v4465 = vadd.f32 %v4452, %v4464
    %v4466 = vpop.f32.mrf.mxu0
    %4467 = vdwg.mxu0
    %4468 = vmatpush.bf16.msra.mxu0 %v3719
    %4469 = vmatpush.bf16.msra.mxu0 %v3715
    %4470 = vmatpush.bf16.msra.mxu0 %v3711
    %4471 = vmatpush.bf16.msra.mxu0 %v3707
    %4472 = vmatpush.bf16.msra.mxu0 %v3703
    %4473 = vmatpush.bf16.msra.mxu0 %v3699
    %4474 = vmatpush.bf16.msra.mxu0 %v3695
    %4475 = vmatpush.bf16.msra.mxu0 %v3691
    %4476 = vmatmul.bf16.gmra.mxu0 %v1214
    %v4477 = vpop.f32.mrf.mxu0
    %v4478 = vadd.f32 %v4465, %v4477
    %v4479 = vpop.f32.mrf.mxu0
    %4480 = vdwg.mxu0
    %4481 = vmatpush.bf16.msra.mxu0 %v3751
    %4482 = vmatpush.bf16.msra.mxu0 %v3747
    %4483 = vmatpush.bf16.msra.mxu0 %v3743
    %4484 = vmatpush.bf16.msra.mxu0 %v3739
    %4485 = vmatpush.bf16.msra.mxu0 %v3735
    %4486 = vmatpush.bf16.msra.mxu0 %v3731
    %4487 = vmatpush.bf16.msra.mxu0 %v3727
    %4488 = vmatpush.bf16.msra.mxu0 %v3723
    %4489 = vmatmul.bf16.gmra.mxu0 %v1215
    %v4490 = vpop.f32.mrf.mxu0
    %v4491 = vadd.f32 %v4478, %v4490
    %v4492 = vpop.f32.mrf.mxu0
    %4493 = vdwg.mxu0
    %4494 = vmatpush.bf16.msra.mxu0 %v3783
    %4495 = vmatpush.bf16.msra.mxu0 %v3779
    %4496 = vmatpush.bf16.msra.mxu0 %v3775
    %4497 = vmatpush.bf16.msra.mxu0 %v3771
    %4498 = vmatpush.bf16.msra.mxu0 %v3767
    %4499 = vmatpush.bf16.msra.mxu0 %v3763
    %4500 = vmatpush.bf16.msra.mxu0 %v3759
    %4501 = vmatpush.bf16.msra.mxu0 %v3755
    %4502 = vmatmul.bf16.gmra.mxu0 %v1216
    %v4503 = vpop.f32.mrf.mxu0
    %v4504 = vadd.f32 %v4491, %v4503
    %v4505 = vpop.f32.mrf.mxu0
    %4506 = vdwg.mxu0
    %4507 = vmatpush.bf16.msra.mxu0 %v3304
    %4508 = vmatpush.bf16.msra.mxu0 %v3300
    %4509 = vmatpush.bf16.msra.mxu0 %v3296
    %4510 = vmatpush.bf16.msra.mxu0 %v3292
    %4511 = vmatpush.bf16.msra.mxu0 %v3288
    %4512 = vmatpush.bf16.msra.mxu0 %v3284
    %4513 = vmatpush.bf16.msra.mxu0 %v3280
    %4514 = vmatpush.bf16.msra.mxu0 %v3276
    %4515 = vmatmul.bf16.gmra.mxu0 %v1201
    %v4516 = vpop.f32.mrf.mxu0
    %v4517 = vadd.f32 %v1732, %v4516
    %v4518 = vpop.f32.mrf.mxu0
    %4519 = vdwg.mxu0
    %4520 = vmatpush.bf16.msra.mxu0 %v3336
    %4521 = vmatpush.bf16.msra.mxu0 %v3332
    %4522 = vmatpush.bf16.msra.mxu0 %v3328
    %4523 = vmatpush.bf16.msra.mxu0 %v3324
    %4524 = vmatpush.bf16.msra.mxu0 %v3320
    %4525 = vmatpush.bf16.msra.mxu0 %v3316
    %4526 = vmatpush.bf16.msra.mxu0 %v3312
    %4527 = vmatpush.bf16.msra.mxu0 %v3308
    %4528 = vmatmul.bf16.gmra.mxu0 %v1202
    %v4529 = vpop.f32.mrf.mxu0
    %v4530 = vadd.f32 %v4517, %v4529
    %v4531 = vpop.f32.mrf.mxu0
    %4532 = vdwg.mxu0
    %4533 = vmatpush.bf16.msra.mxu0 %v3368
    %4534 = vmatpush.bf16.msra.mxu0 %v3364
    %4535 = vmatpush.bf16.msra.mxu0 %v3360
    %4536 = vmatpush.bf16.msra.mxu0 %v3356
    %4537 = vmatpush.bf16.msra.mxu0 %v3352
    %4538 = vmatpush.bf16.msra.mxu0 %v3348
    %4539 = vmatpush.bf16.msra.mxu0 %v3344
    %4540 = vmatpush.bf16.msra.mxu0 %v3340
    %4541 = vmatmul.bf16.gmra.mxu0 %v1203
    %v4542 = vpop.f32.mrf.mxu0
    %v4543 = vadd.f32 %v4530, %v4542
    %v4544 = vpop.f32.mrf.mxu0
    %4545 = vdwg.mxu0
    %4546 = vmatpush.bf16.msra.mxu0 %v3400
    %4547 = vmatpush.bf16.msra.mxu0 %v3396
    %4548 = vmatpush.bf16.msra.mxu0 %v3392
    %4549 = vmatpush.bf16.msra.mxu0 %v3388
    %4550 = vmatpush.bf16.msra.mxu0 %v3384
    %4551 = vmatpush.bf16.msra.mxu0 %v3380
    %4552 = vmatpush.bf16.msra.mxu0 %v3376
    %4553 = vmatpush.bf16.msra.mxu0 %v3372
    %4554 = vmatmul.bf16.gmra.mxu0 %v1204
    %v4555 = vpop.f32.mrf.mxu0
    %v4556 = vadd.f32 %v4543, %v4555
    %v4557 = vpop.f32.mrf.mxu0
    %4558 = vdwg.mxu0
    %4559 = vmatpush.bf16.msra.mxu0 %v3432
    %4560 = vmatpush.bf16.msra.mxu0 %v3428
    %4561 = vmatpush.bf16.msra.mxu0 %v3424
    %4562 = vmatpush.bf16.msra.mxu0 %v3420
    %4563 = vmatpush.bf16.msra.mxu0 %v3416
    %4564 = vmatpush.bf16.msra.mxu0 %v3412
    %4565 = vmatpush.bf16.msra.mxu0 %v3408
    %4566 = vmatpush.bf16.msra.mxu0 %v3404
    %4567 = vmatmul.bf16.gmra.mxu0 %v1205
    %v4568 = vpop.f32.mrf.mxu0
    %v4569 = vadd.f32 %v4556, %v4568
    %v4570 = vpop.f32.mrf.mxu0
    %4571 = vdwg.mxu0
    %4572 = vmatpush.bf16.msra.mxu0 %v3464
    %4573 = vmatpush.bf16.msra.mxu0 %v3460
    %4574 = vmatpush.bf16.msra.mxu0 %v3456
    %4575 = vmatpush.bf16.msra.mxu0 %v3452
    %4576 = vmatpush.bf16.msra.mxu0 %v3448
    %4577 = vmatpush.bf16.msra.mxu0 %v3444
    %4578 = vmatpush.bf16.msra.mxu0 %v3440
    %4579 = vmatpush.bf16.msra.mxu0 %v3436
    %4580 = vmatmul.bf16.gmra.mxu0 %v1206
    %v4581 = vpop.f32.mrf.mxu0
    %v4582 = vadd.f32 %v4569, %v4581
    %v4583 = vpop.f32.mrf.mxu0
    %4584 = vdwg.mxu0
    %4585 = vmatpush.bf16.msra.mxu0 %v3496
    %4586 = vmatpush.bf16.msra.mxu0 %v3492
    %4587 = vmatpush.bf16.msra.mxu0 %v3488
    %4588 = vmatpush.bf16.msra.mxu0 %v3484
    %4589 = vmatpush.bf16.msra.mxu0 %v3480
    %4590 = vmatpush.bf16.msra.mxu0 %v3476
    %4591 = vmatpush.bf16.msra.mxu0 %v3472
    %4592 = vmatpush.bf16.msra.mxu0 %v3468
    %4593 = vmatmul.bf16.gmra.mxu0 %v1207
    %v4594 = vpop.f32.mrf.mxu0
    %v4595 = vadd.f32 %v4582, %v4594
    %v4596 = vpop.f32.mrf.mxu0
    %4597 = vdwg.mxu0
    %4598 = vmatpush.bf16.msra.mxu0 %v3528
    %4599 = vmatpush.bf16.msra.mxu0 %v3524
    %4600 = vmatpush.bf16.msra.mxu0 %v3520
    %4601 = vmatpush.bf16.msra.mxu0 %v3516
    %4602 = vmatpush.bf16.msra.mxu0 %v3512
    %4603 = vmatpush.bf16.msra.mxu0 %v3508
    %4604 = vmatpush.bf16.msra.mxu0 %v3504
    %4605 = vmatpush.bf16.msra.mxu0 %v3500
    %4606 = vmatmul.bf16.gmra.mxu0 %v1208
    %v4607 = vpop.f32.mrf.mxu0
    %v4608 = vadd.f32 %v4595, %v4607
    %v4609 = vpop.f32.mrf.mxu0
    %4610 = vdwg.mxu0
    %4611 = vmatpush.bf16.msra.mxu0 %v3560
    %4612 = vmatpush.bf16.msra.mxu0 %v3556
    %4613 = vmatpush.bf16.msra.mxu0 %v3552
    %4614 = vmatpush.bf16.msra.mxu0 %v3548
    %4615 = vmatpush.bf16.msra.mxu0 %v3544
    %4616 = vmatpush.bf16.msra.mxu0 %v3540
    %4617 = vmatpush.bf16.msra.mxu0 %v3536
    %4618 = vmatpush.bf16.msra.mxu0 %v3532
    %4619 = vmatmul.bf16.gmra.mxu0 %v1209
    %v4620 = vpop.f32.mrf.mxu0
    %v4621 = vadd.f32 %v4608, %v4620
    %v4622 = vpop.f32.mrf.mxu0
    %4623 = vdwg.mxu0
    %4624 = vmatpush.bf16.msra.mxu0 %v3592
    %4625 = vmatpush.bf16.msra.mxu0 %v3588
    %4626 = vmatpush.bf16.msra.mxu0 %v3584
    %4627 = vmatpush.bf16.msra.mxu0 %v3580
    %4628 = vmatpush.bf16.msra.mxu0 %v3576
    %4629 = vmatpush.bf16.msra.mxu0 %v3572
    %4630 = vmatpush.bf16.msra.mxu0 %v3568
    %4631 = vmatpush.bf16.msra.mxu0 %v3564
    %4632 = vmatmul.bf16.gmra.mxu0 %v1210
    %v4633 = vpop.f32.mrf.mxu0
    %v4634 = vadd.f32 %v4621, %v4633
    %v4635 = vpop.f32.mrf.mxu0
    %4636 = vdwg.mxu0
    %4637 = vmatpush.bf16.msra.mxu0 %v3624
    %4638 = vmatpush.bf16.msra.mxu0 %v3620
    %4639 = vmatpush.bf16.msra.mxu0 %v3616
    %4640 = vmatpush.bf16.msra.mxu0 %v3612
    %4641 = vmatpush.bf16.msra.mxu0 %v3608
    %4642 = vmatpush.bf16.msra.mxu0 %v3604
    %4643 = vmatpush.bf16.msra.mxu0 %v3600
    %4644 = vmatpush.bf16.msra.mxu0 %v3596
    %4645 = vmatmul.bf16.gmra.mxu0 %v1211
    %v4646 = vpop.f32.mrf.mxu0
    %v4647 = vadd.f32 %v4634, %v4646
    %v4648 = vpop.f32.mrf.mxu0
    %4649 = vdwg.mxu0
    %4650 = vmatpush.bf16.msra.mxu0 %v3656
    %4651 = vmatpush.bf16.msra.mxu0 %v3652
    %4652 = vmatpush.bf16.msra.mxu0 %v3648
    %4653 = vmatpush.bf16.msra.mxu0 %v3644
    %4654 = vmatpush.bf16.msra.mxu0 %v3640
    %4655 = vmatpush.bf16.msra.mxu0 %v3636
    %4656 = vmatpush.bf16.msra.mxu0 %v3632
    %4657 = vmatpush.bf16.msra.mxu0 %v3628
    %4658 = vmatmul.bf16.gmra.mxu0 %v1212
    %v4659 = vpop.f32.mrf.mxu0
    %v4660 = vadd.f32 %v4647, %v4659
    %v4661 = vpop.f32.mrf.mxu0
    %4662 = vdwg.mxu0
    %4663 = vmatpush.bf16.msra.mxu0 %v3688
    %4664 = vmatpush.bf16.msra.mxu0 %v3684
    %4665 = vmatpush.bf16.msra.mxu0 %v3680
    %4666 = vmatpush.bf16.msra.mxu0 %v3676
    %4667 = vmatpush.bf16.msra.mxu0 %v3672
    %4668 = vmatpush.bf16.msra.mxu0 %v3668
    %4669 = vmatpush.bf16.msra.mxu0 %v3664
    %4670 = vmatpush.bf16.msra.mxu0 %v3660
    %4671 = vmatmul.bf16.gmra.mxu0 %v1213
    %v4672 = vpop.f32.mrf.mxu0
    %v4673 = vadd.f32 %v4660, %v4672
    %v4674 = vpop.f32.mrf.mxu0
    %4675 = vdwg.mxu0
    %4676 = vmatpush.bf16.msra.mxu0 %v3720
    %4677 = vmatpush.bf16.msra.mxu0 %v3716
    %4678 = vmatpush.bf16.msra.mxu0 %v3712
    %4679 = vmatpush.bf16.msra.mxu0 %v3708
    %4680 = vmatpush.bf16.msra.mxu0 %v3704
    %4681 = vmatpush.bf16.msra.mxu0 %v3700
    %4682 = vmatpush.bf16.msra.mxu0 %v3696
    %4683 = vmatpush.bf16.msra.mxu0 %v3692
    %4684 = vmatmul.bf16.gmra.mxu0 %v1214
    %v4685 = vpop.f32.mrf.mxu0
    %v4686 = vadd.f32 %v4673, %v4685
    %v4687 = vpop.f32.mrf.mxu0
    %4688 = vdwg.mxu0
    %4689 = vmatpush.bf16.msra.mxu0 %v3752
    %4690 = vmatpush.bf16.msra.mxu0 %v3748
    %4691 = vmatpush.bf16.msra.mxu0 %v3744
    %4692 = vmatpush.bf16.msra.mxu0 %v3740
    %4693 = vmatpush.bf16.msra.mxu0 %v3736
    %4694 = vmatpush.bf16.msra.mxu0 %v3732
    %4695 = vmatpush.bf16.msra.mxu0 %v3728
    %4696 = vmatpush.bf16.msra.mxu0 %v3724
    %4697 = vmatmul.bf16.gmra.mxu0 %v1215
    %v4698 = vpop.f32.mrf.mxu0
    %v4699 = vadd.f32 %v4686, %v4698
    %v4700 = vpop.f32.mrf.mxu0
    %4701 = vdwg.mxu0
    %4702 = vmatpush.bf16.msra.mxu0 %v3784
    %4703 = vmatpush.bf16.msra.mxu0 %v3780
    %4704 = vmatpush.bf16.msra.mxu0 %v3776
    %4705 = vmatpush.bf16.msra.mxu0 %v3772
    %4706 = vmatpush.bf16.msra.mxu0 %v3768
    %4707 = vmatpush.bf16.msra.mxu0 %v3764
    %4708 = vmatpush.bf16.msra.mxu0 %v3760
    %4709 = vmatpush.bf16.msra.mxu0 %v3756
    %4710 = vmatmul.bf16.gmra.mxu0 %v1216
    %v4711 = vpop.f32.mrf.mxu0
    %v4712 = vadd.f32 %v4699, %v4711
    %v4713 = vpop.f32.mrf.mxu0
    %4714 = vdwg.mxu0
    %4715 = vmatpush.bf16.msra.mxu0 %v3305
    %4716 = vmatpush.bf16.msra.mxu0 %v3301
    %4717 = vmatpush.bf16.msra.mxu0 %v3297
    %4718 = vmatpush.bf16.msra.mxu0 %v3293
    %4719 = vmatpush.bf16.msra.mxu0 %v3289
    %4720 = vmatpush.bf16.msra.mxu0 %v3285
    %4721 = vmatpush.bf16.msra.mxu0 %v3281
    %4722 = vmatpush.bf16.msra.mxu0 %v3277
    %4723 = vmatmul.bf16.gmra.mxu0 %v1201
    %v4724 = vpop.f32.mrf.mxu0
    %v4725 = vadd.f32 %v1733, %v4724
    %v4726 = vpop.f32.mrf.mxu0
    %4727 = vdwg.mxu0
    %4728 = vmatpush.bf16.msra.mxu0 %v3337
    %4729 = vmatpush.bf16.msra.mxu0 %v3333
    %4730 = vmatpush.bf16.msra.mxu0 %v3329
    %4731 = vmatpush.bf16.msra.mxu0 %v3325
    %4732 = vmatpush.bf16.msra.mxu0 %v3321
    %4733 = vmatpush.bf16.msra.mxu0 %v3317
    %4734 = vmatpush.bf16.msra.mxu0 %v3313
    %4735 = vmatpush.bf16.msra.mxu0 %v3309
    %4736 = vmatmul.bf16.gmra.mxu0 %v1202
    %v4737 = vpop.f32.mrf.mxu0
    %v4738 = vadd.f32 %v4725, %v4737
    %v4739 = vpop.f32.mrf.mxu0
    %4740 = vdwg.mxu0
    %4741 = vmatpush.bf16.msra.mxu0 %v3369
    %4742 = vmatpush.bf16.msra.mxu0 %v3365
    %4743 = vmatpush.bf16.msra.mxu0 %v3361
    %4744 = vmatpush.bf16.msra.mxu0 %v3357
    %4745 = vmatpush.bf16.msra.mxu0 %v3353
    %4746 = vmatpush.bf16.msra.mxu0 %v3349
    %4747 = vmatpush.bf16.msra.mxu0 %v3345
    %4748 = vmatpush.bf16.msra.mxu0 %v3341
    %4749 = vmatmul.bf16.gmra.mxu0 %v1203
    %v4750 = vpop.f32.mrf.mxu0
    %v4751 = vadd.f32 %v4738, %v4750
    %v4752 = vpop.f32.mrf.mxu0
    %4753 = vdwg.mxu0
    %4754 = vmatpush.bf16.msra.mxu0 %v3401
    %4755 = vmatpush.bf16.msra.mxu0 %v3397
    %4756 = vmatpush.bf16.msra.mxu0 %v3393
    %4757 = vmatpush.bf16.msra.mxu0 %v3389
    %4758 = vmatpush.bf16.msra.mxu0 %v3385
    %4759 = vmatpush.bf16.msra.mxu0 %v3381
    %4760 = vmatpush.bf16.msra.mxu0 %v3377
    %4761 = vmatpush.bf16.msra.mxu0 %v3373
    %4762 = vmatmul.bf16.gmra.mxu0 %v1204
    %v4763 = vpop.f32.mrf.mxu0
    %v4764 = vadd.f32 %v4751, %v4763
    %v4765 = vpop.f32.mrf.mxu0
    %4766 = vdwg.mxu0
    %4767 = vmatpush.bf16.msra.mxu0 %v3433
    %4768 = vmatpush.bf16.msra.mxu0 %v3429
    %4769 = vmatpush.bf16.msra.mxu0 %v3425
    %4770 = vmatpush.bf16.msra.mxu0 %v3421
    %4771 = vmatpush.bf16.msra.mxu0 %v3417
    %4772 = vmatpush.bf16.msra.mxu0 %v3413
    %4773 = vmatpush.bf16.msra.mxu0 %v3409
    %4774 = vmatpush.bf16.msra.mxu0 %v3405
    %4775 = vmatmul.bf16.gmra.mxu0 %v1205
    %v4776 = vpop.f32.mrf.mxu0
    %v4777 = vadd.f32 %v4764, %v4776
    %v4778 = vpop.f32.mrf.mxu0
    %4779 = vdwg.mxu0
    %4780 = vmatpush.bf16.msra.mxu0 %v3465
    %4781 = vmatpush.bf16.msra.mxu0 %v3461
    %4782 = vmatpush.bf16.msra.mxu0 %v3457
    %4783 = vmatpush.bf16.msra.mxu0 %v3453
    %4784 = vmatpush.bf16.msra.mxu0 %v3449
    %4785 = vmatpush.bf16.msra.mxu0 %v3445
    %4786 = vmatpush.bf16.msra.mxu0 %v3441
    %4787 = vmatpush.bf16.msra.mxu0 %v3437
    %4788 = vmatmul.bf16.gmra.mxu0 %v1206
    %v4789 = vpop.f32.mrf.mxu0
    %v4790 = vadd.f32 %v4777, %v4789
    %v4791 = vpop.f32.mrf.mxu0
    %4792 = vdwg.mxu0
    %4793 = vmatpush.bf16.msra.mxu0 %v3497
    %4794 = vmatpush.bf16.msra.mxu0 %v3493
    %4795 = vmatpush.bf16.msra.mxu0 %v3489
    %4796 = vmatpush.bf16.msra.mxu0 %v3485
    %4797 = vmatpush.bf16.msra.mxu0 %v3481
    %4798 = vmatpush.bf16.msra.mxu0 %v3477
    %4799 = vmatpush.bf16.msra.mxu0 %v3473
    %4800 = vmatpush.bf16.msra.mxu0 %v3469
    %4801 = vmatmul.bf16.gmra.mxu0 %v1207
    %v4802 = vpop.f32.mrf.mxu0
    %v4803 = vadd.f32 %v4790, %v4802
    %v4804 = vpop.f32.mrf.mxu0
    %4805 = vdwg.mxu0
    %4806 = vmatpush.bf16.msra.mxu0 %v3529
    %4807 = vmatpush.bf16.msra.mxu0 %v3525
    %4808 = vmatpush.bf16.msra.mxu0 %v3521
    %4809 = vmatpush.bf16.msra.mxu0 %v3517
    %4810 = vmatpush.bf16.msra.mxu0 %v3513
    %4811 = vmatpush.bf16.msra.mxu0 %v3509
    %4812 = vmatpush.bf16.msra.mxu0 %v3505
    %4813 = vmatpush.bf16.msra.mxu0 %v3501
    %4814 = vmatmul.bf16.gmra.mxu0 %v1208
    %v4815 = vpop.f32.mrf.mxu0
    %v4816 = vadd.f32 %v4803, %v4815
    %v4817 = vpop.f32.mrf.mxu0
    %4818 = vdwg.mxu0
    %4819 = vmatpush.bf16.msra.mxu0 %v3561
    %4820 = vmatpush.bf16.msra.mxu0 %v3557
    %4821 = vmatpush.bf16.msra.mxu0 %v3553
    %4822 = vmatpush.bf16.msra.mxu0 %v3549
    %4823 = vmatpush.bf16.msra.mxu0 %v3545
    %4824 = vmatpush.bf16.msra.mxu0 %v3541
    %4825 = vmatpush.bf16.msra.mxu0 %v3537
    %4826 = vmatpush.bf16.msra.mxu0 %v3533
    %4827 = vmatmul.bf16.gmra.mxu0 %v1209
    %v4828 = vpop.f32.mrf.mxu0
    %v4829 = vadd.f32 %v4816, %v4828
    %v4830 = vpop.f32.mrf.mxu0
    %4831 = vdwg.mxu0
    %4832 = vmatpush.bf16.msra.mxu0 %v3593
    %4833 = vmatpush.bf16.msra.mxu0 %v3589
    %4834 = vmatpush.bf16.msra.mxu0 %v3585
    %4835 = vmatpush.bf16.msra.mxu0 %v3581
    %4836 = vmatpush.bf16.msra.mxu0 %v3577
    %4837 = vmatpush.bf16.msra.mxu0 %v3573
    %4838 = vmatpush.bf16.msra.mxu0 %v3569
    %4839 = vmatpush.bf16.msra.mxu0 %v3565
    %4840 = vmatmul.bf16.gmra.mxu0 %v1210
    %v4841 = vpop.f32.mrf.mxu0
    %v4842 = vadd.f32 %v4829, %v4841
    %v4843 = vpop.f32.mrf.mxu0
    %4844 = vdwg.mxu0
    %4845 = vmatpush.bf16.msra.mxu0 %v3625
    %4846 = vmatpush.bf16.msra.mxu0 %v3621
    %4847 = vmatpush.bf16.msra.mxu0 %v3617
    %4848 = vmatpush.bf16.msra.mxu0 %v3613
    %4849 = vmatpush.bf16.msra.mxu0 %v3609
    %4850 = vmatpush.bf16.msra.mxu0 %v3605
    %4851 = vmatpush.bf16.msra.mxu0 %v3601
    %4852 = vmatpush.bf16.msra.mxu0 %v3597
    %4853 = vmatmul.bf16.gmra.mxu0 %v1211
    %v4854 = vpop.f32.mrf.mxu0
    %v4855 = vadd.f32 %v4842, %v4854
    %v4856 = vpop.f32.mrf.mxu0
    %4857 = vdwg.mxu0
    %4858 = vmatpush.bf16.msra.mxu0 %v3657
    %4859 = vmatpush.bf16.msra.mxu0 %v3653
    %4860 = vmatpush.bf16.msra.mxu0 %v3649
    %4861 = vmatpush.bf16.msra.mxu0 %v3645
    %4862 = vmatpush.bf16.msra.mxu0 %v3641
    %4863 = vmatpush.bf16.msra.mxu0 %v3637
    %4864 = vmatpush.bf16.msra.mxu0 %v3633
    %4865 = vmatpush.bf16.msra.mxu0 %v3629
    %4866 = vmatmul.bf16.gmra.mxu0 %v1212
    %v4867 = vpop.f32.mrf.mxu0
    %v4868 = vadd.f32 %v4855, %v4867
    %v4869 = vpop.f32.mrf.mxu0
    %4870 = vdwg.mxu0
    %4871 = vmatpush.bf16.msra.mxu0 %v3689
    %4872 = vmatpush.bf16.msra.mxu0 %v3685
    %4873 = vmatpush.bf16.msra.mxu0 %v3681
    %4874 = vmatpush.bf16.msra.mxu0 %v3677
    %4875 = vmatpush.bf16.msra.mxu0 %v3673
    %4876 = vmatpush.bf16.msra.mxu0 %v3669
    %4877 = vmatpush.bf16.msra.mxu0 %v3665
    %4878 = vmatpush.bf16.msra.mxu0 %v3661
    %4879 = vmatmul.bf16.gmra.mxu0 %v1213
    %v4880 = vpop.f32.mrf.mxu0
    %v4881 = vadd.f32 %v4868, %v4880
    %v4882 = vpop.f32.mrf.mxu0
    %4883 = vdwg.mxu0
    %4884 = vmatpush.bf16.msra.mxu0 %v3721
    %4885 = vmatpush.bf16.msra.mxu0 %v3717
    %4886 = vmatpush.bf16.msra.mxu0 %v3713
    %4887 = vmatpush.bf16.msra.mxu0 %v3709
    %4888 = vmatpush.bf16.msra.mxu0 %v3705
    %4889 = vmatpush.bf16.msra.mxu0 %v3701
    %4890 = vmatpush.bf16.msra.mxu0 %v3697
    %4891 = vmatpush.bf16.msra.mxu0 %v3693
    %4892 = vmatmul.bf16.gmra.mxu0 %v1214
    %v4893 = vpop.f32.mrf.mxu0
    %v4894 = vadd.f32 %v4881, %v4893
    %v4895 = vpop.f32.mrf.mxu0
    %4896 = vdwg.mxu0
    %4897 = vmatpush.bf16.msra.mxu0 %v3753
    %4898 = vmatpush.bf16.msra.mxu0 %v3749
    %4899 = vmatpush.bf16.msra.mxu0 %v3745
    %4900 = vmatpush.bf16.msra.mxu0 %v3741
    %4901 = vmatpush.bf16.msra.mxu0 %v3737
    %4902 = vmatpush.bf16.msra.mxu0 %v3733
    %4903 = vmatpush.bf16.msra.mxu0 %v3729
    %4904 = vmatpush.bf16.msra.mxu0 %v3725
    %4905 = vmatmul.bf16.gmra.mxu0 %v1215
    %v4906 = vpop.f32.mrf.mxu0
    %v4907 = vadd.f32 %v4894, %v4906
    %v4908 = vpop.f32.mrf.mxu0
    %4909 = vdwg.mxu0
    %4910 = vmatpush.bf16.msra.mxu0 %v3785
    %4911 = vmatpush.bf16.msra.mxu0 %v3781
    %4912 = vmatpush.bf16.msra.mxu0 %v3777
    %4913 = vmatpush.bf16.msra.mxu0 %v3773
    %4914 = vmatpush.bf16.msra.mxu0 %v3769
    %4915 = vmatpush.bf16.msra.mxu0 %v3765
    %4916 = vmatpush.bf16.msra.mxu0 %v3761
    %4917 = vmatpush.bf16.msra.mxu0 %v3757
    %4918 = vmatmul.bf16.gmra.mxu0 %v1216
    %v4919 = vpop.f32.mrf.mxu0
    %v4920 = vadd.f32 %v4907, %v4919
    %v4921 = vpop.f32.mrf.mxu0
    %4922 = vdwg.mxu0
    %4923 = vmatpush.bf16.msra.mxu0 %v3306
    %4924 = vmatpush.bf16.msra.mxu0 %v3302
    %4925 = vmatpush.bf16.msra.mxu0 %v3298
    %4926 = vmatpush.bf16.msra.mxu0 %v3294
    %4927 = vmatpush.bf16.msra.mxu0 %v3290
    %4928 = vmatpush.bf16.msra.mxu0 %v3286
    %4929 = vmatpush.bf16.msra.mxu0 %v3282
    %4930 = vmatpush.bf16.msra.mxu0 %v3278
    %4931 = vmatmul.bf16.gmra.mxu0 %v1201
    %v4932 = vpop.f32.mrf.mxu0
    %v4933 = vadd.f32 %v1734, %v4932
    %v4934 = vpop.f32.mrf.mxu0
    %4935 = vdwg.mxu0
    %4936 = vmatpush.bf16.msra.mxu0 %v3338
    %4937 = vmatpush.bf16.msra.mxu0 %v3334
    %4938 = vmatpush.bf16.msra.mxu0 %v3330
    %4939 = vmatpush.bf16.msra.mxu0 %v3326
    %4940 = vmatpush.bf16.msra.mxu0 %v3322
    %4941 = vmatpush.bf16.msra.mxu0 %v3318
    %4942 = vmatpush.bf16.msra.mxu0 %v3314
    %4943 = vmatpush.bf16.msra.mxu0 %v3310
    %4944 = vmatmul.bf16.gmra.mxu0 %v1202
    %v4945 = vpop.f32.mrf.mxu0
    %v4946 = vadd.f32 %v4933, %v4945
    %v4947 = vpop.f32.mrf.mxu0
    %4948 = vdwg.mxu0
    %4949 = vmatpush.bf16.msra.mxu0 %v3370
    %4950 = vmatpush.bf16.msra.mxu0 %v3366
    %4951 = vmatpush.bf16.msra.mxu0 %v3362
    %4952 = vmatpush.bf16.msra.mxu0 %v3358
    %4953 = vmatpush.bf16.msra.mxu0 %v3354
    %4954 = vmatpush.bf16.msra.mxu0 %v3350
    %4955 = vmatpush.bf16.msra.mxu0 %v3346
    %4956 = vmatpush.bf16.msra.mxu0 %v3342
    %4957 = vmatmul.bf16.gmra.mxu0 %v1203
    %v4958 = vpop.f32.mrf.mxu0
    %v4959 = vadd.f32 %v4946, %v4958
    %v4960 = vpop.f32.mrf.mxu0
    %4961 = vdwg.mxu0
    %4962 = vmatpush.bf16.msra.mxu0 %v3402
    %4963 = vmatpush.bf16.msra.mxu0 %v3398
    %4964 = vmatpush.bf16.msra.mxu0 %v3394
    %4965 = vmatpush.bf16.msra.mxu0 %v3390
    %4966 = vmatpush.bf16.msra.mxu0 %v3386
    %4967 = vmatpush.bf16.msra.mxu0 %v3382
    %4968 = vmatpush.bf16.msra.mxu0 %v3378
    %4969 = vmatpush.bf16.msra.mxu0 %v3374
    %4970 = vmatmul.bf16.gmra.mxu0 %v1204
    %v4971 = vpop.f32.mrf.mxu0
    %v4972 = vadd.f32 %v4959, %v4971
    %v4973 = vpop.f32.mrf.mxu0
    %4974 = vdwg.mxu0
    %4975 = vmatpush.bf16.msra.mxu0 %v3434
    %4976 = vmatpush.bf16.msra.mxu0 %v3430
    %4977 = vmatpush.bf16.msra.mxu0 %v3426
    %4978 = vmatpush.bf16.msra.mxu0 %v3422
    %4979 = vmatpush.bf16.msra.mxu0 %v3418
    %4980 = vmatpush.bf16.msra.mxu0 %v3414
    %4981 = vmatpush.bf16.msra.mxu0 %v3410
    %4982 = vmatpush.bf16.msra.mxu0 %v3406
    %4983 = vmatmul.bf16.gmra.mxu0 %v1205
    %v4984 = vpop.f32.mrf.mxu0
    %v4985 = vadd.f32 %v4972, %v4984
    %v4986 = vpop.f32.mrf.mxu0
    %4987 = vdwg.mxu0
    %4988 = vmatpush.bf16.msra.mxu0 %v3466
    %4989 = vmatpush.bf16.msra.mxu0 %v3462
    %4990 = vmatpush.bf16.msra.mxu0 %v3458
    %4991 = vmatpush.bf16.msra.mxu0 %v3454
    %4992 = vmatpush.bf16.msra.mxu0 %v3450
    %4993 = vmatpush.bf16.msra.mxu0 %v3446
    %4994 = vmatpush.bf16.msra.mxu0 %v3442
    %4995 = vmatpush.bf16.msra.mxu0 %v3438
    %4996 = vmatmul.bf16.gmra.mxu0 %v1206
    %v4997 = vpop.f32.mrf.mxu0
    %v4998 = vadd.f32 %v4985, %v4997
    %v4999 = vpop.f32.mrf.mxu0
    %5000 = vdwg.mxu0
    %5001 = vmatpush.bf16.msra.mxu0 %v3498
    %5002 = vmatpush.bf16.msra.mxu0 %v3494
    %5003 = vmatpush.bf16.msra.mxu0 %v3490
    %5004 = vmatpush.bf16.msra.mxu0 %v3486
    %5005 = vmatpush.bf16.msra.mxu0 %v3482
    %5006 = vmatpush.bf16.msra.mxu0 %v3478
    %5007 = vmatpush.bf16.msra.mxu0 %v3474
    %5008 = vmatpush.bf16.msra.mxu0 %v3470
    %5009 = vmatmul.bf16.gmra.mxu0 %v1207
    %v5010 = vpop.f32.mrf.mxu0
    %v5011 = vadd.f32 %v4998, %v5010
    %v5012 = vpop.f32.mrf.mxu0
    %5013 = vdwg.mxu0
    %5014 = vmatpush.bf16.msra.mxu0 %v3530
    %5015 = vmatpush.bf16.msra.mxu0 %v3526
    %5016 = vmatpush.bf16.msra.mxu0 %v3522
    %5017 = vmatpush.bf16.msra.mxu0 %v3518
    %5018 = vmatpush.bf16.msra.mxu0 %v3514
    %5019 = vmatpush.bf16.msra.mxu0 %v3510
    %5020 = vmatpush.bf16.msra.mxu0 %v3506
    %5021 = vmatpush.bf16.msra.mxu0 %v3502
    %5022 = vmatmul.bf16.gmra.mxu0 %v1208
    %v5023 = vpop.f32.mrf.mxu0
    %v5024 = vadd.f32 %v5011, %v5023
    %v5025 = vpop.f32.mrf.mxu0
    %5026 = vdwg.mxu0
    %5027 = vmatpush.bf16.msra.mxu0 %v3562
    %5028 = vmatpush.bf16.msra.mxu0 %v3558
    %5029 = vmatpush.bf16.msra.mxu0 %v3554
    %5030 = vmatpush.bf16.msra.mxu0 %v3550
    %5031 = vmatpush.bf16.msra.mxu0 %v3546
    %5032 = vmatpush.bf16.msra.mxu0 %v3542
    %5033 = vmatpush.bf16.msra.mxu0 %v3538
    %5034 = vmatpush.bf16.msra.mxu0 %v3534
    %5035 = vmatmul.bf16.gmra.mxu0 %v1209
    %v5036 = vpop.f32.mrf.mxu0
    %v5037 = vadd.f32 %v5024, %v5036
    %v5038 = vpop.f32.mrf.mxu0
    %5039 = vdwg.mxu0
    %5040 = vmatpush.bf16.msra.mxu0 %v3594
    %5041 = vmatpush.bf16.msra.mxu0 %v3590
    %5042 = vmatpush.bf16.msra.mxu0 %v3586
    %5043 = vmatpush.bf16.msra.mxu0 %v3582
    %5044 = vmatpush.bf16.msra.mxu0 %v3578
    %5045 = vmatpush.bf16.msra.mxu0 %v3574
    %5046 = vmatpush.bf16.msra.mxu0 %v3570
    %5047 = vmatpush.bf16.msra.mxu0 %v3566
    %5048 = vmatmul.bf16.gmra.mxu0 %v1210
    %v5049 = vpop.f32.mrf.mxu0
    %v5050 = vadd.f32 %v5037, %v5049
    %v5051 = vpop.f32.mrf.mxu0
    %5052 = vdwg.mxu0
    %5053 = vmatpush.bf16.msra.mxu0 %v3626
    %5054 = vmatpush.bf16.msra.mxu0 %v3622
    %5055 = vmatpush.bf16.msra.mxu0 %v3618
    %5056 = vmatpush.bf16.msra.mxu0 %v3614
    %5057 = vmatpush.bf16.msra.mxu0 %v3610
    %5058 = vmatpush.bf16.msra.mxu0 %v3606
    %5059 = vmatpush.bf16.msra.mxu0 %v3602
    %5060 = vmatpush.bf16.msra.mxu0 %v3598
    %5061 = vmatmul.bf16.gmra.mxu0 %v1211
    %v5062 = vpop.f32.mrf.mxu0
    %v5063 = vadd.f32 %v5050, %v5062
    %v5064 = vpop.f32.mrf.mxu0
    %5065 = vdwg.mxu0
    %5066 = vmatpush.bf16.msra.mxu0 %v3658
    %5067 = vmatpush.bf16.msra.mxu0 %v3654
    %5068 = vmatpush.bf16.msra.mxu0 %v3650
    %5069 = vmatpush.bf16.msra.mxu0 %v3646
    %5070 = vmatpush.bf16.msra.mxu0 %v3642
    %5071 = vmatpush.bf16.msra.mxu0 %v3638
    %5072 = vmatpush.bf16.msra.mxu0 %v3634
    %5073 = vmatpush.bf16.msra.mxu0 %v3630
    %5074 = vmatmul.bf16.gmra.mxu0 %v1212
    %v5075 = vpop.f32.mrf.mxu0
    %v5076 = vadd.f32 %v5063, %v5075
    %v5077 = vpop.f32.mrf.mxu0
    %5078 = vdwg.mxu0
    %5079 = vmatpush.bf16.msra.mxu0 %v3690
    %5080 = vmatpush.bf16.msra.mxu0 %v3686
    %5081 = vmatpush.bf16.msra.mxu0 %v3682
    %5082 = vmatpush.bf16.msra.mxu0 %v3678
    %5083 = vmatpush.bf16.msra.mxu0 %v3674
    %5084 = vmatpush.bf16.msra.mxu0 %v3670
    %5085 = vmatpush.bf16.msra.mxu0 %v3666
    %5086 = vmatpush.bf16.msra.mxu0 %v3662
    %5087 = vmatmul.bf16.gmra.mxu0 %v1213
    %v5088 = vpop.f32.mrf.mxu0
    %v5089 = vadd.f32 %v5076, %v5088
    %v5090 = vpop.f32.mrf.mxu0
    %5091 = vdwg.mxu0
    %5092 = vmatpush.bf16.msra.mxu0 %v3722
    %5093 = vmatpush.bf16.msra.mxu0 %v3718
    %5094 = vmatpush.bf16.msra.mxu0 %v3714
    %5095 = vmatpush.bf16.msra.mxu0 %v3710
    %5096 = vmatpush.bf16.msra.mxu0 %v3706
    %5097 = vmatpush.bf16.msra.mxu0 %v3702
    %5098 = vmatpush.bf16.msra.mxu0 %v3698
    %5099 = vmatpush.bf16.msra.mxu0 %v3694
    %5100 = vmatmul.bf16.gmra.mxu0 %v1214
    %v5101 = vpop.f32.mrf.mxu0
    %v5102 = vadd.f32 %v5089, %v5101
    %v5103 = vpop.f32.mrf.mxu0
    %5104 = vdwg.mxu0
    %5105 = vmatpush.bf16.msra.mxu0 %v3754
    %5106 = vmatpush.bf16.msra.mxu0 %v3750
    %5107 = vmatpush.bf16.msra.mxu0 %v3746
    %5108 = vmatpush.bf16.msra.mxu0 %v3742
    %5109 = vmatpush.bf16.msra.mxu0 %v3738
    %5110 = vmatpush.bf16.msra.mxu0 %v3734
    %5111 = vmatpush.bf16.msra.mxu0 %v3730
    %5112 = vmatpush.bf16.msra.mxu0 %v3726
    %5113 = vmatmul.bf16.gmra.mxu0 %v1215
    %v5114 = vpop.f32.mrf.mxu0
    %v5115 = vadd.f32 %v5102, %v5114
    %v5116 = vpop.f32.mrf.mxu0
    %5117 = vdwg.mxu0
    %5118 = vmatpush.bf16.msra.mxu0 %v3786
    %5119 = vmatpush.bf16.msra.mxu0 %v3782
    %5120 = vmatpush.bf16.msra.mxu0 %v3778
    %5121 = vmatpush.bf16.msra.mxu0 %v3774
    %5122 = vmatpush.bf16.msra.mxu0 %v3770
    %5123 = vmatpush.bf16.msra.mxu0 %v3766
    %5124 = vmatpush.bf16.msra.mxu0 %v3762
    %5125 = vmatpush.bf16.msra.mxu0 %v3758
    %5126 = vmatmul.bf16.gmra.mxu0 %v1216
    %v5127 = vpop.f32.mrf.mxu0
    %v5128 = vadd.f32 %v5115, %v5127
    %v5129 = vpop.f32.mrf.mxu0
    %5130 = vdwg.mxu0
    %v5131 = vmax.f32 %v4504, 0.0
    %v5132 = vmax.f32 %v4712, 0.0
    %v5133 = vmax.f32 %v4920, 0.0
    %v5134 = vmax.f32 %v5128, 0.0
    %v5135 = vpack.c.bf16 %v5131, %v5131
    %v5136 = vpack.c.bf16 %v5132, %v5132
    %v5137 = vpack.c.bf16 %v5133, %v5133
    %v5138 = vpack.c.bf16 %v5134, %v5134
    %v5139 = vld [vmem:[#allocation11] sm:$0xf]
    %v5140 = vld [vmem:[#allocation11 + $0x4] sm:$0xf]
    %v5141 = vld [vmem:[#allocation11 + $0x8] sm:$0xf]
    %v5142 = vld [vmem:[#allocation11 + $0xc] sm:$0xf]
    %v5143 = vld [vmem:[#allocation11 + $0x10] sm:$0xf]
    %v5144 = vld [vmem:[#allocation11 + $0x14] sm:$0xf]
    %v5145 = vld [vmem:[#allocation11 + $0x18] sm:$0xf]
    %v5146 = vld [vmem:[#allocation11 + $0x1c] sm:$0xf]
    %v5147 = vld [vmem:[#allocation11 + $0x20] sm:$0xf]
    %v5148 = vld [vmem:[#allocation11 + $0x24] sm:$0xf]
    %v5149 = vld [vmem:[#allocation11 + $0x28] sm:$0xf]
    %v5150 = vld [vmem:[#allocation11 + $0x2c] sm:$0xf]
    %v5151 = vld [vmem:[#allocation11 + $0x30] sm:$0xf]
    %v5152 = vld [vmem:[#allocation11 + $0x34] sm:$0xf]
    %v5153 = vld [vmem:[#allocation11 + $0x38] sm:$0xf]
    %v5154 = vld [vmem:[#allocation11 + $0x3c] sm:$0xf]
    %v5155 = vld [vmem:[#allocation11 + $0x40] sm:$0xf]
    %v5156 = vld [vmem:[#allocation11 + $0x44] sm:$0xf]
    %v5157 = vld [vmem:[#allocation11 + $0x48] sm:$0xf]
    %v5158 = vld [vmem:[#allocation11 + $0x4c] sm:$0xf]
    %v5159 = vld [vmem:[#allocation11 + $0x50] sm:$0xf]
    %v5160 = vld [vmem:[#allocation11 + $0x54] sm:$0xf]
    %v5161 = vld [vmem:[#allocation11 + $0x58] sm:$0xf]
    %v5162 = vld [vmem:[#allocation11 + $0x5c] sm:$0xf]
    %v5163 = vld [vmem:[#allocation11 + $0x60] sm:$0xf]
    %v5164 = vld [vmem:[#allocation11 + $0x64] sm:$0xf]
    %v5165 = vld [vmem:[#allocation11 + $0x68] sm:$0xf]
    %v5166 = vld [vmem:[#allocation11 + $0x6c] sm:$0xf]
    %v5167 = vld [vmem:[#allocation11 + $0x70] sm:$0xf]
    %v5168 = vld [vmem:[#allocation11 + $0x74] sm:$0xf]
    %v5169 = vld [vmem:[#allocation11 + $0x78] sm:$0xf]
    %v5170 = vld [vmem:[#allocation11 + $0x7c] sm:$0xf]
    %v5171 = vld [vmem:[#allocation11 + $0x80] sm:$0xf]
    %v5172 = vld [vmem:[#allocation11 + $0x84] sm:$0xf]
    %v5173 = vld [vmem:[#allocation11 + $0x88] sm:$0xf]
    %v5174 = vld [vmem:[#allocation11 + $0x8c] sm:$0xf]
    %v5175 = vld [vmem:[#allocation11 + $0x90] sm:$0xf]
    %v5176 = vld [vmem:[#allocation11 + $0x94] sm:$0xf]
    %v5177 = vld [vmem:[#allocation11 + $0x98] sm:$0xf]
    %v5178 = vld [vmem:[#allocation11 + $0x9c] sm:$0xf]
    %v5179 = vld [vmem:[#allocation11 + $0xa0] sm:$0xf]
    %v5180 = vld [vmem:[#allocation11 + $0xa4] sm:$0xf]
    %v5181 = vld [vmem:[#allocation11 + $0xa8] sm:$0xf]
    %v5182 = vld [vmem:[#allocation11 + $0xac] sm:$0xf]
    %v5183 = vld [vmem:[#allocation11 + $0xb0] sm:$0xf]
    %v5184 = vld [vmem:[#allocation11 + $0xb4] sm:$0xf]
    %v5185 = vld [vmem:[#allocation11 + $0xb8] sm:$0xf]
    %v5186 = vld [vmem:[#allocation11 + $0xbc] sm:$0xf]
    %v5187 = vld [vmem:[#allocation11 + $0xc0] sm:$0xf]
    %v5188 = vld [vmem:[#allocation11 + $0xc4] sm:$0xf]
    %v5189 = vld [vmem:[#allocation11 + $0xc8] sm:$0xf]
    %v5190 = vld [vmem:[#allocation11 + $0xcc] sm:$0xf]
    %v5191 = vld [vmem:[#allocation11 + $0xd0] sm:$0xf]
    %v5192 = vld [vmem:[#allocation11 + $0xd4] sm:$0xf]
    %v5193 = vld [vmem:[#allocation11 + $0xd8] sm:$0xf]
    %v5194 = vld [vmem:[#allocation11 + $0xdc] sm:$0xf]
    %v5195 = vld [vmem:[#allocation11 + $0xe0] sm:$0xf]
    %v5196 = vld [vmem:[#allocation11 + $0xe4] sm:$0xf]
    %v5197 = vld [vmem:[#allocation11 + $0xe8] sm:$0xf]
    %v5198 = vld [vmem:[#allocation11 + $0xec] sm:$0xf]
    %v5199 = vld [vmem:[#allocation11 + $0xf0] sm:$0xf]
    %v5200 = vld [vmem:[#allocation11 + $0xf4] sm:$0xf]
    %v5201 = vld [vmem:[#allocation11 + $0xf8] sm:$0xf]
    %v5202 = vld [vmem:[#allocation11 + $0xfc] sm:$0xf]
    %v5203 = vld [vmem:[#allocation13] sm:$0x1]
    %v5205 = vperm.slane %v5203, 0
    %v5271 = vunpack.c.l.b16 %v5139
    %v5272 = vunpack.c.l.b16 %v5140
    %v5273 = vunpack.c.l.b16 %v5141
    %v5274 = vunpack.c.l.b16 %v5142
    %v5275 = vunpack.c.l.b16 %v5143
    %v5276 = vunpack.c.l.b16 %v5144
    %v5277 = vunpack.c.l.b16 %v5145
    %v5278 = vunpack.c.l.b16 %v5146
    %v5279 = vunpack.c.l.b16 %v5147
    %v5280 = vunpack.c.l.b16 %v5148
    %v5281 = vunpack.c.l.b16 %v5149
    %v5282 = vunpack.c.l.b16 %v5150
    %v5283 = vunpack.c.l.b16 %v5151
    %v5284 = vunpack.c.l.b16 %v5152
    %v5285 = vunpack.c.l.b16 %v5153
    %v5286 = vunpack.c.l.b16 %v5154
    %v5287 = vunpack.c.l.b16 %v5155
    %v5288 = vunpack.c.l.b16 %v5156
    %v5289 = vunpack.c.l.b16 %v5157
    %v5290 = vunpack.c.l.b16 %v5158
    %v5291 = vunpack.c.l.b16 %v5159
    %v5292 = vunpack.c.l.b16 %v5160
    %v5293 = vunpack.c.l.b16 %v5161
    %v5294 = vunpack.c.l.b16 %v5162
    %v5295 = vunpack.c.l.b16 %v5163
    %v5296 = vunpack.c.l.b16 %v5164
    %v5297 = vunpack.c.l.b16 %v5165
    %v5298 = vunpack.c.l.b16 %v5166
    %v5299 = vunpack.c.l.b16 %v5167
    %v5300 = vunpack.c.l.b16 %v5168
    %v5301 = vunpack.c.l.b16 %v5169
    %v5302 = vunpack.c.l.b16 %v5170
    %v5303 = vunpack.c.l.b16 %v5171
    %v5304 = vunpack.c.l.b16 %v5172
    %v5305 = vunpack.c.l.b16 %v5173
    %v5306 = vunpack.c.l.b16 %v5174
    %v5307 = vunpack.c.l.b16 %v5175
    %v5308 = vunpack.c.l.b16 %v5176
    %v5309 = vunpack.c.l.b16 %v5177
    %v5310 = vunpack.c.l.b16 %v5178
    %v5311 = vunpack.c.l.b16 %v5179
    %v5312 = vunpack.c.l.b16 %v5180
    %v5313 = vunpack.c.l.b16 %v5181
    %v5314 = vunpack.c.l.b16 %v5182
    %v5315 = vunpack.c.l.b16 %v5183
    %v5316 = vunpack.c.l.b16 %v5184
    %v5317 = vunpack.c.l.b16 %v5185
    %v5318 = vunpack.c.l.b16 %v5186
    %v5319 = vunpack.c.l.b16 %v5187
    %v5320 = vunpack.c.l.b16 %v5188
    %v5321 = vunpack.c.l.b16 %v5189
    %v5322 = vunpack.c.l.b16 %v5190
    %v5323 = vunpack.c.l.b16 %v5191
    %v5324 = vunpack.c.l.b16 %v5192
    %v5325 = vunpack.c.l.b16 %v5193
    %v5326 = vunpack.c.l.b16 %v5194
    %v5327 = vunpack.c.l.b16 %v5195
    %v5328 = vunpack.c.l.b16 %v5196
    %v5329 = vunpack.c.l.b16 %v5197
    %v5330 = vunpack.c.l.b16 %v5198
    %v5331 = vunpack.c.l.b16 %v5199
    %v5332 = vunpack.c.l.b16 %v5200
    %v5333 = vunpack.c.l.b16 %v5201
    %v5334 = vunpack.c.l.b16 %v5202
    %v5335 = vpack.c.b16 %v5272, %v5271
    %v5336 = vpack.c.b16 %v5274, %v5273
    %v5337 = vpack.c.b16 %v5276, %v5275
    %v5338 = vpack.c.b16 %v5278, %v5277
    %v5339 = vpack.c.b16 %v5280, %v5279
    %v5340 = vpack.c.b16 %v5282, %v5281
    %v5341 = vpack.c.b16 %v5284, %v5283
    %v5342 = vpack.c.b16 %v5286, %v5285
    %v5343 = vpack.c.b16 %v5288, %v5287
    %v5344 = vpack.c.b16 %v5290, %v5289
    %v5345 = vpack.c.b16 %v5292, %v5291
    %v5346 = vpack.c.b16 %v5294, %v5293
    %v5347 = vpack.c.b16 %v5296, %v5295
    %v5348 = vpack.c.b16 %v5298, %v5297
    %v5349 = vpack.c.b16 %v5300, %v5299
    %v5350 = vpack.c.b16 %v5302, %v5301
    %v5351 = vpack.c.b16 %v5304, %v5303
    %v5352 = vpack.c.b16 %v5306, %v5305
    %v5353 = vpack.c.b16 %v5308, %v5307
    %v5354 = vpack.c.b16 %v5310, %v5309
    %v5355 = vpack.c.b16 %v5312, %v5311
    %v5356 = vpack.c.b16 %v5314, %v5313
    %v5357 = vpack.c.b16 %v5316, %v5315
    %v5358 = vpack.c.b16 %v5318, %v5317
    %v5359 = vpack.c.b16 %v5320, %v5319
    %v5360 = vpack.c.b16 %v5322, %v5321
    %v5361 = vpack.c.b16 %v5324, %v5323
    %v5362 = vpack.c.b16 %v5326, %v5325
    %v5363 = vpack.c.b16 %v5328, %v5327
    %v5364 = vpack.c.b16 %v5330, %v5329
    %v5365 = vpack.c.b16 %v5332, %v5331
    %v5366 = vpack.c.b16 %v5334, %v5333
    %5399 = vmatpush.bf16.msra.mxu0 %v5342
    %5400 = vmatpush.bf16.msra.mxu0 %v5341
    %5401 = vmatpush.bf16.msra.mxu0 %v5340
    %5402 = vmatpush.bf16.msra.mxu0 %v5339
    %5403 = vmatpush.bf16.msra.mxu0 %v5338
    %5404 = vmatpush.bf16.msra.mxu0 %v5337
    %5405 = vmatpush.bf16.msra.mxu0 %v5336
    %5406 = vmatpush.bf16.msra.mxu0 %v5335
    %5407 = vmatmul.bf16.gmra.mxu0 %v5135
    %v5408 = vpop.f32.mrf.mxu0
    %v5409 = vadd.f32 %v5205, %v5408
    %v5410 = vpop.f32.mrf.mxu0
    %5411 = vdwg.mxu0
    %5412 = vmatpush.bf16.msra.mxu0 %v5350
    %5413 = vmatpush.bf16.msra.mxu0 %v5349
    %5414 = vmatpush.bf16.msra.mxu0 %v5348
    %5415 = vmatpush.bf16.msra.mxu0 %v5347
    %5416 = vmatpush.bf16.msra.mxu0 %v5346
    %5417 = vmatpush.bf16.msra.mxu0 %v5345
    %5418 = vmatpush.bf16.msra.mxu0 %v5344
    %5419 = vmatpush.bf16.msra.mxu0 %v5343
    %5420 = vmatmul.bf16.gmra.mxu0 %v5136
    %v5421 = vpop.f32.mrf.mxu0
    %v5422 = vadd.f32 %v5409, %v5421
    %v5423 = vpop.f32.mrf.mxu0
    %5424 = vdwg.mxu0
    %5425 = vmatpush.bf16.msra.mxu0 %v5358
    %5426 = vmatpush.bf16.msra.mxu0 %v5357
    %5427 = vmatpush.bf16.msra.mxu0 %v5356
    %5428 = vmatpush.bf16.msra.mxu0 %v5355
    %5429 = vmatpush.bf16.msra.mxu0 %v5354
    %5430 = vmatpush.bf16.msra.mxu0 %v5353
    %5431 = vmatpush.bf16.msra.mxu0 %v5352
    %5432 = vmatpush.bf16.msra.mxu0 %v5351
    %5433 = vmatmul.bf16.gmra.mxu0 %v5137
    %v5434 = vpop.f32.mrf.mxu0
    %v5435 = vadd.f32 %v5422, %v5434
    %v5436 = vpop.f32.mrf.mxu0
    %5437 = vdwg.mxu0
    %5438 = vmatpush.bf16.msra.mxu0 %v5366
    %5439 = vmatpush.bf16.msra.mxu0 %v5365
    %5440 = vmatpush.bf16.msra.mxu0 %v5364
    %5441 = vmatpush.bf16.msra.mxu0 %v5363
    %5442 = vmatpush.bf16.msra.mxu0 %v5362
    %5443 = vmatpush.bf16.msra.mxu0 %v5361
    %5444 = vmatpush.bf16.msra.mxu0 %v5360
    %5445 = vmatpush.bf16.msra.mxu0 %v5359
    %5446 = vmatmul.bf16.gmra.mxu0 %v5138
    %v5447 = vpop.f32.mrf.mxu0
    %v5448 = vadd.f32 %v5435, %v5447
    %v5449 = vpop.f32.mrf.mxu0
    %5450 = vdwg.mxu0
    %v5451 = vmax.f32 %v5448, 0.0
    %v5452 = vpack.c.bf16 %v5451, %v5451
    %v5453 = vld [vmem:[%s7] sm:$0xf]
    %v5454 = vld [vmem:[%s7 + $0x4] sm:$0xf]
    %v5455 = vld [vmem:[%s7 + $0x8] sm:$0xf]
    %v5456 = vld [vmem:[%s7 + $0xc] sm:$0xf]
    %v5457 = vld [vmem:[%s7 + $0x10] sm:$0xf]
    %v5458 = vld [vmem:[%s7 + $0x14] sm:$0xf]
    %v5459 = vld [vmem:[%s7 + $0x18] sm:$0xf]
    %v5460 = vld [vmem:[%s7 + $0x1c] sm:$0xf]
    %v5461 = vld [vmem:[%s7 + $0x20] sm:$0xf]
    %v5462 = vld [vmem:[%s7 + $0x24] sm:$0xf]
    %v5463 = vld [vmem:[%s7 + $0x28] sm:$0xf]
    %v5464 = vld [vmem:[%s7 + $0x2c] sm:$0xf]
    %v5465 = vld [vmem:[%s7 + $0x30] sm:$0xf]
    %v5466 = vld [vmem:[%s7 + $0x34] sm:$0xf]
    %v5467 = vld [vmem:[%s7 + $0x38] sm:$0xf]
    %v5468 = vld [vmem:[%s7 + $0x3c] sm:$0xf]
    %v5469 = vld [vmem:[#allocation14] sm:$0x1]
    %v5471 = vperm.slane %v5469, 0
    %v5489 = vunpack.c.l.b16 %v5453
    %v5490 = vunpack.c.l.b16 %v5454
    %v5491 = vunpack.c.l.b16 %v5455
    %v5492 = vunpack.c.l.b16 %v5456
    %v5493 = vunpack.c.l.b16 %v5457
    %v5494 = vunpack.c.l.b16 %v5458
    %v5495 = vunpack.c.l.b16 %v5459
    %v5496 = vunpack.c.l.b16 %v5460
    %v5497 = vunpack.c.l.b16 %v5461
    %v5498 = vunpack.c.l.b16 %v5462
    %v5499 = vunpack.c.l.b16 %v5463
    %v5500 = vunpack.c.l.b16 %v5464
    %v5501 = vunpack.c.l.b16 %v5465
    %v5502 = vunpack.c.l.b16 %v5466
    %v5503 = vunpack.c.l.b16 %v5467
    %v5504 = vunpack.c.l.b16 %v5468
    %v5505 = vpack.c.b16 %v5490, %v5489
    %v5506 = vpack.c.b16 %v5492, %v5491
    %v5507 = vpack.c.b16 %v5494, %v5493
    %v5508 = vpack.c.b16 %v5496, %v5495
    %v5509 = vpack.c.b16 %v5498, %v5497
    %v5510 = vpack.c.b16 %v5500, %v5499
    %v5511 = vpack.c.b16 %v5502, %v5501
    %v5512 = vpack.c.b16 %v5504, %v5503
    %5521 = vmatpush.bf16.msra.mxu0 %v5512
    %5522 = vmatpush.bf16.msra.mxu0 %v5511
    %5523 = vmatpush.bf16.msra.mxu0 %v5510
    %5524 = vmatpush.bf16.msra.mxu0 %v5509
    %5525 = vmatpush.bf16.msra.mxu0 %v5508
    %5526 = vmatpush.bf16.msra.mxu0 %v5507
    %5527 = vmatpush.bf16.msra.mxu0 %v5506
    %5528 = vmatpush.bf16.msra.mxu0 %v5505
    %5529 = vmatmul.bf16.gmra.mxu0 %v5452
    %v5530 = vpop.f32.mrf.mxu0
    %v5531 = vadd.f32 %v5471, %v5530
    %v5532 = vpop.f32.mrf.mxu0
    %5533 = vdwg.mxu0
    %v5534 = vmax.f32 %v5531, 0.0
    %v5535 = vpack.c.bf16 %v5534, %v5534
    %v5536 = vld [vmem:[%s9] sm:$0xf]
    %v5537 = vld [vmem:[%s9 + $0x4] sm:$0xf]
    %v5538 = vld [vmem:[%s9 + $0x8] sm:$0xf]
    %v5539 = vld [vmem:[%s9 + $0xc] sm:$0xf]
    %v5540 = vld [vmem:[#allocation16] sm:$0x1]
    %v5542 = vperm.slane %v5540, 0
    %v5548 = vunpack.c.l.b16 %v5536
    %v5549 = vunpack.c.l.b16 %v5537
    %v5550 = vunpack.c.l.b16 %v5538
    %v5551 = vunpack.c.l.b16 %v5539
    %v5552 = vpack.c.b16 %v5549, %v5548
    %v5553 = vpack.c.b16 %v5551, %v5550
    %vm5556 = vcmask 261120
    %v5558 = vsel %vm5556, %v5535, 0
    %5560 = vmatpush.bf16.msra.mxu0 0
    %5561 = vmatpush.bf16.msra.mxu0 0
    %5562 = vmatpush.bf16.msra.mxu0 0
    %5563 = vmatpush.bf16.msra.mxu0 0
    %5564 = vmatpush.bf16.msra.mxu0 0
    %5565 = vmatpush.bf16.msra.mxu0 0
    %5566 = vmatpush.bf16.msra.mxu0 %v5553
    %5567 = vmatpush.bf16.msra.mxu0 %v5552
    %5568 = vmatmul.bf16.gmra.mxu0 %v5558
    %v5569 = vpop.f32.mrf.mxu0
    %v5570 = vadd.f32 %v5542, %v5569
    %v5571 = vpop.f32.mrf.mxu0
    %5572 = vdwg.mxu0
    %vm5573 = vcmask 15360
    %v5574 = vsel %vm5573, %v5570, -inf
    %5575 = vmax.xlane.f32.xlu0 %v5574
    %v5576 = vpop.xlane.xlu0 %5575
    %v5577 = vsub.f32 %v5570, %v5576
    %v5578 = vmul.f32 %v5577, 1.442695
    %v5579 = vpow.pop %v5578
    %v5580 = vsel %vm5573, %v5579, 0.0
    %5581 = vadd.xlane.f32.xlu0 %v5580
    %v5582 = vpop.xlane.xlu0 %5581
    %v5583 = vrcp.pop %v5582
    %v5584 = vmul.f32 %v5582, %v5583
    %v5585 = vsub.f32 1.0, %v5584
    %v5586 = vmul.f32 %v5583, %v5585
    %v5587 = vadd.f32 %v5583, %v5586
    %vm5588 = vweird.f32 %v5582
    %vm5589 = vweird.f32 %v5583
    %vm5590 = vmor %vm5588, %vm5589
    %v5591 = vsel %vm5590, %v5583, %v5587
    %v5592 = vand.u32 2147483647, %v5582
    %vm5593 = vcmp.eq.f32.partialorder %v5592, 8.507059e+37
    %v5594 = vand.u32 %v5582, 2147483648
    %v5595 = vor.u32 1.1754944e-38, %v5594
    %v5596 = vsel %vm5593, %v5595, %v5591
    %v5597 = vmul.f32 %v5579, %v5596
    %5598 = vst.msk [vmem:[%s11] sm:$0xff] %vm5573, %v5597
    // Predicated region
    $region82: #{_mlp_pallas.1} parent=1 // pred_check
      _
    $region83: #{_mlp_pallas.1} parent=1 // pred_check_branch
      %5600 = sbr.rel (0) target = $region85
    $region84: #{_mlp_pallas.1} parent=1 // pred_region
      _
    $region85: #{_mlp_pallas.1} parent=1 // pred_fallthru
      _
    // Predicated region
    $region86: #{_mlp_pallas.1} parent=1 // pred_check
      _
    $region87: #{_mlp_pallas.1} parent=1 // pred_check_branch
      %5602 = sbr.rel (0) target = $region89
    $region88: #{_mlp_pallas.1} parent=1 // pred_region
      _
    $region89: #{_mlp_pallas.1} parent=1 // pred_fallthru
      _
    %5603 = vsyncpa [#allocation4], 1
    %5604 = vsyncpa [#allocation6], 1
    %5605 = vsyncpa [#allocation9], 1
    %5606 = vsyncpa [#allocation12], 1
    %5607 = vsyncpa [#allocation15], 1

</llo_original>
